<compile_context>
chip_gen: v7x
topology: tpu7x:2x2x1
jax: 0.10.0
libtpu: 0.0.40
codegen_flags: <defaults>
</compile_context>

<pallas_src>
import functools

import jax
import jax.numpy as jnp
from jax.experimental import pallas as pl
from jax.experimental.pallas import tpu as pltpu

EPS = 1e-5          # nn.InstanceNorm2d default eps (affine=False)
LRELU_SLOPE = 0.01  # get_activation('leakyrelu') -> nn.LeakyReLU() default slope


def _vmem_limit_bytes():
    """Generation-aware VMEM limit (75% of physical, clamped)."""
    cap = 128 * 1024 * 1024
    try:
        cap = int(pltpu.get_tpu_info().vmem_capacity_bytes)
    except Exception:
        pass
    return max(32 * 1024 * 1024, min((cap * 3) // 4, 96 * 1024 * 1024))


# ----------------------------------------------------------------------------
# In-kernel helpers (pure jnp on values / refs)
# ----------------------------------------------------------------------------
def _inorm_lrelu(acc, hw):
    """InstanceNorm2d(affine=False) + LeakyReLU, f32, one-pass statistics.

    acc: (H*W, C) f32.  Biased variance, eps inside rsqrt -> matches PyTorch.
    Conv bias is omitted upstream: mean subtraction cancels it exactly.
    """
    inv_n = 1.0 / float(hw)
    mean = jnp.sum(acc, axis=0, keepdims=True) * inv_n
    ex2 = jnp.sum(acc * acc, axis=0, keepdims=True) * inv_n
    var = jnp.maximum(ex2 - mean * mean, 0.0)
    y = (acc - mean) * jax.lax.rsqrt(var + EPS)
    return jnp.where(y > 0, y, LRELU_SLOPE * y)


def _zero_border(pad_ref):
    """Zero only the 1-pixel border of a (Hp, Wp, C) pad scratch."""
    Hp, Wp, C = pad_ref.shape
    pad_ref[0:1, :, :] = jnp.zeros((1, Wp, C), pad_ref.dtype)
    pad_ref[Hp - 1:Hp, :, :] = jnp.zeros((1, Wp, C), pad_ref.dtype)
    pad_ref[:, 0:1, :] = jnp.zeros((Hp, 1, C), pad_ref.dtype)
    pad_ref[:, Wp - 1:Wp, :] = jnp.zeros((Hp, 1, C), pad_ref.dtype)


def _conv3x3(pad_ref, w_ref, Hh, Ww):
    """'same' 3x3 conv as ONE MXU matmul with K = 9*Cin (full im2col).

    pad_ref: (Hh+2, Ww+2, Cin) f32 VMEM scratch (zero border, interior filled)
    w_ref:   (9*Cin, Cout) bf16, row index = (dy*3 + dx)*Cin + c
    returns: (Hh*Ww, Cout) f32
    """
    cin = pad_ref.shape[-1]
    # Hoisted dx-concat: 3 sliced ref loads + 1 lane concat (instead of 9 + 3).
    xcat = jnp.concatenate(
        [pad_ref[:, dx:dx + Ww, :] for dx in range(3)], axis=-1)  # (Hh+2, Ww, 3Cin)
    # dy taps are leading-dim slices of xcat; merge into one K = 9*Cin slab so
    # a single matmul feeds the MXU (amortizes fill/drain on the 256-wide MXU).
    slab = jnp.concatenate(
        [xcat[dy:dy + Hh] for dy in range(3)], axis=-1)           # (Hh, Ww, 9Cin)
    slab = slab.reshape(Hh * Ww, 9 * cin).astype(jnp.bfloat16)
    return jnp.dot(slab, w_ref[...], preferred_element_type=jnp.float32)


def _fill_upsampled_feats(pad_ref, feats, prev_h, prev_w, cf, cl):
    """Write nearest-2x-upsampled feats into pad_ref[1:, 1:, cl:cl+cf].

    feats: (prev_h*prev_w, cf) f32 value from the previous module.
    Only proven op classes: broadcast, leading-dim reshape, masked stores.
    """
    hi, wi = 2 * prev_h, 2 * prev_w
    f = feats.reshape(prev_h, prev_w, cf)
    # H direction: duplicate rows (leading-dim collapse; minor dims untouched).
    f2h = jnp.broadcast_to(f[:, None], (prev_h, 2, prev_w, cf)).reshape(hi, prev_w, cf)
    # W direction: write column pairs (avoids an unsupported minor-dim
    # relayout / strided store).  TODO(synk): reshape-based interleave at large W.
    for x in range(prev_w):
        col2 = jnp.broadcast_to(f2h[:, x:x + 1, :], (hi, 2, cf))
        pad_ref[1:hi + 1, 1 + 2 * x:3 + 2 * x, cl:cl + cf] = col2


# ----------------------------------------------------------------------------
# Fused decoder kernel: all CRN modules + output head, one image per grid step
# ----------------------------------------------------------------------------
def _decoder_kernel(*refs, dims, H, W):
    M = len(dims) - 1
    CL = dims[0]

    pyr = refs[:M]                                   # layout pyramid, coarse->fine
    wts = refs[M:3 * M]                              # (w0_i, w1_i) per module
    ow0_ref, ob0_ref, ow1t_ref, ob1_ref = refs[3 * M:3 * M + 4]
    o_ref = refs[3 * M + 4]
    pads = refs[3 * M + 5:3 * M + 5 + 2 * M]
    xpad = refs[3 * M + 5 + 2 * M]

    feats = None                                     # (Hi*Wi, Cout_i) f32
    for i in range(M):
        Hi = H >> (M - 1 - i)
        Wi = W >> (M - 1 - i)
        cout = dims[i + 1]
        cf = 1 if i == 0 else dims[i]
        pad0, pad1 = pads[2 * i], pads[2 * i + 1]
        w0_ref, w1_ref = wts[2 * i], wts[2 * i + 1]

        # conv0 input = concat([layout, feats]) built in one pad scratch:
        # layout channels [0:CL], feats channels [CL:CL+cf].
        _zero_border(pad0)
        pad0[1:Hi + 1, 1:Wi + 1, 0:CL] = pyr[i][0].astype(jnp.float32)
        if i == 0:
            # First module's feats input is identically zero (torch.zeros).
            pad0[1:Hi + 1, 1:Wi + 1, CL:CL + 1] = jnp.zeros((Hi, Wi, 1), jnp.float32)
        else:
            # Nearest-2x upsample of the previous module's output, in-kernel.
            _fill_upsampled_feats(pad0, feats, Hi // 2, Wi // 2, cf, CL)

        h1 = _inorm_lrelu(_conv3x3(pad0, w0_ref, Hi, Wi), Hi * Wi)

        _zero_border(pad1)
        pad1[1:Hi + 1, 1:Wi + 1, :] = h1.reshape(Hi, Wi, cout)
        feats = _inorm_lrelu(_conv3x3(pad1, w1_ref, Hi, Wi), Hi * Wi)

    # Output head: conv3x3 + bias + LeakyReLU + conv1x1 + bias, channel-major.
    D = dims[-1]
    _zero_border(xpad)
    xpad[1:H + 1, 1:W + 1, :] = feats.reshape(H, W, D)
    acc = _conv3x3(xpad, ow0_ref, H, W) + ob0_ref[...]       # (H*W, D) f32
    hact = jnp.where(acc > 0, acc, LRELU_SLOPE * acc)
    # 1x1 conv emitted channel-major: (3, H*W) lane-dense (H*W % 128 == 0).
    out = jax.lax.dot_general(
        ow1t_ref[...], hact.astype(jnp.bfloat16),
        dimension_numbers=(((1,), (1,)), ((), ())),
        preferred_element_type=jnp.float32) + ob1_ref[...]   # (3, H*W)
    o_ref[...] = out.reshape(1, 3, H * W).astype(o_ref.dtype)


# ----------------------------------------------------------------------------
# Plain-JAX glue (pyramid construction only; everything else is in-kernel)
# ----------------------------------------------------------------------------
def avg_pool2(x):  # F.avg_pool2d(kernel_size=2, stride=2), NHWC
    N, H, W, C = x.shape
    return jnp.mean(x.reshape(N, H // 2, 2, W // 2, 2, C), axis=(2, 4))


# ----------------------------------------------------------------------------
# Parameters (deterministic kaiming-normal weights, zero head biases)
# ----------------------------------------------------------------------------
def _kaiming(key, shape, fan_in):
    std = (2.0 / float(fan_in)) ** 0.5
    return std * jax.random.normal(key, shape, jnp.float32)


def init_params(key, dims):
    layout_dim = dims[0]
    params = {"crn": []}
    for i in range(1, len(dims)):
        input_dim = 1 if i == 1 else dims[i - 1]
        output_dim = dims[i]
        cin = layout_dim + input_dim
        key, k0, k1 = jax.random.split(key, 3)
        # HWIO (dy, dx, cin, cout) -> flat (9*cin, cout): row = (dy*3+dx)*cin + c,
        # matching the in-kernel im2col ordering.  Conv biases omitted: the
        # affine-less InstanceNorm cancels them exactly.
        w0 = _kaiming(k0, (3, 3, cin, output_dim), cin * 9)
        w1 = _kaiming(k1, (3, 3, output_dim, output_dim), output_dim * 9)
        params["crn"].append({
            "w0": w0.reshape(9 * cin, output_dim).astype(jnp.bfloat16),
            "w1": w1.reshape(9 * output_dim, output_dim).astype(jnp.bfloat16),
        })

    d = dims[-1]
    key, k2, k3 = jax.random.split(key, 3)
    w_out0 = _kaiming(k2, (3, 3, d, d), d * 9)
    w_out1 = _kaiming(k3, (d, 3), d)                          # 1x1 conv (Cin, Cout)
    params["out_w0"] = w_out0.reshape(9 * d, d).astype(jnp.bfloat16)
    params["out_b0"] = jnp.zeros((1, d), jnp.float32)
    params["out_w1t"] = jnp.transpose(w_out1).astype(jnp.bfloat16)   # (3, d)
    params["out_b1"] = jnp.zeros((3, 1), jnp.float32)
    return params


# ----------------------------------------------------------------------------
# DecoderNetwork.forward (CRN path), fully fused into one pallas_call
# ----------------------------------------------------------------------------
def decoder_forward(layout_nchw, params, *, dims):
    N, C, H, W = layout_nchw.shape
    M = len(dims) - 1
    CL, D = dims[0], dims[-1]
    assert C == CL
    assert H % (1 << M) == 0 and W % (1 << M) == 0
    assert (H >> M) > 0 and (W >> M) > 0

    layout = jnp.transpose(layout_nchw, (0, 2, 3, 1))         # NCHW -> NHWC, f32
    # Layout pyramid, built progressively (exact for power-of-two factors):
    # pyr[k] has resolution (H/2^k, W/2^k); module i uses level (M-1-i).
    pyr = [layout]
    for _ in range(M - 1):
        pyr.append(avg_pool2(pyr[-1]))
    pyr_in = [pyr[M - 1 - i].astype(jnp.bfloat16) for i in range(M)]

    kern = functools.partial(_decoder_kernel, dims=tuple(dims), H=H, W=W)

    in_specs, args, scratch = [], [], []
    for i in range(M):
        Hi, Wi = H >> (M - 1 - i), W >> (M - 1 - i)
        in_specs.append(pl.BlockSpec((1, Hi, Wi, CL), lambda n: (n, 0, 0, 0)))
        args.append(pyr_in[i])
    for i in range(M):
        p = params["crn"][i]
        in_specs.append(pl.BlockSpec(p["w0"].shape, lambda n: (0, 0)))
        args.append(p["w0"])
        in_specs.append(pl.BlockSpec(p["w1"].shape, lambda n: (0, 0)))
        args.append(p["w1"])
    for name in ("out_w0", "out_b0", "out_w1t", "out_b1"):
        in_specs.append(pl.BlockSpec(params[name].shape, lambda n: (0, 0)))
        args.append(params[name])

    for i in range(M):
        Hi, Wi = H >> (M - 1 - i), W >> (M - 1 - i)
        cin = CL + (1 if i == 0 else dims[i])
        cout = dims[i + 1]
        scratch.append(pltpu.VMEM((Hi + 2, Wi + 2, cin), jnp.float32))   # conv0 pad
        scratch.append(pltpu.VMEM((Hi + 2, Wi + 2, cout), jnp.float32))  # conv1 pad
    scratch.append(pltpu.VMEM((H + 2, W + 2, D), jnp.float32))           # head pad

    out = pl.pallas_call(
        kern,
        out_shape=jax.ShapeDtypeStruct((N, 3, H * W), jnp.bfloat16),
        grid=(N,),
        in_specs=in_specs,
        out_specs=pl.BlockSpec((1, 3, H * W), lambda n: (n, 0, 0)),
        scratch_shapes=scratch,
        compiler_params=pltpu.CompilerParams(
            dimension_semantics=("parallel",),
            vmem_limit_bytes=_vmem_limit_bytes()),
    )(*args)
    return out.reshape(N, 3, H, W)                            # already NCHW


# ----------------------------------------------------------------------------
if __name__ == "__main__":
    key = jax.random.PRNGKey(0)
    dims = (8, 32, 16)          # layout_dim=8, two CRN decoder modules
    N, H, W = 2, 16, 16

    pkey, xkey = jax.random.split(key)
    params = init_params(pkey, dims)
    layout = jax.random.normal(xkey, (N, dims[0], H, W), jnp.float32)

    fwd = jax.jit(functools.partial(decoder_forward, dims=dims))
    out = fwd(layout, params)
    jax.block_until_ready(out)
    assert out.shape == (N, 3, H, W), out.shape
    assert bool(jnp.all(jnp.isfinite(out.astype(jnp.float32))))
    print("KERNEL_OK")
</pallas_src>

<mosaic_0001>
module attributes {stable_mosaic.version = 11 : i64} {
  func.func @_decoder_kernel(%arg0: i32, %arg1: memref<1x8x8x8xbf16, #tpu.memory_space<vmem>>, %arg2: memref<1x16x16x8xbf16, #tpu.memory_space<vmem>>, %arg3: memref<81x32xbf16, #tpu.memory_space<vmem>>, %arg4: memref<288x32xbf16, #tpu.memory_space<vmem>>, %arg5: memref<360x16xbf16, #tpu.memory_space<vmem>>, %arg6: memref<144x16xbf16, #tpu.memory_space<vmem>>, %arg7: memref<144x16xbf16, #tpu.memory_space<vmem>>, %arg8: memref<1x16xf32, #tpu.memory_space<vmem>>, %arg9: memref<3x16xbf16, #tpu.memory_space<vmem>>, %arg10: memref<3x1xf32, #tpu.memory_space<vmem>>, %arg11: memref<1x3x256xbf16, #tpu.memory_space<vmem>>, %arg12: memref<10x10x9xf32, #tpu.memory_space<vmem>>, %arg13: memref<10x10x32xf32, #tpu.memory_space<vmem>>, %arg14: memref<18x18x40xf32, #tpu.memory_space<vmem>>, %arg15: memref<18x18x16xf32, #tpu.memory_space<vmem>>, %arg16: memref<18x18x16xf32, #tpu.memory_space<vmem>>) attributes {dimension_semantics = [#tpu.dimension_semantics<parallel>], iteration_bounds = array<i64: 2>, scalar_prefetch = 0 : i64, scratch_operands = 5 : i64, tpu.core_type = #tpu.core_type<tc>, window_params = [{transform_indices = @transform_0, window_bounds = array<i64: 1, 8, 8, 8>}, {transform_indices = @transform_1, window_bounds = array<i64: 1, 16, 16, 8>}, {pipeline_mode = #tpu.pipeline_mode<synchronous>, transform_indices = @transform_2, window_bounds = array<i64: 81, 32>}, {pipeline_mode = #tpu.pipeline_mode<synchronous>, transform_indices = @transform_3, window_bounds = array<i64: 288, 32>}, {pipeline_mode = #tpu.pipeline_mode<synchronous>, transform_indices = @transform_4, window_bounds = array<i64: 360, 16>}, {pipeline_mode = #tpu.pipeline_mode<synchronous>, transform_indices = @transform_5, window_bounds = array<i64: 144, 16>}, {pipeline_mode = #tpu.pipeline_mode<synchronous>, transform_indices = @transform_6, window_bounds = array<i64: 144, 16>}, {pipeline_mode = #tpu.pipeline_mode<synchronous>, transform_indices = @transform_7, window_bounds = array<i64: 1, 16>}, {pipeline_mode = #tpu.pipeline_mode<synchronous>, transform_indices = @transform_8, window_bounds = array<i64: 3, 16>}, {pipeline_mode = #tpu.pipeline_mode<synchronous>, transform_indices = @transform_9, window_bounds = array<i64: 3, 1>}, {transform_indices = @transform_10, window_bounds = array<i64: 1, 3, 256>}]} {
    %cst = arith.constant 0.000000e+00 : f32
    %0 = vector.broadcast %cst : f32 to vector<1x10x9xf32>
    %c0 = arith.constant 0 : index
    %c0_0 = arith.constant 0 : index
    %c0_1 = arith.constant 0 : index
    %1 = vector.load %arg12[%c0, %c0_0, %c0_1] : memref<10x10x9xf32, #tpu.memory_space<vmem>>, vector<1x10x9xf32>
    tpu.vector_store %arg12[%c0, %c0_0, %c0_1], %0 {strides = array<i32>} : memref<10x10x9xf32, #tpu.memory_space<vmem>>, vector<1x10x9xf32>,
    %cst_2 = arith.constant 0.000000e+00 : f32
    %2 = vector.broadcast %cst_2 : f32 to vector<1x10x9xf32>
    %c9 = arith.constant 9 : index
    %c0_3 = arith.constant 0 : index
    %c0_4 = arith.constant 0 : index
    %3 = vector.load %arg12[%c9, %c0_3, %c0_4] : memref<10x10x9xf32, #tpu.memory_space<vmem>>, vector<1x10x9xf32>
    tpu.vector_store %arg12[%c9, %c0_3, %c0_4], %2 {strides = array<i32>} : memref<10x10x9xf32, #tpu.memory_space<vmem>>, vector<1x10x9xf32>,
    %cst_5 = arith.constant 0.000000e+00 : f32
    %4 = vector.broadcast %cst_5 : f32 to vector<10x1x9xf32>
    %c0_6 = arith.constant 0 : index
    %c0_7 = arith.constant 0 : index
    %c0_8 = arith.constant 0 : index
    %5 = vector.load %arg12[%c0_6, %c0_7, %c0_8] : memref<10x10x9xf32, #tpu.memory_space<vmem>>, vector<10x1x9xf32>
    tpu.vector_store %arg12[%c0_6, %c0_7, %c0_8], %4 {strides = array<i32>} : memref<10x10x9xf32, #tpu.memory_space<vmem>>, vector<10x1x9xf32>,
    %cst_9 = arith.constant 0.000000e+00 : f32
    %6 = vector.broadcast %cst_9 : f32 to vector<10x1x9xf32>
    %c0_10 = arith.constant 0 : index
    %c9_11 = arith.constant 9 : index
    %c0_12 = arith.constant 0 : index
    %7 = vector.load %arg12[%c0_10, %c9_11, %c0_12] : memref<10x10x9xf32, #tpu.memory_space<vmem>>, vector<10x1x9xf32>
    tpu.vector_store %arg12[%c0_10, %c9_11, %c0_12], %6 {strides = array<i32>} : memref<10x10x9xf32, #tpu.memory_space<vmem>>, vector<10x1x9xf32>,
    %c0_13 = arith.constant 0 : index
    %c0_14 = arith.constant 0 : index
    %c0_15 = arith.constant 0 : index
    %c0_16 = arith.constant 0 : index
    %8 = vector.load %arg1[%c0_13, %c0_14, %c0_15, %c0_16] : memref<1x8x8x8xbf16, #tpu.memory_space<vmem>>, vector<1x8x8x8xbf16>
    %9 = vector.shape_cast %8 : vector<1x8x8x8xbf16> to vector<8x8x8xbf16>
    %10 = arith.extf %9 : vector<8x8x8xbf16> to vector<8x8x8xf32>
    %c1 = arith.constant 1 : index
    %c1_17 = arith.constant 1 : index
    %c0_18 = arith.constant 0 : index
    %11 = vector.load %arg12[%c1, %c1_17, %c0_18] : memref<10x10x9xf32, #tpu.memory_space<vmem>>, vector<8x8x8xf32>
    tpu.vector_store %arg12[%c1, %c1_17, %c0_18], %10 {strides = array<i32>} : memref<10x10x9xf32, #tpu.memory_space<vmem>>, vector<8x8x8xf32>,
    %cst_19 = arith.constant 0.000000e+00 : f32
    %12 = vector.broadcast %cst_19 : f32 to vector<8x8x1xf32>
    %c1_20 = arith.constant 1 : index
    %c1_21 = arith.constant 1 : index
    %c8 = arith.constant 8 : index
    %13 = vector.load %arg12[%c1_20, %c1_21, %c8] : memref<10x10x9xf32, #tpu.memory_space<vmem>>, vector<8x8x1xf32>
    tpu.vector_store %arg12[%c1_20, %c1_21, %c8], %12 {strides = array<i32>} : memref<10x10x9xf32, #tpu.memory_space<vmem>>, vector<8x8x1xf32>,
    %c0_22 = arith.constant 0 : index
    %c0_23 = arith.constant 0 : index
    %c0_24 = arith.constant 0 : index
    %14 = vector.load %arg12[%c0_22, %c0_23, %c0_24] : memref<10x10x9xf32, #tpu.memory_space<vmem>>, vector<10x8x9xf32>
    %c0_25 = arith.constant 0 : index
    %c1_26 = arith.constant 1 : index
    %c0_27 = arith.constant 0 : index
    %15 = vector.load %arg12[%c0_25, %c1_26, %c0_27] : memref<10x10x9xf32, #tpu.memory_space<vmem>>, vector<10x8x9xf32>
    %c0_28 = arith.constant 0 : index
    %c2 = arith.constant 2 : index
    %c0_29 = arith.constant 0 : index
    %16 = vector.load %arg12[%c0_28, %c2, %c0_29] : memref<10x10x9xf32, #tpu.memory_space<vmem>>, vector<10x8x9xf32>
    %17 = tpu.concatenate %14, %15, %16 in 2 : vector<10x8x9xf32>, vector<10x8x9xf32>, vector<10x8x9xf32> -> vector<10x8x27xf32>
    %18 = vector.extract_strided_slice %17 {offsets = [0, 0, 0], sizes = [8, 8, 27], strides = [1, 1, 1]} : vector<10x8x27xf32> to vector<8x8x27xf32>
    %19 = vector.extract_strided_slice %17 {offsets = [1, 0, 0], sizes = [8, 8, 27], strides = [1, 1, 1]} : vector<10x8x27xf32> to vector<8x8x27xf32>
    %20 = vector.extract_strided_slice %17 {offsets = [2, 0, 0], sizes = [8, 8, 27], strides = [1, 1, 1]} : vector<10x8x27xf32> to vector<8x8x27xf32>
    %21 = tpu.concatenate %18, %19, %20 in 2 : vector<8x8x27xf32>, vector<8x8x27xf32>, vector<8x8x27xf32> -> vector<8x8x81xf32>
    %22 = vector.shape_cast %21 : vector<8x8x81xf32> to vector<64x81xf32>
    %23 = arith.truncf %22 : vector<64x81xf32> to vector<64x81xbf16>
    %c0_30 = arith.constant 0 : index
    %c0_31 = arith.constant 0 : index
    %24 = vector.load %arg3[%c0_30, %c0_31] : memref<81x32xbf16, #tpu.memory_space<vmem>>, vector<81x32xbf16>
    %cst_32 = arith.constant dense<0.000000e+00> : vector<64x32xf32>
    %25 = tpu.matmul %23, %24, %cst_32 {dimension_numbers = #tpu.dot_dimension_numbers<[1], [0], [0], [1], [0, 0, 1, 1], [], []>} : vector<64x81xbf16>, vector<81x32xbf16>, vector<64x32xf32> -> vector<64x32xf32>
    %cst_33 = arith.constant dense<0.000000e+00> : vector<32xf32>
    %26 = vector.multi_reduction <add>, %25, %cst_33 [0] : vector<64x32xf32> to vector<32xf32>
    %27 = vector.shape_cast %26 : vector<32xf32> to vector<1x32xf32>
    %cst_34 = arith.constant 1.562500e-02 : f32
    %28 = vector.broadcast %cst_34 : f32 to vector<1x32xf32>
    %29 = arith.mulf %27, %28 : vector<1x32xf32>
    %30 = arith.mulf %25, %25 : vector<64x32xf32>
    %cst_35 = arith.constant dense<0.000000e+00> : vector<32xf32>
    %31 = vector.multi_reduction <add>, %30, %cst_35 [0] : vector<64x32xf32> to vector<32xf32>
    %32 = vector.shape_cast %31 : vector<32xf32> to vector<1x32xf32>
    %cst_36 = arith.constant 1.562500e-02 : f32
    %33 = vector.broadcast %cst_36 : f32 to vector<1x32xf32>
    %34 = arith.mulf %32, %33 : vector<1x32xf32>
    %35 = arith.mulf %29, %29 : vector<1x32xf32>
    %36 = arith.subf %34, %35 : vector<1x32xf32>
    %cst_37 = arith.constant 0.000000e+00 : f32
    %37 = vector.broadcast %cst_37 : f32 to vector<1x32xf32>
    %38 = arith.maximumf %36, %37 : vector<1x32xf32>
    %39 = vector.broadcast %29 : vector<1x32xf32> to vector<64x32xf32>
    %40 = arith.subf %25, %39 : vector<64x32xf32>
    %cst_38 = arith.constant 9.99999974E-6 : f32
    %41 = vector.broadcast %cst_38 : f32 to vector<1x32xf32>
    %42 = arith.addf %38, %41 : vector<1x32xf32>
    %43 = math.rsqrt %42 : vector<1x32xf32>
    %44 = vector.broadcast %43 : vector<1x32xf32> to vector<64x32xf32>
    %45 = arith.mulf %40, %44 : vector<64x32xf32>
    %cst_39 = arith.constant 0.000000e+00 : f32
    %46 = vector.broadcast %cst_39 : f32 to vector<64x32xf32>
    %47 = arith.cmpf ogt, %45, %46 : vector<64x32xf32>
    %cst_40 = arith.constant 0.00999999977 : f32
    %48 = vector.broadcast %cst_40 : f32 to vector<64x32xf32>
    %49 = arith.mulf %48, %45 : vector<64x32xf32>
    %50 = arith.select %47, %45, %49 : vector<64x32xi1>, vector<64x32xf32>
    %cst_41 = arith.constant 0.000000e+00 : f32
    %51 = vector.broadcast %cst_41 : f32 to vector<1x10x32xf32>
    %c0_42 = arith.constant 0 : index
    %c0_43 = arith.constant 0 : index
    %c0_44 = arith.constant 0 : index
    %52 = vector.load %arg13[%c0_42, %c0_43, %c0_44] : memref<10x10x32xf32, #tpu.memory_space<vmem>>, vector<1x10x32xf32>
    tpu.vector_store %arg13[%c0_42, %c0_43, %c0_44], %51 {strides = array<i32>} : memref<10x10x32xf32, #tpu.memory_space<vmem>>, vector<1x10x32xf32>,
    %cst_45 = arith.constant 0.000000e+00 : f32
    %53 = vector.broadcast %cst_45 : f32 to vector<1x10x32xf32>
    %c9_46 = arith.constant 9 : index
    %c0_47 = arith.constant 0 : index
    %c0_48 = arith.constant 0 : index
    %54 = vector.load %arg13[%c9_46, %c0_47, %c0_48] : memref<10x10x32xf32, #tpu.memory_space<vmem>>, vector<1x10x32xf32>
    tpu.vector_store %arg13[%c9_46, %c0_47, %c0_48], %53 {strides = array<i32>} : memref<10x10x32xf32, #tpu.memory_space<vmem>>, vector<1x10x32xf32>,
    %cst_49 = arith.constant 0.000000e+00 : f32
    %55 = vector.broadcast %cst_49 : f32 to vector<10x1x32xf32>
    %c0_50 = arith.constant 0 : index
    %c0_51 = arith.constant 0 : index
    %c0_52 = arith.constant 0 : index
    %56 = vector.load %arg13[%c0_50, %c0_51, %c0_52] : memref<10x10x32xf32, #tpu.memory_space<vmem>>, vector<10x1x32xf32>
    tpu.vector_store %arg13[%c0_50, %c0_51, %c0_52], %55 {strides = array<i32>} : memref<10x10x32xf32, #tpu.memory_space<vmem>>, vector<10x1x32xf32>,
    %cst_53 = arith.constant 0.000000e+00 : f32
    %57 = vector.broadcast %cst_53 : f32 to vector<10x1x32xf32>
    %c0_54 = arith.constant 0 : index
    %c9_55 = arith.constant 9 : index
    %c0_56 = arith.constant 0 : index
    %58 = vector.load %arg13[%c0_54, %c9_55, %c0_56] : memref<10x10x32xf32, #tpu.memory_space<vmem>>, vector<10x1x32xf32>
    tpu.vector_store %arg13[%c0_54, %c9_55, %c0_56], %57 {strides = array<i32>} : memref<10x10x32xf32, #tpu.memory_space<vmem>>, vector<10x1x32xf32>,
    %59 = vector.shape_cast %50 : vector<64x32xf32> to vector<8x8x32xf32>
    %c1_57 = arith.constant 1 : index
    %c1_58 = arith.constant 1 : index
    %c0_59 = arith.constant 0 : index
    %60 = vector.load %arg13[%c1_57, %c1_58, %c0_59] : memref<10x10x32xf32, #tpu.memory_space<vmem>>, vector<8x8x32xf32>
    tpu.vector_store %arg13[%c1_57, %c1_58, %c0_59], %59 {strides = array<i32>} : memref<10x10x32xf32, #tpu.memory_space<vmem>>, vector<8x8x32xf32>,
    %c0_60 = arith.constant 0 : index
    %c0_61 = arith.constant 0 : index
    %c0_62 = arith.constant 0 : index
    %61 = vector.load %arg13[%c0_60, %c0_61, %c0_62] : memref<10x10x32xf32, #tpu.memory_space<vmem>>, vector<10x8x32xf32>
    %c0_63 = arith.constant 0 : index
    %c1_64 = arith.constant 1 : index
    %c0_65 = arith.constant 0 : index
    %62 = vector.load %arg13[%c0_63, %c1_64, %c0_65] : memref<10x10x32xf32, #tpu.memory_space<vmem>>, vector<10x8x32xf32>
    %c0_66 = arith.constant 0 : index
    %c2_67 = arith.constant 2 : index
    %c0_68 = arith.constant 0 : index
    %63 = vector.load %arg13[%c0_66, %c2_67, %c0_68] : memref<10x10x32xf32, #tpu.memory_space<vmem>>, vector<10x8x32xf32>
    %64 = tpu.concatenate %61, %62, %63 in 2 : vector<10x8x32xf32>, vector<10x8x32xf32>, vector<10x8x32xf32> -> vector<10x8x96xf32>
    %65 = vector.extract_strided_slice %64 {offsets = [0, 0, 0], sizes = [8, 8, 96], strides = [1, 1, 1]} : vector<10x8x96xf32> to vector<8x8x96xf32>
    %66 = vector.extract_strided_slice %64 {offsets = [1, 0, 0], sizes = [8, 8, 96], strides = [1, 1, 1]} : vector<10x8x96xf32> to vector<8x8x96xf32>
    %67 = vector.extract_strided_slice %64 {offsets = [2, 0, 0], sizes = [8, 8, 96], strides = [1, 1, 1]} : vector<10x8x96xf32> to vector<8x8x96xf32>
    %68 = tpu.concatenate %65, %66, %67 in 2 : vector<8x8x96xf32>, vector<8x8x96xf32>, vector<8x8x96xf32> -> vector<8x8x288xf32>
    %69 = vector.shape_cast %68 : vector<8x8x288xf32> to vector<64x288xf32>
    %70 = arith.truncf %69 : vector<64x288xf32> to vector<64x288xbf16>
    %c0_69 = arith.constant 0 : index
    %c0_70 = arith.constant 0 : index
    %71 = vector.load %arg4[%c0_69, %c0_70] : memref<288x32xbf16, #tpu.memory_space<vmem>>, vector<288x32xbf16>
    %cst_71 = arith.constant dense<0.000000e+00> : vector<64x32xf32>
    %72 = tpu.matmul %70, %71, %cst_71 {dimension_numbers = #tpu.dot_dimension_numbers<[1], [0], [0], [1], [0, 0, 1, 1], [], []>} : vector<64x288xbf16>, vector<288x32xbf16>, vector<64x32xf32> -> vector<64x32xf32>
    %cst_72 = arith.constant dense<0.000000e+00> : vector<32xf32>
    %73 = vector.multi_reduction <add>, %72, %cst_72 [0] : vector<64x32xf32> to vector<32xf32>
    %74 = vector.shape_cast %73 : vector<32xf32> to vector<1x32xf32>
    %cst_73 = arith.constant 1.562500e-02 : f32
    %75 = vector.broadcast %cst_73 : f32 to vector<1x32xf32>
    %76 = arith.mulf %74, %75 : vector<1x32xf32>
    %77 = arith.mulf %72, %72 : vector<64x32xf32>
    %cst_74 = arith.constant dense<0.000000e+00> : vector<32xf32>
    %78 = vector.multi_reduction <add>, %77, %cst_74 [0] : vector<64x32xf32> to vector<32xf32>
    %79 = vector.shape_cast %78 : vector<32xf32> to vector<1x32xf32>
    %cst_75 = arith.constant 1.562500e-02 : f32
    %80 = vector.broadcast %cst_75 : f32 to vector<1x32xf32>
    %81 = arith.mulf %79, %80 : vector<1x32xf32>
    %82 = arith.mulf %76, %76 : vector<1x32xf32>
    %83 = arith.subf %81, %82 : vector<1x32xf32>
    %cst_76 = arith.constant 0.000000e+00 : f32
    %84 = vector.broadcast %cst_76 : f32 to vector<1x32xf32>
    %85 = arith.maximumf %83, %84 : vector<1x32xf32>
    %86 = vector.broadcast %76 : vector<1x32xf32> to vector<64x32xf32>
    %87 = arith.subf %72, %86 : vector<64x32xf32>
    %cst_77 = arith.constant 9.99999974E-6 : f32
    %88 = vector.broadcast %cst_77 : f32 to vector<1x32xf32>
    %89 = arith.addf %85, %88 : vector<1x32xf32>
    %90 = math.rsqrt %89 : vector<1x32xf32>
    %91 = vector.broadcast %90 : vector<1x32xf32> to vector<64x32xf32>
    %92 = arith.mulf %87, %91 : vector<64x32xf32>
    %cst_78 = arith.constant 0.000000e+00 : f32
    %93 = vector.broadcast %cst_78 : f32 to vector<64x32xf32>
    %94 = arith.cmpf ogt, %92, %93 : vector<64x32xf32>
    %cst_79 = arith.constant 0.00999999977 : f32
    %95 = vector.broadcast %cst_79 : f32 to vector<64x32xf32>
    %96 = arith.mulf %95, %92 : vector<64x32xf32>
    %97 = arith.select %94, %92, %96 : vector<64x32xi1>, vector<64x32xf32>
    %cst_80 = arith.constant 0.000000e+00 : f32
    %98 = vector.broadcast %cst_80 : f32 to vector<1x18x40xf32>
    %c0_81 = arith.constant 0 : index
    %c0_82 = arith.constant 0 : index
    %c0_83 = arith.constant 0 : index
    %99 = vector.load %arg14[%c0_81, %c0_82, %c0_83] : memref<18x18x40xf32, #tpu.memory_space<vmem>>, vector<1x18x40xf32>
    tpu.vector_store %arg14[%c0_81, %c0_82, %c0_83], %98 {strides = array<i32>} : memref<18x18x40xf32, #tpu.memory_space<vmem>>, vector<1x18x40xf32>,
    %cst_84 = arith.constant 0.000000e+00 : f32
    %100 = vector.broadcast %cst_84 : f32 to vector<1x18x40xf32>
    %c17 = arith.constant 17 : index
    %c0_85 = arith.constant 0 : index
    %c0_86 = arith.constant 0 : index
    %101 = vector.load %arg14[%c17, %c0_85, %c0_86] : memref<18x18x40xf32, #tpu.memory_space<vmem>>, vector<1x18x40xf32>
    tpu.vector_store %arg14[%c17, %c0_85, %c0_86], %100 {strides = array<i32>} : memref<18x18x40xf32, #tpu.memory_space<vmem>>, vector<1x18x40xf32>,
    %cst_87 = arith.constant 0.000000e+00 : f32
    %102 = vector.broadcast %cst_87 : f32 to vector<18x1x40xf32>
    %c0_88 = arith.constant 0 : index
    %c0_89 = arith.constant 0 : index
    %c0_90 = arith.constant 0 : index
    %103 = vector.load %arg14[%c0_88, %c0_89, %c0_90] : memref<18x18x40xf32, #tpu.memory_space<vmem>>, vector<18x1x40xf32>
    tpu.vector_store %arg14[%c0_88, %c0_89, %c0_90], %102 {strides = array<i32>} : memref<18x18x40xf32, #tpu.memory_space<vmem>>, vector<18x1x40xf32>,
    %cst_91 = arith.constant 0.000000e+00 : f32
    %104 = vector.broadcast %cst_91 : f32 to vector<18x1x40xf32>
    %c0_92 = arith.constant 0 : index
    %c17_93 = arith.constant 17 : index
    %c0_94 = arith.constant 0 : index
    %105 = vector.load %arg14[%c0_92, %c17_93, %c0_94] : memref<18x18x40xf32, #tpu.memory_space<vmem>>, vector<18x1x40xf32>
    tpu.vector_store %arg14[%c0_92, %c17_93, %c0_94], %104 {strides = array<i32>} : memref<18x18x40xf32, #tpu.memory_space<vmem>>, vector<18x1x40xf32>,
    %c0_95 = arith.constant 0 : index
    %c0_96 = arith.constant 0 : index
    %c0_97 = arith.constant 0 : index
    %c0_98 = arith.constant 0 : index
    %106 = vector.load %arg2[%c0_95, %c0_96, %c0_97, %c0_98] : memref<1x16x16x8xbf16, #tpu.memory_space<vmem>>, vector<1x16x16x8xbf16>
    %107 = vector.shape_cast %106 : vector<1x16x16x8xbf16> to vector<16x16x8xbf16>
    %108 = arith.extf %107 : vector<16x16x8xbf16> to vector<16x16x8xf32>
    %c1_99 = arith.constant 1 : index
    %c1_100 = arith.constant 1 : index
    %c0_101 = arith.constant 0 : index
    %109 = vector.load %arg14[%c1_99, %c1_100, %c0_101] : memref<18x18x40xf32, #tpu.memory_space<vmem>>, vector<16x16x8xf32>
    tpu.vector_store %arg14[%c1_99, %c1_100, %c0_101], %108 {strides = array<i32>} : memref<18x18x40xf32, #tpu.memory_space<vmem>>, vector<16x16x8xf32>,
    %110 = vector.shape_cast %97 : vector<64x32xf32> to vector<8x8x32xf32>
    %111 = vector.shape_cast %110 : vector<8x8x32xf32> to vector<8x1x8x32xf32>
    %112 = vector.shape_cast %111 : vector<8x1x8x32xf32> to vector<8x1x8x32xf32>
    %113 = vector.broadcast %112 : vector<8x1x8x32xf32> to vector<8x2x8x32xf32>
    %114 = vector.shape_cast %113 : vector<8x2x8x32xf32> to vector<16x8x32xf32>
    %115 = vector.extract_strided_slice %114 {offsets = [0, 0, 0], sizes = [16, 1, 32], strides = [1, 1, 1]} : vector<16x8x32xf32> to vector<16x1x32xf32>
    %116 = vector.shape_cast %115 : vector<16x1x32xf32> to vector<16x1x32xf32>
    %117 = vector.broadcast %116 : vector<16x1x32xf32> to vector<16x2x32xf32>
    %c1_102 = arith.constant 1 : index
    %c1_103 = arith.constant 1 : index
    %c8_104 = arith.constant 8 : index
    %118 = vector.load %arg14[%c1_102, %c1_103, %c8_104] : memref<18x18x40xf32, #tpu.memory_space<vmem>>, vector<16x2x32xf32>
    tpu.vector_store %arg14[%c1_102, %c1_103, %c8_104], %117 {strides = array<i32>} : memref<18x18x40xf32, #tpu.memory_space<vmem>>, vector<16x2x32xf32>,
    %119 = vector.extract_strided_slice %114 {offsets = [0, 1, 0], sizes = [16, 1, 32], strides = [1, 1, 1]} : vector<16x8x32xf32> to vector<16x1x32xf32>
    %120 = vector.shape_cast %119 : vector<16x1x32xf32> to vector<16x1x32xf32>
    %121 = vector.broadcast %120 : vector<16x1x32xf32> to vector<16x2x32xf32>
    %c1_105 = arith.constant 1 : index
    %c3 = arith.constant 3 : index
    %c8_106 = arith.constant 8 : index
    %122 = vector.load %arg14[%c1_105, %c3, %c8_106] : memref<18x18x40xf32, #tpu.memory_space<vmem>>, vector<16x2x32xf32>
    tpu.vector_store %arg14[%c1_105, %c3, %c8_106], %121 {strides = array<i32>} : memref<18x18x40xf32, #tpu.memory_space<vmem>>, vector<16x2x32xf32>,
    %123 = vector.extract_strided_slice %114 {offsets = [0, 2, 0], sizes = [16, 1, 32], strides = [1, 1, 1]} : vector<16x8x32xf32> to vector<16x1x32xf32>
    %124 = vector.shape_cast %123 : vector<16x1x32xf32> to vector<16x1x32xf32>
    %125 = vector.broadcast %124 : vector<16x1x32xf32> to vector<16x2x32xf32>
    %c1_107 = arith.constant 1 : index
    %c5 = arith.constant 5 : index
    %c8_108 = arith.constant 8 : index
    %126 = vector.load %arg14[%c1_107, %c5, %c8_108] : memref<18x18x40xf32, #tpu.memory_space<vmem>>, vector<16x2x32xf32>
    tpu.vector_store %arg14[%c1_107, %c5, %c8_108], %125 {strides = array<i32>} : memref<18x18x40xf32, #tpu.memory_space<vmem>>, vector<16x2x32xf32>,
    %127 = vector.extract_strided_slice %114 {offsets = [0, 3, 0], sizes = [16, 1, 32], strides = [1, 1, 1]} : vector<16x8x32xf32> to vector<16x1x32xf32>
    %128 = vector.shape_cast %127 : vector<16x1x32xf32> to vector<16x1x32xf32>
    %129 = vector.broadcast %128 : vector<16x1x32xf32> to vector<16x2x32xf32>
    %c1_109 = arith.constant 1 : index
    %c7 = arith.constant 7 : index
    %c8_110 = arith.constant 8 : index
    %130 = vector.load %arg14[%c1_109, %c7, %c8_110] : memref<18x18x40xf32, #tpu.memory_space<vmem>>, vector<16x2x32xf32>
    tpu.vector_store %arg14[%c1_109, %c7, %c8_110], %129 {strides = array<i32>} : memref<18x18x40xf32, #tpu.memory_space<vmem>>, vector<16x2x32xf32>,
    %131 = vector.extract_strided_slice %114 {offsets = [0, 4, 0], sizes = [16, 1, 32], strides = [1, 1, 1]} : vector<16x8x32xf32> to vector<16x1x32xf32>
    %132 = vector.shape_cast %131 : vector<16x1x32xf32> to vector<16x1x32xf32>
    %133 = vector.broadcast %132 : vector<16x1x32xf32> to vector<16x2x32xf32>
    %c1_111 = arith.constant 1 : index
    %c9_112 = arith.constant 9 : index
    %c8_113 = arith.constant 8 : index
    %134 = vector.load %arg14[%c1_111, %c9_112, %c8_113] : memref<18x18x40xf32, #tpu.memory_space<vmem>>, vector<16x2x32xf32>
    tpu.vector_store %arg14[%c1_111, %c9_112, %c8_113], %133 {strides = array<i32>} : memref<18x18x40xf32, #tpu.memory_space<vmem>>, vector<16x2x32xf32>,
    %135 = vector.extract_strided_slice %114 {offsets = [0, 5, 0], sizes = [16, 1, 32], strides = [1, 1, 1]} : vector<16x8x32xf32> to vector<16x1x32xf32>
    %136 = vector.shape_cast %135 : vector<16x1x32xf32> to vector<16x1x32xf32>
    %137 = vector.broadcast %136 : vector<16x1x32xf32> to vector<16x2x32xf32>
    %c1_114 = arith.constant 1 : index
    %c11 = arith.constant 11 : index
    %c8_115 = arith.constant 8 : index
    %138 = vector.load %arg14[%c1_114, %c11, %c8_115] : memref<18x18x40xf32, #tpu.memory_space<vmem>>, vector<16x2x32xf32>
    tpu.vector_store %arg14[%c1_114, %c11, %c8_115], %137 {strides = array<i32>} : memref<18x18x40xf32, #tpu.memory_space<vmem>>, vector<16x2x32xf32>,
    %139 = vector.extract_strided_slice %114 {offsets = [0, 6, 0], sizes = [16, 1, 32], strides = [1, 1, 1]} : vector<16x8x32xf32> to vector<16x1x32xf32>
    %140 = vector.shape_cast %139 : vector<16x1x32xf32> to vector<16x1x32xf32>
    %141 = vector.broadcast %140 : vector<16x1x32xf32> to vector<16x2x32xf32>
    %c1_116 = arith.constant 1 : index
    %c13 = arith.constant 13 : index
    %c8_117 = arith.constant 8 : index
    %142 = vector.load %arg14[%c1_116, %c13, %c8_117] : memref<18x18x40xf32, #tpu.memory_space<vmem>>, vector<16x2x32xf32>
    tpu.vector_store %arg14[%c1_116, %c13, %c8_117], %141 {strides = array<i32>} : memref<18x18x40xf32, #tpu.memory_space<vmem>>, vector<16x2x32xf32>,
    %143 = vector.extract_strided_slice %114 {offsets = [0, 7, 0], sizes = [16, 1, 32], strides = [1, 1, 1]} : vector<16x8x32xf32> to vector<16x1x32xf32>
    %144 = vector.shape_cast %143 : vector<16x1x32xf32> to vector<16x1x32xf32>
    %145 = vector.broadcast %144 : vector<16x1x32xf32> to vector<16x2x32xf32>
    %c1_118 = arith.constant 1 : index
    %c15 = arith.constant 15 : index
    %c8_119 = arith.constant 8 : index
    %146 = vector.load %arg14[%c1_118, %c15, %c8_119] : memref<18x18x40xf32, #tpu.memory_space<vmem>>, vector<16x2x32xf32>
    tpu.vector_store %arg14[%c1_118, %c15, %c8_119], %145 {strides = array<i32>} : memref<18x18x40xf32, #tpu.memory_space<vmem>>, vector<16x2x32xf32>,
    %c0_120 = arith.constant 0 : index
    %c0_121 = arith.constant 0 : index
    %c0_122 = arith.constant 0 : index
    %147 = vector.load %arg14[%c0_120, %c0_121, %c0_122] : memref<18x18x40xf32, #tpu.memory_space<vmem>>, vector<18x16x40xf32>
    %c0_123 = arith.constant 0 : index
    %c1_124 = arith.constant 1 : index
    %c0_125 = arith.constant 0 : index
    %148 = vector.load %arg14[%c0_123, %c1_124, %c0_125] : memref<18x18x40xf32, #tpu.memory_space<vmem>>, vector<18x16x40xf32>
    %c0_126 = arith.constant 0 : index
    %c2_127 = arith.constant 2 : index
    %c0_128 = arith.constant 0 : index
    %149 = vector.load %arg14[%c0_126, %c2_127, %c0_128] : memref<18x18x40xf32, #tpu.memory_space<vmem>>, vector<18x16x40xf32>
    %150 = tpu.concatenate %147, %148, %149 in 2 : vector<18x16x40xf32>, vector<18x16x40xf32>, vector<18x16x40xf32> -> vector<18x16x120xf32>
    %151 = vector.extract_strided_slice %150 {offsets = [0, 0, 0], sizes = [16, 16, 120], strides = [1, 1, 1]} : vector<18x16x120xf32> to vector<16x16x120xf32>
    %152 = vector.extract_strided_slice %150 {offsets = [1, 0, 0], sizes = [16, 16, 120], strides = [1, 1, 1]} : vector<18x16x120xf32> to vector<16x16x120xf32>
    %153 = vector.extract_strided_slice %150 {offsets = [2, 0, 0], sizes = [16, 16, 120], strides = [1, 1, 1]} : vector<18x16x120xf32> to vector<16x16x120xf32>
    %154 = tpu.concatenate %151, %152, %153 in 2 : vector<16x16x120xf32>, vector<16x16x120xf32>, vector<16x16x120xf32> -> vector<16x16x360xf32>
    %155 = vector.shape_cast %154 : vector<16x16x360xf32> to vector<256x360xf32>
    %156 = arith.truncf %155 : vector<256x360xf32> to vector<256x360xbf16>
    %c0_129 = arith.constant 0 : index
    %c0_130 = arith.constant 0 : index
    %157 = vector.load %arg5[%c0_129, %c0_130] : memref<360x16xbf16, #tpu.memory_space<vmem>>, vector<360x16xbf16>
    %cst_131 = arith.constant dense<0.000000e+00> : vector<256x16xf32>
    %158 = tpu.matmul %156, %157, %cst_131 {dimension_numbers = #tpu.dot_dimension_numbers<[1], [0], [0], [1], [0, 0, 1, 1], [], []>} : vector<256x360xbf16>, vector<360x16xbf16>, vector<256x16xf32> -> vector<256x16xf32>
    %cst_132 = arith.constant dense<0.000000e+00> : vector<16xf32>
    %159 = vector.multi_reduction <add>, %158, %cst_132 [0] : vector<256x16xf32> to vector<16xf32>
    %160 = vector.shape_cast %159 : vector<16xf32> to vector<1x16xf32>
    %cst_133 = arith.constant 3.906250e-03 : f32
    %161 = vector.broadcast %cst_133 : f32 to vector<1x16xf32>
    %162 = arith.mulf %160, %161 : vector<1x16xf32>
    %163 = arith.mulf %158, %158 : vector<256x16xf32>
    %cst_134 = arith.constant dense<0.000000e+00> : vector<16xf32>
    %164 = vector.multi_reduction <add>, %163, %cst_134 [0] : vector<256x16xf32> to vector<16xf32>
    %165 = vector.shape_cast %164 : vector<16xf32> to vector<1x16xf32>
    %cst_135 = arith.constant 3.906250e-03 : f32
    %166 = vector.broadcast %cst_135 : f32 to vector<1x16xf32>
    %167 = arith.mulf %165, %166 : vector<1x16xf32>
    %168 = arith.mulf %162, %162 : vector<1x16xf32>
    %169 = arith.subf %167, %168 : vector<1x16xf32>
    %cst_136 = arith.constant 0.000000e+00 : f32
    %170 = vector.broadcast %cst_136 : f32 to vector<1x16xf32>
    %171 = arith.maximumf %169, %170 : vector<1x16xf32>
    %172 = vector.broadcast %162 : vector<1x16xf32> to vector<256x16xf32>
    %173 = arith.subf %158, %172 : vector<256x16xf32>
    %cst_137 = arith.constant 9.99999974E-6 : f32
    %174 = vector.broadcast %cst_137 : f32 to vector<1x16xf32>
    %175 = arith.addf %171, %174 : vector<1x16xf32>
    %176 = math.rsqrt %175 : vector<1x16xf32>
    %177 = vector.broadcast %176 : vector<1x16xf32> to vector<256x16xf32>
    %178 = arith.mulf %173, %177 : vector<256x16xf32>
    %cst_138 = arith.constant 0.000000e+00 : f32
    %179 = vector.broadcast %cst_138 : f32 to vector<256x16xf32>
    %180 = arith.cmpf ogt, %178, %179 : vector<256x16xf32>
    %cst_139 = arith.constant 0.00999999977 : f32
    %181 = vector.broadcast %cst_139 : f32 to vector<256x16xf32>
    %182 = arith.mulf %181, %178 : vector<256x16xf32>
    %183 = arith.select %180, %178, %182 : vector<256x16xi1>, vector<256x16xf32>
    %cst_140 = arith.constant 0.000000e+00 : f32
    %184 = vector.broadcast %cst_140 : f32 to vector<1x18x16xf32>
    %c0_141 = arith.constant 0 : index
    %c0_142 = arith.constant 0 : index
    %c0_143 = arith.constant 0 : index
    %185 = vector.load %arg15[%c0_141, %c0_142, %c0_143] : memref<18x18x16xf32, #tpu.memory_space<vmem>>, vector<1x18x16xf32>
    tpu.vector_store %arg15[%c0_141, %c0_142, %c0_143], %184 {strides = array<i32>} : memref<18x18x16xf32, #tpu.memory_space<vmem>>, vector<1x18x16xf32>,
    %cst_144 = arith.constant 0.000000e+00 : f32
    %186 = vector.broadcast %cst_144 : f32 to vector<1x18x16xf32>
    %c17_145 = arith.constant 17 : index
    %c0_146 = arith.constant 0 : index
    %c0_147 = arith.constant 0 : index
    %187 = vector.load %arg15[%c17_145, %c0_146, %c0_147] : memref<18x18x16xf32, #tpu.memory_space<vmem>>, vector<1x18x16xf32>
    tpu.vector_store %arg15[%c17_145, %c0_146, %c0_147], %186 {strides = array<i32>} : memref<18x18x16xf32, #tpu.memory_space<vmem>>, vector<1x18x16xf32>,
    %cst_148 = arith.constant 0.000000e+00 : f32
    %188 = vector.broadcast %cst_148 : f32 to vector<18x1x16xf32>
    %c0_149 = arith.constant 0 : index
    %c0_150 = arith.constant 0 : index
    %c0_151 = arith.constant 0 : index
    %189 = vector.load %arg15[%c0_149, %c0_150, %c0_151] : memref<18x18x16xf32, #tpu.memory_space<vmem>>, vector<18x1x16xf32>
    tpu.vector_store %arg15[%c0_149, %c0_150, %c0_151], %188 {strides = array<i32>} : memref<18x18x16xf32, #tpu.memory_space<vmem>>, vector<18x1x16xf32>,
    %cst_152 = arith.constant 0.000000e+00 : f32
    %190 = vector.broadcast %cst_152 : f32 to vector<18x1x16xf32>
    %c0_153 = arith.constant 0 : index
    %c17_154 = arith.constant 17 : index
    %c0_155 = arith.constant 0 : index
    %191 = vector.load %arg15[%c0_153, %c17_154, %c0_155] : memref<18x18x16xf32, #tpu.memory_space<vmem>>, vector<18x1x16xf32>
    tpu.vector_store %arg15[%c0_153, %c17_154, %c0_155], %190 {strides = array<i32>} : memref<18x18x16xf32, #tpu.memory_space<vmem>>, vector<18x1x16xf32>,
    %192 = vector.shape_cast %183 : vector<256x16xf32> to vector<16x16x16xf32>
    %c1_156 = arith.constant 1 : index
    %c1_157 = arith.constant 1 : index
    %c0_158 = arith.constant 0 : index
    %193 = vector.load %arg15[%c1_156, %c1_157, %c0_158] : memref<18x18x16xf32, #tpu.memory_space<vmem>>, vector<16x16x16xf32>
    tpu.vector_store %arg15[%c1_156, %c1_157, %c0_158], %192 {strides = array<i32>} : memref<18x18x16xf32, #tpu.memory_space<vmem>>, vector<16x16x16xf32>,
    %c0_159 = arith.constant 0 : index
    %c0_160 = arith.constant 0 : index
    %c0_161 = arith.constant 0 : index
    %194 = vector.load %arg15[%c0_159, %c0_160, %c0_161] : memref<18x18x16xf32, #tpu.memory_space<vmem>>, vector<18x16x16xf32>
    %c0_162 = arith.constant 0 : index
    %c1_163 = arith.constant 1 : index
    %c0_164 = arith.constant 0 : index
    %195 = vector.load %arg15[%c0_162, %c1_163, %c0_164] : memref<18x18x16xf32, #tpu.memory_space<vmem>>, vector<18x16x16xf32>
    %c0_165 = arith.constant 0 : index
    %c2_166 = arith.constant 2 : index
    %c0_167 = arith.constant 0 : index
    %196 = vector.load %arg15[%c0_165, %c2_166, %c0_167] : memref<18x18x16xf32, #tpu.memory_space<vmem>>, vector<18x16x16xf32>
    %197 = tpu.concatenate %194, %195, %196 in 2 : vector<18x16x16xf32>, vector<18x16x16xf32>, vector<18x16x16xf32> -> vector<18x16x48xf32>
    %198 = vector.extract_strided_slice %197 {offsets = [0, 0, 0], sizes = [16, 16, 48], strides = [1, 1, 1]} : vector<18x16x48xf32> to vector<16x16x48xf32>
    %199 = vector.extract_strided_slice %197 {offsets = [1, 0, 0], sizes = [16, 16, 48], strides = [1, 1, 1]} : vector<18x16x48xf32> to vector<16x16x48xf32>
    %200 = vector.extract_strided_slice %197 {offsets = [2, 0, 0], sizes = [16, 16, 48], strides = [1, 1, 1]} : vector<18x16x48xf32> to vector<16x16x48xf32>
    %201 = tpu.concatenate %198, %199, %200 in 2 : vector<16x16x48xf32>, vector<16x16x48xf32>, vector<16x16x48xf32> -> vector<16x16x144xf32>
    %202 = vector.shape_cast %201 : vector<16x16x144xf32> to vector<256x144xf32>
    %203 = arith.truncf %202 : vector<256x144xf32> to vector<256x144xbf16>
    %c0_168 = arith.constant 0 : index
    %c0_169 = arith.constant 0 : index
    %204 = vector.load %arg6[%c0_168, %c0_169] : memref<144x16xbf16, #tpu.memory_space<vmem>>, vector<144x16xbf16>
    %cst_170 = arith.constant dense<0.000000e+00> : vector<256x16xf32>
    %205 = tpu.matmul %203, %204, %cst_170 {dimension_numbers = #tpu.dot_dimension_numbers<[1], [0], [0], [1], [0, 0, 1, 1], [], []>} : vector<256x144xbf16>, vector<144x16xbf16>, vector<256x16xf32> -> vector<256x16xf32>
    %cst_171 = arith.constant dense<0.000000e+00> : vector<16xf32>
    %206 = vector.multi_reduction <add>, %205, %cst_171 [0] : vector<256x16xf32> to vector<16xf32>
    %207 = vector.shape_cast %206 : vector<16xf32> to vector<1x16xf32>
    %cst_172 = arith.constant 3.906250e-03 : f32
    %208 = vector.broadcast %cst_172 : f32 to vector<1x16xf32>
    %209 = arith.mulf %207, %208 : vector<1x16xf32>
    %210 = arith.mulf %205, %205 : vector<256x16xf32>
    %cst_173 = arith.constant dense<0.000000e+00> : vector<16xf32>
    %211 = vector.multi_reduction <add>, %210, %cst_173 [0] : vector<256x16xf32> to vector<16xf32>
    %212 = vector.shape_cast %211 : vector<16xf32> to vector<1x16xf32>
    %cst_174 = arith.constant 3.906250e-03 : f32
    %213 = vector.broadcast %cst_174 : f32 to vector<1x16xf32>
    %214 = arith.mulf %212, %213 : vector<1x16xf32>
    %215 = arith.mulf %209, %209 : vector<1x16xf32>
    %216 = arith.subf %214, %215 : vector<1x16xf32>
    %cst_175 = arith.constant 0.000000e+00 : f32
    %217 = vector.broadcast %cst_175 : f32 to vector<1x16xf32>
    %218 = arith.maximumf %216, %217 : vector<1x16xf32>
    %219 = vector.broadcast %209 : vector<1x16xf32> to vector<256x16xf32>
    %220 = arith.subf %205, %219 : vector<256x16xf32>
    %cst_176 = arith.constant 9.99999974E-6 : f32
    %221 = vector.broadcast %cst_176 : f32 to vector<1x16xf32>
    %222 = arith.addf %218, %221 : vector<1x16xf32>
    %223 = math.rsqrt %222 : vector<1x16xf32>
    %224 = vector.broadcast %223 : vector<1x16xf32> to vector<256x16xf32>
    %225 = arith.mulf %220, %224 : vector<256x16xf32>
    %cst_177 = arith.constant 0.000000e+00 : f32
    %226 = vector.broadcast %cst_177 : f32 to vector<256x16xf32>
    %227 = arith.cmpf ogt, %225, %226 : vector<256x16xf32>
    %cst_178 = arith.constant 0.00999999977 : f32
    %228 = vector.broadcast %cst_178 : f32 to vector<256x16xf32>
    %229 = arith.mulf %228, %225 : vector<256x16xf32>
    %230 = arith.select %227, %225, %229 : vector<256x16xi1>, vector<256x16xf32>
    %cst_179 = arith.constant 0.000000e+00 : f32
    %231 = vector.broadcast %cst_179 : f32 to vector<1x18x16xf32>
    %c0_180 = arith.constant 0 : index
    %c0_181 = arith.constant 0 : index
    %c0_182 = arith.constant 0 : index
    %232 = vector.load %arg16[%c0_180, %c0_181, %c0_182] : memref<18x18x16xf32, #tpu.memory_space<vmem>>, vector<1x18x16xf32>
    tpu.vector_store %arg16[%c0_180, %c0_181, %c0_182], %231 {strides = array<i32>} : memref<18x18x16xf32, #tpu.memory_space<vmem>>, vector<1x18x16xf32>,
    %cst_183 = arith.constant 0.000000e+00 : f32
    %233 = vector.broadcast %cst_183 : f32 to vector<1x18x16xf32>
    %c17_184 = arith.constant 17 : index
    %c0_185 = arith.constant 0 : index
    %c0_186 = arith.constant 0 : index
    %234 = vector.load %arg16[%c17_184, %c0_185, %c0_186] : memref<18x18x16xf32, #tpu.memory_space<vmem>>, vector<1x18x16xf32>
    tpu.vector_store %arg16[%c17_184, %c0_185, %c0_186], %233 {strides = array<i32>} : memref<18x18x16xf32, #tpu.memory_space<vmem>>, vector<1x18x16xf32>,
    %cst_187 = arith.constant 0.000000e+00 : f32
    %235 = vector.broadcast %cst_187 : f32 to vector<18x1x16xf32>
    %c0_188 = arith.constant 0 : index
    %c0_189 = arith.constant 0 : index
    %c0_190 = arith.constant 0 : index
    %236 = vector.load %arg16[%c0_188, %c0_189, %c0_190] : memref<18x18x16xf32, #tpu.memory_space<vmem>>, vector<18x1x16xf32>
    tpu.vector_store %arg16[%c0_188, %c0_189, %c0_190], %235 {strides = array<i32>} : memref<18x18x16xf32, #tpu.memory_space<vmem>>, vector<18x1x16xf32>,
    %cst_191 = arith.constant 0.000000e+00 : f32
    %237 = vector.broadcast %cst_191 : f32 to vector<18x1x16xf32>
    %c0_192 = arith.constant 0 : index
    %c17_193 = arith.constant 17 : index
    %c0_194 = arith.constant 0 : index
    %238 = vector.load %arg16[%c0_192, %c17_193, %c0_194] : memref<18x18x16xf32, #tpu.memory_space<vmem>>, vector<18x1x16xf32>
    tpu.vector_store %arg16[%c0_192, %c17_193, %c0_194], %237 {strides = array<i32>} : memref<18x18x16xf32, #tpu.memory_space<vmem>>, vector<18x1x16xf32>,
    %239 = vector.shape_cast %230 : vector<256x16xf32> to vector<16x16x16xf32>
    %c1_195 = arith.constant 1 : index
    %c1_196 = arith.constant 1 : index
    %c0_197 = arith.constant 0 : index
    %240 = vector.load %arg16[%c1_195, %c1_196, %c0_197] : memref<18x18x16xf32, #tpu.memory_space<vmem>>, vector<16x16x16xf32>
    tpu.vector_store %arg16[%c1_195, %c1_196, %c0_197], %239 {strides = array<i32>} : memref<18x18x16xf32, #tpu.memory_space<vmem>>, vector<16x16x16xf32>,
    %c0_198 = arith.constant 0 : index
    %c0_199 = arith.constant 0 : index
    %c0_200 = arith.constant 0 : index
    %241 = vector.load %arg16[%c0_198, %c0_199, %c0_200] : memref<18x18x16xf32, #tpu.memory_space<vmem>>, vector<18x16x16xf32>
    %c0_201 = arith.constant 0 : index
    %c1_202 = arith.constant 1 : index
    %c0_203 = arith.constant 0 : index
    %242 = vector.load %arg16[%c0_201, %c1_202, %c0_203] : memref<18x18x16xf32, #tpu.memory_space<vmem>>, vector<18x16x16xf32>
    %c0_204 = arith.constant 0 : index
    %c2_205 = arith.constant 2 : index
    %c0_206 = arith.constant 0 : index
    %243 = vector.load %arg16[%c0_204, %c2_205, %c0_206] : memref<18x18x16xf32, #tpu.memory_space<vmem>>, vector<18x16x16xf32>
    %244 = tpu.concatenate %241, %242, %243 in 2 : vector<18x16x16xf32>, vector<18x16x16xf32>, vector<18x16x16xf32> -> vector<18x16x48xf32>
    %245 = vector.extract_strided_slice %244 {offsets = [0, 0, 0], sizes = [16, 16, 48], strides = [1, 1, 1]} : vector<18x16x48xf32> to vector<16x16x48xf32>
    %246 = vector.extract_strided_slice %244 {offsets = [1, 0, 0], sizes = [16, 16, 48], strides = [1, 1, 1]} : vector<18x16x48xf32> to vector<16x16x48xf32>
    %247 = vector.extract_strided_slice %244 {offsets = [2, 0, 0], sizes = [16, 16, 48], strides = [1, 1, 1]} : vector<18x16x48xf32> to vector<16x16x48xf32>
    %248 = tpu.concatenate %245, %246, %247 in 2 : vector<16x16x48xf32>, vector<16x16x48xf32>, vector<16x16x48xf32> -> vector<16x16x144xf32>
    %249 = vector.shape_cast %248 : vector<16x16x144xf32> to vector<256x144xf32>
    %250 = arith.truncf %249 : vector<256x144xf32> to vector<256x144xbf16>
    %c0_207 = arith.constant 0 : index
    %c0_208 = arith.constant 0 : index
    %251 = vector.load %arg7[%c0_207, %c0_208] : memref<144x16xbf16, #tpu.memory_space<vmem>>, vector<144x16xbf16>
    %cst_209 = arith.constant dense<0.000000e+00> : vector<256x16xf32>
    %252 = tpu.matmul %250, %251, %cst_209 {dimension_numbers = #tpu.dot_dimension_numbers<[1], [0], [0], [1], [0, 0, 1, 1], [], []>} : vector<256x144xbf16>, vector<144x16xbf16>, vector<256x16xf32> -> vector<256x16xf32>
    %c0_210 = arith.constant 0 : index
    %c0_211 = arith.constant 0 : index
    %253 = vector.load %arg8[%c0_210, %c0_211] : memref<1x16xf32, #tpu.memory_space<vmem>>, vector<1x16xf32>
    %254 = vector.broadcast %253 : vector<1x16xf32> to vector<256x16xf32>
    %255 = arith.addf %252, %254 : vector<256x16xf32>
    %cst_212 = arith.constant 0.000000e+00 : f32
    %256 = vector.broadcast %cst_212 : f32 to vector<256x16xf32>
    %257 = arith.cmpf ogt, %255, %256 : vector<256x16xf32>
    %cst_213 = arith.constant 0.00999999977 : f32
    %258 = vector.broadcast %cst_213 : f32 to vector<256x16xf32>
    %259 = arith.mulf %258, %255 : vector<256x16xf32>
    %260 = arith.select %257, %255, %259 : vector<256x16xi1>, vector<256x16xf32>
    %c0_214 = arith.constant 0 : index
    %c0_215 = arith.constant 0 : index
    %261 = vector.load %arg9[%c0_214, %c0_215] : memref<3x16xbf16, #tpu.memory_space<vmem>>, vector<3x16xbf16>
    %262 = arith.truncf %260 : vector<256x16xf32> to vector<256x16xbf16>
    %cst_216 = arith.constant dense<0.000000e+00> : vector<3x256xf32>
    %263 = tpu.matmul %261, %262, %cst_216 {dimension_numbers = #tpu.dot_dimension_numbers<[1], [1], [0], [0], [0, 0, 1, 0], [], []>} : vector<3x16xbf16>, vector<256x16xbf16>, vector<3x256xf32> -> vector<3x256xf32>
    %c0_217 = arith.constant 0 : index
    %c0_218 = arith.constant 0 : index
    %264 = vector.load %arg10[%c0_217, %c0_218] : memref<3x1xf32, #tpu.memory_space<vmem>>, vector<3x1xf32>
    %265 = vector.broadcast %264 : vector<3x1xf32> to vector<3x256xf32>
    %266 = arith.addf %263, %265 : vector<3x256xf32>
    %267 = vector.shape_cast %266 : vector<3x256xf32> to vector<1x3x256xf32>
    %268 = arith.truncf %267 : vector<1x3x256xf32> to vector<1x3x256xbf16>
    %c0_219 = arith.constant 0 : index
    %c0_220 = arith.constant 0 : index
    %c0_221 = arith.constant 0 : index
    %269 = vector.load %arg11[%c0_219, %c0_220, %c0_221] : memref<1x3x256xbf16, #tpu.memory_space<vmem>>, vector<1x3x256xbf16>
    tpu.vector_store %arg11[%c0_219, %c0_220, %c0_221], %268 {strides = array<i32>} : memref<1x3x256xbf16, #tpu.memory_space<vmem>>, vector<1x3x256xbf16>,
    return
  }
  func.func @transform_0(%arg0: i32) -> (i32, i32, i32, i32) {
    %c0_i32 = arith.constant 0 : i32
    %c0_i32_0 = arith.constant 0 : i32
    %c0_i32_1 = arith.constant 0 : i32
    %c0_i32_2 = arith.constant 0 : i32
    return %arg0, %c0_i32, %c0_i32_0, %c0_i32_1 : i32, i32, i32, i32
  }
  func.func @transform_1(%arg0: i32) -> (i32, i32, i32, i32) {
    %c0_i32 = arith.constant 0 : i32
    %c0_i32_0 = arith.constant 0 : i32
    %c0_i32_1 = arith.constant 0 : i32
    %c0_i32_2 = arith.constant 0 : i32
    return %arg0, %c0_i32, %c0_i32_0, %c0_i32_1 : i32, i32, i32, i32
  }
  func.func @transform_2(%arg0: i32) -> (i32, i32) {
    %c0_i32 = arith.constant 0 : i32
    %c0_i32_0 = arith.constant 0 : i32
    %c0_i32_1 = arith.constant 0 : i32
    return %c0_i32, %c0_i32_0 : i32, i32
  }
  func.func @transform_3(%arg0: i32) -> (i32, i32) {
    %c0_i32 = arith.constant 0 : i32
    %c0_i32_0 = arith.constant 0 : i32
    %c0_i32_1 = arith.constant 0 : i32
    return %c0_i32, %c0_i32_0 : i32, i32
  }
  func.func @transform_4(%arg0: i32) -> (i32, i32) {
    %c0_i32 = arith.constant 0 : i32
    %c0_i32_0 = arith.constant 0 : i32
    %c0_i32_1 = arith.constant 0 : i32
    return %c0_i32, %c0_i32_0 : i32, i32
  }
  func.func @transform_5(%arg0: i32) -> (i32, i32) {
    %c0_i32 = arith.constant 0 : i32
    %c0_i32_0 = arith.constant 0 : i32
    %c0_i32_1 = arith.constant 0 : i32
    return %c0_i32, %c0_i32_0 : i32, i32
  }
  func.func @transform_6(%arg0: i32) -> (i32, i32) {
    %c0_i32 = arith.constant 0 : i32
    %c0_i32_0 = arith.constant 0 : i32
    %c0_i32_1 = arith.constant 0 : i32
    return %c0_i32, %c0_i32_0 : i32, i32
  }
  func.func @transform_7(%arg0: i32) -> (i32, i32) {
    %c0_i32 = arith.constant 0 : i32
    %c0_i32_0 = arith.constant 0 : i32
    %c0_i32_1 = arith.constant 0 : i32
    return %c0_i32, %c0_i32_0 : i32, i32
  }
  func.func @transform_8(%arg0: i32) -> (i32, i32) {
    %c0_i32 = arith.constant 0 : i32
    %c0_i32_0 = arith.constant 0 : i32
    %c0_i32_1 = arith.constant 0 : i32
    return %c0_i32, %c0_i32_0 : i32, i32
  }
  func.func @transform_9(%arg0: i32) -> (i32, i32) {
    %c0_i32 = arith.constant 0 : i32
    %c0_i32_0 = arith.constant 0 : i32
    %c0_i32_1 = arith.constant 0 : i32
    return %c0_i32, %c0_i32_0 : i32, i32
  }
  func.func @transform_10(%arg0: i32) -> (i32, i32, i32) {
    %c0_i32 = arith.constant 0 : i32
    %c0_i32_0 = arith.constant 0 : i32
    %c0_i32_1 = arith.constant 0 : i32
    return %arg0, %c0_i32, %c0_i32_0 : i32, i32, i32
  }
}

</mosaic_0001>

<llo_original>
// kernel: decoder_forward.1
$region0: #{decoder_forward.1}
  #allocation0 [shape = 'u32[]', space=smem, size = 0x4, offset = 0x4, fixed_abs, tag = 'smem constant byte address 0x4 - core index']
  #allocation1 [shape = 'u32[144,128]{1,0:T(1,128)}', space=vmem, size = 0x12000, scoped, tag = 'internal scratch']
  #allocation2 [shape = 'f32[10,10,9]{2,1,0:T(8,128)}', space=vmem, size = 0x14000, scoped, tag = 'scratch operand']
  #allocation3 [shape = 'f32[10,10,32]{2,1,0:T(8,128)}', space=vmem, size = 0x14000, scoped, tag = 'scratch operand']
  #allocation4 [shape = 'f32[18,18,40]{2,1,0:T(8,128)}', space=vmem, size = 0x36000, scoped, tag = 'scratch operand']
  #allocation5 [shape = 'f32[18,18,16]{2,1,0:T(8,128)}', space=vmem, size = 0x36000, scoped, tag = 'scratch operand']
  #allocation6 [shape = 'f32[18,18,16]{2,1,0:T(8,128)}', space=vmem, size = 0x36000, scoped, tag = 'scratch operand']
  %s0 = inlined_call_operand.hbm [shape: bf16[2,8,8,8], index: 0, kind: input, shape index: {}]
  %s1 = inlined_call_operand.hbm [shape: bf16[2,16,16,8], index: 1, kind: input, shape index: {}]
  %s2 = inlined_call_operand.hbm [shape: bf16[81,32], index: 2, kind: input, shape index: {}]
  %s3 = inlined_call_operand.hbm [shape: bf16[288,32], index: 3, kind: input, shape index: {}]
  %s4 = inlined_call_operand.hbm [shape: bf16[360,16], index: 4, kind: input, shape index: {}]
  %s5 = inlined_call_operand.hbm [shape: bf16[144,16], index: 5, kind: input, shape index: {}]
  %s6 = inlined_call_operand.hbm [shape: bf16[144,16], index: 6, kind: input, shape index: {}]
  %s7 = inlined_call_operand.hbm [shape: f32[1,16], index: 7, kind: input, shape index: {}]
  %s8 = inlined_call_operand.hbm [shape: bf16[3,16], index: 8, kind: input, shape index: {}]
  %s9 = inlined_call_operand.hbm [shape: f32[3,1], index: 9, kind: input, shape index: {}]
  %s10 = inlined_call_operand.hbm [shape: bf16[2,3,256], index: 10, kind: output, shape index: {}]
  %s11 = sld [smem:[#allocation0]]
  $region113: #{decoder_forward.1} parent=0
    _
  %s13 = ssub.s32 1, %s11
  %s14 = scalar_select 0, %s13, %s11
  $region1: #{decoder_forward.1} parent=0
    #allocation7 [shape = 'u8[32768]{0}', space=vmem, size = 0x8000, scoped, tag = 'input window, operand 0']
    #allocation8 [shape = 's32[2]{0}', space=sflag, size = 0x8, scoped, tag = 'scoped memory for decoder_forward.1']
    #allocation9 [shape = 's32[2]{0}', space=sflag, size = 0x8, scoped, tag = 'scoped memory for decoder_forward.1']
    #allocation10 [shape = 'u8[131072]{0}', space=vmem, size = 0x20000, scoped, tag = 'input window, operand 1']
    #allocation11 [shape = 's32[2]{0}', space=sflag, size = 0x8, scoped, tag = 'scoped memory for decoder_forward.1']
    #allocation12 [shape = 'u8[22528]{0}', space=vmem, size = 0x5800, scoped, tag = 'input window, operand 2, single buffered']
    #allocation13 [shape = 'u8[73728]{0}', space=vmem, size = 0x12000, scoped, tag = 'input window, operand 3, single buffered']
    #allocation14 [shape = 's32[1]{0}', space=sflag, size = 0x4, scoped, tag = 'scoped memory for decoder_forward.1']
    #allocation15 [shape = 'u8[92160]{0}', space=vmem, size = 0x16800, scoped, tag = 'input window, operand 4, single buffered']
    #allocation16 [shape = 'u8[36864]{0}', space=vmem, size = 0x9000, scoped, tag = 'input window, operand 5, single buffered']
    #allocation17 [shape = 's32[1]{0}', space=sflag, size = 0x4, scoped, tag = 'scoped memory for decoder_forward.1']
    #allocation18 [shape = 'u8[36864]{0}', space=vmem, size = 0x9000, scoped, tag = 'input window, operand 6, single buffered']
    #allocation19 [shape = 'u8[512]{0}', space=vmem, size = 0x400, scoped, tag = 'input window, operand 7, single buffered']
    #allocation20 [shape = 's32[1]{0}', space=sflag, size = 0x4, scoped, tag = 'scoped memory for decoder_forward.1']
    #allocation21 [shape = 'u8[1024]{0}', space=vmem, size = 0x400, scoped, tag = 'input window, operand 8, single buffered']
    #allocation22 [shape = 'u8[2048]{0}', space=vmem, size = 0x800, scoped, tag = 'input window, operand 9, single buffered']
    #allocation23 [shape = 's32[1]{0}', space=sflag, size = 0x4, scoped, tag = 'scoped memory for decoder_forward.1']
    #allocation24 [shape = 'u8[4096]{0}', space=vmem, size = 0x1000, scoped, tag = 'output window, operand 0']
    %15 = vsyncpa [#allocation8], 0
    %s16 = scalar_lea.sflag [#allocation8], 1
    %17 = vsyncpa %s16, 0
    %18 = vsyncpa [#allocation11], 0
    %s19 = scalar_lea.sflag [#allocation11], 1
    %20 = vsyncpa %s19, 0
    %21 = vsyncpa [#allocation14], 0
    %22 = vsyncpa [#allocation17], 0
    %23 = vsyncpa [#allocation20], 0
    %24 = vsyncpa [#allocation23], 0
    %25 = vsyncpa [#allocation9], 0
    %s26 = scalar_lea.sflag [#allocation9], 1
    %27 = vsyncpa %s26, 0
    loop: start=0, step=1, limit=4
    $region2: #{decoder_forward.1} parent=1 // loop_pre_header
      _
    $region3: #{decoder_forward.1} parent=1 // loop_header
      %s29 = sphi 0, %s33
      %p30 = scmp.ge.s32.totalorder %s29, 4
      %s39 = sphi 0, %s41
      %s42 = sphi 0, %s39
      %s43 = sphi 0, %s42
      %s59 = sphi 0, %s43
      %s65 = sphi 0, %s67
      %s68 = sphi 0, %s65
      %s69 = sphi 0, %s68
      %s85 = sphi 0, %s69
      %s89 = sphi 0, %s89
      %s91 = sphi 0, %s89
      %s92 = sphi 0, %s91
      %s106 = sphi 0, %s92
      %s110 = sphi 0, %s110
      %s112 = sphi 0, %s110
      %s113 = sphi 0, %s112
      %s127 = sphi 0, %s113
      %s131 = sphi 0, %s131
      %s133 = sphi 0, %s131
      %s134 = sphi 0, %s133
      %s148 = sphi 0, %s134
      %s152 = sphi 0, %s152
      %s154 = sphi 0, %s152
      %s155 = sphi 0, %s154
      %s169 = sphi 0, %s155
      %s173 = sphi 0, %s173
      %s175 = sphi 0, %s173
      %s176 = sphi 0, %s175
      %s190 = sphi 0, %s176
      %s194 = sphi 0, %s194
      %s196 = sphi 0, %s194
      %s197 = sphi 0, %s196
      %s211 = sphi 0, %s197
      %s215 = sphi 0, %s215
      %s217 = sphi 0, %s215
      %s218 = sphi 0, %s217
      %s232 = sphi 0, %s218
      %s236 = sphi 0, %s236
      %s238 = sphi 0, %s236
      %s239 = sphi 0, %s238
      %s253 = sphi 0, %s239
      %s259 = sphi 0, %s261
      %s262 = sphi 0, %s259
      %s263 = sphi 0, %s262
      %s279 = sphi 0, %s263
    $region4: #{decoder_forward.1} parent=1 // loop_header_branch
      %32 = sbr.rel (%p30) target = $region8
    $region5: #{decoder_forward.1} parent=1 // loop_body
      %s34 = ssub.s32 %s29, 1
      %s35 = ssub.s32 %s29, 2
      %s36 = sadd.s32 %s29, 1
      %s37 = ssub.s32 %s29, %s36
      %p38 = scmp.eq.s32.totalorder %s37, 0
      %s40 = sadd.s32 %s39, 1
      %s41 = scalar_select %p38, %s39, %s40
      %p44 = pneg %p38
      %p45 = scmp.eq.s32.totalorder %s29, 1
      %p46 = por %p44, %p45
      %p47 = scmp.ne.s32.totalorder %s39, %s42
      %p48 = scmp.eq.s32.totalorder %s29, 0
      %p49 = por %p47, %p48
      %p50 = scmp.ne.s32.totalorder %s39, %s42
      %p51 = scmp.eq.s32.totalorder %s34, 1
      %p52 = por %p50, %p51
      %p53 = scmp.ne.s32.totalorder %s42, %s43
      %p54 = scmp.eq.s32.totalorder %s34, 0
      %p55 = por %p53, %p54
      %p56 = scmp.ne.s32.totalorder %s42, %s43
      %p57 = scmp.eq.s32.totalorder %s35, 1
      %p58 = por %p56, %p57
      %p60 = scmp.ne.s32.totalorder %s43, %s59
      %p61 = scmp.eq.s32.totalorder %s35, 0
      %p62 = por %p60, %p61
      %s63 = ssub.s32 %s29, %s36
      %p64 = scmp.eq.s32.totalorder %s63, 0
      %s66 = sadd.s32 %s65, 1
      %s67 = scalar_select %p64, %s65, %s66
      %p70 = pneg %p64
      %p71 = scmp.eq.s32.totalorder %s29, 1
      %p72 = por %p70, %p71
      %p73 = scmp.ne.s32.totalorder %s65, %s68
      %p74 = scmp.eq.s32.totalorder %s29, 0
      %p75 = por %p73, %p74
      %p76 = scmp.ne.s32.totalorder %s65, %s68
      %p77 = scmp.eq.s32.totalorder %s34, 1
      %p78 = por %p76, %p77
      %p79 = scmp.ne.s32.totalorder %s68, %s69
      %p80 = scmp.eq.s32.totalorder %s34, 0
      %p81 = por %p79, %p80
      %p82 = scmp.ne.s32.totalorder %s68, %s69
      %p83 = scmp.eq.s32.totalorder %s35, 1
      %p84 = por %p82, %p83
      %p86 = scmp.ne.s32.totalorder %s69, %s85
      %p87 = scmp.eq.s32.totalorder %s35, 0
      %p88 = por %p86, %p87
      %s90 = sadd.s32 %s89, 1
      %p93 = scmp.eq.s32.totalorder %s29, 1
      %p94 = scmp.ne.s32.totalorder %s89, %s91
      %p95 = scmp.eq.s32.totalorder %s29, 0
      %p96 = por %p94, %p95
      %p97 = scmp.ne.s32.totalorder %s89, %s91
      %p98 = scmp.eq.s32.totalorder %s34, 1
      %p99 = por %p97, %p98
      %p100 = scmp.ne.s32.totalorder %s91, %s92
      %p101 = scmp.eq.s32.totalorder %s34, 0
      %p102 = por %p100, %p101
      %p103 = scmp.ne.s32.totalorder %s91, %s92
      %p104 = scmp.eq.s32.totalorder %s35, 1
      %p105 = por %p103, %p104
      %p107 = scmp.ne.s32.totalorder %s92, %s106
      %p108 = scmp.eq.s32.totalorder %s35, 0
      %p109 = por %p107, %p108
      %s111 = sadd.s32 %s110, 1
      %p114 = scmp.eq.s32.totalorder %s29, 1
      %p115 = scmp.ne.s32.totalorder %s110, %s112
      %p116 = scmp.eq.s32.totalorder %s29, 0
      %p117 = por %p115, %p116
      %p118 = scmp.ne.s32.totalorder %s110, %s112
      %p119 = scmp.eq.s32.totalorder %s34, 1
      %p120 = por %p118, %p119
      %p121 = scmp.ne.s32.totalorder %s112, %s113
      %p122 = scmp.eq.s32.totalorder %s34, 0
      %p123 = por %p121, %p122
      %p124 = scmp.ne.s32.totalorder %s112, %s113
      %p125 = scmp.eq.s32.totalorder %s35, 1
      %p126 = por %p124, %p125
      %p128 = scmp.ne.s32.totalorder %s113, %s127
      %p129 = scmp.eq.s32.totalorder %s35, 0
      %p130 = por %p128, %p129
      %s132 = sadd.s32 %s131, 1
      %p135 = scmp.eq.s32.totalorder %s29, 1
      %p136 = scmp.ne.s32.totalorder %s131, %s133
      %p137 = scmp.eq.s32.totalorder %s29, 0
      %p138 = por %p136, %p137
      %p139 = scmp.ne.s32.totalorder %s131, %s133
      %p140 = scmp.eq.s32.totalorder %s34, 1
      %p141 = por %p139, %p140
      %p142 = scmp.ne.s32.totalorder %s133, %s134
      %p143 = scmp.eq.s32.totalorder %s34, 0
      %p144 = por %p142, %p143
      %p145 = scmp.ne.s32.totalorder %s133, %s134
      %p146 = scmp.eq.s32.totalorder %s35, 1
      %p147 = por %p145, %p146
      %p149 = scmp.ne.s32.totalorder %s134, %s148
      %p150 = scmp.eq.s32.totalorder %s35, 0
      %p151 = por %p149, %p150
      %s153 = sadd.s32 %s152, 1
      %p156 = scmp.eq.s32.totalorder %s29, 1
      %p157 = scmp.ne.s32.totalorder %s152, %s154
      %p158 = scmp.eq.s32.totalorder %s29, 0
      %p159 = por %p157, %p158
      %p160 = scmp.ne.s32.totalorder %s152, %s154
      %p161 = scmp.eq.s32.totalorder %s34, 1
      %p162 = por %p160, %p161
      %p163 = scmp.ne.s32.totalorder %s154, %s155
      %p164 = scmp.eq.s32.totalorder %s34, 0
      %p165 = por %p163, %p164
      %p166 = scmp.ne.s32.totalorder %s154, %s155
      %p167 = scmp.eq.s32.totalorder %s35, 1
      %p168 = por %p166, %p167
      %p170 = scmp.ne.s32.totalorder %s155, %s169
      %p171 = scmp.eq.s32.totalorder %s35, 0
      %p172 = por %p170, %p171
      %s174 = sadd.s32 %s173, 1
      %p177 = scmp.eq.s32.totalorder %s29, 1
      %p178 = scmp.ne.s32.totalorder %s173, %s175
      %p179 = scmp.eq.s32.totalorder %s29, 0
      %p180 = por %p178, %p179
      %p181 = scmp.ne.s32.totalorder %s173, %s175
      %p182 = scmp.eq.s32.totalorder %s34, 1
      %p183 = por %p181, %p182
      %p184 = scmp.ne.s32.totalorder %s175, %s176
      %p185 = scmp.eq.s32.totalorder %s34, 0
      %p186 = por %p184, %p185
      %p187 = scmp.ne.s32.totalorder %s175, %s176
      %p188 = scmp.eq.s32.totalorder %s35, 1
      %p189 = por %p187, %p188
      %p191 = scmp.ne.s32.totalorder %s176, %s190
      %p192 = scmp.eq.s32.totalorder %s35, 0
      %p193 = por %p191, %p192
      %s195 = sadd.s32 %s194, 1
      %p198 = scmp.eq.s32.totalorder %s29, 1
      %p199 = scmp.ne.s32.totalorder %s194, %s196
      %p200 = scmp.eq.s32.totalorder %s29, 0
      %p201 = por %p199, %p200
      %p202 = scmp.ne.s32.totalorder %s194, %s196
      %p203 = scmp.eq.s32.totalorder %s34, 1
      %p204 = por %p202, %p203
      %p205 = scmp.ne.s32.totalorder %s196, %s197
      %p206 = scmp.eq.s32.totalorder %s34, 0
      %p207 = por %p205, %p206
      %p208 = scmp.ne.s32.totalorder %s196, %s197
      %p209 = scmp.eq.s32.totalorder %s35, 1
      %p210 = por %p208, %p209
      %p212 = scmp.ne.s32.totalorder %s197, %s211
      %p213 = scmp.eq.s32.totalorder %s35, 0
      %p214 = por %p212, %p213
      %s216 = sadd.s32 %s215, 1
      %p219 = scmp.eq.s32.totalorder %s29, 1
      %p220 = scmp.ne.s32.totalorder %s215, %s217
      %p221 = scmp.eq.s32.totalorder %s29, 0
      %p222 = por %p220, %p221
      %p223 = scmp.ne.s32.totalorder %s215, %s217
      %p224 = scmp.eq.s32.totalorder %s34, 1
      %p225 = por %p223, %p224
      %p226 = scmp.ne.s32.totalorder %s217, %s218
      %p227 = scmp.eq.s32.totalorder %s34, 0
      %p228 = por %p226, %p227
      %p229 = scmp.ne.s32.totalorder %s217, %s218
      %p230 = scmp.eq.s32.totalorder %s35, 1
      %p231 = por %p229, %p230
      %p233 = scmp.ne.s32.totalorder %s218, %s232
      %p234 = scmp.eq.s32.totalorder %s35, 0
      %p235 = por %p233, %p234
      %s237 = sadd.s32 %s236, 1
      %p240 = scmp.eq.s32.totalorder %s29, 1
      %p241 = scmp.ne.s32.totalorder %s236, %s238
      %p242 = scmp.eq.s32.totalorder %s29, 0
      %p243 = por %p241, %p242
      %p244 = scmp.ne.s32.totalorder %s236, %s238
      %p245 = scmp.eq.s32.totalorder %s34, 1
      %p246 = por %p244, %p245
      %p247 = scmp.ne.s32.totalorder %s238, %s239
      %p248 = scmp.eq.s32.totalorder %s34, 0
      %p249 = por %p247, %p248
      %p250 = scmp.ne.s32.totalorder %s238, %s239
      %p251 = scmp.eq.s32.totalorder %s35, 1
      %p252 = por %p250, %p251
      %p254 = scmp.ne.s32.totalorder %s239, %s253
      %p255 = scmp.eq.s32.totalorder %s35, 0
      %p256 = por %p254, %p255
      %s257 = ssub.s32 %s29, %s36
      %p258 = scmp.eq.s32.totalorder %s257, 0
      %s260 = sadd.s32 %s259, 1
      %s261 = scalar_select %p258, %s259, %s260
      %p264 = pneg %p258
      %p265 = scmp.eq.s32.totalorder %s29, 1
      %p266 = por %p264, %p265
      %p267 = scmp.ne.s32.totalorder %s259, %s262
      %p268 = scmp.eq.s32.totalorder %s29, 0
      %p269 = por %p267, %p268
      %p270 = scmp.ne.s32.totalorder %s259, %s262
      %p271 = scmp.eq.s32.totalorder %s34, 1
      %p272 = por %p270, %p271
      %p273 = scmp.ne.s32.totalorder %s262, %s263
      %p274 = scmp.eq.s32.totalorder %s34, 0
      %p275 = por %p273, %p274
      %p276 = scmp.ne.s32.totalorder %s262, %s263
      %p277 = scmp.eq.s32.totalorder %s35, 1
      %p278 = por %p276, %p277
      %p280 = scmp.ne.s32.totalorder %s263, %s279
      %p281 = scmp.eq.s32.totalorder %s35, 0
      %p282 = por %p280, %p281
      %p283 = scmp.le.s32.totalorder 1, %s29
      %p284 = scmp.lt.s32.totalorder %s29, 3
      %p285 = pnand %p283, %p284
      %p286 = pneg %p285
      // Predicated region
      $region9: #{decoder_forward.1} parent=5 // pred_check
        _
      $region10: #{decoder_forward.1} parent=5 // pred_check_branch
        %288 = sbr.rel (%p285) target = $region12
      $region11: #{decoder_forward.1} parent=5 // pred_region
        %s289 = ssub.s32 %s29, 1
        // Predicated region
        $region13: #{decoder_forward.1} parent=11 // pred_check
          %p290 = pneg %p102
        $region14: #{decoder_forward.1} parent=11 // pred_check_branch
          %292 = sbr.rel (%p290) target = $region16
        $region15: #{decoder_forward.1} parent=11 // pred_region
          %s294 = ssub.s32 704, 704
          %295 = vsyncadd [#allocation11], %s294
          %s296 = sshll.u32 [#allocation12], 4
          %s297 = int_to_ptr.vmem [resolvable:$true] %s296
          %302 = dma.hbm_to_vmem [thread:$0]  %s2, 704, %s297, [#allocation11], 64, 64, 4
        $region16: #{decoder_forward.1} parent=11 // pred_fallthru
          _
        // Predicated region
        $region17: #{decoder_forward.1} parent=11 // pred_check
          %p303 = pneg %p123
        $region18: #{decoder_forward.1} parent=11 // pred_check_branch
          %305 = sbr.rel (%p303) target = $region20
        $region19: #{decoder_forward.1} parent=11 // pred_region
          %s307 = ssub.s32 2304, 2304
          %308 = vsyncadd [#allocation14], %s307
          %s309 = sshll.u32 [#allocation13], 4
          %s310 = int_to_ptr.vmem [resolvable:$true] %s309
          %315 = dma.hbm_to_vmem [thread:$0]  %s3, 2304, %s310, [#allocation14], 64, 64, 4
        $region20: #{decoder_forward.1} parent=11 // pred_fallthru
          _
        // Predicated region
        $region21: #{decoder_forward.1} parent=11 // pred_check
          %p316 = pneg %p144
        $region22: #{decoder_forward.1} parent=11 // pred_check_branch
          %318 = sbr.rel (%p316) target = $region24
        $region23: #{decoder_forward.1} parent=11 // pred_region
          %s320 = ssub.s32 2880, 2880
          %321 = vsyncadd [#allocation14], %s320
          %s322 = sshll.u32 [#allocation15], 4
          %s323 = int_to_ptr.vmem [resolvable:$true] %s322
          %328 = dma.hbm_to_vmem [thread:$0]  %s4, 2880, %s323, [#allocation14], 64, 64, 4
        $region24: #{decoder_forward.1} parent=11 // pred_fallthru
          _
        // Predicated region
        $region25: #{decoder_forward.1} parent=11 // pred_check
          %p329 = pneg %p165
        $region26: #{decoder_forward.1} parent=11 // pred_check_branch
          %331 = sbr.rel (%p329) target = $region28
        $region27: #{decoder_forward.1} parent=11 // pred_region
          %s333 = ssub.s32 1152, 1152
          %334 = vsyncadd [#allocation17], %s333
          %s335 = sshll.u32 [#allocation16], 4
          %s336 = int_to_ptr.vmem [resolvable:$true] %s335
          %341 = dma.hbm_to_vmem [thread:$0]  %s5, 1152, %s336, [#allocation17], 64, 64, 4
        $region28: #{decoder_forward.1} parent=11 // pred_fallthru
          _
        // Predicated region
        $region29: #{decoder_forward.1} parent=11 // pred_check
          %p342 = pneg %p186
        $region30: #{decoder_forward.1} parent=11 // pred_check_branch
          %344 = sbr.rel (%p342) target = $region32
        $region31: #{decoder_forward.1} parent=11 // pred_region
          %s346 = ssub.s32 1152, 1152
          %347 = vsyncadd [#allocation17], %s346
          %s348 = sshll.u32 [#allocation18], 4
          %s349 = int_to_ptr.vmem [resolvable:$true] %s348
          %354 = dma.hbm_to_vmem [thread:$0]  %s6, 1152, %s349, [#allocation17], 64, 64, 4
        $region32: #{decoder_forward.1} parent=11 // pred_fallthru
          _
        // Predicated region
        $region33: #{decoder_forward.1} parent=11 // pred_check
          %p355 = pneg %p207
        $region34: #{decoder_forward.1} parent=11 // pred_check_branch
          %357 = sbr.rel (%p355) target = $region36
        $region35: #{decoder_forward.1} parent=11 // pred_region
          %s359 = ssub.s32 16, 16
          %360 = vsyncadd [#allocation20], %s359
          %s362 = sshll.u32 [#allocation19], 4
          %s363 = int_to_ptr.vmem [resolvable:$true] %s362
          %365 = dma.hbm_to_vmem [thread:$0]  %s7, 16, %s363, [#allocation20]
        $region36: #{decoder_forward.1} parent=11 // pred_fallthru
          _
        // Predicated region
        $region37: #{decoder_forward.1} parent=11 // pred_check
          %p366 = pneg %p228
        $region38: #{decoder_forward.1} parent=11 // pred_check_branch
          %368 = sbr.rel (%p366) target = $region40
        $region39: #{decoder_forward.1} parent=11 // pred_region
          %s370 = ssub.s32 32, 32
          %371 = vsyncadd [#allocation20], %s370
          %s373 = sshll.u32 [#allocation21], 4
          %s374 = int_to_ptr.vmem [resolvable:$true] %s373
          %376 = dma.hbm_to_vmem [thread:$0]  %s8, 32, %s374, [#allocation20]
        $region40: #{decoder_forward.1} parent=11 // pred_fallthru
          _
        // Predicated region
        $region41: #{decoder_forward.1} parent=11 // pred_check
          %p377 = pneg %p249
        $region42: #{decoder_forward.1} parent=11 // pred_check_branch
          %379 = sbr.rel (%p377) target = $region44
        $region43: #{decoder_forward.1} parent=11 // pred_region
          %s381 = ssub.s32 64, 64
          %382 = vsyncadd [#allocation23], %s381
          %s384 = sshll.u32 [#allocation22], 4
          %s385 = int_to_ptr.vmem [resolvable:$true] %s384
          %387 = dma.hbm_to_vmem [thread:$0]  %s9, 64, %s385, [#allocation23]
        $region44: #{decoder_forward.1} parent=11 // pred_fallthru
          _
      $region12: #{decoder_forward.1} parent=5 // pred_fallthru
        _
      %p388 = scmp.lt.s32.totalorder %s29, 2
      // Predicated region
      $region45: #{decoder_forward.1} parent=5 // pred_check
        %p389 = pneg %p388
      $region46: #{decoder_forward.1} parent=5 // pred_check_branch
        %391 = sbr.rel (%p389) target = $region48
      $region47: #{decoder_forward.1} parent=5 // pred_region
        // Predicated region
        $region49: #{decoder_forward.1} parent=47 // pred_check
          %p392 = pneg %p49
        $region50: #{decoder_forward.1} parent=47 // pred_check_branch
          %394 = sbr.rel (%p392) target = $region52
        $region51: #{decoder_forward.1} parent=47 // pred_region
          %s395 = sand.u32 %s39, 1
          %s396 = scalar_lea.sflag [#allocation8], %s395
          %s397 = sand.u32 %s39, 1
          %s398 = smul.addr %s397, 32
          %s399 = scalar_lea.vmem [#allocation7], %s398
          %s401 = ssub.s32 512, 512
          %402 = vsyncadd %s396, %s401
          %s403 = smul.addr %s29, 8
          %s404 = smul.addr %s403, 64
          %s405 = scalar_lea.hbm %s0, %s404
          %s406 = sshll.u32 %s399, 4
          %s407 = int_to_ptr.vmem [resolvable:$true] %s406
          %412 = dma.hbm_to_vmem [thread:$0]  %s405, 512, %s407, %s396, 64, 64, 4
        $region52: #{decoder_forward.1} parent=47 // pred_fallthru
          _
        // Predicated region
        $region53: #{decoder_forward.1} parent=47 // pred_check
          %p413 = pneg %p75
        $region54: #{decoder_forward.1} parent=47 // pred_check_branch
          %415 = sbr.rel (%p413) target = $region56
        $region55: #{decoder_forward.1} parent=47 // pred_region
          %s416 = sand.u32 %s29, 1
          %s417 = scalar_lea.sflag [#allocation11], %s416
          %s418 = sand.u32 %s65, 1
          %s419 = smul.addr %s418, 128
          %s420 = scalar_lea.vmem [#allocation10], %s419
          %s422 = ssub.s32 2048, 2048
          %423 = vsyncadd %s417, %s422
          %s424 = smul.addr %s29, 32
          %s425 = smul.addr %s424, 64
          %s426 = scalar_lea.hbm %s1, %s425
          %s427 = sshll.u32 %s420, 4
          %s428 = int_to_ptr.vmem [resolvable:$true] %s427
          %433 = dma.hbm_to_vmem [thread:$0]  %s426, 2048, %s428, %s417, 64, 64, 4
        $region56: #{decoder_forward.1} parent=47 // pred_fallthru
          _
      $region48: #{decoder_forward.1} parent=5 // pred_fallthru
        _
      %p434 = scmp.le.s32.totalorder 1, %s29
      %p435 = scmp.lt.s32.totalorder %s29, 3
      %p436 = pnand %p434, %p435
      %p437 = pneg %p436
      // Predicated region
      $region57: #{decoder_forward.1} parent=5 // pred_check
        _
      $region58: #{decoder_forward.1} parent=5 // pred_check_branch
        %439 = sbr.rel (%p436) target = $region60
      $region59: #{decoder_forward.1} parent=5 // pred_region
        %s440 = ssub.s32 %s29, 1
        %s441 = sand.u32 %s42, 1
        %s442 = scalar_lea.sflag [#allocation8], %s441
        %s443 = sand.u32 %s42, 1
        %s444 = smul.addr %s443, 32
        %s445 = scalar_lea.vmem [#allocation7], %s444
        // Predicated region
        $region61: #{decoder_forward.1} parent=59 // pred_check
          %p446 = pneg %p55
        $region62: #{decoder_forward.1} parent=59 // pred_check_branch
          %448 = sbr.rel (%p446) target = $region64
        $region63: #{decoder_forward.1} parent=59 // pred_region
          %449 = dma.done %s442, 512
        $region64: #{decoder_forward.1} parent=59 // pred_fallthru
          _
        %s450 = sand.u32 %s34, 1
        %s451 = scalar_lea.sflag [#allocation11], %s450
        %s452 = sand.u32 %s68, 1
        %s453 = smul.addr %s452, 128
        %s454 = scalar_lea.vmem [#allocation10], %s453
        // Predicated region
        $region65: #{decoder_forward.1} parent=59 // pred_check
          %p455 = pneg %p81
        $region66: #{decoder_forward.1} parent=59 // pred_check_branch
          %457 = sbr.rel (%p455) target = $region68
        $region67: #{decoder_forward.1} parent=59 // pred_region
          %458 = dma.done %s451, 2048
        $region68: #{decoder_forward.1} parent=59 // pred_fallthru
          _
        // Predicated region
        $region69: #{decoder_forward.1} parent=59 // pred_check
          %p459 = pneg %p102
        $region70: #{decoder_forward.1} parent=59 // pred_check_branch
          %461 = sbr.rel (%p459) target = $region72
        $region71: #{decoder_forward.1} parent=59 // pred_region
          %462 = dma.done [#allocation11], 704
        $region72: #{decoder_forward.1} parent=59 // pred_fallthru
          _
        // Predicated region
        $region73: #{decoder_forward.1} parent=59 // pred_check
          %p463 = pneg %p123
        $region74: #{decoder_forward.1} parent=59 // pred_check_branch
          %465 = sbr.rel (%p463) target = $region76
        $region75: #{decoder_forward.1} parent=59 // pred_region
          %466 = dma.done [#allocation14], 2304
        $region76: #{decoder_forward.1} parent=59 // pred_fallthru
          _
        // Predicated region
        $region77: #{decoder_forward.1} parent=59 // pred_check
          %p467 = pneg %p144
        $region78: #{decoder_forward.1} parent=59 // pred_check_branch
          %469 = sbr.rel (%p467) target = $region80
        $region79: #{decoder_forward.1} parent=59 // pred_region
          %470 = dma.done [#allocation14], 2880
        $region80: #{decoder_forward.1} parent=59 // pred_fallthru
          _
        // Predicated region
        $region81: #{decoder_forward.1} parent=59 // pred_check
          %p471 = pneg %p165
        $region82: #{decoder_forward.1} parent=59 // pred_check_branch
          %473 = sbr.rel (%p471) target = $region84
        $region83: #{decoder_forward.1} parent=59 // pred_region
          %474 = dma.done [#allocation17], 1152
        $region84: #{decoder_forward.1} parent=59 // pred_fallthru
          _
        // Predicated region
        $region85: #{decoder_forward.1} parent=59 // pred_check
          %p475 = pneg %p186
        $region86: #{decoder_forward.1} parent=59 // pred_check_branch
          %477 = sbr.rel (%p475) target = $region88
        $region87: #{decoder_forward.1} parent=59 // pred_region
          %478 = dma.done [#allocation17], 1152
        $region88: #{decoder_forward.1} parent=59 // pred_fallthru
          _
        // Predicated region
        $region89: #{decoder_forward.1} parent=59 // pred_check
          %p479 = pneg %p207
        $region90: #{decoder_forward.1} parent=59 // pred_check_branch
          %481 = sbr.rel (%p479) target = $region92
        $region91: #{decoder_forward.1} parent=59 // pred_region
          %482 = dma.done [#allocation20], 16
        $region92: #{decoder_forward.1} parent=59 // pred_fallthru
          _
        // Predicated region
        $region93: #{decoder_forward.1} parent=59 // pred_check
          %p483 = pneg %p228
        $region94: #{decoder_forward.1} parent=59 // pred_check_branch
          %485 = sbr.rel (%p483) target = $region96
        $region95: #{decoder_forward.1} parent=59 // pred_region
          %486 = dma.done [#allocation20], 32
        $region96: #{decoder_forward.1} parent=59 // pred_fallthru
          _
        // Predicated region
        $region97: #{decoder_forward.1} parent=59 // pred_check
          %p487 = pneg %p249
        $region98: #{decoder_forward.1} parent=59 // pred_check_branch
          %489 = sbr.rel (%p487) target = $region100
        $region99: #{decoder_forward.1} parent=59 // pred_region
          %490 = dma.done [#allocation23], 64
        $region100: #{decoder_forward.1} parent=59 // pred_fallthru
          _
        %s491 = sand.u32 %s42, 1
        %s492 = scalar_lea.sflag [#allocation8], %s491
        %s493 = sand.u32 %s42, 1
        %s494 = smul.addr %s493, 32
        %s495 = scalar_lea.vmem [#allocation7], %s494
        %p496 = pneg %p55
        %p497 = pneg %p52
        %s498 = sand.u32 %s34, 1
        %s499 = scalar_lea.sflag [#allocation11], %s498
        %s500 = sand.u32 %s68, 1
        %s501 = smul.addr %s500, 128
        %s502 = scalar_lea.vmem [#allocation10], %s501
        %p503 = pneg %p81
        %p504 = pneg %p78
        %p505 = pneg %p102
        %p506 = pneg %p99
        %p507 = pneg %p123
        %p508 = pneg %p120
        %p509 = pneg %p144
        %p510 = pneg %p141
        %p511 = pneg %p165
        %p512 = pneg %p162
        %p513 = pneg %p186
        %p514 = pneg %p183
        %p515 = pneg %p207
        %p516 = pneg %p204
        %p517 = pneg %p228
        %p518 = pneg %p225
        %p519 = pneg %p249
        %p520 = pneg %p246
        %p521 = pneg %p275
        %p522 = pneg %p272
        %s523 = sand.u32 %s262, 1
        %s524 = scalar_lea.sflag [#allocation9], %s523
        %s525 = sand.u32 %s262, 1
        %s526 = smul.addr %s525, 4
        %s527 = scalar_lea.vmem [#allocation24], %s526
        %vm529 = vcmask 72704
        %530 = vst.msk [vmem:[#allocation2] sm:$0xff] %vm529, 0.0
        %vm531 = vcmask 66560
        %532 = vst.msk [vmem:[#allocation2 + $0x8] sm:$0x3] %vm531, 0.0
        %s533 = scalar_lea.vmem [#allocation2], 144
        %534 = vst.msk [vmem:[%s533] sm:$0xff] %vm529, 0.0
        %535 = vst.msk [vmem:[%s533 + $0x8] sm:$0x3] %vm531, 0.0
        %vm536 = vcmask 65536
        %537 = vst.msk [vmem:[#allocation2] sm:$0x1] %vm536, 0.0
        %538 = vst.msk [vmem:[#allocation2 + $0x10] sm:$0x1] %vm536, 0.0
        %539 = vst.msk [vmem:[#allocation2 + $0x20] sm:$0x1] %vm536, 0.0
        %540 = vst.msk [vmem:[#allocation2 + $0x30] sm:$0x1] %vm536, 0.0
        %541 = vst.msk [vmem:[#allocation2 + $0x40] sm:$0x1] %vm536, 0.0
        %542 = vst.msk [vmem:[#allocation2 + $0x50] sm:$0x1] %vm536, 0.0
        %543 = vst.msk [vmem:[#allocation2 + $0x60] sm:$0x1] %vm536, 0.0
        %544 = vst.msk [vmem:[#allocation2 + $0x70] sm:$0x1] %vm536, 0.0
        %545 = vst.msk [vmem:[#allocation2 + $0x80] sm:$0x1] %vm536, 0.0
        %546 = vst.msk [vmem:[#allocation2 + $0x90] sm:$0x1] %vm536, 0.0
        %547 = vst.msk [vmem:[#allocation2 + $0x9] sm:$0x1] %vm536, 0.0
        %548 = vst.msk [vmem:[#allocation2 + $0x19] sm:$0x1] %vm536, 0.0
        %549 = vst.msk [vmem:[#allocation2 + $0x29] sm:$0x1] %vm536, 0.0
        %550 = vst.msk [vmem:[#allocation2 + $0x39] sm:$0x1] %vm536, 0.0
        %551 = vst.msk [vmem:[#allocation2 + $0x49] sm:$0x1] %vm536, 0.0
        %552 = vst.msk [vmem:[#allocation2 + $0x59] sm:$0x1] %vm536, 0.0
        %553 = vst.msk [vmem:[#allocation2 + $0x69] sm:$0x1] %vm536, 0.0
        %554 = vst.msk [vmem:[#allocation2 + $0x79] sm:$0x1] %vm536, 0.0
        %555 = vst.msk [vmem:[#allocation2 + $0x89] sm:$0x1] %vm536, 0.0
        %556 = vst.msk [vmem:[#allocation2 + $0x99] sm:$0x1] %vm536, 0.0
        %v557 = vld [vmem:[%s445] sm:$0xf]
        %v558 = vld [vmem:[%s445 + $0x4] sm:$0xf]
        %v559 = vld [vmem:[%s445 + $0x8] sm:$0xf]
        %v560 = vld [vmem:[%s445 + $0xc] sm:$0xf]
        %v561 = vld [vmem:[%s445 + $0x10] sm:$0xf]
        %v562 = vld [vmem:[%s445 + $0x14] sm:$0xf]
        %v563 = vld [vmem:[%s445 + $0x18] sm:$0xf]
        %v564 = vld [vmem:[%s445 + $0x1c] sm:$0xf]
        %v565 = vunpack.c.l.bf16 %v557
        %v566 = vunpack.c.l.bf16 %v558
        %v567 = vunpack.c.l.bf16 %v559
        %v568 = vunpack.c.l.bf16 %v560
        %v569 = vunpack.c.l.bf16 %v561
        %v570 = vunpack.c.l.bf16 %v562
        %v571 = vunpack.c.l.bf16 %v563
        %v572 = vunpack.c.l.bf16 %v564
        %s573 = scalar_lea.vmem [#allocation2], 16
        %vm574 = vcmask 64512
        %575 = vst.msk [vmem:[%s573 + $0x1] sm:$0xff] %vm574, %v565
        %576 = vst.msk [vmem:[%s573 + $0x11] sm:$0xff] %vm574, %v566
        %577 = vst.msk [vmem:[%s573 + $0x21] sm:$0xff] %vm574, %v567
        %578 = vst.msk [vmem:[%s573 + $0x31] sm:$0xff] %vm574, %v568
        %579 = vst.msk [vmem:[%s573 + $0x41] sm:$0xff] %vm574, %v569
        %580 = vst.msk [vmem:[%s573 + $0x51] sm:$0xff] %vm574, %v570
        %581 = vst.msk [vmem:[%s573 + $0x61] sm:$0xff] %vm574, %v571
        %582 = vst.msk [vmem:[%s573 + $0x71] sm:$0xff] %vm574, %v572
        %vm583 = vcmask 72768
        %584 = vst.msk [vmem:[%s573 + $0x1] sm:$0xff] %vm583, 0.0
        %585 = vst.msk [vmem:[%s573 + $0x11] sm:$0xff] %vm583, 0.0
        %586 = vst.msk [vmem:[%s573 + $0x21] sm:$0xff] %vm583, 0.0
        %587 = vst.msk [vmem:[%s573 + $0x31] sm:$0xff] %vm583, 0.0
        %588 = vst.msk [vmem:[%s573 + $0x41] sm:$0xff] %vm583, 0.0
        %589 = vst.msk [vmem:[%s573 + $0x51] sm:$0xff] %vm583, 0.0
        %590 = vst.msk [vmem:[%s573 + $0x61] sm:$0xff] %vm583, 0.0
        %591 = vst.msk [vmem:[%s573 + $0x71] sm:$0xff] %vm583, 0.0
        %v592 = vld [vmem:[#allocation2] sm:$0xff]
        %v593 = vld [vmem:[#allocation2 + $0x10] sm:$0xff]
        %v594 = vld [vmem:[#allocation2 + $0x20] sm:$0xff]
        %v595 = vld [vmem:[#allocation2 + $0x30] sm:$0xff]
        %v596 = vld [vmem:[#allocation2 + $0x40] sm:$0xff]
        %v597 = vld [vmem:[#allocation2 + $0x50] sm:$0xff]
        %v598 = vld [vmem:[#allocation2 + $0x60] sm:$0xff]
        %v599 = vld [vmem:[#allocation2 + $0x70] sm:$0xff]
        %v600 = vld [vmem:[#allocation2 + $0x80] sm:$0xff]
        %v601 = vld [vmem:[#allocation2 + $0x90] sm:$0xff]
        %v602 = vld [vmem:[#allocation2 + $0x1] sm:$0xff]
        %v603 = vld [vmem:[#allocation2 + $0x11] sm:$0xff]
        %v604 = vld [vmem:[#allocation2 + $0x21] sm:$0xff]
        %v605 = vld [vmem:[#allocation2 + $0x31] sm:$0xff]
        %v606 = vld [vmem:[#allocation2 + $0x41] sm:$0xff]
        %v607 = vld [vmem:[#allocation2 + $0x51] sm:$0xff]
        %v608 = vld [vmem:[#allocation2 + $0x61] sm:$0xff]
        %v609 = vld [vmem:[#allocation2 + $0x71] sm:$0xff]
        %v610 = vld [vmem:[#allocation2 + $0x81] sm:$0xff]
        %v611 = vld [vmem:[#allocation2 + $0x91] sm:$0xff]
        %v612 = vld [vmem:[#allocation2 + $0x2] sm:$0xff]
        %v613 = vld [vmem:[#allocation2 + $0x12] sm:$0xff]
        %v614 = vld [vmem:[#allocation2 + $0x22] sm:$0xff]
        %v615 = vld [vmem:[#allocation2 + $0x32] sm:$0xff]
        %v616 = vld [vmem:[#allocation2 + $0x42] sm:$0xff]
        %v617 = vld [vmem:[#allocation2 + $0x52] sm:$0xff]
        %v618 = vld [vmem:[#allocation2 + $0x62] sm:$0xff]
        %v619 = vld [vmem:[#allocation2 + $0x72] sm:$0xff]
        %v620 = vld [vmem:[#allocation2 + $0x82] sm:$0xff]
        %v621 = vld [vmem:[#allocation2 + $0x92] sm:$0xff]
        %632 = vrot.lane.b32.xlu0 %v602, 9
        %v633 = vpop.permute.xlu0 %632
        %634 = vrot.lane.b32.xlu0 %v603, 9
        %v635 = vpop.permute.xlu0 %634
        %636 = vrot.lane.b32.xlu0 %v604, 9
        %v637 = vpop.permute.xlu0 %636
        %638 = vrot.lane.b32.xlu0 %v605, 9
        %v639 = vpop.permute.xlu0 %638
        %640 = vrot.lane.b32.xlu0 %v606, 9
        %v641 = vpop.permute.xlu0 %640
        %642 = vrot.lane.b32.xlu0 %v607, 9
        %v643 = vpop.permute.xlu0 %642
        %644 = vrot.lane.b32.xlu0 %v608, 9
        %v645 = vpop.permute.xlu0 %644
        %646 = vrot.lane.b32.xlu0 %v609, 9
        %v647 = vpop.permute.xlu0 %646
        %648 = vrot.lane.b32.xlu0 %v610, 9
        %v649 = vpop.permute.xlu0 %648
        %650 = vrot.lane.b32.xlu0 %v611, 9
        %v651 = vpop.permute.xlu0 %650
        %672 = vrot.lane.b32.xlu0 %v612, 18
        %v673 = vpop.permute.xlu0 %672
        %674 = vrot.lane.b32.xlu0 %v613, 18
        %v675 = vpop.permute.xlu0 %674
        %676 = vrot.lane.b32.xlu0 %v614, 18
        %v677 = vpop.permute.xlu0 %676
        %678 = vrot.lane.b32.xlu0 %v615, 18
        %v679 = vpop.permute.xlu0 %678
        %680 = vrot.lane.b32.xlu0 %v616, 18
        %v681 = vpop.permute.xlu0 %680
        %682 = vrot.lane.b32.xlu0 %v617, 18
        %v683 = vpop.permute.xlu0 %682
        %684 = vrot.lane.b32.xlu0 %v618, 18
        %v685 = vpop.permute.xlu0 %684
        %686 = vrot.lane.b32.xlu0 %v619, 18
        %v687 = vpop.permute.xlu0 %686
        %688 = vrot.lane.b32.xlu0 %v620, 18
        %v689 = vpop.permute.xlu0 %688
        %690 = vrot.lane.b32.xlu0 %v621, 18
        %v691 = vpop.permute.xlu0 %690
        %v702 = vsel %vm529, %v592, %v633
        %v703 = vsel %vm529, %v593, %v635
        %v704 = vsel %vm529, %v594, %v637
        %v705 = vsel %vm529, %v595, %v639
        %v706 = vsel %vm529, %v596, %v641
        %v707 = vsel %vm529, %v597, %v643
        %v708 = vsel %vm529, %v598, %v645
        %v709 = vsel %vm529, %v599, %v647
        %v710 = vsel %vm529, %v600, %v649
        %v711 = vsel %vm529, %v601, %v651
        %vm712 = vcmask 146432
        %v713 = vsel %vm712, %v702, %v673
        %v714 = vsel %vm712, %v703, %v675
        %v715 = vsel %vm712, %v704, %v677
        %v716 = vsel %vm712, %v705, %v679
        %v717 = vsel %vm712, %v706, %v681
        %v718 = vsel %vm712, %v707, %v683
        %v719 = vsel %vm712, %v708, %v685
        %v720 = vsel %vm712, %v709, %v687
        %v721 = vsel %vm712, %v710, %v689
        %v722 = vsel %vm712, %v711, %v691
        %731 = vrot.lane.b32.xlu0 %v714, 27
        %v732 = vpop.permute.xlu0 %731
        %733 = vrot.lane.b32.xlu0 %v715, 27
        %v734 = vpop.permute.xlu0 %733
        %735 = vrot.lane.b32.xlu0 %v716, 27
        %v736 = vpop.permute.xlu0 %735
        %737 = vrot.lane.b32.xlu0 %v717, 27
        %v738 = vpop.permute.xlu0 %737
        %739 = vrot.lane.b32.xlu0 %v718, 27
        %v740 = vpop.permute.xlu0 %739
        %741 = vrot.lane.b32.xlu0 %v719, 27
        %v742 = vpop.permute.xlu0 %741
        %743 = vrot.lane.b32.xlu0 %v720, 27
        %v744 = vpop.permute.xlu0 %743
        %745 = vrot.lane.b32.xlu0 %v721, 27
        %v746 = vpop.permute.xlu0 %745
        %756 = vrot.lane.b32.xlu0 %v715, 54
        %v757 = vpop.permute.xlu0 %756
        %758 = vrot.lane.b32.xlu0 %v716, 54
        %v759 = vpop.permute.xlu0 %758
        %760 = vrot.lane.b32.xlu0 %v717, 54
        %v761 = vpop.permute.xlu0 %760
        %762 = vrot.lane.b32.xlu0 %v718, 54
        %v763 = vpop.permute.xlu0 %762
        %764 = vrot.lane.b32.xlu0 %v719, 54
        %v765 = vpop.permute.xlu0 %764
        %766 = vrot.lane.b32.xlu0 %v720, 54
        %v767 = vpop.permute.xlu0 %766
        %768 = vrot.lane.b32.xlu0 %v721, 54
        %v769 = vpop.permute.xlu0 %768
        %770 = vrot.lane.b32.xlu0 %v722, 54
        %v771 = vpop.permute.xlu0 %770
        %vm780 = vcmask 220160
        %v781 = vsel %vm780, %v713, %v732
        %v782 = vsel %vm780, %v714, %v734
        %v783 = vsel %vm780, %v715, %v736
        %v784 = vsel %vm780, %v716, %v738
        %v785 = vsel %vm780, %v717, %v740
        %v786 = vsel %vm780, %v718, %v742
        %v787 = vsel %vm780, %v719, %v744
        %v788 = vsel %vm780, %v720, %v746
        %vm789 = vcmask 441344
        %v790 = vsel %vm789, %v781, %v757
        %v791 = vsel %vm789, %v782, %v759
        %v792 = vsel %vm789, %v783, %v761
        %v793 = vsel %vm789, %v784, %v763
        %v794 = vsel %vm789, %v785, %v765
        %v795 = vsel %vm789, %v786, %v767
        %v796 = vsel %vm789, %v787, %v769
        %v797 = vsel %vm789, %v788, %v771
        %v798 = vpack.c.bf16 %v791, %v790
        %v799 = vpack.c.bf16 %v793, %v792
        %v800 = vpack.c.bf16 %v795, %v794
        %v801 = vpack.c.bf16 %v797, %v796
        %v802 = vld [vmem:[#allocation12] sm:$0xf]
        %v803 = vld [vmem:[#allocation12 + $0x4] sm:$0xf]
        %v804 = vld [vmem:[#allocation12 + $0x8] sm:$0xf]
        %v805 = vld [vmem:[#allocation12 + $0xc] sm:$0xf]
        %v806 = vld [vmem:[#allocation12 + $0x10] sm:$0xf]
        %v807 = vld [vmem:[#allocation12 + $0x14] sm:$0xf]
        %v808 = vld [vmem:[#allocation12 + $0x18] sm:$0xf]
        %v809 = vld [vmem:[#allocation12 + $0x1c] sm:$0xf]
        %v810 = vld [vmem:[#allocation12 + $0x20] sm:$0xf]
        %v811 = vld [vmem:[#allocation12 + $0x24] sm:$0xf]
        %v812 = vld [vmem:[#allocation12 + $0x28] sm:$0x1]
        %v824 = vunpack.c.l.b16 %v802
        %v825 = vunpack.c.l.b16 %v803
        %v826 = vunpack.c.l.b16 %v804
        %v827 = vunpack.c.l.b16 %v805
        %v828 = vunpack.c.l.b16 %v806
        %v829 = vunpack.c.l.b16 %v807
        %v830 = vunpack.c.l.b16 %v808
        %v831 = vunpack.c.l.b16 %v809
        %v832 = vunpack.c.l.b16 %v810
        %v833 = vunpack.c.l.b16 %v811
        %v834 = vunpack.c.l.b16 %v812
        %v835 = vpack.c.b16 %v825, %v824
        %v836 = vpack.c.b16 %v827, %v826
        %v837 = vpack.c.b16 %v829, %v828
        %v838 = vpack.c.b16 %v831, %v830
        %v839 = vpack.c.b16 %v833, %v832
        %v840 = vpack.c.b16 %v834, %v834
        %vm846 = vcmask 662528
        %v848 = vsel %vm846, %v798, 0
        %v851 = vsel %vm846, %v799, 0
        %v854 = vsel %vm846, %v800, 0
        %v857 = vsel %vm846, %v801, 0
        %vm859 = vcmask 1040384
        %v860 = vsel 0, 4294967295, 65535
        %v861 = vsel %vm859, %v860, 0
        %v863 = vand.u32 %v840, %v861
        %865 = vmatprep.subr.bf16.mxu0 0
        %866 = vmatpush1.bf16.msra.mxu0 %v835
        %867 = vmatprep.subr.bf16.mxu0 0
        %868 = vmatpush1.bf16.msra.mxu0 %v836
        %869 = vmatprep.subr.bf16.mxu0 0
        %870 = vmatpush1.bf16.msra.mxu0 %v837
        %871 = vmatprep.subr.bf16.mxu0 0
        %872 = vmatpush1.bf16.msra.mxu0 %v838
        %873 = vmatprep.subr.bf16.mxu0 0
        %874 = vmatpush1.bf16.msra.mxu0 %v839
        %875 = vmatprep.subr.bf16.mxu0 0
        %876 = vmatpush1.bf16.msra.mxu0 %v863
        %877 = vmatprep.subr.bf16.mxu0 0
        %878 = vmatpush1.bf16.msra.mxu0 0
        %879 = vmatprep.subr.bf16.mxu0 0
        %880 = vmatpush1.bf16.msra.mxu0 0
        %881 = vmatprep.subr.bf16.mxu0 0
        %882 = vmatpush1.bf16.msra.mxu0 0
        %883 = vmatprep.subr.bf16.mxu0 0
        %884 = vmatpush1.bf16.msra.mxu0 0
        %885 = vmatprep.subr.bf16.mxu0 0
        %886 = vmatpush1.bf16.msra.mxu0 0
        %887 = vmatprep.subr.bf16.mxu0 0
        %888 = vmatpush1.bf16.msra.mxu0 0
        %889 = vmatprep.subr.bf16.mxu0 0
        %890 = vmatpush1.bf16.msra.mxu0 0
        %891 = vmatprep.subr.bf16.mxu0 0
        %892 = vmatpush1.bf16.msra.mxu0 0
        %893 = vmatprep.subr.bf16.mxu0 0
        %894 = vmatpush1.bf16.msra.mxu0 0
        %895 = vmatprep.subr.bf16.mxu0 0
        %896 = vmatpush1.bf16.msra.mxu0 0
        %897 = vmatprep.mubr.bf16.mxu0 0
        %898 = vmatmul.mubr.bf16.gmra.mrb[0].mxu0 %v848
        %v899 = vpop.f32.mrb[0].mxu0
        %v900 = vadd.f32 0.0, %v899
        %v901 = vpop.f32.mrb[0].mxu0
        %v902 = vpop.f32.mrb[0].mxu0
        %v903 = vadd.f32 0.0, %v902
        %v904 = vpop.f32.mrb[0].mxu0
        %905 = vmatprep.mubr.bf16.mxu0 0
        %906 = vmatmul.mubr.bf16.gmra.mrb[0].mxu0 %v851
        %v907 = vpop.f32.mrb[0].mxu0
        %v908 = vadd.f32 0.0, %v907
        %v909 = vpop.f32.mrb[0].mxu0
        %v910 = vpop.f32.mrb[0].mxu0
        %v911 = vadd.f32 0.0, %v910
        %v912 = vpop.f32.mrb[0].mxu0
        %913 = vmatprep.mubr.bf16.mxu0 0
        %914 = vmatmul.mubr.bf16.gmra.mrb[0].mxu0 %v854
        %v915 = vpop.f32.mrb[0].mxu0
        %v916 = vadd.f32 0.0, %v915
        %v917 = vpop.f32.mrb[0].mxu0
        %v918 = vpop.f32.mrb[0].mxu0
        %v919 = vadd.f32 0.0, %v918
        %v920 = vpop.f32.mrb[0].mxu0
        %921 = vmatprep.mubr.bf16.mxu0 0
        %922 = vmatmul.mubr.bf16.gmra.mrb[0].mxu0 %v857
        %v923 = vpop.f32.mrb[0].mxu0
        %v924 = vadd.f32 0.0, %v923
        %v925 = vpop.f32.mrb[0].mxu0
        %v926 = vpop.f32.mrb[0].mxu0
        %v927 = vadd.f32 0.0, %v926
        %v928 = vpop.f32.mrb[0].mxu0
        %929 = vdwg.mxu0
        %vm930 = vcmask 261120
        %v931 = vsel %vm930, %v900, 0.0
        %v932 = vsel %vm930, %v903, 0.0
        %v933 = vadd.f32 %v931, %v932
        %v934 = vsel %vm930, %v908, 0.0
        %v935 = vadd.f32 %v933, %v934
        %v936 = vsel %vm930, %v911, 0.0
        %v937 = vadd.f32 %v935, %v936
        %v938 = vsel %vm930, %v916, 0.0
        %v939 = vadd.f32 %v937, %v938
        %v940 = vsel %vm930, %v919, 0.0
        %v941 = vadd.f32 %v939, %v940
        %v942 = vsel %vm930, %v924, 0.0
        %v943 = vadd.f32 %v941, %v942
        %v944 = vsel %vm930, %v927, 0.0
        %v945 = vadd.f32 %v943, %v944
        %v946 = vrot.slane %v945, 4
        %v947 = vadd.f32 %v945, %v946
        %v948 = vrot.slane %v947, 2
        %v949 = vadd.f32 %v947, %v948
        %v950 = vrot.slane %v949, 1
        %v951 = vadd.f32 %v949, %v950
        %v952 = vmul.f32 %v951, 0.015625
        %v953 = vmul.f32 %v900, %v900
        %v954 = vmul.f32 %v903, %v903
        %v955 = vmul.f32 %v908, %v908
        %v956 = vmul.f32 %v911, %v911
        %v957 = vmul.f32 %v916, %v916
        %v958 = vmul.f32 %v919, %v919
        %v959 = vmul.f32 %v924, %v924
        %v960 = vmul.f32 %v927, %v927
        %v961 = vsel %vm930, %v953, 0.0
        %v962 = vsel %vm930, %v954, 0.0
        %v963 = vadd.f32 %v961, %v962
        %v964 = vsel %vm930, %v955, 0.0
        %v965 = vadd.f32 %v963, %v964
        %v966 = vsel %vm930, %v956, 0.0
        %v967 = vadd.f32 %v965, %v966
        %v968 = vsel %vm930, %v957, 0.0
        %v969 = vadd.f32 %v967, %v968
        %v970 = vsel %vm930, %v958, 0.0
        %v971 = vadd.f32 %v969, %v970
        %v972 = vsel %vm930, %v959, 0.0
        %v973 = vadd.f32 %v971, %v972
        %v974 = vsel %vm930, %v960, 0.0
        %v975 = vadd.f32 %v973, %v974
        %v976 = vrot.slane %v975, 4
        %v977 = vadd.f32 %v975, %v976
        %v978 = vrot.slane %v977, 2
        %v979 = vadd.f32 %v977, %v978
        %v980 = vrot.slane %v979, 1
        %v981 = vadd.f32 %v979, %v980
        %v982 = vmul.f32 %v981, 0.015625
        %v983 = vmul.f32 %v952, %v952
        %v984 = vsub.f32 %v982, %v983
        %v985 = vmax.f32 %v984, 0.0
        %v986 = vsub.f32 %v900, %v952
        %v987 = vsub.f32 %v903, %v952
        %v988 = vsub.f32 %v908, %v952
        %v989 = vsub.f32 %v911, %v952
        %v990 = vsub.f32 %v916, %v952
        %v991 = vsub.f32 %v919, %v952
        %v992 = vsub.f32 %v924, %v952
        %v993 = vsub.f32 %v927, %v952
        %v994 = vadd.f32 %v985, 1e-05
        %v995 = vrsqrt.pop %v994
        %v996 = vmul.f32 %v986, %v995
        %v997 = vmul.f32 %v987, %v995
        %v998 = vmul.f32 %v988, %v995
        %v999 = vmul.f32 %v989, %v995
        %v1000 = vmul.f32 %v990, %v995
        %v1001 = vmul.f32 %v991, %v995
        %v1002 = vmul.f32 %v992, %v995
        %v1003 = vmul.f32 %v993, %v995
        %vm1004 = vcmp.gt.f32.partialorder %v996, 0.0
        %vm1005 = vcmp.gt.f32.partialorder %v997, 0.0
        %vm1006 = vcmp.gt.f32.partialorder %v998, 0.0
        %vm1007 = vcmp.gt.f32.partialorder %v999, 0.0
        %vm1008 = vcmp.gt.f32.partialorder %v1000, 0.0
        %vm1009 = vcmp.gt.f32.partialorder %v1001, 0.0
        %vm1010 = vcmp.gt.f32.partialorder %v1002, 0.0
        %vm1011 = vcmp.gt.f32.partialorder %v1003, 0.0
        %v1012 = vmul.f32 %v996, 0.01
        %v1013 = vmul.f32 %v997, 0.01
        %v1014 = vmul.f32 %v998, 0.01
        %v1015 = vmul.f32 %v999, 0.01
        %v1016 = vmul.f32 %v1000, 0.01
        %v1017 = vmul.f32 %v1001, 0.01
        %v1018 = vmul.f32 %v1002, 0.01
        %v1019 = vmul.f32 %v1003, 0.01
        %v1020 = vsel %vm1004, %v996, %v1012
        %v1021 = vsel %vm1005, %v997, %v1013
        %v1022 = vsel %vm1006, %v998, %v1014
        %v1023 = vsel %vm1007, %v999, %v1015
        %v1024 = vsel %vm1008, %v1000, %v1016
        %v1025 = vsel %vm1009, %v1001, %v1017
        %v1026 = vsel %vm1010, %v1002, %v1018
        %v1027 = vsel %vm1011, %v1003, %v1019
        %1028 = vst.msk [vmem:[#allocation3] sm:$0xff] %vm930, 0.0
        %vm1029 = vcmask 254976
        %1030 = vst.msk [vmem:[#allocation3 + $0x8] sm:$0x3] %vm1029, 0.0
        %s1031 = scalar_lea.vmem [#allocation3], 144
        %1032 = vst.msk [vmem:[%s1031] sm:$0xff] %vm930, 0.0
        %1033 = vst.msk [vmem:[%s1031 + $0x8] sm:$0x3] %vm1029, 0.0
        %vm1034 = vcmask 253952
        %1035 = vst.msk [vmem:[#allocation3] sm:$0x1] %vm1034, 0.0
        %1036 = vst.msk [vmem:[#allocation3 + $0x10] sm:$0x1] %vm1034, 0.0
        %1037 = vst.msk [vmem:[#allocation3 + $0x20] sm:$0x1] %vm1034, 0.0
        %1038 = vst.msk [vmem:[#allocation3 + $0x30] sm:$0x1] %vm1034, 0.0
        %1039 = vst.msk [vmem:[#allocation3 + $0x40] sm:$0x1] %vm1034, 0.0
        %1040 = vst.msk [vmem:[#allocation3 + $0x50] sm:$0x1] %vm1034, 0.0
        %1041 = vst.msk [vmem:[#allocation3 + $0x60] sm:$0x1] %vm1034, 0.0
        %1042 = vst.msk [vmem:[#allocation3 + $0x70] sm:$0x1] %vm1034, 0.0
        %1043 = vst.msk [vmem:[#allocation3 + $0x80] sm:$0x1] %vm1034, 0.0
        %1044 = vst.msk [vmem:[#allocation3 + $0x90] sm:$0x1] %vm1034, 0.0
        %1045 = vst.msk [vmem:[#allocation3 + $0x9] sm:$0x1] %vm1034, 0.0
        %1046 = vst.msk [vmem:[#allocation3 + $0x19] sm:$0x1] %vm1034, 0.0
        %1047 = vst.msk [vmem:[#allocation3 + $0x29] sm:$0x1] %vm1034, 0.0
        %1048 = vst.msk [vmem:[#allocation3 + $0x39] sm:$0x1] %vm1034, 0.0
        %1049 = vst.msk [vmem:[#allocation3 + $0x49] sm:$0x1] %vm1034, 0.0
        %1050 = vst.msk [vmem:[#allocation3 + $0x59] sm:$0x1] %vm1034, 0.0
        %1051 = vst.msk [vmem:[#allocation3 + $0x69] sm:$0x1] %vm1034, 0.0
        %1052 = vst.msk [vmem:[#allocation3 + $0x79] sm:$0x1] %vm1034, 0.0
        %1053 = vst.msk [vmem:[#allocation3 + $0x89] sm:$0x1] %vm1034, 0.0
        %1054 = vst.msk [vmem:[#allocation3 + $0x99] sm:$0x1] %vm1034, 0.0
        %s1055 = scalar_lea.vmem [#allocation3], 16
        %1056 = vst.msk [vmem:[%s1055 + $0x1] sm:$0xff] %vm930, %v1020
        %1057 = vst.msk [vmem:[%s1055 + $0x11] sm:$0xff] %vm930, %v1021
        %1058 = vst.msk [vmem:[%s1055 + $0x21] sm:$0xff] %vm930, %v1022
        %1059 = vst.msk [vmem:[%s1055 + $0x31] sm:$0xff] %vm930, %v1023
        %1060 = vst.msk [vmem:[%s1055 + $0x41] sm:$0xff] %vm930, %v1024
        %1061 = vst.msk [vmem:[%s1055 + $0x51] sm:$0xff] %vm930, %v1025
        %1062 = vst.msk [vmem:[%s1055 + $0x61] sm:$0xff] %vm930, %v1026
        %1063 = vst.msk [vmem:[%s1055 + $0x71] sm:$0xff] %vm930, %v1027
        %v1064 = vld [vmem:[#allocation3] sm:$0xff]
        %v1065 = vld [vmem:[#allocation3 + $0x10] sm:$0xff]
        %v1066 = vld [vmem:[#allocation3 + $0x20] sm:$0xff]
        %v1067 = vld [vmem:[#allocation3 + $0x30] sm:$0xff]
        %v1068 = vld [vmem:[#allocation3 + $0x40] sm:$0xff]
        %v1069 = vld [vmem:[#allocation3 + $0x50] sm:$0xff]
        %v1070 = vld [vmem:[#allocation3 + $0x60] sm:$0xff]
        %v1071 = vld [vmem:[#allocation3 + $0x70] sm:$0xff]
        %v1072 = vld [vmem:[#allocation3 + $0x80] sm:$0xff]
        %v1073 = vld [vmem:[#allocation3 + $0x90] sm:$0xff]
        %v1074 = vld [vmem:[#allocation3 + $0x1] sm:$0xff]
        %v1075 = vld [vmem:[#allocation3 + $0x11] sm:$0xff]
        %v1076 = vld [vmem:[#allocation3 + $0x21] sm:$0xff]
        %v1077 = vld [vmem:[#allocation3 + $0x31] sm:$0xff]
        %v1078 = vld [vmem:[#allocation3 + $0x41] sm:$0xff]
        %v1079 = vld [vmem:[#allocation3 + $0x51] sm:$0xff]
        %v1080 = vld [vmem:[#allocation3 + $0x61] sm:$0xff]
        %v1081 = vld [vmem:[#allocation3 + $0x71] sm:$0xff]
        %v1082 = vld [vmem:[#allocation3 + $0x81] sm:$0xff]
        %v1083 = vld [vmem:[#allocation3 + $0x91] sm:$0xff]
        %v1084 = vld [vmem:[#allocation3 + $0x2] sm:$0xff]
        %v1085 = vld [vmem:[#allocation3 + $0x12] sm:$0xff]
        %v1086 = vld [vmem:[#allocation3 + $0x22] sm:$0xff]
        %v1087 = vld [vmem:[#allocation3 + $0x32] sm:$0xff]
        %v1088 = vld [vmem:[#allocation3 + $0x42] sm:$0xff]
        %v1089 = vld [vmem:[#allocation3 + $0x52] sm:$0xff]
        %v1090 = vld [vmem:[#allocation3 + $0x62] sm:$0xff]
        %v1091 = vld [vmem:[#allocation3 + $0x72] sm:$0xff]
        %v1092 = vld [vmem:[#allocation3 + $0x82] sm:$0xff]
        %v1093 = vld [vmem:[#allocation3 + $0x92] sm:$0xff]
        %1104 = vrot.lane.b32.xlu0 %v1074, 32
        %v1105 = vpop.permute.xlu0 %1104
        %1106 = vrot.lane.b32.xlu0 %v1075, 32
        %v1107 = vpop.permute.xlu0 %1106
        %1108 = vrot.lane.b32.xlu0 %v1076, 32
        %v1109 = vpop.permute.xlu0 %1108
        %1110 = vrot.lane.b32.xlu0 %v1077, 32
        %v1111 = vpop.permute.xlu0 %1110
        %1112 = vrot.lane.b32.xlu0 %v1078, 32
        %v1113 = vpop.permute.xlu0 %1112
        %1114 = vrot.lane.b32.xlu0 %v1079, 32
        %v1115 = vpop.permute.xlu0 %1114
        %1116 = vrot.lane.b32.xlu0 %v1080, 32
        %v1117 = vpop.permute.xlu0 %1116
        %1118 = vrot.lane.b32.xlu0 %v1081, 32
        %v1119 = vpop.permute.xlu0 %1118
        %1120 = vrot.lane.b32.xlu0 %v1082, 32
        %v1121 = vpop.permute.xlu0 %1120
        %1122 = vrot.lane.b32.xlu0 %v1083, 32
        %v1123 = vpop.permute.xlu0 %1122
        %1144 = vrot.lane.b32.xlu0 %v1084, 64
        %v1145 = vpop.permute.xlu0 %1144
        %1146 = vrot.lane.b32.xlu0 %v1085, 64
        %v1147 = vpop.permute.xlu0 %1146
        %1148 = vrot.lane.b32.xlu0 %v1086, 64
        %v1149 = vpop.permute.xlu0 %1148
        %1150 = vrot.lane.b32.xlu0 %v1087, 64
        %v1151 = vpop.permute.xlu0 %1150
        %1152 = vrot.lane.b32.xlu0 %v1088, 64
        %v1153 = vpop.permute.xlu0 %1152
        %1154 = vrot.lane.b32.xlu0 %v1089, 64
        %v1155 = vpop.permute.xlu0 %1154
        %1156 = vrot.lane.b32.xlu0 %v1090, 64
        %v1157 = vpop.permute.xlu0 %1156
        %1158 = vrot.lane.b32.xlu0 %v1091, 64
        %v1159 = vpop.permute.xlu0 %1158
        %1160 = vrot.lane.b32.xlu0 %v1092, 64
        %v1161 = vpop.permute.xlu0 %1160
        %1162 = vrot.lane.b32.xlu0 %v1093, 64
        %v1163 = vpop.permute.xlu0 %1162
        %v1174 = vsel %vm930, %v1064, %v1105
        %v1175 = vsel %vm930, %v1065, %v1107
        %v1176 = vsel %vm930, %v1066, %v1109
        %v1177 = vsel %vm930, %v1067, %v1111
        %v1178 = vsel %vm930, %v1068, %v1113
        %v1179 = vsel %vm930, %v1069, %v1115
        %v1180 = vsel %vm930, %v1070, %v1117
        %v1181 = vsel %vm930, %v1071, %v1119
        %v1182 = vsel %vm930, %v1072, %v1121
        %v1183 = vsel %vm930, %v1073, %v1123
        %vm1184 = vcmask 523264
        %v1185 = vsel %vm1184, %v1174, %v1145
        %v1186 = vsel %vm1184, %v1175, %v1147
        %v1187 = vsel %vm1184, %v1176, %v1149
        %v1188 = vsel %vm1184, %v1177, %v1151
        %v1189 = vsel %vm1184, %v1178, %v1153
        %v1190 = vsel %vm1184, %v1179, %v1155
        %v1191 = vsel %vm1184, %v1180, %v1157
        %v1192 = vsel %vm1184, %v1181, %v1159
        %v1193 = vsel %vm1184, %v1182, %v1161
        %v1194 = vsel %vm1184, %v1183, %v1163
        %1203 = vrot.lane.b32.xlu0 %v1186, 96
        %v1204 = vpop.permute.xlu0 %1203
        %1205 = vrot.lane.b32.xlu0 %v1187, 96
        %v1206 = vpop.permute.xlu0 %1205
        %1207 = vrot.lane.b32.xlu0 %v1188, 96
        %v1208 = vpop.permute.xlu0 %1207
        %1209 = vrot.lane.b32.xlu0 %v1189, 96
        %v1210 = vpop.permute.xlu0 %1209
        %1211 = vrot.lane.b32.xlu0 %v1190, 96
        %v1212 = vpop.permute.xlu0 %1211
        %1213 = vrot.lane.b32.xlu0 %v1191, 96
        %v1214 = vpop.permute.xlu0 %1213
        %1215 = vrot.lane.b32.xlu0 %v1192, 96
        %v1216 = vpop.permute.xlu0 %1215
        %1217 = vrot.lane.b32.xlu0 %v1193, 96
        %v1218 = vpop.permute.xlu0 %1217
        %1228 = vrot.lane.b32.xlu0 %v1187, 64
        %v1229 = vpop.permute.xlu0 %1228
        %1230 = vrot.lane.b32.xlu0 %v1188, 64
        %v1231 = vpop.permute.xlu0 %1230
        %1232 = vrot.lane.b32.xlu0 %v1189, 64
        %v1233 = vpop.permute.xlu0 %1232
        %1234 = vrot.lane.b32.xlu0 %v1190, 64
        %v1235 = vpop.permute.xlu0 %1234
        %1236 = vrot.lane.b32.xlu0 %v1191, 64
        %v1237 = vpop.permute.xlu0 %1236
        %1238 = vrot.lane.b32.xlu0 %v1192, 64
        %v1239 = vpop.permute.xlu0 %1238
        %1240 = vrot.lane.b32.xlu0 %v1193, 64
        %v1241 = vpop.permute.xlu0 %1240
        %1242 = vrot.lane.b32.xlu0 %v1194, 64
        %v1243 = vpop.permute.xlu0 %1242
        %vm1252 = vcmask 785408
        %v1253 = vsel %vm1252, %v1185, %v1204
        %v1254 = vsel %vm1252, %v1186, %v1206
        %v1255 = vsel %vm1252, %v1187, %v1208
        %v1256 = vsel %vm1252, %v1188, %v1210
        %v1257 = vsel %vm1252, %v1189, %v1212
        %v1258 = vsel %vm1252, %v1190, %v1214
        %v1259 = vsel %vm1252, %v1191, %v1216
        %v1260 = vsel %vm1252, %v1192, %v1218
        %v1261 = vsel %vm1184, %v1204, %v1229
        %v1262 = vsel %vm1184, %v1206, %v1231
        %v1263 = vsel %vm1184, %v1208, %v1233
        %v1264 = vsel %vm1184, %v1210, %v1235
        %v1265 = vsel %vm1184, %v1212, %v1237
        %v1266 = vsel %vm1184, %v1214, %v1239
        %v1267 = vsel %vm1184, %v1216, %v1241
        %v1268 = vsel %vm1184, %v1218, %v1243
        %v1269 = vpack.c.bf16 %v1254, %v1253
        %v1270 = vpack.c.bf16 %v1262, %v1261
        %v1271 = vpack.c.bf16 %v1231, %v1229
        %v1272 = vpack.c.bf16 %v1256, %v1255
        %v1273 = vpack.c.bf16 %v1264, %v1263
        %v1274 = vpack.c.bf16 %v1235, %v1233
        %v1275 = vpack.c.bf16 %v1258, %v1257
        %v1276 = vpack.c.bf16 %v1266, %v1265
        %v1277 = vpack.c.bf16 %v1239, %v1237
        %v1278 = vpack.c.bf16 %v1260, %v1259
        %v1279 = vpack.c.bf16 %v1268, %v1267
        %v1280 = vpack.c.bf16 %v1243, %v1241
        %v1281 = vld [vmem:[#allocation13] sm:$0xf]
        %v1282 = vld [vmem:[#allocation13 + $0x4] sm:$0xf]
        %v1283 = vld [vmem:[#allocation13 + $0x8] sm:$0xf]
        %v1284 = vld [vmem:[#allocation13 + $0xc] sm:$0xf]
        %v1285 = vld [vmem:[#allocation13 + $0x10] sm:$0xf]
        %v1286 = vld [vmem:[#allocation13 + $0x14] sm:$0xf]
        %v1287 = vld [vmem:[#allocation13 + $0x18] sm:$0xf]
        %v1288 = vld [vmem:[#allocation13 + $0x1c] sm:$0xf]
        %v1289 = vld [vmem:[#allocation13 + $0x20] sm:$0xf]
        %v1290 = vld [vmem:[#allocation13 + $0x24] sm:$0xf]
        %v1291 = vld [vmem:[#allocation13 + $0x28] sm:$0xf]
        %v1292 = vld [vmem:[#allocation13 + $0x2c] sm:$0xf]
        %v1293 = vld [vmem:[#allocation13 + $0x30] sm:$0xf]
        %v1294 = vld [vmem:[#allocation13 + $0x34] sm:$0xf]
        %v1295 = vld [vmem:[#allocation13 + $0x38] sm:$0xf]
        %v1296 = vld [vmem:[#allocation13 + $0x3c] sm:$0xf]
        %v1297 = vld [vmem:[#allocation13 + $0x40] sm:$0xf]
        %v1298 = vld [vmem:[#allocation13 + $0x44] sm:$0xf]
        %v1299 = vld [vmem:[#allocation13 + $0x48] sm:$0xf]
        %v1300 = vld [vmem:[#allocation13 + $0x4c] sm:$0xf]
        %v1301 = vld [vmem:[#allocation13 + $0x50] sm:$0xf]
        %v1302 = vld [vmem:[#allocation13 + $0x54] sm:$0xf]
        %v1303 = vld [vmem:[#allocation13 + $0x58] sm:$0xf]
        %v1304 = vld [vmem:[#allocation13 + $0x5c] sm:$0xf]
        %v1305 = vld [vmem:[#allocation13 + $0x60] sm:$0xf]
        %v1306 = vld [vmem:[#allocation13 + $0x64] sm:$0xf]
        %v1307 = vld [vmem:[#allocation13 + $0x68] sm:$0xf]
        %v1308 = vld [vmem:[#allocation13 + $0x6c] sm:$0xf]
        %v1309 = vld [vmem:[#allocation13 + $0x70] sm:$0xf]
        %v1310 = vld [vmem:[#allocation13 + $0x74] sm:$0xf]
        %v1311 = vld [vmem:[#allocation13 + $0x78] sm:$0xf]
        %v1312 = vld [vmem:[#allocation13 + $0x7c] sm:$0xf]
        %v1313 = vld [vmem:[#allocation13 + $0x80] sm:$0xf]
        %v1314 = vld [vmem:[#allocation13 + $0x84] sm:$0xf]
        %v1315 = vld [vmem:[#allocation13 + $0x88] sm:$0xf]
        %v1316 = vld [vmem:[#allocation13 + $0x8c] sm:$0xf]
        %v1353 = vunpack.c.l.b16 %v1281
        %v1354 = vunpack.c.l.b16 %v1282
        %v1355 = vunpack.c.l.b16 %v1283
        %v1356 = vunpack.c.l.b16 %v1284
        %v1357 = vunpack.c.l.b16 %v1285
        %v1358 = vunpack.c.l.b16 %v1286
        %v1359 = vunpack.c.l.b16 %v1287
        %v1360 = vunpack.c.l.b16 %v1288
        %v1361 = vunpack.c.l.b16 %v1289
        %v1362 = vunpack.c.l.b16 %v1290
        %v1363 = vunpack.c.l.b16 %v1291
        %v1364 = vunpack.c.l.b16 %v1292
        %v1365 = vunpack.c.l.b16 %v1293
        %v1366 = vunpack.c.l.b16 %v1294
        %v1367 = vunpack.c.l.b16 %v1295
        %v1368 = vunpack.c.l.b16 %v1296
        %v1369 = vunpack.c.l.b16 %v1297
        %v1370 = vunpack.c.l.b16 %v1298
        %v1371 = vunpack.c.l.b16 %v1299
        %v1372 = vunpack.c.l.b16 %v1300
        %v1373 = vunpack.c.l.b16 %v1301
        %v1374 = vunpack.c.l.b16 %v1302
        %v1375 = vunpack.c.l.b16 %v1303
        %v1376 = vunpack.c.l.b16 %v1304
        %v1377 = vunpack.c.l.b16 %v1305
        %v1378 = vunpack.c.l.b16 %v1306
        %v1379 = vunpack.c.l.b16 %v1307
        %v1380 = vunpack.c.l.b16 %v1308
        %v1381 = vunpack.c.l.b16 %v1309
        %v1382 = vunpack.c.l.b16 %v1310
        %v1383 = vunpack.c.l.b16 %v1311
        %v1384 = vunpack.c.l.b16 %v1312
        %v1385 = vunpack.c.l.b16 %v1313
        %v1386 = vunpack.c.l.b16 %v1314
        %v1387 = vunpack.c.l.b16 %v1315
        %v1388 = vunpack.c.l.b16 %v1316
        %v1389 = vpack.c.b16 %v1354, %v1353
        %v1390 = vpack.c.b16 %v1356, %v1355
        %v1391 = vpack.c.b16 %v1358, %v1357
        %v1392 = vpack.c.b16 %v1360, %v1359
        %v1393 = vpack.c.b16 %v1362, %v1361
        %v1394 = vpack.c.b16 %v1364, %v1363
        %v1395 = vpack.c.b16 %v1366, %v1365
        %v1396 = vpack.c.b16 %v1368, %v1367
        %v1397 = vpack.c.b16 %v1370, %v1369
        %v1398 = vpack.c.b16 %v1372, %v1371
        %v1399 = vpack.c.b16 %v1374, %v1373
        %v1400 = vpack.c.b16 %v1376, %v1375
        %v1401 = vpack.c.b16 %v1378, %v1377
        %v1402 = vpack.c.b16 %v1380, %v1379
        %v1403 = vpack.c.b16 %v1382, %v1381
        %v1404 = vpack.c.b16 %v1384, %v1383
        %v1405 = vpack.c.b16 %v1386, %v1385
        %v1406 = vpack.c.b16 %v1388, %v1387
        %v1426 = vsel %vm930, %v1271, 0
        %v1429 = vsel %vm930, %v1274, 0
        %v1432 = vsel %vm930, %v1277, 0
        %v1435 = vsel %vm930, %v1280, 0
        %1437 = vmatprep.subr.bf16.mxu0 0
        %1438 = vmatpush1.bf16.msra.mxu0 %v1389
        %1439 = vmatprep.subr.bf16.mxu0 0
        %1440 = vmatpush1.bf16.msra.mxu0 %v1390
        %1441 = vmatprep.subr.bf16.mxu0 0
        %1442 = vmatpush1.bf16.msra.mxu0 %v1391
        %1443 = vmatprep.subr.bf16.mxu0 0
        %1444 = vmatpush1.bf16.msra.mxu0 %v1392
        %1445 = vmatprep.subr.bf16.mxu0 0
        %1446 = vmatpush1.bf16.msra.mxu0 %v1393
        %1447 = vmatprep.subr.bf16.mxu0 0
        %1448 = vmatpush1.bf16.msra.mxu0 %v1394
        %1449 = vmatprep.subr.bf16.mxu0 0
        %1450 = vmatpush1.bf16.msra.mxu0 %v1395
        %1451 = vmatprep.subr.bf16.mxu0 0
        %1452 = vmatpush1.bf16.msra.mxu0 %v1396
        %1453 = vmatprep.subr.bf16.mxu0 0
        %1454 = vmatpush1.bf16.msra.mxu0 %v1397
        %1455 = vmatprep.subr.bf16.mxu0 0
        %1456 = vmatpush1.bf16.msra.mxu0 %v1398
        %1457 = vmatprep.subr.bf16.mxu0 0
        %1458 = vmatpush1.bf16.msra.mxu0 %v1399
        %1459 = vmatprep.subr.bf16.mxu0 0
        %1460 = vmatpush1.bf16.msra.mxu0 %v1400
        %1461 = vmatprep.subr.bf16.mxu0 0
        %1462 = vmatpush1.bf16.msra.mxu0 %v1401
        %1463 = vmatprep.subr.bf16.mxu0 0
        %1464 = vmatpush1.bf16.msra.mxu0 %v1402
        %1465 = vmatprep.subr.bf16.mxu0 0
        %1466 = vmatpush1.bf16.msra.mxu0 %v1403
        %1467 = vmatprep.subr.bf16.mxu0 0
        %1468 = vmatpush1.bf16.msra.mxu0 %v1404
        %1469 = vmatprep.mubr.bf16.mxu0 %v1270
        %1470 = vmatmul.mubr.bf16.gmra.mrb[0].mxu0 %v1269
        %v1471 = vpop.f32.mrb[0].mxu0
        %v1472 = vadd.f32 0.0, %v1471
        %v1473 = vpop.f32.mrb[0].mxu0
        %v1474 = vpop.f32.mrb[0].mxu0
        %v1475 = vadd.f32 0.0, %v1474
        %v1476 = vpop.f32.mrb[0].mxu0
        %1477 = vmatprep.mubr.bf16.mxu0 %v1273
        %1478 = vmatmul.mubr.bf16.gmra.mrb[0].mxu0 %v1272
        %v1479 = vpop.f32.mrb[0].mxu0
        %v1480 = vadd.f32 0.0, %v1479
        %v1481 = vpop.f32.mrb[0].mxu0
        %v1482 = vpop.f32.mrb[0].mxu0
        %v1483 = vadd.f32 0.0, %v1482
        %v1484 = vpop.f32.mrb[0].mxu0
        %1485 = vmatprep.mubr.bf16.mxu0 %v1276
        %1486 = vmatmul.mubr.bf16.gmra.mrb[0].mxu0 %v1275
        %v1487 = vpop.f32.mrb[0].mxu0
        %v1488 = vadd.f32 0.0, %v1487
        %v1489 = vpop.f32.mrb[0].mxu0
        %v1490 = vpop.f32.mrb[0].mxu0
        %v1491 = vadd.f32 0.0, %v1490
        %v1492 = vpop.f32.mrb[0].mxu0
        %1493 = vmatprep.mubr.bf16.mxu0 %v1279
        %1494 = vmatmul.mubr.bf16.gmra.mrb[0].mxu0 %v1278
        %v1495 = vpop.f32.mrb[0].mxu0
        %v1496 = vadd.f32 0.0, %v1495
        %v1497 = vpop.f32.mrb[0].mxu0
        %v1498 = vpop.f32.mrb[0].mxu0
        %v1499 = vadd.f32 0.0, %v1498
        %v1500 = vpop.f32.mrb[0].mxu0
        %1501 = vdwg.mxu0
        %1502 = vmatprep.subr.bf16.mxu0 0
        %1503 = vmatpush1.bf16.msra.mxu0 %v1405
        %1504 = vmatprep.subr.bf16.mxu0 0
        %1505 = vmatpush1.bf16.msra.mxu0 %v1406
        %1506 = vmatprep.subr.bf16.mxu0 0
        %1507 = vmatpush1.bf16.msra.mxu0 0
        %1508 = vmatprep.subr.bf16.mxu0 0
        %1509 = vmatpush1.bf16.msra.mxu0 0
        %1510 = vmatprep.subr.bf16.mxu0 0
        %1511 = vmatpush1.bf16.msra.mxu0 0
        %1512 = vmatprep.subr.bf16.mxu0 0
        %1513 = vmatpush1.bf16.msra.mxu0 0
        %1514 = vmatprep.subr.bf16.mxu0 0
        %1515 = vmatpush1.bf16.msra.mxu0 0
        %1516 = vmatprep.subr.bf16.mxu0 0
        %1517 = vmatpush1.bf16.msra.mxu0 0
        %1518 = vmatprep.subr.bf16.mxu0 0
        %1519 = vmatpush1.bf16.msra.mxu0 0
        %1520 = vmatprep.subr.bf16.mxu0 0
        %1521 = vmatpush1.bf16.msra.mxu0 0
        %1522 = vmatprep.subr.bf16.mxu0 0
        %1523 = vmatpush1.bf16.msra.mxu0 0
        %1524 = vmatprep.subr.bf16.mxu0 0
        %1525 = vmatpush1.bf16.msra.mxu0 0
        %1526 = vmatprep.subr.bf16.mxu0 0
        %1527 = vmatpush1.bf16.msra.mxu0 0
        %1528 = vmatprep.subr.bf16.mxu0 0
        %1529 = vmatpush1.bf16.msra.mxu0 0
        %1530 = vmatprep.subr.bf16.mxu0 0
        %1531 = vmatpush1.bf16.msra.mxu0 0
        %1532 = vmatprep.subr.bf16.mxu0 0
        %1533 = vmatpush1.bf16.msra.mxu0 0
        %1534 = vmatprep.mubr.bf16.mxu0 0
        %1535 = vmatmul.mubr.bf16.gmra.mrb[0].mxu0 %v1426
        %v1536 = vpop.f32.mrb[0].mxu0
        %v1537 = vadd.f32 %v1472, %v1536
        %v1538 = vpop.f32.mrb[0].mxu0
        %v1539 = vpop.f32.mrb[0].mxu0
        %v1540 = vadd.f32 %v1475, %v1539
        %v1541 = vpop.f32.mrb[0].mxu0
        %1542 = vmatprep.mubr.bf16.mxu0 0
        %1543 = vmatmul.mubr.bf16.gmra.mrb[0].mxu0 %v1429
        %v1544 = vpop.f32.mrb[0].mxu0
        %v1545 = vadd.f32 %v1480, %v1544
        %v1546 = vpop.f32.mrb[0].mxu0
        %v1547 = vpop.f32.mrb[0].mxu0
        %v1548 = vadd.f32 %v1483, %v1547
        %v1549 = vpop.f32.mrb[0].mxu0
        %1550 = vmatprep.mubr.bf16.mxu0 0
        %1551 = vmatmul.mubr.bf16.gmra.mrb[0].mxu0 %v1432
        %v1552 = vpop.f32.mrb[0].mxu0
        %v1553 = vadd.f32 %v1488, %v1552
        %v1554 = vpop.f32.mrb[0].mxu0
        %v1555 = vpop.f32.mrb[0].mxu0
        %v1556 = vadd.f32 %v1491, %v1555
        %v1557 = vpop.f32.mrb[0].mxu0
        %1558 = vmatprep.mubr.bf16.mxu0 0
        %1559 = vmatmul.mubr.bf16.gmra.mrb[0].mxu0 %v1435
        %v1560 = vpop.f32.mrb[0].mxu0
        %v1561 = vadd.f32 %v1496, %v1560
        %v1562 = vpop.f32.mrb[0].mxu0
        %v1563 = vpop.f32.mrb[0].mxu0
        %v1564 = vadd.f32 %v1499, %v1563
        %v1565 = vpop.f32.mrb[0].mxu0
        %1566 = vdwg.mxu0
        %v1567 = vsel %vm930, %v1537, 0.0
        %v1568 = vsel %vm930, %v1540, 0.0
        %v1569 = vadd.f32 %v1567, %v1568
        %v1570 = vsel %vm930, %v1545, 0.0
        %v1571 = vadd.f32 %v1569, %v1570
        %v1572 = vsel %vm930, %v1548, 0.0
        %v1573 = vadd.f32 %v1571, %v1572
        %v1574 = vsel %vm930, %v1553, 0.0
        %v1575 = vadd.f32 %v1573, %v1574
        %v1576 = vsel %vm930, %v1556, 0.0
        %v1577 = vadd.f32 %v1575, %v1576
        %v1578 = vsel %vm930, %v1561, 0.0
        %v1579 = vadd.f32 %v1577, %v1578
        %v1580 = vsel %vm930, %v1564, 0.0
        %v1581 = vadd.f32 %v1579, %v1580
        %v1582 = vrot.slane %v1581, 4
        %v1583 = vadd.f32 %v1581, %v1582
        %v1584 = vrot.slane %v1583, 2
        %v1585 = vadd.f32 %v1583, %v1584
        %v1586 = vrot.slane %v1585, 1
        %v1587 = vadd.f32 %v1585, %v1586
        %v1588 = vmul.f32 %v1587, 0.015625
        %v1589 = vmul.f32 %v1537, %v1537
        %v1590 = vmul.f32 %v1540, %v1540
        %v1591 = vmul.f32 %v1545, %v1545
        %v1592 = vmul.f32 %v1548, %v1548
        %v1593 = vmul.f32 %v1553, %v1553
        %v1594 = vmul.f32 %v1556, %v1556
        %v1595 = vmul.f32 %v1561, %v1561
        %v1596 = vmul.f32 %v1564, %v1564
        %v1597 = vsel %vm930, %v1589, 0.0
        %v1598 = vsel %vm930, %v1590, 0.0
        %v1599 = vadd.f32 %v1597, %v1598
        %v1600 = vsel %vm930, %v1591, 0.0
        %v1601 = vadd.f32 %v1599, %v1600
        %v1602 = vsel %vm930, %v1592, 0.0
        %v1603 = vadd.f32 %v1601, %v1602
        %v1604 = vsel %vm930, %v1593, 0.0
        %v1605 = vadd.f32 %v1603, %v1604
        %v1606 = vsel %vm930, %v1594, 0.0
        %v1607 = vadd.f32 %v1605, %v1606
        %v1608 = vsel %vm930, %v1595, 0.0
        %v1609 = vadd.f32 %v1607, %v1608
        %v1610 = vsel %vm930, %v1596, 0.0
        %v1611 = vadd.f32 %v1609, %v1610
        %v1612 = vrot.slane %v1611, 4
        %v1613 = vadd.f32 %v1611, %v1612
        %v1614 = vrot.slane %v1613, 2
        %v1615 = vadd.f32 %v1613, %v1614
        %v1616 = vrot.slane %v1615, 1
        %v1617 = vadd.f32 %v1615, %v1616
        %v1618 = vmul.f32 %v1617, 0.015625
        %v1619 = vmul.f32 %v1588, %v1588
        %v1620 = vsub.f32 %v1618, %v1619
        %v1621 = vmax.f32 %v1620, 0.0
        %v1622 = vsub.f32 %v1537, %v1588
        %v1623 = vsub.f32 %v1540, %v1588
        %v1624 = vsub.f32 %v1545, %v1588
        %v1625 = vsub.f32 %v1548, %v1588
        %v1626 = vsub.f32 %v1553, %v1588
        %v1627 = vsub.f32 %v1556, %v1588
        %v1628 = vsub.f32 %v1561, %v1588
        %v1629 = vsub.f32 %v1564, %v1588
        %v1630 = vadd.f32 %v1621, 1e-05
        %v1631 = vrsqrt.pop %v1630
        %v1632 = vmul.f32 %v1622, %v1631
        %v1633 = vmul.f32 %v1623, %v1631
        %v1634 = vmul.f32 %v1624, %v1631
        %v1635 = vmul.f32 %v1625, %v1631
        %v1636 = vmul.f32 %v1626, %v1631
        %v1637 = vmul.f32 %v1627, %v1631
        %v1638 = vmul.f32 %v1628, %v1631
        %v1639 = vmul.f32 %v1629, %v1631
        %vm1640 = vcmp.gt.f32.partialorder %v1632, 0.0
        %vm1641 = vcmp.gt.f32.partialorder %v1633, 0.0
        %vm1642 = vcmp.gt.f32.partialorder %v1634, 0.0
        %vm1643 = vcmp.gt.f32.partialorder %v1635, 0.0
        %vm1644 = vcmp.gt.f32.partialorder %v1636, 0.0
        %vm1645 = vcmp.gt.f32.partialorder %v1637, 0.0
        %vm1646 = vcmp.gt.f32.partialorder %v1638, 0.0
        %vm1647 = vcmp.gt.f32.partialorder %v1639, 0.0
        %v1648 = vmul.f32 %v1632, 0.01
        %v1649 = vmul.f32 %v1633, 0.01
        %v1650 = vmul.f32 %v1634, 0.01
        %v1651 = vmul.f32 %v1635, 0.01
        %v1652 = vmul.f32 %v1636, 0.01
        %v1653 = vmul.f32 %v1637, 0.01
        %v1654 = vmul.f32 %v1638, 0.01
        %v1655 = vmul.f32 %v1639, 0.01
        %v1656 = vsel %vm1640, %v1632, %v1648
        %v1657 = vsel %vm1641, %v1633, %v1649
        %v1658 = vsel %vm1642, %v1634, %v1650
        %v1659 = vsel %vm1643, %v1635, %v1651
        %v1660 = vsel %vm1644, %v1636, %v1652
        %v1661 = vsel %vm1645, %v1637, %v1653
        %v1662 = vsel %vm1646, %v1638, %v1654
        %v1663 = vsel %vm1647, %v1639, %v1655
        %vm1664 = vcmask 326656
        %1665 = vst.msk [vmem:[#allocation4] sm:$0xff] %vm1664, 0.0
        %1666 = vst.msk [vmem:[#allocation4 + $0x8] sm:$0xff] %vm1664, 0.0
        %vm1667 = vcmask 320512
        %1668 = vst.msk [vmem:[#allocation4 + $0x10] sm:$0x3] %vm1667, 0.0
        %s1669 = scalar_lea.vmem [#allocation4], 408
        %1670 = vst.msk [vmem:[%s1669] sm:$0xff] %vm1664, 0.0
        %1671 = vst.msk [vmem:[%s1669 + $0x8] sm:$0xff] %vm1664, 0.0
        %1672 = vst.msk [vmem:[%s1669 + $0x10] sm:$0x3] %vm1667, 0.0
        %vm1673 = vcmask 319488
        %1674 = vst.msk [vmem:[#allocation4] sm:$0x1] %vm1673, 0.0
        %1675 = vst.msk [vmem:[#allocation4 + $0x18] sm:$0x1] %vm1673, 0.0
        %1676 = vst.msk [vmem:[#allocation4 + $0x30] sm:$0x1] %vm1673, 0.0
        %1677 = vst.msk [vmem:[#allocation4 + $0x48] sm:$0x1] %vm1673, 0.0
        %1678 = vst.msk [vmem:[#allocation4 + $0x60] sm:$0x1] %vm1673, 0.0
        %1679 = vst.msk [vmem:[#allocation4 + $0x78] sm:$0x1] %vm1673, 0.0
        %1680 = vst.msk [vmem:[#allocation4 + $0x90] sm:$0x1] %vm1673, 0.0
        %1681 = vst.msk [vmem:[#allocation4 + $0xa8] sm:$0x1] %vm1673, 0.0
        %1682 = vst.msk [vmem:[#allocation4 + $0xc0] sm:$0x1] %vm1673, 0.0
        %1683 = vst.msk [vmem:[#allocation4 + $0xd8] sm:$0x1] %vm1673, 0.0
        %1684 = vst.msk [vmem:[#allocation4 + $0xf0] sm:$0x1] %vm1673, 0.0
        %1685 = vst.msk [vmem:[#allocation4 + $0x108] sm:$0x1] %vm1673, 0.0
        %1686 = vst.msk [vmem:[#allocation4 + $0x120] sm:$0x1] %vm1673, 0.0
        %1687 = vst.msk [vmem:[#allocation4 + $0x138] sm:$0x1] %vm1673, 0.0
        %1688 = vst.msk [vmem:[#allocation4 + $0x150] sm:$0x1] %vm1673, 0.0
        %1689 = vst.msk [vmem:[#allocation4 + $0x168] sm:$0x1] %vm1673, 0.0
        %1690 = vst.msk [vmem:[#allocation4 + $0x180] sm:$0x1] %vm1673, 0.0
        %1691 = vst.msk [vmem:[#allocation4 + $0x198] sm:$0x1] %vm1673, 0.0
        %1692 = vst.msk [vmem:[#allocation4 + $0x11] sm:$0x1] %vm1673, 0.0
        %1693 = vst.msk [vmem:[#allocation4 + $0x29] sm:$0x1] %vm1673, 0.0
        %1694 = vst.msk [vmem:[#allocation4 + $0x41] sm:$0x1] %vm1673, 0.0
        %1695 = vst.msk [vmem:[#allocation4 + $0x59] sm:$0x1] %vm1673, 0.0
        %1696 = vst.msk [vmem:[#allocation4 + $0x71] sm:$0x1] %vm1673, 0.0
        %1697 = vst.msk [vmem:[#allocation4 + $0x89] sm:$0x1] %vm1673, 0.0
        %1698 = vst.msk [vmem:[#allocation4 + $0xa1] sm:$0x1] %vm1673, 0.0
        %1699 = vst.msk [vmem:[#allocation4 + $0xb9] sm:$0x1] %vm1673, 0.0
        %1700 = vst.msk [vmem:[#allocation4 + $0xd1] sm:$0x1] %vm1673, 0.0
        %1701 = vst.msk [vmem:[#allocation4 + $0xe9] sm:$0x1] %vm1673, 0.0
        %1702 = vst.msk [vmem:[#allocation4 + $0x101] sm:$0x1] %vm1673, 0.0
        %1703 = vst.msk [vmem:[#allocation4 + $0x119] sm:$0x1] %vm1673, 0.0
        %1704 = vst.msk [vmem:[#allocation4 + $0x131] sm:$0x1] %vm1673, 0.0
        %1705 = vst.msk [vmem:[#allocation4 + $0x149] sm:$0x1] %vm1673, 0.0
        %1706 = vst.msk [vmem:[#allocation4 + $0x161] sm:$0x1] %vm1673, 0.0
        %1707 = vst.msk [vmem:[#allocation4 + $0x179] sm:$0x1] %vm1673, 0.0
        %1708 = vst.msk [vmem:[#allocation4 + $0x191] sm:$0x1] %vm1673, 0.0
        %1709 = vst.msk [vmem:[#allocation4 + $0x1a9] sm:$0x1] %vm1673, 0.0
        %v1710 = vld [vmem:[%s454] sm:$0xf]
        %v1711 = vld [vmem:[%s454 + $0x4] sm:$0xf]
        %v1712 = vld [vmem:[%s454 + $0x8] sm:$0xf]
        %v1713 = vld [vmem:[%s454 + $0xc] sm:$0xf]
        %v1714 = vld [vmem:[%s454 + $0x10] sm:$0xf]
        %v1715 = vld [vmem:[%s454 + $0x14] sm:$0xf]
        %v1716 = vld [vmem:[%s454 + $0x18] sm:$0xf]
        %v1717 = vld [vmem:[%s454 + $0x1c] sm:$0xf]
        %v1718 = vld [vmem:[%s454 + $0x20] sm:$0xf]
        %v1719 = vld [vmem:[%s454 + $0x24] sm:$0xf]
        %v1720 = vld [vmem:[%s454 + $0x28] sm:$0xf]
        %v1721 = vld [vmem:[%s454 + $0x2c] sm:$0xf]
        %v1722 = vld [vmem:[%s454 + $0x30] sm:$0xf]
        %v1723 = vld [vmem:[%s454 + $0x34] sm:$0xf]
        %v1724 = vld [vmem:[%s454 + $0x38] sm:$0xf]
        %v1725 = vld [vmem:[%s454 + $0x3c] sm:$0xf]
        %v1726 = vld [vmem:[%s454 + $0x40] sm:$0xf]
        %v1727 = vld [vmem:[%s454 + $0x44] sm:$0xf]
        %v1728 = vld [vmem:[%s454 + $0x48] sm:$0xf]
        %v1729 = vld [vmem:[%s454 + $0x4c] sm:$0xf]
        %v1730 = vld [vmem:[%s454 + $0x50] sm:$0xf]
        %v1731 = vld [vmem:[%s454 + $0x54] sm:$0xf]
        %v1732 = vld [vmem:[%s454 + $0x58] sm:$0xf]
        %v1733 = vld [vmem:[%s454 + $0x5c] sm:$0xf]
        %v1734 = vld [vmem:[%s454 + $0x60] sm:$0xf]
        %v1735 = vld [vmem:[%s454 + $0x64] sm:$0xf]
        %v1736 = vld [vmem:[%s454 + $0x68] sm:$0xf]
        %v1737 = vld [vmem:[%s454 + $0x6c] sm:$0xf]
        %v1738 = vld [vmem:[%s454 + $0x70] sm:$0xf]
        %v1739 = vld [vmem:[%s454 + $0x74] sm:$0xf]
        %v1740 = vld [vmem:[%s454 + $0x78] sm:$0xf]
        %v1741 = vld [vmem:[%s454 + $0x7c] sm:$0xf]
        %v1742 = vunpack.c.l.bf16 %v1710
        %v1743 = vunpack.c.l.bf16 %v1711
        %v1744 = vunpack.c.l.bf16 %v1712
        %v1745 = vunpack.c.l.bf16 %v1713
        %v1746 = vunpack.c.l.bf16 %v1714
        %v1747 = vunpack.c.l.bf16 %v1715
        %v1748 = vunpack.c.l.bf16 %v1716
        %v1749 = vunpack.c.l.bf16 %v1717
        %v1750 = vunpack.c.l.bf16 %v1718
        %v1751 = vunpack.c.l.bf16 %v1719
        %v1752 = vunpack.c.l.bf16 %v1720
        %v1753 = vunpack.c.l.bf16 %v1721
        %v1754 = vunpack.c.l.bf16 %v1722
        %v1755 = vunpack.c.l.bf16 %v1723
        %v1756 = vunpack.c.l.bf16 %v1724
        %v1757 = vunpack.c.l.bf16 %v1725
        %v1758 = vunpack.c.l.bf16 %v1726
        %v1759 = vunpack.c.l.bf16 %v1727
        %v1760 = vunpack.c.l.bf16 %v1728
        %v1761 = vunpack.c.l.bf16 %v1729
        %v1762 = vunpack.c.l.bf16 %v1730
        %v1763 = vunpack.c.l.bf16 %v1731
        %v1764 = vunpack.c.l.bf16 %v1732
        %v1765 = vunpack.c.l.bf16 %v1733
        %v1766 = vunpack.c.l.bf16 %v1734
        %v1767 = vunpack.c.l.bf16 %v1735
        %v1768 = vunpack.c.l.bf16 %v1736
        %v1769 = vunpack.c.l.bf16 %v1737
        %v1770 = vunpack.c.l.bf16 %v1738
        %v1771 = vunpack.c.l.bf16 %v1739
        %v1772 = vunpack.c.l.bf16 %v1740
        %v1773 = vunpack.c.l.bf16 %v1741
        %s1774 = scalar_lea.vmem [#allocation4], 24
        %1775 = vst.msk [vmem:[%s1774 + $0x1] sm:$0xff] %vm574, %v1742
        %1776 = vst.msk [vmem:[%s1774 + $0x9] sm:$0xff] %vm574, %v1743
        %1777 = vst.msk [vmem:[%s1774 + $0x19] sm:$0xff] %vm574, %v1744
        %1778 = vst.msk [vmem:[%s1774 + $0x21] sm:$0xff] %vm574, %v1745
        %1779 = vst.msk [vmem:[%s1774 + $0x31] sm:$0xff] %vm574, %v1746
        %1780 = vst.msk [vmem:[%s1774 + $0x39] sm:$0xff] %vm574, %v1747
        %1781 = vst.msk [vmem:[%s1774 + $0x49] sm:$0xff] %vm574, %v1748
        %1782 = vst.msk [vmem:[%s1774 + $0x51] sm:$0xff] %vm574, %v1749
        %1783 = vst.msk [vmem:[%s1774 + $0x61] sm:$0xff] %vm574, %v1750
        %1784 = vst.msk [vmem:[%s1774 + $0x69] sm:$0xff] %vm574, %v1751
        %1785 = vst.msk [vmem:[%s1774 + $0x79] sm:$0xff] %vm574, %v1752
        %1786 = vst.msk [vmem:[%s1774 + $0x81] sm:$0xff] %vm574, %v1753
        %1787 = vst.msk [vmem:[%s1774 + $0x91] sm:$0xff] %vm574, %v1754
        %1788 = vst.msk [vmem:[%s1774 + $0x99] sm:$0xff] %vm574, %v1755
        %1789 = vst.msk [vmem:[%s1774 + $0xa9] sm:$0xff] %vm574, %v1756
        %1790 = vst.msk [vmem:[%s1774 + $0xb1] sm:$0xff] %vm574, %v1757
        %1791 = vst.msk [vmem:[%s1774 + $0xc1] sm:$0xff] %vm574, %v1758
        %1792 = vst.msk [vmem:[%s1774 + $0xc9] sm:$0xff] %vm574, %v1759
        %1793 = vst.msk [vmem:[%s1774 + $0xd9] sm:$0xff] %vm574, %v1760
        %1794 = vst.msk [vmem:[%s1774 + $0xe1] sm:$0xff] %vm574, %v1761
        %1795 = vst.msk [vmem:[%s1774 + $0xf1] sm:$0xff] %vm574, %v1762
        %1796 = vst.msk [vmem:[%s1774 + $0xf9] sm:$0xff] %vm574, %v1763
        %1797 = vst.msk [vmem:[%s1774 + $0x109] sm:$0xff] %vm574, %v1764
        %1798 = vst.msk [vmem:[%s1774 + $0x111] sm:$0xff] %vm574, %v1765
        %1799 = vst.msk [vmem:[%s1774 + $0x121] sm:$0xff] %vm574, %v1766
        %1800 = vst.msk [vmem:[%s1774 + $0x129] sm:$0xff] %vm574, %v1767
        %1801 = vst.msk [vmem:[%s1774 + $0x139] sm:$0xff] %vm574, %v1768
        %1802 = vst.msk [vmem:[%s1774 + $0x141] sm:$0xff] %vm574, %v1769
        %1803 = vst.msk [vmem:[%s1774 + $0x151] sm:$0xff] %vm574, %v1770
        %1804 = vst.msk [vmem:[%s1774 + $0x159] sm:$0xff] %vm574, %v1771
        %1805 = vst.msk [vmem:[%s1774 + $0x169] sm:$0xff] %vm574, %v1772
        %1806 = vst.msk [vmem:[%s1774 + $0x171] sm:$0xff] %vm574, %v1773
        %v1807 = vlaneseq
        %v1808 = vshrl.u32 %v1807, 7
        %v1809 = vsub.s32 0, %v1808
        %v1810 = vrot.slane %v1656, %v1809
        %v1811 = vlaneseq
        %v1812 = vshrl.u32 %v1811, 7
        %v1813 = vsub.s32 0, %v1812
        %v1814 = vrot.slane %v1657, %v1813
        %v1815 = vlaneseq
        %v1816 = vshrl.u32 %v1815, 7
        %v1817 = vsub.s32 0, %v1816
        %v1818 = vrot.slane %v1658, %v1817
        %v1819 = vlaneseq
        %v1820 = vshrl.u32 %v1819, 7
        %v1821 = vsub.s32 0, %v1820
        %v1822 = vrot.slane %v1659, %v1821
        %v1823 = vlaneseq
        %v1824 = vshrl.u32 %v1823, 7
        %v1825 = vsub.s32 0, %v1824
        %v1826 = vrot.slane %v1660, %v1825
        %v1827 = vlaneseq
        %v1828 = vshrl.u32 %v1827, 7
        %v1829 = vsub.s32 0, %v1828
        %v1830 = vrot.slane %v1661, %v1829
        %v1831 = vlaneseq
        %v1832 = vshrl.u32 %v1831, 7
        %v1833 = vsub.s32 0, %v1832
        %v1834 = vrot.slane %v1662, %v1833
        %v1835 = vlaneseq
        %v1836 = vshrl.u32 %v1835, 7
        %v1837 = vsub.s32 0, %v1836
        %v1838 = vrot.slane %v1663, %v1837
        %1847 = vrot.lane.b32.xlu0 %v1810, 8
        %v1848 = vpop.permute.xlu0 %1847
        %1849 = vrot.lane.b32.xlu0 %v1814, 8
        %v1850 = vpop.permute.xlu0 %1849
        %1851 = vrot.lane.b32.xlu0 %v1818, 8
        %v1852 = vpop.permute.xlu0 %1851
        %1853 = vrot.lane.b32.xlu0 %v1822, 8
        %v1854 = vpop.permute.xlu0 %1853
        %1855 = vrot.lane.b32.xlu0 %v1826, 8
        %v1856 = vpop.permute.xlu0 %1855
        %1857 = vrot.lane.b32.xlu0 %v1830, 8
        %v1858 = vpop.permute.xlu0 %1857
        %1859 = vrot.lane.b32.xlu0 %v1834, 8
        %v1860 = vpop.permute.xlu0 %1859
        %1861 = vrot.lane.b32.xlu0 %v1838, 8
        %v1862 = vpop.permute.xlu0 %1861
        %vm1871 = vcmask 320576
        %1872 = vst.msk [vmem:[%s1774 + $0x1] sm:$0x3] %vm1871, %v1848
        %1873 = vst.msk [vmem:[%s1774 + $0x19] sm:$0x3] %vm1871, %v1848
        %1874 = vst.msk [vmem:[%s1774 + $0x31] sm:$0x3] %vm1871, %v1850
        %1875 = vst.msk [vmem:[%s1774 + $0x49] sm:$0x3] %vm1871, %v1850
        %1876 = vst.msk [vmem:[%s1774 + $0x61] sm:$0x3] %vm1871, %v1852
        %1877 = vst.msk [vmem:[%s1774 + $0x79] sm:$0x3] %vm1871, %v1852
        %1878 = vst.msk [vmem:[%s1774 + $0x91] sm:$0x3] %vm1871, %v1854
        %1879 = vst.msk [vmem:[%s1774 + $0xa9] sm:$0x3] %vm1871, %v1854
        %1880 = vst.msk [vmem:[%s1774 + $0xc1] sm:$0x3] %vm1871, %v1856
        %1881 = vst.msk [vmem:[%s1774 + $0xd9] sm:$0x3] %vm1871, %v1856
        %1882 = vst.msk [vmem:[%s1774 + $0xf1] sm:$0x3] %vm1871, %v1858
        %1883 = vst.msk [vmem:[%s1774 + $0x109] sm:$0x3] %vm1871, %v1858
        %1884 = vst.msk [vmem:[%s1774 + $0x121] sm:$0x3] %vm1871, %v1860
        %1885 = vst.msk [vmem:[%s1774 + $0x139] sm:$0x3] %vm1871, %v1860
        %1886 = vst.msk [vmem:[%s1774 + $0x151] sm:$0x3] %vm1871, %v1862
        %1887 = vst.msk [vmem:[%s1774 + $0x169] sm:$0x3] %vm1871, %v1862
        %v1888 = vlaneseq
        %v1889 = vshrl.u32 %v1888, 7
        %v1890 = vsub.s32 1, %v1889
        %v1891 = vrot.slane %v1656, %v1890
        %v1892 = vlaneseq
        %v1893 = vshrl.u32 %v1892, 7
        %v1894 = vsub.s32 1, %v1893
        %v1895 = vrot.slane %v1657, %v1894
        %v1896 = vlaneseq
        %v1897 = vshrl.u32 %v1896, 7
        %v1898 = vsub.s32 1, %v1897
        %v1899 = vrot.slane %v1658, %v1898
        %v1900 = vlaneseq
        %v1901 = vshrl.u32 %v1900, 7
        %v1902 = vsub.s32 1, %v1901
        %v1903 = vrot.slane %v1659, %v1902
        %v1904 = vlaneseq
        %v1905 = vshrl.u32 %v1904, 7
        %v1906 = vsub.s32 1, %v1905
        %v1907 = vrot.slane %v1660, %v1906
        %v1908 = vlaneseq
        %v1909 = vshrl.u32 %v1908, 7
        %v1910 = vsub.s32 1, %v1909
        %v1911 = vrot.slane %v1661, %v1910
        %v1912 = vlaneseq
        %v1913 = vshrl.u32 %v1912, 7
        %v1914 = vsub.s32 1, %v1913
        %v1915 = vrot.slane %v1662, %v1914
        %v1916 = vlaneseq
        %v1917 = vshrl.u32 %v1916, 7
        %v1918 = vsub.s32 1, %v1917
        %v1919 = vrot.slane %v1663, %v1918
        %1928 = vrot.lane.b32.xlu0 %v1891, 8
        %v1929 = vpop.permute.xlu0 %1928
        %1930 = vrot.lane.b32.xlu0 %v1895, 8
        %v1931 = vpop.permute.xlu0 %1930
        %1932 = vrot.lane.b32.xlu0 %v1899, 8
        %v1933 = vpop.permute.xlu0 %1932
        %1934 = vrot.lane.b32.xlu0 %v1903, 8
        %v1935 = vpop.permute.xlu0 %1934
        %1936 = vrot.lane.b32.xlu0 %v1907, 8
        %v1937 = vpop.permute.xlu0 %1936
        %1938 = vrot.lane.b32.xlu0 %v1911, 8
        %v1939 = vpop.permute.xlu0 %1938
        %1940 = vrot.lane.b32.xlu0 %v1915, 8
        %v1941 = vpop.permute.xlu0 %1940
        %1942 = vrot.lane.b32.xlu0 %v1919, 8
        %v1943 = vpop.permute.xlu0 %1942
        %1952 = vst.msk [vmem:[%s1774 + $0x3] sm:$0x3] %vm1871, %v1929
        %1953 = vst.msk [vmem:[%s1774 + $0x1b] sm:$0x3] %vm1871, %v1929
        %1954 = vst.msk [vmem:[%s1774 + $0x33] sm:$0x3] %vm1871, %v1931
        %1955 = vst.msk [vmem:[%s1774 + $0x4b] sm:$0x3] %vm1871, %v1931
        %1956 = vst.msk [vmem:[%s1774 + $0x63] sm:$0x3] %vm1871, %v1933
        %1957 = vst.msk [vmem:[%s1774 + $0x7b] sm:$0x3] %vm1871, %v1933
        %1958 = vst.msk [vmem:[%s1774 + $0x93] sm:$0x3] %vm1871, %v1935
        %1959 = vst.msk [vmem:[%s1774 + $0xab] sm:$0x3] %vm1871, %v1935
        %1960 = vst.msk [vmem:[%s1774 + $0xc3] sm:$0x3] %vm1871, %v1937
        %1961 = vst.msk [vmem:[%s1774 + $0xdb] sm:$0x3] %vm1871, %v1937
        %1962 = vst.msk [vmem:[%s1774 + $0xf3] sm:$0x3] %vm1871, %v1939
        %1963 = vst.msk [vmem:[%s1774 + $0x10b] sm:$0x3] %vm1871, %v1939
        %1964 = vst.msk [vmem:[%s1774 + $0x123] sm:$0x3] %vm1871, %v1941
        %1965 = vst.msk [vmem:[%s1774 + $0x13b] sm:$0x3] %vm1871, %v1941
        %1966 = vst.msk [vmem:[%s1774 + $0x153] sm:$0x3] %vm1871, %v1943
        %1967 = vst.msk [vmem:[%s1774 + $0x16b] sm:$0x3] %vm1871, %v1943
        %v1968 = vlaneseq
        %v1969 = vshrl.u32 %v1968, 7
        %v1970 = vsub.s32 2, %v1969
        %v1971 = vrot.slane %v1656, %v1970
        %v1972 = vlaneseq
        %v1973 = vshrl.u32 %v1972, 7
        %v1974 = vsub.s32 2, %v1973
        %v1975 = vrot.slane %v1657, %v1974
        %v1976 = vlaneseq
        %v1977 = vshrl.u32 %v1976, 7
        %v1978 = vsub.s32 2, %v1977
        %v1979 = vrot.slane %v1658, %v1978
        %v1980 = vlaneseq
        %v1981 = vshrl.u32 %v1980, 7
        %v1982 = vsub.s32 2, %v1981
        %v1983 = vrot.slane %v1659, %v1982
        %v1984 = vlaneseq
        %v1985 = vshrl.u32 %v1984, 7
        %v1986 = vsub.s32 2, %v1985
        %v1987 = vrot.slane %v1660, %v1986
        %v1988 = vlaneseq
        %v1989 = vshrl.u32 %v1988, 7
        %v1990 = vsub.s32 2, %v1989
        %v1991 = vrot.slane %v1661, %v1990
        %v1992 = vlaneseq
        %v1993 = vshrl.u32 %v1992, 7
        %v1994 = vsub.s32 2, %v1993
        %v1995 = vrot.slane %v1662, %v1994
        %v1996 = vlaneseq
        %v1997 = vshrl.u32 %v1996, 7
        %v1998 = vsub.s32 2, %v1997
        %v1999 = vrot.slane %v1663, %v1998
        %2008 = vrot.lane.b32.xlu0 %v1971, 8
        %v2009 = vpop.permute.xlu0 %2008
        %2010 = vrot.lane.b32.xlu0 %v1975, 8
        %v2011 = vpop.permute.xlu0 %2010
        %2012 = vrot.lane.b32.xlu0 %v1979, 8
        %v2013 = vpop.permute.xlu0 %2012
        %2014 = vrot.lane.b32.xlu0 %v1983, 8
        %v2015 = vpop.permute.xlu0 %2014
        %2016 = vrot.lane.b32.xlu0 %v1987, 8
        %v2017 = vpop.permute.xlu0 %2016
        %2018 = vrot.lane.b32.xlu0 %v1991, 8
        %v2019 = vpop.permute.xlu0 %2018
        %2020 = vrot.lane.b32.xlu0 %v1995, 8
        %v2021 = vpop.permute.xlu0 %2020
        %2022 = vrot.lane.b32.xlu0 %v1999, 8
        %v2023 = vpop.permute.xlu0 %2022
        %2032 = vst.msk [vmem:[%s1774 + $0x5] sm:$0x3] %vm1871, %v2009
        %2033 = vst.msk [vmem:[%s1774 + $0x1d] sm:$0x3] %vm1871, %v2009
        %2034 = vst.msk [vmem:[%s1774 + $0x35] sm:$0x3] %vm1871, %v2011
        %2035 = vst.msk [vmem:[%s1774 + $0x4d] sm:$0x3] %vm1871, %v2011
        %2036 = vst.msk [vmem:[%s1774 + $0x65] sm:$0x3] %vm1871, %v2013
        %2037 = vst.msk [vmem:[%s1774 + $0x7d] sm:$0x3] %vm1871, %v2013
        %2038 = vst.msk [vmem:[%s1774 + $0x95] sm:$0x3] %vm1871, %v2015
        %2039 = vst.msk [vmem:[%s1774 + $0xad] sm:$0x3] %vm1871, %v2015
        %2040 = vst.msk [vmem:[%s1774 + $0xc5] sm:$0x3] %vm1871, %v2017
        %2041 = vst.msk [vmem:[%s1774 + $0xdd] sm:$0x3] %vm1871, %v2017
        %2042 = vst.msk [vmem:[%s1774 + $0xf5] sm:$0x3] %vm1871, %v2019
        %2043 = vst.msk [vmem:[%s1774 + $0x10d] sm:$0x3] %vm1871, %v2019
        %2044 = vst.msk [vmem:[%s1774 + $0x125] sm:$0x3] %vm1871, %v2021
        %2045 = vst.msk [vmem:[%s1774 + $0x13d] sm:$0x3] %vm1871, %v2021
        %2046 = vst.msk [vmem:[%s1774 + $0x155] sm:$0x3] %vm1871, %v2023
        %2047 = vst.msk [vmem:[%s1774 + $0x16d] sm:$0x3] %vm1871, %v2023
        %v2048 = vlaneseq
        %v2049 = vshrl.u32 %v2048, 7
        %v2050 = vsub.s32 3, %v2049
        %v2051 = vrot.slane %v1656, %v2050
        %v2052 = vlaneseq
        %v2053 = vshrl.u32 %v2052, 7
        %v2054 = vsub.s32 3, %v2053
        %v2055 = vrot.slane %v1657, %v2054
        %v2056 = vlaneseq
        %v2057 = vshrl.u32 %v2056, 7
        %v2058 = vsub.s32 3, %v2057
        %v2059 = vrot.slane %v1658, %v2058
        %v2060 = vlaneseq
        %v2061 = vshrl.u32 %v2060, 7
        %v2062 = vsub.s32 3, %v2061
        %v2063 = vrot.slane %v1659, %v2062
        %v2064 = vlaneseq
        %v2065 = vshrl.u32 %v2064, 7
        %v2066 = vsub.s32 3, %v2065
        %v2067 = vrot.slane %v1660, %v2066
        %v2068 = vlaneseq
        %v2069 = vshrl.u32 %v2068, 7
        %v2070 = vsub.s32 3, %v2069
        %v2071 = vrot.slane %v1661, %v2070
        %v2072 = vlaneseq
        %v2073 = vshrl.u32 %v2072, 7
        %v2074 = vsub.s32 3, %v2073
        %v2075 = vrot.slane %v1662, %v2074
        %v2076 = vlaneseq
        %v2077 = vshrl.u32 %v2076, 7
        %v2078 = vsub.s32 3, %v2077
        %v2079 = vrot.slane %v1663, %v2078
        %2088 = vrot.lane.b32.xlu0 %v2051, 8
        %v2089 = vpop.permute.xlu0 %2088
        %2090 = vrot.lane.b32.xlu0 %v2055, 8
        %v2091 = vpop.permute.xlu0 %2090
        %2092 = vrot.lane.b32.xlu0 %v2059, 8
        %v2093 = vpop.permute.xlu0 %2092
        %2094 = vrot.lane.b32.xlu0 %v2063, 8
        %v2095 = vpop.permute.xlu0 %2094
        %2096 = vrot.lane.b32.xlu0 %v2067, 8
        %v2097 = vpop.permute.xlu0 %2096
        %2098 = vrot.lane.b32.xlu0 %v2071, 8
        %v2099 = vpop.permute.xlu0 %2098
        %2100 = vrot.lane.b32.xlu0 %v2075, 8
        %v2101 = vpop.permute.xlu0 %2100
        %2102 = vrot.lane.b32.xlu0 %v2079, 8
        %v2103 = vpop.permute.xlu0 %2102
        %2112 = vst.msk [vmem:[%s1774 + $0x7] sm:$0x3] %vm1871, %v2089
        %2113 = vst.msk [vmem:[%s1774 + $0x1f] sm:$0x3] %vm1871, %v2089
        %2114 = vst.msk [vmem:[%s1774 + $0x37] sm:$0x3] %vm1871, %v2091
        %2115 = vst.msk [vmem:[%s1774 + $0x4f] sm:$0x3] %vm1871, %v2091
        %2116 = vst.msk [vmem:[%s1774 + $0x67] sm:$0x3] %vm1871, %v2093
        %2117 = vst.msk [vmem:[%s1774 + $0x7f] sm:$0x3] %vm1871, %v2093
        %2118 = vst.msk [vmem:[%s1774 + $0x97] sm:$0x3] %vm1871, %v2095
        %2119 = vst.msk [vmem:[%s1774 + $0xaf] sm:$0x3] %vm1871, %v2095
        %2120 = vst.msk [vmem:[%s1774 + $0xc7] sm:$0x3] %vm1871, %v2097
        %2121 = vst.msk [vmem:[%s1774 + $0xdf] sm:$0x3] %vm1871, %v2097
        %2122 = vst.msk [vmem:[%s1774 + $0xf7] sm:$0x3] %vm1871, %v2099
        %2123 = vst.msk [vmem:[%s1774 + $0x10f] sm:$0x3] %vm1871, %v2099
        %2124 = vst.msk [vmem:[%s1774 + $0x127] sm:$0x3] %vm1871, %v2101
        %2125 = vst.msk [vmem:[%s1774 + $0x13f] sm:$0x3] %vm1871, %v2101
        %2126 = vst.msk [vmem:[%s1774 + $0x157] sm:$0x3] %vm1871, %v2103
        %2127 = vst.msk [vmem:[%s1774 + $0x16f] sm:$0x3] %vm1871, %v2103
        %v2128 = vlaneseq
        %v2129 = vshrl.u32 %v2128, 7
        %v2130 = vsub.s32 4, %v2129
        %v2131 = vrot.slane %v1656, %v2130
        %v2132 = vlaneseq
        %v2133 = vshrl.u32 %v2132, 7
        %v2134 = vsub.s32 4, %v2133
        %v2135 = vrot.slane %v1657, %v2134
        %v2136 = vlaneseq
        %v2137 = vshrl.u32 %v2136, 7
        %v2138 = vsub.s32 4, %v2137
        %v2139 = vrot.slane %v1658, %v2138
        %v2140 = vlaneseq
        %v2141 = vshrl.u32 %v2140, 7
        %v2142 = vsub.s32 4, %v2141
        %v2143 = vrot.slane %v1659, %v2142
        %v2144 = vlaneseq
        %v2145 = vshrl.u32 %v2144, 7
        %v2146 = vsub.s32 4, %v2145
        %v2147 = vrot.slane %v1660, %v2146
        %v2148 = vlaneseq
        %v2149 = vshrl.u32 %v2148, 7
        %v2150 = vsub.s32 4, %v2149
        %v2151 = vrot.slane %v1661, %v2150
        %v2152 = vlaneseq
        %v2153 = vshrl.u32 %v2152, 7
        %v2154 = vsub.s32 4, %v2153
        %v2155 = vrot.slane %v1662, %v2154
        %v2156 = vlaneseq
        %v2157 = vshrl.u32 %v2156, 7
        %v2158 = vsub.s32 4, %v2157
        %v2159 = vrot.slane %v1663, %v2158
        %2168 = vrot.lane.b32.xlu0 %v2131, 8
        %v2169 = vpop.permute.xlu0 %2168
        %2170 = vrot.lane.b32.xlu0 %v2135, 8
        %v2171 = vpop.permute.xlu0 %2170
        %2172 = vrot.lane.b32.xlu0 %v2139, 8
        %v2173 = vpop.permute.xlu0 %2172
        %2174 = vrot.lane.b32.xlu0 %v2143, 8
        %v2175 = vpop.permute.xlu0 %2174
        %2176 = vrot.lane.b32.xlu0 %v2147, 8
        %v2177 = vpop.permute.xlu0 %2176
        %2178 = vrot.lane.b32.xlu0 %v2151, 8
        %v2179 = vpop.permute.xlu0 %2178
        %2180 = vrot.lane.b32.xlu0 %v2155, 8
        %v2181 = vpop.permute.xlu0 %2180
        %2182 = vrot.lane.b32.xlu0 %v2159, 8
        %v2183 = vpop.permute.xlu0 %2182
        %2192 = vst.msk [vmem:[%s1774 + $0x9] sm:$0x3] %vm1871, %v2169
        %2193 = vst.msk [vmem:[%s1774 + $0x21] sm:$0x3] %vm1871, %v2169
        %2194 = vst.msk [vmem:[%s1774 + $0x39] sm:$0x3] %vm1871, %v2171
        %2195 = vst.msk [vmem:[%s1774 + $0x51] sm:$0x3] %vm1871, %v2171
        %2196 = vst.msk [vmem:[%s1774 + $0x69] sm:$0x3] %vm1871, %v2173
        %2197 = vst.msk [vmem:[%s1774 + $0x81] sm:$0x3] %vm1871, %v2173
        %2198 = vst.msk [vmem:[%s1774 + $0x99] sm:$0x3] %vm1871, %v2175
        %2199 = vst.msk [vmem:[%s1774 + $0xb1] sm:$0x3] %vm1871, %v2175
        %2200 = vst.msk [vmem:[%s1774 + $0xc9] sm:$0x3] %vm1871, %v2177
        %2201 = vst.msk [vmem:[%s1774 + $0xe1] sm:$0x3] %vm1871, %v2177
        %2202 = vst.msk [vmem:[%s1774 + $0xf9] sm:$0x3] %vm1871, %v2179
        %2203 = vst.msk [vmem:[%s1774 + $0x111] sm:$0x3] %vm1871, %v2179
        %2204 = vst.msk [vmem:[%s1774 + $0x129] sm:$0x3] %vm1871, %v2181
        %2205 = vst.msk [vmem:[%s1774 + $0x141] sm:$0x3] %vm1871, %v2181
        %2206 = vst.msk [vmem:[%s1774 + $0x159] sm:$0x3] %vm1871, %v2183
        %2207 = vst.msk [vmem:[%s1774 + $0x171] sm:$0x3] %vm1871, %v2183
        %v2208 = vlaneseq
        %v2209 = vshrl.u32 %v2208, 7
        %v2210 = vsub.s32 5, %v2209
        %v2211 = vrot.slane %v1656, %v2210
        %v2212 = vlaneseq
        %v2213 = vshrl.u32 %v2212, 7
        %v2214 = vsub.s32 5, %v2213
        %v2215 = vrot.slane %v1657, %v2214
        %v2216 = vlaneseq
        %v2217 = vshrl.u32 %v2216, 7
        %v2218 = vsub.s32 5, %v2217
        %v2219 = vrot.slane %v1658, %v2218
        %v2220 = vlaneseq
        %v2221 = vshrl.u32 %v2220, 7
        %v2222 = vsub.s32 5, %v2221
        %v2223 = vrot.slane %v1659, %v2222
        %v2224 = vlaneseq
        %v2225 = vshrl.u32 %v2224, 7
        %v2226 = vsub.s32 5, %v2225
        %v2227 = vrot.slane %v1660, %v2226
        %v2228 = vlaneseq
        %v2229 = vshrl.u32 %v2228, 7
        %v2230 = vsub.s32 5, %v2229
        %v2231 = vrot.slane %v1661, %v2230
        %v2232 = vlaneseq
        %v2233 = vshrl.u32 %v2232, 7
        %v2234 = vsub.s32 5, %v2233
        %v2235 = vrot.slane %v1662, %v2234
        %v2236 = vlaneseq
        %v2237 = vshrl.u32 %v2236, 7
        %v2238 = vsub.s32 5, %v2237
        %v2239 = vrot.slane %v1663, %v2238
        %2248 = vrot.lane.b32.xlu0 %v2211, 8
        %v2249 = vpop.permute.xlu0 %2248
        %2250 = vrot.lane.b32.xlu0 %v2215, 8
        %v2251 = vpop.permute.xlu0 %2250
        %2252 = vrot.lane.b32.xlu0 %v2219, 8
        %v2253 = vpop.permute.xlu0 %2252
        %2254 = vrot.lane.b32.xlu0 %v2223, 8
        %v2255 = vpop.permute.xlu0 %2254
        %2256 = vrot.lane.b32.xlu0 %v2227, 8
        %v2257 = vpop.permute.xlu0 %2256
        %2258 = vrot.lane.b32.xlu0 %v2231, 8
        %v2259 = vpop.permute.xlu0 %2258
        %2260 = vrot.lane.b32.xlu0 %v2235, 8
        %v2261 = vpop.permute.xlu0 %2260
        %2262 = vrot.lane.b32.xlu0 %v2239, 8
        %v2263 = vpop.permute.xlu0 %2262
        %2272 = vst.msk [vmem:[%s1774 + $0xb] sm:$0x3] %vm1871, %v2249
        %2273 = vst.msk [vmem:[%s1774 + $0x23] sm:$0x3] %vm1871, %v2249
        %2274 = vst.msk [vmem:[%s1774 + $0x3b] sm:$0x3] %vm1871, %v2251
        %2275 = vst.msk [vmem:[%s1774 + $0x53] sm:$0x3] %vm1871, %v2251
        %2276 = vst.msk [vmem:[%s1774 + $0x6b] sm:$0x3] %vm1871, %v2253
        %2277 = vst.msk [vmem:[%s1774 + $0x83] sm:$0x3] %vm1871, %v2253
        %2278 = vst.msk [vmem:[%s1774 + $0x9b] sm:$0x3] %vm1871, %v2255
        %2279 = vst.msk [vmem:[%s1774 + $0xb3] sm:$0x3] %vm1871, %v2255
        %2280 = vst.msk [vmem:[%s1774 + $0xcb] sm:$0x3] %vm1871, %v2257
        %2281 = vst.msk [vmem:[%s1774 + $0xe3] sm:$0x3] %vm1871, %v2257
        %2282 = vst.msk [vmem:[%s1774 + $0xfb] sm:$0x3] %vm1871, %v2259
        %2283 = vst.msk [vmem:[%s1774 + $0x113] sm:$0x3] %vm1871, %v2259
        %2284 = vst.msk [vmem:[%s1774 + $0x12b] sm:$0x3] %vm1871, %v2261
        %2285 = vst.msk [vmem:[%s1774 + $0x143] sm:$0x3] %vm1871, %v2261
        %2286 = vst.msk [vmem:[%s1774 + $0x15b] sm:$0x3] %vm1871, %v2263
        %2287 = vst.msk [vmem:[%s1774 + $0x173] sm:$0x3] %vm1871, %v2263
        %v2288 = vlaneseq
        %v2289 = vshrl.u32 %v2288, 7
        %v2290 = vsub.s32 6, %v2289
        %v2291 = vrot.slane %v1656, %v2290
        %v2292 = vlaneseq
        %v2293 = vshrl.u32 %v2292, 7
        %v2294 = vsub.s32 6, %v2293
        %v2295 = vrot.slane %v1657, %v2294
        %v2296 = vlaneseq
        %v2297 = vshrl.u32 %v2296, 7
        %v2298 = vsub.s32 6, %v2297
        %v2299 = vrot.slane %v1658, %v2298
        %v2300 = vlaneseq
        %v2301 = vshrl.u32 %v2300, 7
        %v2302 = vsub.s32 6, %v2301
        %v2303 = vrot.slane %v1659, %v2302
        %v2304 = vlaneseq
        %v2305 = vshrl.u32 %v2304, 7
        %v2306 = vsub.s32 6, %v2305
        %v2307 = vrot.slane %v1660, %v2306
        %v2308 = vlaneseq
        %v2309 = vshrl.u32 %v2308, 7
        %v2310 = vsub.s32 6, %v2309
        %v2311 = vrot.slane %v1661, %v2310
        %v2312 = vlaneseq
        %v2313 = vshrl.u32 %v2312, 7
        %v2314 = vsub.s32 6, %v2313
        %v2315 = vrot.slane %v1662, %v2314
        %v2316 = vlaneseq
        %v2317 = vshrl.u32 %v2316, 7
        %v2318 = vsub.s32 6, %v2317
        %v2319 = vrot.slane %v1663, %v2318
        %2328 = vrot.lane.b32.xlu0 %v2291, 8
        %v2329 = vpop.permute.xlu0 %2328
        %2330 = vrot.lane.b32.xlu0 %v2295, 8
        %v2331 = vpop.permute.xlu0 %2330
        %2332 = vrot.lane.b32.xlu0 %v2299, 8
        %v2333 = vpop.permute.xlu0 %2332
        %2334 = vrot.lane.b32.xlu0 %v2303, 8
        %v2335 = vpop.permute.xlu0 %2334
        %2336 = vrot.lane.b32.xlu0 %v2307, 8
        %v2337 = vpop.permute.xlu0 %2336
        %2338 = vrot.lane.b32.xlu0 %v2311, 8
        %v2339 = vpop.permute.xlu0 %2338
        %2340 = vrot.lane.b32.xlu0 %v2315, 8
        %v2341 = vpop.permute.xlu0 %2340
        %2342 = vrot.lane.b32.xlu0 %v2319, 8
        %v2343 = vpop.permute.xlu0 %2342
        %2352 = vst.msk [vmem:[%s1774 + $0xd] sm:$0x3] %vm1871, %v2329
        %2353 = vst.msk [vmem:[%s1774 + $0x25] sm:$0x3] %vm1871, %v2329
        %2354 = vst.msk [vmem:[%s1774 + $0x3d] sm:$0x3] %vm1871, %v2331
        %2355 = vst.msk [vmem:[%s1774 + $0x55] sm:$0x3] %vm1871, %v2331
        %2356 = vst.msk [vmem:[%s1774 + $0x6d] sm:$0x3] %vm1871, %v2333
        %2357 = vst.msk [vmem:[%s1774 + $0x85] sm:$0x3] %vm1871, %v2333
        %2358 = vst.msk [vmem:[%s1774 + $0x9d] sm:$0x3] %vm1871, %v2335
        %2359 = vst.msk [vmem:[%s1774 + $0xb5] sm:$0x3] %vm1871, %v2335
        %2360 = vst.msk [vmem:[%s1774 + $0xcd] sm:$0x3] %vm1871, %v2337
        %2361 = vst.msk [vmem:[%s1774 + $0xe5] sm:$0x3] %vm1871, %v2337
        %2362 = vst.msk [vmem:[%s1774 + $0xfd] sm:$0x3] %vm1871, %v2339
        %2363 = vst.msk [vmem:[%s1774 + $0x115] sm:$0x3] %vm1871, %v2339
        %2364 = vst.msk [vmem:[%s1774 + $0x12d] sm:$0x3] %vm1871, %v2341
        %2365 = vst.msk [vmem:[%s1774 + $0x145] sm:$0x3] %vm1871, %v2341
        %2366 = vst.msk [vmem:[%s1774 + $0x15d] sm:$0x3] %vm1871, %v2343
        %2367 = vst.msk [vmem:[%s1774 + $0x175] sm:$0x3] %vm1871, %v2343
        %v2368 = vlaneseq
        %v2369 = vshrl.u32 %v2368, 7
        %v2370 = vsub.s32 7, %v2369
        %v2371 = vrot.slane %v1656, %v2370
        %v2372 = vlaneseq
        %v2373 = vshrl.u32 %v2372, 7
        %v2374 = vsub.s32 7, %v2373
        %v2375 = vrot.slane %v1657, %v2374
        %v2376 = vlaneseq
        %v2377 = vshrl.u32 %v2376, 7
        %v2378 = vsub.s32 7, %v2377
        %v2379 = vrot.slane %v1658, %v2378
        %v2380 = vlaneseq
        %v2381 = vshrl.u32 %v2380, 7
        %v2382 = vsub.s32 7, %v2381
        %v2383 = vrot.slane %v1659, %v2382
        %v2384 = vlaneseq
        %v2385 = vshrl.u32 %v2384, 7
        %v2386 = vsub.s32 7, %v2385
        %v2387 = vrot.slane %v1660, %v2386
        %v2388 = vlaneseq
        %v2389 = vshrl.u32 %v2388, 7
        %v2390 = vsub.s32 7, %v2389
        %v2391 = vrot.slane %v1661, %v2390
        %v2392 = vlaneseq
        %v2393 = vshrl.u32 %v2392, 7
        %v2394 = vsub.s32 7, %v2393
        %v2395 = vrot.slane %v1662, %v2394
        %v2396 = vlaneseq
        %v2397 = vshrl.u32 %v2396, 7
        %v2398 = vsub.s32 7, %v2397
        %v2399 = vrot.slane %v1663, %v2398
        %2408 = vrot.lane.b32.xlu0 %v2371, 8
        %v2409 = vpop.permute.xlu0 %2408
        %2410 = vrot.lane.b32.xlu0 %v2375, 8
        %v2411 = vpop.permute.xlu0 %2410
        %2412 = vrot.lane.b32.xlu0 %v2379, 8
        %v2413 = vpop.permute.xlu0 %2412
        %2414 = vrot.lane.b32.xlu0 %v2383, 8
        %v2415 = vpop.permute.xlu0 %2414
        %2416 = vrot.lane.b32.xlu0 %v2387, 8
        %v2417 = vpop.permute.xlu0 %2416
        %2418 = vrot.lane.b32.xlu0 %v2391, 8
        %v2419 = vpop.permute.xlu0 %2418
        %2420 = vrot.lane.b32.xlu0 %v2395, 8
        %v2421 = vpop.permute.xlu0 %2420
        %2422 = vrot.lane.b32.xlu0 %v2399, 8
        %v2423 = vpop.permute.xlu0 %2422
        %2432 = vst.msk [vmem:[%s1774 + $0xf] sm:$0x3] %vm1871, %v2409
        %2433 = vst.msk [vmem:[%s1774 + $0x27] sm:$0x3] %vm1871, %v2409
        %2434 = vst.msk [vmem:[%s1774 + $0x3f] sm:$0x3] %vm1871, %v2411
        %2435 = vst.msk [vmem:[%s1774 + $0x57] sm:$0x3] %vm1871, %v2411
        %2436 = vst.msk [vmem:[%s1774 + $0x6f] sm:$0x3] %vm1871, %v2413
        %2437 = vst.msk [vmem:[%s1774 + $0x87] sm:$0x3] %vm1871, %v2413
        %2438 = vst.msk [vmem:[%s1774 + $0x9f] sm:$0x3] %vm1871, %v2415
        %2439 = vst.msk [vmem:[%s1774 + $0xb7] sm:$0x3] %vm1871, %v2415
        %2440 = vst.msk [vmem:[%s1774 + $0xcf] sm:$0x3] %vm1871, %v2417
        %2441 = vst.msk [vmem:[%s1774 + $0xe7] sm:$0x3] %vm1871, %v2417
        %2442 = vst.msk [vmem:[%s1774 + $0xff] sm:$0x3] %vm1871, %v2419
        %2443 = vst.msk [vmem:[%s1774 + $0x117] sm:$0x3] %vm1871, %v2419
        %2444 = vst.msk [vmem:[%s1774 + $0x12f] sm:$0x3] %vm1871, %v2421
        %2445 = vst.msk [vmem:[%s1774 + $0x147] sm:$0x3] %vm1871, %v2421
        %2446 = vst.msk [vmem:[%s1774 + $0x15f] sm:$0x3] %vm1871, %v2423
        %2447 = vst.msk [vmem:[%s1774 + $0x177] sm:$0x3] %vm1871, %v2423
        %v2448 = vld [vmem:[#allocation4] sm:$0xff]
        %v2449 = vld [vmem:[#allocation4 + $0x8] sm:$0xff]
        %v2450 = vld [vmem:[#allocation4 + $0x18] sm:$0xff]
        %v2451 = vld [vmem:[#allocation4 + $0x20] sm:$0xff]
        %v2452 = vld [vmem:[#allocation4 + $0x30] sm:$0xff]
        %v2453 = vld [vmem:[#allocation4 + $0x38] sm:$0xff]
        %v2454 = vld [vmem:[#allocation4 + $0x48] sm:$0xff]
        %v2455 = vld [vmem:[#allocation4 + $0x50] sm:$0xff]
        %v2456 = vld [vmem:[#allocation4 + $0x60] sm:$0xff]
        %v2457 = vld [vmem:[#allocation4 + $0x68] sm:$0xff]
        %v2458 = vld [vmem:[#allocation4 + $0x78] sm:$0xff]
        %v2459 = vld [vmem:[#allocation4 + $0x80] sm:$0xff]
        %v2460 = vld [vmem:[#allocation4 + $0x90] sm:$0xff]
        %v2461 = vld [vmem:[#allocation4 + $0x98] sm:$0xff]
        %v2462 = vld [vmem:[#allocation4 + $0xa8] sm:$0xff]
        %v2463 = vld [vmem:[#allocation4 + $0xb0] sm:$0xff]
        %v2464 = vld [vmem:[#allocation4 + $0xc0] sm:$0xff]
        %v2465 = vld [vmem:[#allocation4 + $0xc8] sm:$0xff]
        %v2466 = vld [vmem:[#allocation4 + $0xd8] sm:$0xff]
        %v2467 = vld [vmem:[#allocation4 + $0xe0] sm:$0xff]
        %v2468 = vld [vmem:[#allocation4 + $0xf0] sm:$0xff]
        %v2469 = vld [vmem:[#allocation4 + $0xf8] sm:$0xff]
        %v2470 = vld [vmem:[#allocation4 + $0x108] sm:$0xff]
        %v2471 = vld [vmem:[#allocation4 + $0x110] sm:$0xff]
        %v2472 = vld [vmem:[#allocation4 + $0x120] sm:$0xff]
        %v2473 = vld [vmem:[#allocation4 + $0x128] sm:$0xff]
        %v2474 = vld [vmem:[#allocation4 + $0x138] sm:$0xff]
        %v2475 = vld [vmem:[#allocation4 + $0x140] sm:$0xff]
        %v2476 = vld [vmem:[#allocation4 + $0x150] sm:$0xff]
        %v2477 = vld [vmem:[#allocation4 + $0x158] sm:$0xff]
        %v2478 = vld [vmem:[#allocation4 + $0x168] sm:$0xff]
        %v2479 = vld [vmem:[#allocation4 + $0x170] sm:$0xff]
        %v2480 = vld [vmem:[#allocation4 + $0x180] sm:$0xff]
        %v2481 = vld [vmem:[#allocation4 + $0x188] sm:$0xff]
        %v2482 = vld [vmem:[#allocation4 + $0x198] sm:$0xff]
        %v2483 = vld [vmem:[#allocation4 + $0x1a0] sm:$0xff]
        %v2484 = vld [vmem:[#allocation4 + $0x1] sm:$0xff]
        %v2485 = vld [vmem:[#allocation4 + $0x9] sm:$0xff]
        %v2486 = vld [vmem:[#allocation4 + $0x19] sm:$0xff]
        %v2487 = vld [vmem:[#allocation4 + $0x21] sm:$0xff]
        %v2488 = vld [vmem:[#allocation4 + $0x31] sm:$0xff]
        %v2489 = vld [vmem:[#allocation4 + $0x39] sm:$0xff]
        %v2490 = vld [vmem:[#allocation4 + $0x49] sm:$0xff]
        %v2491 = vld [vmem:[#allocation4 + $0x51] sm:$0xff]
        %v2492 = vld [vmem:[#allocation4 + $0x61] sm:$0xff]
        %v2493 = vld [vmem:[#allocation4 + $0x69] sm:$0xff]
        %v2494 = vld [vmem:[#allocation4 + $0x79] sm:$0xff]
        %v2495 = vld [vmem:[#allocation4 + $0x81] sm:$0xff]
        %v2496 = vld [vmem:[#allocation4 + $0x91] sm:$0xff]
        %v2497 = vld [vmem:[#allocation4 + $0x99] sm:$0xff]
        %v2498 = vld [vmem:[#allocation4 + $0xa9] sm:$0xff]
        %v2499 = vld [vmem:[#allocation4 + $0xb1] sm:$0xff]
        %v2500 = vld [vmem:[#allocation4 + $0xc1] sm:$0xff]
        %v2501 = vld [vmem:[#allocation4 + $0xc9] sm:$0xff]
        %v2502 = vld [vmem:[#allocation4 + $0xd9] sm:$0xff]
        %v2503 = vld [vmem:[#allocation4 + $0xe1] sm:$0xff]
        %v2504 = vld [vmem:[#allocation4 + $0xf1] sm:$0xff]
        %v2505 = vld [vmem:[#allocation4 + $0xf9] sm:$0xff]
        %v2506 = vld [vmem:[#allocation4 + $0x109] sm:$0xff]
        %v2507 = vld [vmem:[#allocation4 + $0x111] sm:$0xff]
        %v2508 = vld [vmem:[#allocation4 + $0x121] sm:$0xff]
        %v2509 = vld [vmem:[#allocation4 + $0x129] sm:$0xff]
        %v2510 = vld [vmem:[#allocation4 + $0x139] sm:$0xff]
        %v2511 = vld [vmem:[#allocation4 + $0x141] sm:$0xff]
        %v2512 = vld [vmem:[#allocation4 + $0x151] sm:$0xff]
        %v2513 = vld [vmem:[#allocation4 + $0x159] sm:$0xff]
        %v2514 = vld [vmem:[#allocation4 + $0x169] sm:$0xff]
        %v2515 = vld [vmem:[#allocation4 + $0x171] sm:$0xff]
        %v2516 = vld [vmem:[#allocation4 + $0x181] sm:$0xff]
        %v2517 = vld [vmem:[#allocation4 + $0x189] sm:$0xff]
        %v2518 = vld [vmem:[#allocation4 + $0x199] sm:$0xff]
        %v2519 = vld [vmem:[#allocation4 + $0x1a1] sm:$0xff]
        %v2520 = vld [vmem:[#allocation4 + $0x2] sm:$0xff]
        %v2521 = vld [vmem:[#allocation4 + $0xa] sm:$0xff]
        %v2522 = vld [vmem:[#allocation4 + $0x1a] sm:$0xff]
        %v2523 = vld [vmem:[#allocation4 + $0x22] sm:$0xff]
        %v2524 = vld [vmem:[#allocation4 + $0x32] sm:$0xff]
        %v2525 = vld [vmem:[#allocation4 + $0x3a] sm:$0xff]
        %v2526 = vld [vmem:[#allocation4 + $0x4a] sm:$0xff]
        %v2527 = vld [vmem:[#allocation4 + $0x52] sm:$0xff]
        %v2528 = vld [vmem:[#allocation4 + $0x62] sm:$0xff]
        %v2529 = vld [vmem:[#allocation4 + $0x6a] sm:$0xff]
        %v2530 = vld [vmem:[#allocation4 + $0x7a] sm:$0xff]
        %v2531 = vld [vmem:[#allocation4 + $0x82] sm:$0xff]
        %v2532 = vld [vmem:[#allocation4 + $0x92] sm:$0xff]
        %v2533 = vld [vmem:[#allocation4 + $0x9a] sm:$0xff]
        %v2534 = vld [vmem:[#allocation4 + $0xaa] sm:$0xff]
        %v2535 = vld [vmem:[#allocation4 + $0xb2] sm:$0xff]
        %v2536 = vld [vmem:[#allocation4 + $0xc2] sm:$0xff]
        %v2537 = vld [vmem:[#allocation4 + $0xca] sm:$0xff]
        %v2538 = vld [vmem:[#allocation4 + $0xda] sm:$0xff]
        %v2539 = vld [vmem:[#allocation4 + $0xe2] sm:$0xff]
        %v2540 = vld [vmem:[#allocation4 + $0xf2] sm:$0xff]
        %v2541 = vld [vmem:[#allocation4 + $0xfa] sm:$0xff]
        %v2542 = vld [vmem:[#allocation4 + $0x10a] sm:$0xff]
        %v2543 = vld [vmem:[#allocation4 + $0x112] sm:$0xff]
        %v2544 = vld [vmem:[#allocation4 + $0x122] sm:$0xff]
        %v2545 = vld [vmem:[#allocation4 + $0x12a] sm:$0xff]
        %v2546 = vld [vmem:[#allocation4 + $0x13a] sm:$0xff]
        %v2547 = vld [vmem:[#allocation4 + $0x142] sm:$0xff]
        %v2548 = vld [vmem:[#allocation4 + $0x152] sm:$0xff]
        %v2549 = vld [vmem:[#allocation4 + $0x15a] sm:$0xff]
        %v2550 = vld [vmem:[#allocation4 + $0x16a] sm:$0xff]
        %v2551 = vld [vmem:[#allocation4 + $0x172] sm:$0xff]
        %v2552 = vld [vmem:[#allocation4 + $0x182] sm:$0xff]
        %v2553 = vld [vmem:[#allocation4 + $0x18a] sm:$0xff]
        %v2554 = vld [vmem:[#allocation4 + $0x19a] sm:$0xff]
        %v2555 = vld [vmem:[#allocation4 + $0x1a2] sm:$0xff]
        %2592 = vrot.lane.b32.xlu0 %v2484, 40
        %v2593 = vpop.permute.xlu0 %2592
        %2594 = vrot.lane.b32.xlu0 %v2485, 40
        %v2595 = vpop.permute.xlu0 %2594
        %2596 = vrot.lane.b32.xlu0 %v2486, 40
        %v2597 = vpop.permute.xlu0 %2596
        %2598 = vrot.lane.b32.xlu0 %v2487, 40
        %v2599 = vpop.permute.xlu0 %2598
        %2600 = vrot.lane.b32.xlu0 %v2488, 40
        %v2601 = vpop.permute.xlu0 %2600
        %2602 = vrot.lane.b32.xlu0 %v2489, 40
        %v2603 = vpop.permute.xlu0 %2602
        %2604 = vrot.lane.b32.xlu0 %v2490, 40
        %v2605 = vpop.permute.xlu0 %2604
        %2606 = vrot.lane.b32.xlu0 %v2491, 40
        %v2607 = vpop.permute.xlu0 %2606
        %2608 = vrot.lane.b32.xlu0 %v2492, 40
        %v2609 = vpop.permute.xlu0 %2608
        %2610 = vrot.lane.b32.xlu0 %v2493, 40
        %v2611 = vpop.permute.xlu0 %2610
        %2612 = vrot.lane.b32.xlu0 %v2494, 40
        %v2613 = vpop.permute.xlu0 %2612
        %2614 = vrot.lane.b32.xlu0 %v2495, 40
        %v2615 = vpop.permute.xlu0 %2614
        %2616 = vrot.lane.b32.xlu0 %v2496, 40
        %v2617 = vpop.permute.xlu0 %2616
        %2618 = vrot.lane.b32.xlu0 %v2497, 40
        %v2619 = vpop.permute.xlu0 %2618
        %2620 = vrot.lane.b32.xlu0 %v2498, 40
        %v2621 = vpop.permute.xlu0 %2620
        %2622 = vrot.lane.b32.xlu0 %v2499, 40
        %v2623 = vpop.permute.xlu0 %2622
        %2624 = vrot.lane.b32.xlu0 %v2500, 40
        %v2625 = vpop.permute.xlu0 %2624
        %2626 = vrot.lane.b32.xlu0 %v2501, 40
        %v2627 = vpop.permute.xlu0 %2626
        %2628 = vrot.lane.b32.xlu0 %v2502, 40
        %v2629 = vpop.permute.xlu0 %2628
        %2630 = vrot.lane.b32.xlu0 %v2503, 40
        %v2631 = vpop.permute.xlu0 %2630
        %2632 = vrot.lane.b32.xlu0 %v2504, 40
        %v2633 = vpop.permute.xlu0 %2632
        %2634 = vrot.lane.b32.xlu0 %v2505, 40
        %v2635 = vpop.permute.xlu0 %2634
        %2636 = vrot.lane.b32.xlu0 %v2506, 40
        %v2637 = vpop.permute.xlu0 %2636
        %2638 = vrot.lane.b32.xlu0 %v2507, 40
        %v2639 = vpop.permute.xlu0 %2638
        %2640 = vrot.lane.b32.xlu0 %v2508, 40
        %v2641 = vpop.permute.xlu0 %2640
        %2642 = vrot.lane.b32.xlu0 %v2509, 40
        %v2643 = vpop.permute.xlu0 %2642
        %2644 = vrot.lane.b32.xlu0 %v2510, 40
        %v2645 = vpop.permute.xlu0 %2644
        %2646 = vrot.lane.b32.xlu0 %v2511, 40
        %v2647 = vpop.permute.xlu0 %2646
        %2648 = vrot.lane.b32.xlu0 %v2512, 40
        %v2649 = vpop.permute.xlu0 %2648
        %2650 = vrot.lane.b32.xlu0 %v2513, 40
        %v2651 = vpop.permute.xlu0 %2650
        %2652 = vrot.lane.b32.xlu0 %v2514, 40
        %v2653 = vpop.permute.xlu0 %2652
        %2654 = vrot.lane.b32.xlu0 %v2515, 40
        %v2655 = vpop.permute.xlu0 %2654
        %2656 = vrot.lane.b32.xlu0 %v2516, 40
        %v2657 = vpop.permute.xlu0 %2656
        %2658 = vrot.lane.b32.xlu0 %v2517, 40
        %v2659 = vpop.permute.xlu0 %2658
        %2660 = vrot.lane.b32.xlu0 %v2518, 40
        %v2661 = vpop.permute.xlu0 %2660
        %2662 = vrot.lane.b32.xlu0 %v2519, 40
        %v2663 = vpop.permute.xlu0 %2662
        %2736 = vrot.lane.b32.xlu0 %v2520, 80
        %v2737 = vpop.permute.xlu0 %2736
        %2738 = vrot.lane.b32.xlu0 %v2521, 80
        %v2739 = vpop.permute.xlu0 %2738
        %2740 = vrot.lane.b32.xlu0 %v2522, 80
        %v2741 = vpop.permute.xlu0 %2740
        %2742 = vrot.lane.b32.xlu0 %v2523, 80
        %v2743 = vpop.permute.xlu0 %2742
        %2744 = vrot.lane.b32.xlu0 %v2524, 80
        %v2745 = vpop.permute.xlu0 %2744
        %2746 = vrot.lane.b32.xlu0 %v2525, 80
        %v2747 = vpop.permute.xlu0 %2746
        %2748 = vrot.lane.b32.xlu0 %v2526, 80
        %v2749 = vpop.permute.xlu0 %2748
        %2750 = vrot.lane.b32.xlu0 %v2527, 80
        %v2751 = vpop.permute.xlu0 %2750
        %2752 = vrot.lane.b32.xlu0 %v2528, 80
        %v2753 = vpop.permute.xlu0 %2752
        %2754 = vrot.lane.b32.xlu0 %v2529, 80
        %v2755 = vpop.permute.xlu0 %2754
        %2756 = vrot.lane.b32.xlu0 %v2530, 80
        %v2757 = vpop.permute.xlu0 %2756
        %2758 = vrot.lane.b32.xlu0 %v2531, 80
        %v2759 = vpop.permute.xlu0 %2758
        %2760 = vrot.lane.b32.xlu0 %v2532, 80
        %v2761 = vpop.permute.xlu0 %2760
        %2762 = vrot.lane.b32.xlu0 %v2533, 80
        %v2763 = vpop.permute.xlu0 %2762
        %2764 = vrot.lane.b32.xlu0 %v2534, 80
        %v2765 = vpop.permute.xlu0 %2764
        %2766 = vrot.lane.b32.xlu0 %v2535, 80
        %v2767 = vpop.permute.xlu0 %2766
        %2768 = vrot.lane.b32.xlu0 %v2536, 80
        %v2769 = vpop.permute.xlu0 %2768
        %2770 = vrot.lane.b32.xlu0 %v2537, 80
        %v2771 = vpop.permute.xlu0 %2770
        %2772 = vrot.lane.b32.xlu0 %v2538, 80
        %v2773 = vpop.permute.xlu0 %2772
        %2774 = vrot.lane.b32.xlu0 %v2539, 80
        %v2775 = vpop.permute.xlu0 %2774
        %2776 = vrot.lane.b32.xlu0 %v2540, 80
        %v2777 = vpop.permute.xlu0 %2776
        %2778 = vrot.lane.b32.xlu0 %v2541, 80
        %v2779 = vpop.permute.xlu0 %2778
        %2780 = vrot.lane.b32.xlu0 %v2542, 80
        %v2781 = vpop.permute.xlu0 %2780
        %2782 = vrot.lane.b32.xlu0 %v2543, 80
        %v2783 = vpop.permute.xlu0 %2782
        %2784 = vrot.lane.b32.xlu0 %v2544, 80
        %v2785 = vpop.permute.xlu0 %2784
        %2786 = vrot.lane.b32.xlu0 %v2545, 80
        %v2787 = vpop.permute.xlu0 %2786
        %2788 = vrot.lane.b32.xlu0 %v2546, 80
        %v2789 = vpop.permute.xlu0 %2788
        %2790 = vrot.lane.b32.xlu0 %v2547, 80
        %v2791 = vpop.permute.xlu0 %2790
        %2792 = vrot.lane.b32.xlu0 %v2548, 80
        %v2793 = vpop.permute.xlu0 %2792
        %2794 = vrot.lane.b32.xlu0 %v2549, 80
        %v2795 = vpop.permute.xlu0 %2794
        %2796 = vrot.lane.b32.xlu0 %v2550, 80
        %v2797 = vpop.permute.xlu0 %2796
        %2798 = vrot.lane.b32.xlu0 %v2551, 80
        %v2799 = vpop.permute.xlu0 %2798
        %2800 = vrot.lane.b32.xlu0 %v2552, 80
        %v2801 = vpop.permute.xlu0 %2800
        %2802 = vrot.lane.b32.xlu0 %v2553, 80
        %v2803 = vpop.permute.xlu0 %2802
        %2804 = vrot.lane.b32.xlu0 %v2554, 80
        %v2805 = vpop.permute.xlu0 %2804
        %2806 = vrot.lane.b32.xlu0 %v2555, 80
        %v2807 = vpop.permute.xlu0 %2806
        %v2844 = vsel %vm1664, %v2448, %v2593
        %v2845 = vsel %vm1664, %v2449, %v2595
        %v2846 = vsel %vm1664, %v2450, %v2597
        %v2847 = vsel %vm1664, %v2451, %v2599
        %v2848 = vsel %vm1664, %v2452, %v2601
        %v2849 = vsel %vm1664, %v2453, %v2603
        %v2850 = vsel %vm1664, %v2454, %v2605
        %v2851 = vsel %vm1664, %v2455, %v2607
        %v2852 = vsel %vm1664, %v2456, %v2609
        %v2853 = vsel %vm1664, %v2457, %v2611
        %v2854 = vsel %vm1664, %v2458, %v2613
        %v2855 = vsel %vm1664, %v2459, %v2615
        %v2856 = vsel %vm1664, %v2460, %v2617
        %v2857 = vsel %vm1664, %v2461, %v2619
        %v2858 = vsel %vm1664, %v2462, %v2621
        %v2859 = vsel %vm1664, %v2463, %v2623
        %v2860 = vsel %vm1664, %v2464, %v2625
        %v2861 = vsel %vm1664, %v2465, %v2627
        %v2862 = vsel %vm1664, %v2466, %v2629
        %v2863 = vsel %vm1664, %v2467, %v2631
        %v2864 = vsel %vm1664, %v2468, %v2633
        %v2865 = vsel %vm1664, %v2469, %v2635
        %v2866 = vsel %vm1664, %v2470, %v2637
        %v2867 = vsel %vm1664, %v2471, %v2639
        %v2868 = vsel %vm1664, %v2472, %v2641
        %v2869 = vsel %vm1664, %v2473, %v2643
        %v2870 = vsel %vm1664, %v2474, %v2645
        %v2871 = vsel %vm1664, %v2475, %v2647
        %v2872 = vsel %vm1664, %v2476, %v2649
        %v2873 = vsel %vm1664, %v2477, %v2651
        %v2874 = vsel %vm1664, %v2478, %v2653
        %v2875 = vsel %vm1664, %v2479, %v2655
        %v2876 = vsel %vm1664, %v2480, %v2657
        %v2877 = vsel %vm1664, %v2481, %v2659
        %v2878 = vsel %vm1664, %v2482, %v2661
        %v2879 = vsel %vm1664, %v2483, %v2663
        %vm2880 = vcmask 654336
        %v2881 = vsel %vm2880, %v2844, %v2737
        %v2882 = vsel %vm2880, %v2845, %v2739
        %v2883 = vsel %vm2880, %v2846, %v2741
        %v2884 = vsel %vm2880, %v2847, %v2743
        %v2885 = vsel %vm2880, %v2848, %v2745
        %v2886 = vsel %vm2880, %v2849, %v2747
        %v2887 = vsel %vm2880, %v2850, %v2749
        %v2888 = vsel %vm2880, %v2851, %v2751
        %v2889 = vsel %vm2880, %v2852, %v2753
        %v2890 = vsel %vm2880, %v2853, %v2755
        %v2891 = vsel %vm2880, %v2854, %v2757
        %v2892 = vsel %vm2880, %v2855, %v2759
        %v2893 = vsel %vm2880, %v2856, %v2761
        %v2894 = vsel %vm2880, %v2857, %v2763
        %v2895 = vsel %vm2880, %v2858, %v2765
        %v2896 = vsel %vm2880, %v2859, %v2767
        %v2897 = vsel %vm2880, %v2860, %v2769
        %v2898 = vsel %vm2880, %v2861, %v2771
        %v2899 = vsel %vm2880, %v2862, %v2773
        %v2900 = vsel %vm2880, %v2863, %v2775
        %v2901 = vsel %vm2880, %v2864, %v2777
        %v2902 = vsel %vm2880, %v2865, %v2779
        %v2903 = vsel %vm2880, %v2866, %v2781
        %v2904 = vsel %vm2880, %v2867, %v2783
        %v2905 = vsel %vm2880, %v2868, %v2785
        %v2906 = vsel %vm2880, %v2869, %v2787
        %v2907 = vsel %vm2880, %v2870, %v2789
        %v2908 = vsel %vm2880, %v2871, %v2791
        %v2909 = vsel %vm2880, %v2872, %v2793
        %v2910 = vsel %vm2880, %v2873, %v2795
        %v2911 = vsel %vm2880, %v2874, %v2797
        %v2912 = vsel %vm2880, %v2875, %v2799
        %v2913 = vsel %vm2880, %v2876, %v2801
        %v2914 = vsel %vm2880, %v2877, %v2803
        %v2915 = vsel %vm2880, %v2878, %v2805
        %v2916 = vsel %vm2880, %v2879, %v2807
        %2949 = vrot.lane.b32.xlu0 %v2883, 120
        %v2950 = vpop.permute.xlu0 %2949
        %2951 = vrot.lane.b32.xlu0 %v2884, 120
        %v2952 = vpop.permute.xlu0 %2951
        %2953 = vrot.lane.b32.xlu0 %v2885, 120
        %v2954 = vpop.permute.xlu0 %2953
        %2955 = vrot.lane.b32.xlu0 %v2886, 120
        %v2956 = vpop.permute.xlu0 %2955
        %2957 = vrot.lane.b32.xlu0 %v2887, 120
        %v2958 = vpop.permute.xlu0 %2957
        %2959 = vrot.lane.b32.xlu0 %v2888, 120
        %v2960 = vpop.permute.xlu0 %2959
        %2961 = vrot.lane.b32.xlu0 %v2889, 120
        %v2962 = vpop.permute.xlu0 %2961
        %2963 = vrot.lane.b32.xlu0 %v2890, 120
        %v2964 = vpop.permute.xlu0 %2963
        %2965 = vrot.lane.b32.xlu0 %v2891, 120
        %v2966 = vpop.permute.xlu0 %2965
        %2967 = vrot.lane.b32.xlu0 %v2892, 120
        %v2968 = vpop.permute.xlu0 %2967
        %2969 = vrot.lane.b32.xlu0 %v2893, 120
        %v2970 = vpop.permute.xlu0 %2969
        %2971 = vrot.lane.b32.xlu0 %v2894, 120
        %v2972 = vpop.permute.xlu0 %2971
        %2973 = vrot.lane.b32.xlu0 %v2895, 120
        %v2974 = vpop.permute.xlu0 %2973
        %2975 = vrot.lane.b32.xlu0 %v2896, 120
        %v2976 = vpop.permute.xlu0 %2975
        %2977 = vrot.lane.b32.xlu0 %v2897, 120
        %v2978 = vpop.permute.xlu0 %2977
        %2979 = vrot.lane.b32.xlu0 %v2898, 120
        %v2980 = vpop.permute.xlu0 %2979
        %2981 = vrot.lane.b32.xlu0 %v2899, 120
        %v2982 = vpop.permute.xlu0 %2981
        %2983 = vrot.lane.b32.xlu0 %v2900, 120
        %v2984 = vpop.permute.xlu0 %2983
        %2985 = vrot.lane.b32.xlu0 %v2901, 120
        %v2986 = vpop.permute.xlu0 %2985
        %2987 = vrot.lane.b32.xlu0 %v2902, 120
        %v2988 = vpop.permute.xlu0 %2987
        %2989 = vrot.lane.b32.xlu0 %v2903, 120
        %v2990 = vpop.permute.xlu0 %2989
        %2991 = vrot.lane.b32.xlu0 %v2904, 120
        %v2992 = vpop.permute.xlu0 %2991
        %2993 = vrot.lane.b32.xlu0 %v2905, 120
        %v2994 = vpop.permute.xlu0 %2993
        %2995 = vrot.lane.b32.xlu0 %v2906, 120
        %v2996 = vpop.permute.xlu0 %2995
        %2997 = vrot.lane.b32.xlu0 %v2907, 120
        %v2998 = vpop.permute.xlu0 %2997
        %2999 = vrot.lane.b32.xlu0 %v2908, 120
        %v3000 = vpop.permute.xlu0 %2999
        %3001 = vrot.lane.b32.xlu0 %v2909, 120
        %v3002 = vpop.permute.xlu0 %3001
        %3003 = vrot.lane.b32.xlu0 %v2910, 120
        %v3004 = vpop.permute.xlu0 %3003
        %3005 = vrot.lane.b32.xlu0 %v2911, 120
        %v3006 = vpop.permute.xlu0 %3005
        %3007 = vrot.lane.b32.xlu0 %v2912, 120
        %v3008 = vpop.permute.xlu0 %3007
        %3009 = vrot.lane.b32.xlu0 %v2913, 120
        %v3010 = vpop.permute.xlu0 %3009
        %3011 = vrot.lane.b32.xlu0 %v2914, 120
        %v3012 = vpop.permute.xlu0 %3011
        %3047 = vrot.lane.b32.xlu0 %v2885, 112
        %v3048 = vpop.permute.xlu0 %3047
        %3049 = vrot.lane.b32.xlu0 %v2886, 112
        %v3050 = vpop.permute.xlu0 %3049
        %3051 = vrot.lane.b32.xlu0 %v2887, 112
        %v3052 = vpop.permute.xlu0 %3051
        %3053 = vrot.lane.b32.xlu0 %v2888, 112
        %v3054 = vpop.permute.xlu0 %3053
        %3055 = vrot.lane.b32.xlu0 %v2889, 112
        %v3056 = vpop.permute.xlu0 %3055
        %3057 = vrot.lane.b32.xlu0 %v2890, 112
        %v3058 = vpop.permute.xlu0 %3057
        %3059 = vrot.lane.b32.xlu0 %v2891, 112
        %v3060 = vpop.permute.xlu0 %3059
        %3061 = vrot.lane.b32.xlu0 %v2892, 112
        %v3062 = vpop.permute.xlu0 %3061
        %3063 = vrot.lane.b32.xlu0 %v2893, 112
        %v3064 = vpop.permute.xlu0 %3063
        %3065 = vrot.lane.b32.xlu0 %v2894, 112
        %v3066 = vpop.permute.xlu0 %3065
        %3067 = vrot.lane.b32.xlu0 %v2895, 112
        %v3068 = vpop.permute.xlu0 %3067
        %3069 = vrot.lane.b32.xlu0 %v2896, 112
        %v3070 = vpop.permute.xlu0 %3069
        %3071 = vrot.lane.b32.xlu0 %v2897, 112
        %v3072 = vpop.permute.xlu0 %3071
        %3073 = vrot.lane.b32.xlu0 %v2898, 112
        %v3074 = vpop.permute.xlu0 %3073
        %3075 = vrot.lane.b32.xlu0 %v2899, 112
        %v3076 = vpop.permute.xlu0 %3075
        %3077 = vrot.lane.b32.xlu0 %v2900, 112
        %v3078 = vpop.permute.xlu0 %3077
        %3079 = vrot.lane.b32.xlu0 %v2901, 112
        %v3080 = vpop.permute.xlu0 %3079
        %3081 = vrot.lane.b32.xlu0 %v2902, 112
        %v3082 = vpop.permute.xlu0 %3081
        %3083 = vrot.lane.b32.xlu0 %v2903, 112
        %v3084 = vpop.permute.xlu0 %3083
        %3085 = vrot.lane.b32.xlu0 %v2904, 112
        %v3086 = vpop.permute.xlu0 %3085
        %3087 = vrot.lane.b32.xlu0 %v2905, 112
        %v3088 = vpop.permute.xlu0 %3087
        %3089 = vrot.lane.b32.xlu0 %v2906, 112
        %v3090 = vpop.permute.xlu0 %3089
        %3091 = vrot.lane.b32.xlu0 %v2907, 112
        %v3092 = vpop.permute.xlu0 %3091
        %3093 = vrot.lane.b32.xlu0 %v2908, 112
        %v3094 = vpop.permute.xlu0 %3093
        %3095 = vrot.lane.b32.xlu0 %v2909, 112
        %v3096 = vpop.permute.xlu0 %3095
        %3097 = vrot.lane.b32.xlu0 %v2910, 112
        %v3098 = vpop.permute.xlu0 %3097
        %3099 = vrot.lane.b32.xlu0 %v2911, 112
        %v3100 = vpop.permute.xlu0 %3099
        %3101 = vrot.lane.b32.xlu0 %v2912, 112
        %v3102 = vpop.permute.xlu0 %3101
        %3103 = vrot.lane.b32.xlu0 %v2913, 112
        %v3104 = vpop.permute.xlu0 %3103
        %3105 = vrot.lane.b32.xlu0 %v2914, 112
        %v3106 = vpop.permute.xlu0 %3105
        %3107 = vrot.lane.b32.xlu0 %v2915, 112
        %v3108 = vpop.permute.xlu0 %3107
        %3109 = vrot.lane.b32.xlu0 %v2916, 112
        %v3110 = vpop.permute.xlu0 %3109
        %vm3143 = vcmask 982016
        %v3144 = vsel %vm3143, %v2881, %v2950
        %v3145 = vsel %vm3143, %v2882, %v2952
        %v3146 = vsel %vm3143, %v2883, %v2954
        %v3147 = vsel %vm3143, %v2884, %v2956
        %v3148 = vsel %vm3143, %v2885, %v2958
        %v3149 = vsel %vm3143, %v2886, %v2960
        %v3150 = vsel %vm3143, %v2887, %v2962
        %v3151 = vsel %vm3143, %v2888, %v2964
        %v3152 = vsel %vm3143, %v2889, %v2966
        %v3153 = vsel %vm3143, %v2890, %v2968
        %v3154 = vsel %vm3143, %v2891, %v2970
        %v3155 = vsel %vm3143, %v2892, %v2972
        %v3156 = vsel %vm3143, %v2893, %v2974
        %v3157 = vsel %vm3143, %v2894, %v2976
        %v3158 = vsel %vm3143, %v2895, %v2978
        %v3159 = vsel %vm3143, %v2896, %v2980
        %v3160 = vsel %vm3143, %v2897, %v2982
        %v3161 = vsel %vm3143, %v2898, %v2984
        %v3162 = vsel %vm3143, %v2899, %v2986
        %v3163 = vsel %vm3143, %v2900, %v2988
        %v3164 = vsel %vm3143, %v2901, %v2990
        %v3165 = vsel %vm3143, %v2902, %v2992
        %v3166 = vsel %vm3143, %v2903, %v2994
        %v3167 = vsel %vm3143, %v2904, %v2996
        %v3168 = vsel %vm3143, %v2905, %v2998
        %v3169 = vsel %vm3143, %v2906, %v3000
        %v3170 = vsel %vm3143, %v2907, %v3002
        %v3171 = vsel %vm3143, %v2908, %v3004
        %v3172 = vsel %vm3143, %v2909, %v3006
        %v3173 = vsel %vm3143, %v2910, %v3008
        %v3174 = vsel %vm3143, %v2911, %v3010
        %v3175 = vsel %vm3143, %v2912, %v3012
        %vm3176 = vcmask 916480
        %v3177 = vsel %vm3176, %v2950, %v3048
        %v3178 = vsel %vm3176, %v2952, %v3050
        %v3179 = vsel %vm3176, %v2954, %v3052
        %v3180 = vsel %vm3176, %v2956, %v3054
        %v3181 = vsel %vm3176, %v2958, %v3056
        %v3182 = vsel %vm3176, %v2960, %v3058
        %v3183 = vsel %vm3176, %v2962, %v3060
        %v3184 = vsel %vm3176, %v2964, %v3062
        %v3185 = vsel %vm3176, %v2966, %v3064
        %v3186 = vsel %vm3176, %v2968, %v3066
        %v3187 = vsel %vm3176, %v2970, %v3068
        %v3188 = vsel %vm3176, %v2972, %v3070
        %v3189 = vsel %vm3176, %v2974, %v3072
        %v3190 = vsel %vm3176, %v2976, %v3074
        %v3191 = vsel %vm3176, %v2978, %v3076
        %v3192 = vsel %vm3176, %v2980, %v3078
        %v3193 = vsel %vm3176, %v2982, %v3080
        %v3194 = vsel %vm3176, %v2984, %v3082
        %v3195 = vsel %vm3176, %v2986, %v3084
        %v3196 = vsel %vm3176, %v2988, %v3086
        %v3197 = vsel %vm3176, %v2990, %v3088
        %v3198 = vsel %vm3176, %v2992, %v3090
        %v3199 = vsel %vm3176, %v2994, %v3092
        %v3200 = vsel %vm3176, %v2996, %v3094
        %v3201 = vsel %vm3176, %v2998, %v3096
        %v3202 = vsel %vm3176, %v3000, %v3098
        %v3203 = vsel %vm3176, %v3002, %v3100
        %v3204 = vsel %vm3176, %v3004, %v3102
        %v3205 = vsel %vm3176, %v3006, %v3104
        %v3206 = vsel %vm3176, %v3008, %v3106
        %v3207 = vsel %vm3176, %v3010, %v3108
        %v3208 = vsel %vm3176, %v3012, %v3110
        %v3209 = vpack.c.bf16 %v3145, %v3144
        %v3210 = vpack.c.bf16 %v3178, %v3177
        %v3211 = vpack.c.bf16 %v3050, %v3048
        %v3212 = vpack.c.bf16 %v3147, %v3146
        %v3213 = vpack.c.bf16 %v3180, %v3179
        %v3214 = vpack.c.bf16 %v3054, %v3052
        %v3215 = vpack.c.bf16 %v3149, %v3148
        %v3216 = vpack.c.bf16 %v3182, %v3181
        %v3217 = vpack.c.bf16 %v3058, %v3056
        %v3218 = vpack.c.bf16 %v3151, %v3150
        %v3219 = vpack.c.bf16 %v3184, %v3183
        %v3220 = vpack.c.bf16 %v3062, %v3060
        %v3221 = vpack.c.bf16 %v3153, %v3152
        %v3222 = vpack.c.bf16 %v3186, %v3185
        %v3223 = vpack.c.bf16 %v3066, %v3064
        %v3224 = vpack.c.bf16 %v3155, %v3154
        %v3225 = vpack.c.bf16 %v3188, %v3187
        %v3226 = vpack.c.bf16 %v3070, %v3068
        %v3227 = vpack.c.bf16 %v3157, %v3156
        %v3228 = vpack.c.bf16 %v3190, %v3189
        %v3229 = vpack.c.bf16 %v3074, %v3072
        %v3230 = vpack.c.bf16 %v3159, %v3158
        %v3231 = vpack.c.bf16 %v3192, %v3191
        %v3232 = vpack.c.bf16 %v3078, %v3076
        %v3233 = vpack.c.bf16 %v3161, %v3160
        %v3234 = vpack.c.bf16 %v3194, %v3193
        %v3235 = vpack.c.bf16 %v3082, %v3080
        %v3236 = vpack.c.bf16 %v3163, %v3162
        %v3237 = vpack.c.bf16 %v3196, %v3195
        %v3238 = vpack.c.bf16 %v3086, %v3084
        %v3239 = vpack.c.bf16 %v3165, %v3164
        %v3240 = vpack.c.bf16 %v3198, %v3197
        %v3241 = vpack.c.bf16 %v3090, %v3088
        %v3242 = vpack.c.bf16 %v3167, %v3166
        %v3243 = vpack.c.bf16 %v3200, %v3199
        %v3244 = vpack.c.bf16 %v3094, %v3092
        %v3245 = vpack.c.bf16 %v3169, %v3168
        %v3246 = vpack.c.bf16 %v3202, %v3201
        %v3247 = vpack.c.bf16 %v3098, %v3096
        %v3248 = vpack.c.bf16 %v3171, %v3170
        %v3249 = vpack.c.bf16 %v3204, %v3203
        %v3250 = vpack.c.bf16 %v3102, %v3100
        %v3251 = vpack.c.bf16 %v3173, %v3172
        %v3252 = vpack.c.bf16 %v3206, %v3205
        %v3253 = vpack.c.bf16 %v3106, %v3104
        %v3254 = vpack.c.bf16 %v3175, %v3174
        %v3255 = vpack.c.bf16 %v3208, %v3207
        %v3256 = vpack.c.bf16 %v3110, %v3108
        %v3257 = vld [vmem:[#allocation15] sm:$0xf]
        %v3258 = vld [vmem:[#allocation15 + $0x4] sm:$0xf]
        %v3259 = vld [vmem:[#allocation15 + $0x8] sm:$0xf]
        %v3260 = vld [vmem:[#allocation15 + $0xc] sm:$0xf]
        %v3261 = vld [vmem:[#allocation15 + $0x10] sm:$0xf]
        %v3262 = vld [vmem:[#allocation15 + $0x14] sm:$0xf]
        %v3263 = vld [vmem:[#allocation15 + $0x18] sm:$0xf]
        %v3264 = vld [vmem:[#allocation15 + $0x1c] sm:$0xf]
        %v3265 = vld [vmem:[#allocation15 + $0x20] sm:$0xf]
        %v3266 = vld [vmem:[#allocation15 + $0x24] sm:$0xf]
        %v3267 = vld [vmem:[#allocation15 + $0x28] sm:$0xf]
        %v3268 = vld [vmem:[#allocation15 + $0x2c] sm:$0xf]
        %v3269 = vld [vmem:[#allocation15 + $0x30] sm:$0xf]
        %v3270 = vld [vmem:[#allocation15 + $0x34] sm:$0xf]
        %v3271 = vld [vmem:[#allocation15 + $0x38] sm:$0xf]
        %v3272 = vld [vmem:[#allocation15 + $0x3c] sm:$0xf]
        %v3273 = vld [vmem:[#allocation15 + $0x40] sm:$0xf]
        %v3274 = vld [vmem:[#allocation15 + $0x44] sm:$0xf]
        %v3275 = vld [vmem:[#allocation15 + $0x48] sm:$0xf]
        %v3276 = vld [vmem:[#allocation15 + $0x4c] sm:$0xf]
        %v3277 = vld [vmem:[#allocation15 + $0x50] sm:$0xf]
        %v3278 = vld [vmem:[#allocation15 + $0x54] sm:$0xf]
        %v3279 = vld [vmem:[#allocation15 + $0x58] sm:$0xf]
        %v3280 = vld [vmem:[#allocation15 + $0x5c] sm:$0xf]
        %v3281 = vld [vmem:[#allocation15 + $0x60] sm:$0xf]
        %v3282 = vld [vmem:[#allocation15 + $0x64] sm:$0xf]
        %v3283 = vld [vmem:[#allocation15 + $0x68] sm:$0xf]
        %v3284 = vld [vmem:[#allocation15 + $0x6c] sm:$0xf]
        %v3285 = vld [vmem:[#allocation15 + $0x70] sm:$0xf]
        %v3286 = vld [vmem:[#allocation15 + $0x74] sm:$0xf]
        %v3287 = vld [vmem:[#allocation15 + $0x78] sm:$0xf]
        %v3288 = vld [vmem:[#allocation15 + $0x7c] sm:$0xf]
        %v3289 = vld [vmem:[#allocation15 + $0x80] sm:$0xf]
        %v3290 = vld [vmem:[#allocation15 + $0x84] sm:$0xf]
        %v3291 = vld [vmem:[#allocation15 + $0x88] sm:$0xf]
        %v3292 = vld [vmem:[#allocation15 + $0x8c] sm:$0xf]
        %v3293 = vld [vmem:[#allocation15 + $0x90] sm:$0xf]
        %v3294 = vld [vmem:[#allocation15 + $0x94] sm:$0xf]
        %v3295 = vld [vmem:[#allocation15 + $0x98] sm:$0xf]
        %v3296 = vld [vmem:[#allocation15 + $0x9c] sm:$0xf]
        %v3297 = vld [vmem:[#allocation15 + $0xa0] sm:$0xf]
        %v3298 = vld [vmem:[#allocation15 + $0xa4] sm:$0xf]
        %v3299 = vld [vmem:[#allocation15 + $0xa8] sm:$0xf]
        %v3300 = vld [vmem:[#allocation15 + $0xac] sm:$0xf]
        %v3301 = vld [vmem:[#allocation15 + $0xb0] sm:$0xf]
        %v3347 = vunpack.c.l.b16 %v3257
        %v3348 = vunpack.c.l.b16 %v3258
        %v3349 = vunpack.c.l.b16 %v3259
        %v3350 = vunpack.c.l.b16 %v3260
        %v3351 = vunpack.c.l.b16 %v3261
        %v3352 = vunpack.c.l.b16 %v3262
        %v3353 = vunpack.c.l.b16 %v3263
        %v3354 = vunpack.c.l.b16 %v3264
        %v3355 = vunpack.c.l.b16 %v3265
        %v3356 = vunpack.c.l.b16 %v3266
        %v3357 = vunpack.c.l.b16 %v3267
        %v3358 = vunpack.c.l.b16 %v3268
        %v3359 = vunpack.c.l.b16 %v3269
        %v3360 = vunpack.c.l.b16 %v3270
        %v3361 = vunpack.c.l.b16 %v3271
        %v3362 = vunpack.c.l.b16 %v3272
        %v3363 = vunpack.c.l.b16 %v3273
        %v3364 = vunpack.c.l.b16 %v3274
        %v3365 = vunpack.c.l.b16 %v3275
        %v3366 = vunpack.c.l.b16 %v3276
        %v3367 = vunpack.c.l.b16 %v3277
        %v3368 = vunpack.c.l.b16 %v3278
        %v3369 = vunpack.c.l.b16 %v3279
        %v3370 = vunpack.c.l.b16 %v3280
        %v3371 = vunpack.c.l.b16 %v3281
        %v3372 = vunpack.c.l.b16 %v3282
        %v3373 = vunpack.c.l.b16 %v3283
        %v3374 = vunpack.c.l.b16 %v3284
        %v3375 = vunpack.c.l.b16 %v3285
        %v3376 = vunpack.c.l.b16 %v3286
        %v3377 = vunpack.c.l.b16 %v3287
        %v3378 = vunpack.c.l.b16 %v3288
        %v3379 = vunpack.c.l.b16 %v3289
        %v3380 = vunpack.c.l.b16 %v3290
        %v3381 = vunpack.c.l.b16 %v3291
        %v3382 = vunpack.c.l.b16 %v3292
        %v3383 = vunpack.c.l.b16 %v3293
        %v3384 = vunpack.c.l.b16 %v3294
        %v3385 = vunpack.c.l.b16 %v3295
        %v3386 = vunpack.c.l.b16 %v3296
        %v3387 = vunpack.c.l.b16 %v3297
        %v3388 = vunpack.c.l.b16 %v3298
        %v3389 = vunpack.c.l.b16 %v3299
        %v3390 = vunpack.c.l.b16 %v3300
        %v3391 = vunpack.c.l.b16 %v3301
        %v3392 = vpack.c.b16 %v3348, %v3347
        %v3393 = vpack.c.b16 %v3350, %v3349
        %v3394 = vpack.c.b16 %v3352, %v3351
        %v3395 = vpack.c.b16 %v3354, %v3353
        %v3396 = vpack.c.b16 %v3356, %v3355
        %v3397 = vpack.c.b16 %v3358, %v3357
        %v3398 = vpack.c.b16 %v3360, %v3359
        %v3399 = vpack.c.b16 %v3362, %v3361
        %v3400 = vpack.c.b16 %v3364, %v3363
        %v3401 = vpack.c.b16 %v3366, %v3365
        %v3402 = vpack.c.b16 %v3368, %v3367
        %v3403 = vpack.c.b16 %v3370, %v3369
        %v3404 = vpack.c.b16 %v3372, %v3371
        %v3405 = vpack.c.b16 %v3374, %v3373
        %v3406 = vpack.c.b16 %v3376, %v3375
        %v3407 = vpack.c.b16 %v3378, %v3377
        %v3408 = vpack.c.b16 %v3380, %v3379
        %v3409 = vpack.c.b16 %v3382, %v3381
        %v3410 = vpack.c.b16 %v3384, %v3383
        %v3411 = vpack.c.b16 %v3386, %v3385
        %v3412 = vpack.c.b16 %v3388, %v3387
        %v3413 = vpack.c.b16 %v3390, %v3389
        %v3414 = vpack.c.b16 %v3391, %v3391
        %vm3437 = vcmask 850944
        %v3439 = vsel %vm3437, %v3211, 0
        %v3442 = vsel %vm3437, %v3214, 0
        %v3445 = vsel %vm3437, %v3217, 0
        %v3448 = vsel %vm3437, %v3220, 0
        %v3451 = vsel %vm3437, %v3223, 0
        %v3454 = vsel %vm3437, %v3226, 0
        %v3457 = vsel %vm3437, %v3229, 0
        %v3460 = vsel %vm3437, %v3232, 0
        %v3463 = vsel %vm3437, %v3235, 0
        %v3466 = vsel %vm3437, %v3238, 0
        %v3469 = vsel %vm3437, %v3241, 0
        %v3472 = vsel %vm3437, %v3244, 0
        %v3475 = vsel %vm3437, %v3247, 0
        %v3478 = vsel %vm3437, %v3250, 0
        %v3481 = vsel %vm3437, %v3253, 0
        %v3484 = vsel %vm3437, %v3256, 0
        %vm3486 = vcmask 1043456
        %v3488 = vsel %vm3486, %v3414, 0
        %3490 = vmatprep.subr.bf16.mxu0 0
        %3491 = vmatpush1.bf16.msra.mxu0 %v3392
        %3492 = vmatprep.subr.bf16.mxu0 0
        %3493 = vmatpush1.bf16.msra.mxu0 %v3393
        %3494 = vmatprep.subr.bf16.mxu0 0
        %3495 = vmatpush1.bf16.msra.mxu0 %v3394
        %3496 = vmatprep.subr.bf16.mxu0 0
        %3497 = vmatpush1.bf16.msra.mxu0 %v3395
        %3498 = vmatprep.subr.bf16.mxu0 0
        %3499 = vmatpush1.bf16.msra.mxu0 %v3396
        %3500 = vmatprep.subr.bf16.mxu0 0
        %3501 = vmatpush1.bf16.msra.mxu0 %v3397
        %3502 = vmatprep.subr.bf16.mxu0 0
        %3503 = vmatpush1.bf16.msra.mxu0 %v3398
        %3504 = vmatprep.subr.bf16.mxu0 0
        %3505 = vmatpush1.bf16.msra.mxu0 %v3399
        %3506 = vmatprep.subr.bf16.mxu0 0
        %3507 = vmatpush1.bf16.msra.mxu0 %v3400
        %3508 = vmatprep.subr.bf16.mxu0 0
        %3509 = vmatpush1.bf16.msra.mxu0 %v3401
        %3510 = vmatprep.subr.bf16.mxu0 0
        %3511 = vmatpush1.bf16.msra.mxu0 %v3402
        %3512 = vmatprep.subr.bf16.mxu0 0
        %3513 = vmatpush1.bf16.msra.mxu0 %v3403
        %3514 = vmatprep.subr.bf16.mxu0 0
        %3515 = vmatpush1.bf16.msra.mxu0 %v3404
        %3516 = vmatprep.subr.bf16.mxu0 0
        %3517 = vmatpush1.bf16.msra.mxu0 %v3405
        %3518 = vmatprep.subr.bf16.mxu0 0
        %3519 = vmatpush1.bf16.msra.mxu0 %v3406
        %3520 = vmatprep.subr.bf16.mxu0 0
        %3521 = vmatpush1.bf16.msra.mxu0 %v3407
        %3522 = vmatprep.mubr.bf16.mxu0 %v3210
        %3523 = vmatmul.mubr.bf16.gmra.mrb[0].mxu0 %v3209
        %v3524 = vpop.f32.mrb[0].mxu0
        %v3525 = vadd.f32 0.0, %v3524
        %v3526 = vpop.f32.mrb[0].mxu0
        %v3527 = vpop.f32.mrb[0].mxu0
        %v3528 = vadd.f32 0.0, %v3527
        %v3529 = vpop.f32.mrb[0].mxu0
        %3530 = vmatprep.mubr.bf16.mxu0 %v3213
        %3531 = vmatmul.mubr.bf16.gmra.mrb[0].mxu0 %v3212
        %v3532 = vpop.f32.mrb[0].mxu0
        %v3533 = vadd.f32 0.0, %v3532
        %v3534 = vpop.f32.mrb[0].mxu0
        %v3535 = vpop.f32.mrb[0].mxu0
        %v3536 = vadd.f32 0.0, %v3535
        %v3537 = vpop.f32.mrb[0].mxu0
        %3538 = vmatprep.mubr.bf16.mxu0 %v3216
        %3539 = vmatmul.mubr.bf16.gmra.mrb[0].mxu0 %v3215
        %v3540 = vpop.f32.mrb[0].mxu0
        %v3541 = vadd.f32 0.0, %v3540
        %v3542 = vpop.f32.mrb[0].mxu0
        %v3543 = vpop.f32.mrb[0].mxu0
        %v3544 = vadd.f32 0.0, %v3543
        %v3545 = vpop.f32.mrb[0].mxu0
        %3546 = vmatprep.mubr.bf16.mxu0 %v3219
        %3547 = vmatmul.mubr.bf16.gmra.mrb[0].mxu0 %v3218
        %v3548 = vpop.f32.mrb[0].mxu0
        %v3549 = vadd.f32 0.0, %v3548
        %v3550 = vpop.f32.mrb[0].mxu0
        %v3551 = vpop.f32.mrb[0].mxu0
        %v3552 = vadd.f32 0.0, %v3551
        %v3553 = vpop.f32.mrb[0].mxu0
        %3554 = vmatprep.mubr.bf16.mxu0 %v3222
        %3555 = vmatmul.mubr.bf16.gmra.mrb[0].mxu0 %v3221
        %v3556 = vpop.f32.mrb[0].mxu0
        %v3557 = vadd.f32 0.0, %v3556
        %v3558 = vpop.f32.mrb[0].mxu0
        %v3559 = vpop.f32.mrb[0].mxu0
        %v3560 = vadd.f32 0.0, %v3559
        %v3561 = vpop.f32.mrb[0].mxu0
        %3562 = vmatprep.mubr.bf16.mxu0 %v3225
        %3563 = vmatmul.mubr.bf16.gmra.mrb[0].mxu0 %v3224
        %v3564 = vpop.f32.mrb[0].mxu0
        %v3565 = vadd.f32 0.0, %v3564
        %v3566 = vpop.f32.mrb[0].mxu0
        %v3567 = vpop.f32.mrb[0].mxu0
        %v3568 = vadd.f32 0.0, %v3567
        %v3569 = vpop.f32.mrb[0].mxu0
        %3570 = vmatprep.mubr.bf16.mxu0 %v3228
        %3571 = vmatmul.mubr.bf16.gmra.mrb[0].mxu0 %v3227
        %v3572 = vpop.f32.mrb[0].mxu0
        %v3573 = vadd.f32 0.0, %v3572
        %v3574 = vpop.f32.mrb[0].mxu0
        %v3575 = vpop.f32.mrb[0].mxu0
        %v3576 = vadd.f32 0.0, %v3575
        %v3577 = vpop.f32.mrb[0].mxu0
        %3578 = vmatprep.mubr.bf16.mxu0 %v3231
        %3579 = vmatmul.mubr.bf16.gmra.mrb[0].mxu0 %v3230
        %v3580 = vpop.f32.mrb[0].mxu0
        %v3581 = vadd.f32 0.0, %v3580
        %v3582 = vpop.f32.mrb[0].mxu0
        %v3583 = vpop.f32.mrb[0].mxu0
        %v3584 = vadd.f32 0.0, %v3583
        %v3585 = vpop.f32.mrb[0].mxu0
        %3586 = vmatprep.mubr.bf16.mxu0 %v3234
        %3587 = vmatmul.mubr.bf16.gmra.mrb[0].mxu0 %v3233
        %v3588 = vpop.f32.mrb[0].mxu0
        %v3589 = vadd.f32 0.0, %v3588
        %v3590 = vpop.f32.mrb[0].mxu0
        %v3591 = vpop.f32.mrb[0].mxu0
        %v3592 = vadd.f32 0.0, %v3591
        %v3593 = vpop.f32.mrb[0].mxu0
        %3594 = vmatprep.mubr.bf16.mxu0 %v3237
        %3595 = vmatmul.mubr.bf16.gmra.mrb[0].mxu0 %v3236
        %v3596 = vpop.f32.mrb[0].mxu0
        %v3597 = vadd.f32 0.0, %v3596
        %v3598 = vpop.f32.mrb[0].mxu0
        %v3599 = vpop.f32.mrb[0].mxu0
        %v3600 = vadd.f32 0.0, %v3599
        %v3601 = vpop.f32.mrb[0].mxu0
        %3602 = vmatprep.mubr.bf16.mxu0 %v3240
        %3603 = vmatmul.mubr.bf16.gmra.mrb[0].mxu0 %v3239
        %v3604 = vpop.f32.mrb[0].mxu0
        %v3605 = vadd.f32 0.0, %v3604
        %v3606 = vpop.f32.mrb[0].mxu0
        %v3607 = vpop.f32.mrb[0].mxu0
        %v3608 = vadd.f32 0.0, %v3607
        %v3609 = vpop.f32.mrb[0].mxu0
        %3610 = vmatprep.mubr.bf16.mxu0 %v3243
        %3611 = vmatmul.mubr.bf16.gmra.mrb[0].mxu0 %v3242
        %v3612 = vpop.f32.mrb[0].mxu0
        %v3613 = vadd.f32 0.0, %v3612
        %v3614 = vpop.f32.mrb[0].mxu0
        %v3615 = vpop.f32.mrb[0].mxu0
        %v3616 = vadd.f32 0.0, %v3615
        %v3617 = vpop.f32.mrb[0].mxu0
        %3618 = vmatprep.mubr.bf16.mxu0 %v3246
        %3619 = vmatmul.mubr.bf16.gmra.mrb[0].mxu0 %v3245
        %v3620 = vpop.f32.mrb[0].mxu0
        %v3621 = vadd.f32 0.0, %v3620
        %v3622 = vpop.f32.mrb[0].mxu0
        %v3623 = vpop.f32.mrb[0].mxu0
        %v3624 = vadd.f32 0.0, %v3623
        %v3625 = vpop.f32.mrb[0].mxu0
        %3626 = vmatprep.mubr.bf16.mxu0 %v3249
        %3627 = vmatmul.mubr.bf16.gmra.mrb[0].mxu0 %v3248
        %v3628 = vpop.f32.mrb[0].mxu0
        %v3629 = vadd.f32 0.0, %v3628
        %v3630 = vpop.f32.mrb[0].mxu0
        %v3631 = vpop.f32.mrb[0].mxu0
        %v3632 = vadd.f32 0.0, %v3631
        %v3633 = vpop.f32.mrb[0].mxu0
        %3634 = vmatprep.mubr.bf16.mxu0 %v3252
        %3635 = vmatmul.mubr.bf16.gmra.mrb[0].mxu0 %v3251
        %v3636 = vpop.f32.mrb[0].mxu0
        %v3637 = vadd.f32 0.0, %v3636
        %v3638 = vpop.f32.mrb[0].mxu0
        %v3639 = vpop.f32.mrb[0].mxu0
        %v3640 = vadd.f32 0.0, %v3639
        %v3641 = vpop.f32.mrb[0].mxu0
        %3642 = vmatprep.mubr.bf16.mxu0 %v3255
        %3643 = vmatmul.mubr.bf16.gmra.mrb[0].mxu0 %v3254
        %v3644 = vpop.f32.mrb[0].mxu0
        %v3645 = vadd.f32 0.0, %v3644
        %v3646 = vpop.f32.mrb[0].mxu0
        %v3647 = vpop.f32.mrb[0].mxu0
        %v3648 = vadd.f32 0.0, %v3647
        %v3649 = vpop.f32.mrb[0].mxu0
        %3650 = vdwg.mxu0
        %3651 = vmatprep.subr.bf16.mxu0 0
        %3652 = vmatpush1.bf16.msra.mxu0 %v3408
        %3653 = vmatprep.subr.bf16.mxu0 0
        %3654 = vmatpush1.bf16.msra.mxu0 %v3409
        %3655 = vmatprep.subr.bf16.mxu0 0
        %3656 = vmatpush1.bf16.msra.mxu0 %v3410
        %3657 = vmatprep.subr.bf16.mxu0 0
        %3658 = vmatpush1.bf16.msra.mxu0 %v3411
        %3659 = vmatprep.subr.bf16.mxu0 0
        %3660 = vmatpush1.bf16.msra.mxu0 %v3412
        %3661 = vmatprep.subr.bf16.mxu0 0
        %3662 = vmatpush1.bf16.msra.mxu0 %v3413
        %3663 = vmatprep.subr.bf16.mxu0 0
        %3664 = vmatpush1.bf16.msra.mxu0 %v3488
        %3665 = vmatprep.subr.bf16.mxu0 0
        %3666 = vmatpush1.bf16.msra.mxu0 0
        %3667 = vmatprep.subr.bf16.mxu0 0
        %3668 = vmatpush1.bf16.msra.mxu0 0
        %3669 = vmatprep.subr.bf16.mxu0 0
        %3670 = vmatpush1.bf16.msra.mxu0 0
        %3671 = vmatprep.subr.bf16.mxu0 0
        %3672 = vmatpush1.bf16.msra.mxu0 0
        %3673 = vmatprep.subr.bf16.mxu0 0
        %3674 = vmatpush1.bf16.msra.mxu0 0
        %3675 = vmatprep.subr.bf16.mxu0 0
        %3676 = vmatpush1.bf16.msra.mxu0 0
        %3677 = vmatprep.subr.bf16.mxu0 0
        %3678 = vmatpush1.bf16.msra.mxu0 0
        %3679 = vmatprep.subr.bf16.mxu0 0
        %3680 = vmatpush1.bf16.msra.mxu0 0
        %3681 = vmatprep.subr.bf16.mxu0 0
        %3682 = vmatpush1.bf16.msra.mxu0 0
        %3683 = vmatprep.mubr.bf16.mxu0 0
        %3684 = vmatmul.mubr.bf16.gmra.mrb[0].mxu0 %v3439
        %v3685 = vpop.f32.mrb[0].mxu0
        %v3686 = vadd.f32 %v3525, %v3685
        %v3687 = vpop.f32.mrb[0].mxu0
        %v3688 = vpop.f32.mrb[0].mxu0
        %v3689 = vadd.f32 %v3528, %v3688
        %v3690 = vpop.f32.mrb[0].mxu0
        %3691 = vmatprep.mubr.bf16.mxu0 0
        %3692 = vmatmul.mubr.bf16.gmra.mrb[0].mxu0 %v3442
        %v3693 = vpop.f32.mrb[0].mxu0
        %v3694 = vadd.f32 %v3533, %v3693
        %v3695 = vpop.f32.mrb[0].mxu0
        %v3696 = vpop.f32.mrb[0].mxu0
        %v3697 = vadd.f32 %v3536, %v3696
        %v3698 = vpop.f32.mrb[0].mxu0
        %3699 = vmatprep.mubr.bf16.mxu0 0
        %3700 = vmatmul.mubr.bf16.gmra.mrb[0].mxu0 %v3445
        %v3701 = vpop.f32.mrb[0].mxu0
        %v3702 = vadd.f32 %v3541, %v3701
        %v3703 = vpop.f32.mrb[0].mxu0
        %v3704 = vpop.f32.mrb[0].mxu0
        %v3705 = vadd.f32 %v3544, %v3704
        %v3706 = vpop.f32.mrb[0].mxu0
        %3707 = vmatprep.mubr.bf16.mxu0 0
        %3708 = vmatmul.mubr.bf16.gmra.mrb[0].mxu0 %v3448
        %v3709 = vpop.f32.mrb[0].mxu0
        %v3710 = vadd.f32 %v3549, %v3709
        %v3711 = vpop.f32.mrb[0].mxu0
        %v3712 = vpop.f32.mrb[0].mxu0
        %v3713 = vadd.f32 %v3552, %v3712
        %v3714 = vpop.f32.mrb[0].mxu0
        %3715 = vmatprep.mubr.bf16.mxu0 0
        %3716 = vmatmul.mubr.bf16.gmra.mrb[0].mxu0 %v3451
        %v3717 = vpop.f32.mrb[0].mxu0
        %v3718 = vadd.f32 %v3557, %v3717
        %v3719 = vpop.f32.mrb[0].mxu0
        %v3720 = vpop.f32.mrb[0].mxu0
        %v3721 = vadd.f32 %v3560, %v3720
        %v3722 = vpop.f32.mrb[0].mxu0
        %3723 = vmatprep.mubr.bf16.mxu0 0
        %3724 = vmatmul.mubr.bf16.gmra.mrb[0].mxu0 %v3454
        %v3725 = vpop.f32.mrb[0].mxu0
        %v3726 = vadd.f32 %v3565, %v3725
        %v3727 = vpop.f32.mrb[0].mxu0
        %v3728 = vpop.f32.mrb[0].mxu0
        %v3729 = vadd.f32 %v3568, %v3728
        %v3730 = vpop.f32.mrb[0].mxu0
        %3731 = vmatprep.mubr.bf16.mxu0 0
        %3732 = vmatmul.mubr.bf16.gmra.mrb[0].mxu0 %v3457
        %v3733 = vpop.f32.mrb[0].mxu0
        %v3734 = vadd.f32 %v3573, %v3733
        %v3735 = vpop.f32.mrb[0].mxu0
        %v3736 = vpop.f32.mrb[0].mxu0
        %v3737 = vadd.f32 %v3576, %v3736
        %v3738 = vpop.f32.mrb[0].mxu0
        %3739 = vmatprep.mubr.bf16.mxu0 0
        %3740 = vmatmul.mubr.bf16.gmra.mrb[0].mxu0 %v3460
        %v3741 = vpop.f32.mrb[0].mxu0
        %v3742 = vadd.f32 %v3581, %v3741
        %v3743 = vpop.f32.mrb[0].mxu0
        %v3744 = vpop.f32.mrb[0].mxu0
        %v3745 = vadd.f32 %v3584, %v3744
        %v3746 = vpop.f32.mrb[0].mxu0
        %3747 = vmatprep.mubr.bf16.mxu0 0
        %3748 = vmatmul.mubr.bf16.gmra.mrb[0].mxu0 %v3463
        %v3749 = vpop.f32.mrb[0].mxu0
        %v3750 = vadd.f32 %v3589, %v3749
        %v3751 = vpop.f32.mrb[0].mxu0
        %v3752 = vpop.f32.mrb[0].mxu0
        %v3753 = vadd.f32 %v3592, %v3752
        %v3754 = vpop.f32.mrb[0].mxu0
        %3755 = vmatprep.mubr.bf16.mxu0 0
        %3756 = vmatmul.mubr.bf16.gmra.mrb[0].mxu0 %v3466
        %v3757 = vpop.f32.mrb[0].mxu0
        %v3758 = vadd.f32 %v3597, %v3757
        %v3759 = vpop.f32.mrb[0].mxu0
        %v3760 = vpop.f32.mrb[0].mxu0
        %v3761 = vadd.f32 %v3600, %v3760
        %v3762 = vpop.f32.mrb[0].mxu0
        %3763 = vmatprep.mubr.bf16.mxu0 0
        %3764 = vmatmul.mubr.bf16.gmra.mrb[0].mxu0 %v3469
        %v3765 = vpop.f32.mrb[0].mxu0
        %v3766 = vadd.f32 %v3605, %v3765
        %v3767 = vpop.f32.mrb[0].mxu0
        %v3768 = vpop.f32.mrb[0].mxu0
        %v3769 = vadd.f32 %v3608, %v3768
        %v3770 = vpop.f32.mrb[0].mxu0
        %3771 = vmatprep.mubr.bf16.mxu0 0
        %3772 = vmatmul.mubr.bf16.gmra.mrb[0].mxu0 %v3472
        %v3773 = vpop.f32.mrb[0].mxu0
        %v3774 = vadd.f32 %v3613, %v3773
        %v3775 = vpop.f32.mrb[0].mxu0
        %v3776 = vpop.f32.mrb[0].mxu0
        %v3777 = vadd.f32 %v3616, %v3776
        %v3778 = vpop.f32.mrb[0].mxu0
        %3779 = vmatprep.mubr.bf16.mxu0 0
        %3780 = vmatmul.mubr.bf16.gmra.mrb[0].mxu0 %v3475
        %v3781 = vpop.f32.mrb[0].mxu0
        %v3782 = vadd.f32 %v3621, %v3781
        %v3783 = vpop.f32.mrb[0].mxu0
        %v3784 = vpop.f32.mrb[0].mxu0
        %v3785 = vadd.f32 %v3624, %v3784
        %v3786 = vpop.f32.mrb[0].mxu0
        %3787 = vmatprep.mubr.bf16.mxu0 0
        %3788 = vmatmul.mubr.bf16.gmra.mrb[0].mxu0 %v3478
        %v3789 = vpop.f32.mrb[0].mxu0
        %v3790 = vadd.f32 %v3629, %v3789
        %v3791 = vpop.f32.mrb[0].mxu0
        %v3792 = vpop.f32.mrb[0].mxu0
        %v3793 = vadd.f32 %v3632, %v3792
        %v3794 = vpop.f32.mrb[0].mxu0
        %3795 = vmatprep.mubr.bf16.mxu0 0
        %3796 = vmatmul.mubr.bf16.gmra.mrb[0].mxu0 %v3481
        %v3797 = vpop.f32.mrb[0].mxu0
        %v3798 = vadd.f32 %v3637, %v3797
        %v3799 = vpop.f32.mrb[0].mxu0
        %v3800 = vpop.f32.mrb[0].mxu0
        %v3801 = vadd.f32 %v3640, %v3800
        %v3802 = vpop.f32.mrb[0].mxu0
        %3803 = vmatprep.mubr.bf16.mxu0 0
        %3804 = vmatmul.mubr.bf16.gmra.mrb[0].mxu0 %v3484
        %v3805 = vpop.f32.mrb[0].mxu0
        %v3806 = vadd.f32 %v3645, %v3805
        %v3807 = vpop.f32.mrb[0].mxu0
        %v3808 = vpop.f32.mrb[0].mxu0
        %v3809 = vadd.f32 %v3648, %v3808
        %v3810 = vpop.f32.mrb[0].mxu0
        %3811 = vdwg.mxu0
        %vm3812 = vcmask 130048
        %v3813 = vsel %vm3812, %v3686, 0.0
        %v3814 = vsel %vm3812, %v3689, 0.0
        %v3815 = vadd.f32 %v3813, %v3814
        %v3816 = vsel %vm3812, %v3694, 0.0
        %v3817 = vadd.f32 %v3815, %v3816
        %v3818 = vsel %vm3812, %v3697, 0.0
        %v3819 = vadd.f32 %v3817, %v3818
        %v3820 = vsel %vm3812, %v3702, 0.0
        %v3821 = vadd.f32 %v3819, %v3820
        %v3822 = vsel %vm3812, %v3705, 0.0
        %v3823 = vadd.f32 %v3821, %v3822
        %v3824 = vsel %vm3812, %v3710, 0.0
        %v3825 = vadd.f32 %v3823, %v3824
        %v3826 = vsel %vm3812, %v3713, 0.0
        %v3827 = vadd.f32 %v3825, %v3826
        %v3828 = vsel %vm3812, %v3718, 0.0
        %v3829 = vadd.f32 %v3827, %v3828
        %v3830 = vsel %vm3812, %v3721, 0.0
        %v3831 = vadd.f32 %v3829, %v3830
        %v3832 = vsel %vm3812, %v3726, 0.0
        %v3833 = vadd.f32 %v3831, %v3832
        %v3834 = vsel %vm3812, %v3729, 0.0
        %v3835 = vadd.f32 %v3833, %v3834
        %v3836 = vsel %vm3812, %v3734, 0.0
        %v3837 = vadd.f32 %v3835, %v3836
        %v3838 = vsel %vm3812, %v3737, 0.0
        %v3839 = vadd.f32 %v3837, %v3838
        %v3840 = vsel %vm3812, %v3742, 0.0
        %v3841 = vadd.f32 %v3839, %v3840
        %v3842 = vsel %vm3812, %v3745, 0.0
        %v3843 = vadd.f32 %v3841, %v3842
        %v3844 = vsel %vm3812, %v3750, 0.0
        %v3845 = vadd.f32 %v3843, %v3844
        %v3846 = vsel %vm3812, %v3753, 0.0
        %v3847 = vadd.f32 %v3845, %v3846
        %v3848 = vsel %vm3812, %v3758, 0.0
        %v3849 = vadd.f32 %v3847, %v3848
        %v3850 = vsel %vm3812, %v3761, 0.0
        %v3851 = vadd.f32 %v3849, %v3850
        %v3852 = vsel %vm3812, %v3766, 0.0
        %v3853 = vadd.f32 %v3851, %v3852
        %v3854 = vsel %vm3812, %v3769, 0.0
        %v3855 = vadd.f32 %v3853, %v3854
        %v3856 = vsel %vm3812, %v3774, 0.0
        %v3857 = vadd.f32 %v3855, %v3856
        %v3858 = vsel %vm3812, %v3777, 0.0
        %v3859 = vadd.f32 %v3857, %v3858
        %v3860 = vsel %vm3812, %v3782, 0.0
        %v3861 = vadd.f32 %v3859, %v3860
        %v3862 = vsel %vm3812, %v3785, 0.0
        %v3863 = vadd.f32 %v3861, %v3862
        %v3864 = vsel %vm3812, %v3790, 0.0
        %v3865 = vadd.f32 %v3863, %v3864
        %v3866 = vsel %vm3812, %v3793, 0.0
        %v3867 = vadd.f32 %v3865, %v3866
        %v3868 = vsel %vm3812, %v3798, 0.0
        %v3869 = vadd.f32 %v3867, %v3868
        %v3870 = vsel %vm3812, %v3801, 0.0
        %v3871 = vadd.f32 %v3869, %v3870
        %v3872 = vsel %vm3812, %v3806, 0.0
        %v3873 = vadd.f32 %v3871, %v3872
        %v3874 = vsel %vm3812, %v3809, 0.0
        %v3875 = vadd.f32 %v3873, %v3874
        %v3876 = vrot.slane %v3875, 4
        %v3877 = vadd.f32 %v3875, %v3876
        %v3878 = vrot.slane %v3877, 2
        %v3879 = vadd.f32 %v3877, %v3878
        %v3880 = vrot.slane %v3879, 1
        %v3881 = vadd.f32 %v3879, %v3880
        %v3882 = vmul.f32 %v3881, 0.00390625
        %v3883 = vmul.f32 %v3686, %v3686
        %v3884 = vmul.f32 %v3689, %v3689
        %v3885 = vmul.f32 %v3694, %v3694
        %v3886 = vmul.f32 %v3697, %v3697
        %v3887 = vmul.f32 %v3702, %v3702
        %v3888 = vmul.f32 %v3705, %v3705
        %v3889 = vmul.f32 %v3710, %v3710
        %v3890 = vmul.f32 %v3713, %v3713
        %v3891 = vmul.f32 %v3718, %v3718
        %v3892 = vmul.f32 %v3721, %v3721
        %v3893 = vmul.f32 %v3726, %v3726
        %v3894 = vmul.f32 %v3729, %v3729
        %v3895 = vmul.f32 %v3734, %v3734
        %v3896 = vmul.f32 %v3737, %v3737
        %v3897 = vmul.f32 %v3742, %v3742
        %v3898 = vmul.f32 %v3745, %v3745
        %v3899 = vmul.f32 %v3750, %v3750
        %v3900 = vmul.f32 %v3753, %v3753
        %v3901 = vmul.f32 %v3758, %v3758
        %v3902 = vmul.f32 %v3761, %v3761
        %v3903 = vmul.f32 %v3766, %v3766
        %v3904 = vmul.f32 %v3769, %v3769
        %v3905 = vmul.f32 %v3774, %v3774
        %v3906 = vmul.f32 %v3777, %v3777
        %v3907 = vmul.f32 %v3782, %v3782
        %v3908 = vmul.f32 %v3785, %v3785
        %v3909 = vmul.f32 %v3790, %v3790
        %v3910 = vmul.f32 %v3793, %v3793
        %v3911 = vmul.f32 %v3798, %v3798
        %v3912 = vmul.f32 %v3801, %v3801
        %v3913 = vmul.f32 %v3806, %v3806
        %v3914 = vmul.f32 %v3809, %v3809
        %v3915 = vsel %vm3812, %v3883, 0.0
        %v3916 = vsel %vm3812, %v3884, 0.0
        %v3917 = vadd.f32 %v3915, %v3916
        %v3918 = vsel %vm3812, %v3885, 0.0
        %v3919 = vadd.f32 %v3917, %v3918
        %v3920 = vsel %vm3812, %v3886, 0.0
        %v3921 = vadd.f32 %v3919, %v3920
        %v3922 = vsel %vm3812, %v3887, 0.0
        %v3923 = vadd.f32 %v3921, %v3922
        %v3924 = vsel %vm3812, %v3888, 0.0
        %v3925 = vadd.f32 %v3923, %v3924
        %v3926 = vsel %vm3812, %v3889, 0.0
        %v3927 = vadd.f32 %v3925, %v3926
        %v3928 = vsel %vm3812, %v3890, 0.0
        %v3929 = vadd.f32 %v3927, %v3928
        %v3930 = vsel %vm3812, %v3891, 0.0
        %v3931 = vadd.f32 %v3929, %v3930
        %v3932 = vsel %vm3812, %v3892, 0.0
        %v3933 = vadd.f32 %v3931, %v3932
        %v3934 = vsel %vm3812, %v3893, 0.0
        %v3935 = vadd.f32 %v3933, %v3934
        %v3936 = vsel %vm3812, %v3894, 0.0
        %v3937 = vadd.f32 %v3935, %v3936
        %v3938 = vsel %vm3812, %v3895, 0.0
        %v3939 = vadd.f32 %v3937, %v3938
        %v3940 = vsel %vm3812, %v3896, 0.0
        %v3941 = vadd.f32 %v3939, %v3940
        %v3942 = vsel %vm3812, %v3897, 0.0
        %v3943 = vadd.f32 %v3941, %v3942
        %v3944 = vsel %vm3812, %v3898, 0.0
        %v3945 = vadd.f32 %v3943, %v3944
        %v3946 = vsel %vm3812, %v3899, 0.0
        %v3947 = vadd.f32 %v3945, %v3946
        %v3948 = vsel %vm3812, %v3900, 0.0
        %v3949 = vadd.f32 %v3947, %v3948
        %v3950 = vsel %vm3812, %v3901, 0.0
        %v3951 = vadd.f32 %v3949, %v3950
        %v3952 = vsel %vm3812, %v3902, 0.0
        %v3953 = vadd.f32 %v3951, %v3952
        %v3954 = vsel %vm3812, %v3903, 0.0
        %v3955 = vadd.f32 %v3953, %v3954
        %v3956 = vsel %vm3812, %v3904, 0.0
        %v3957 = vadd.f32 %v3955, %v3956
        %v3958 = vsel %vm3812, %v3905, 0.0
        %v3959 = vadd.f32 %v3957, %v3958
        %v3960 = vsel %vm3812, %v3906, 0.0
        %v3961 = vadd.f32 %v3959, %v3960
        %v3962 = vsel %vm3812, %v3907, 0.0
        %v3963 = vadd.f32 %v3961, %v3962
        %v3964 = vsel %vm3812, %v3908, 0.0
        %v3965 = vadd.f32 %v3963, %v3964
        %v3966 = vsel %vm3812, %v3909, 0.0
        %v3967 = vadd.f32 %v3965, %v3966
        %v3968 = vsel %vm3812, %v3910, 0.0
        %v3969 = vadd.f32 %v3967, %v3968
        %v3970 = vsel %vm3812, %v3911, 0.0
        %v3971 = vadd.f32 %v3969, %v3970
        %v3972 = vsel %vm3812, %v3912, 0.0
        %v3973 = vadd.f32 %v3971, %v3972
        %v3974 = vsel %vm3812, %v3913, 0.0
        %v3975 = vadd.f32 %v3973, %v3974
        %v3976 = vsel %vm3812, %v3914, 0.0
        %v3977 = vadd.f32 %v3975, %v3976
        %v3978 = vrot.slane %v3977, 4
        %v3979 = vadd.f32 %v3977, %v3978
        %v3980 = vrot.slane %v3979, 2
        %v3981 = vadd.f32 %v3979, %v3980
        %v3982 = vrot.slane %v3981, 1
        %v3983 = vadd.f32 %v3981, %v3982
        %v3984 = vmul.f32 %v3983, 0.00390625
        %v3985 = vmul.f32 %v3882, %v3882
        %v3986 = vsub.f32 %v3984, %v3985
        %v3987 = vmax.f32 %v3986, 0.0
        %v3988 = vsub.f32 %v3686, %v3882
        %v3989 = vsub.f32 %v3689, %v3882
        %v3990 = vsub.f32 %v3694, %v3882
        %v3991 = vsub.f32 %v3697, %v3882
        %v3992 = vsub.f32 %v3702, %v3882
        %v3993 = vsub.f32 %v3705, %v3882
        %v3994 = vsub.f32 %v3710, %v3882
        %v3995 = vsub.f32 %v3713, %v3882
        %v3996 = vsub.f32 %v3718, %v3882
        %v3997 = vsub.f32 %v3721, %v3882
        %v3998 = vsub.f32 %v3726, %v3882
        %v3999 = vsub.f32 %v3729, %v3882
        %v4000 = vsub.f32 %v3734, %v3882
        %v4001 = vsub.f32 %v3737, %v3882
        %v4002 = vsub.f32 %v3742, %v3882
        %v4003 = vsub.f32 %v3745, %v3882
        %v4004 = vsub.f32 %v3750, %v3882
        %v4005 = vsub.f32 %v3753, %v3882
        %v4006 = vsub.f32 %v3758, %v3882
        %v4007 = vsub.f32 %v3761, %v3882
        %v4008 = vsub.f32 %v3766, %v3882
        %v4009 = vsub.f32 %v3769, %v3882
        %v4010 = vsub.f32 %v3774, %v3882
        %v4011 = vsub.f32 %v3777, %v3882
        %v4012 = vsub.f32 %v3782, %v3882
        %v4013 = vsub.f32 %v3785, %v3882
        %v4014 = vsub.f32 %v3790, %v3882
        %v4015 = vsub.f32 %v3793, %v3882
        %v4016 = vsub.f32 %v3798, %v3882
        %v4017 = vsub.f32 %v3801, %v3882
        %v4018 = vsub.f32 %v3806, %v3882
        %v4019 = vsub.f32 %v3809, %v3882
        %v4020 = vadd.f32 %v3987, 1e-05
        %v4021 = vrsqrt.pop %v4020
        %v4022 = vmul.f32 %v3988, %v4021
        %v4023 = vmul.f32 %v3989, %v4021
        %v4024 = vmul.f32 %v3990, %v4021
        %v4025 = vmul.f32 %v3991, %v4021
        %v4026 = vmul.f32 %v3992, %v4021
        %v4027 = vmul.f32 %v3993, %v4021
        %v4028 = vmul.f32 %v3994, %v4021
        %v4029 = vmul.f32 %v3995, %v4021
        %v4030 = vmul.f32 %v3996, %v4021
        %v4031 = vmul.f32 %v3997, %v4021
        %v4032 = vmul.f32 %v3998, %v4021
        %v4033 = vmul.f32 %v3999, %v4021
        %v4034 = vmul.f32 %v4000, %v4021
        %v4035 = vmul.f32 %v4001, %v4021
        %v4036 = vmul.f32 %v4002, %v4021
        %v4037 = vmul.f32 %v4003, %v4021
        %v4038 = vmul.f32 %v4004, %v4021
        %v4039 = vmul.f32 %v4005, %v4021
        %v4040 = vmul.f32 %v4006, %v4021
        %v4041 = vmul.f32 %v4007, %v4021
        %v4042 = vmul.f32 %v4008, %v4021
        %v4043 = vmul.f32 %v4009, %v4021
        %v4044 = vmul.f32 %v4010, %v4021
        %v4045 = vmul.f32 %v4011, %v4021
        %v4046 = vmul.f32 %v4012, %v4021
        %v4047 = vmul.f32 %v4013, %v4021
        %v4048 = vmul.f32 %v4014, %v4021
        %v4049 = vmul.f32 %v4015, %v4021
        %v4050 = vmul.f32 %v4016, %v4021
        %v4051 = vmul.f32 %v4017, %v4021
        %v4052 = vmul.f32 %v4018, %v4021
        %v4053 = vmul.f32 %v4019, %v4021
        %vm4054 = vcmp.gt.f32.partialorder %v4022, 0.0
        %vm4055 = vcmp.gt.f32.partialorder %v4023, 0.0
        %vm4056 = vcmp.gt.f32.partialorder %v4024, 0.0
        %vm4057 = vcmp.gt.f32.partialorder %v4025, 0.0
        %vm4058 = vcmp.gt.f32.partialorder %v4026, 0.0
        %vm4059 = vcmp.gt.f32.partialorder %v4027, 0.0
        %vm4060 = vcmp.gt.f32.partialorder %v4028, 0.0
        %vm4061 = vcmp.gt.f32.partialorder %v4029, 0.0
        %vm4062 = vcmp.gt.f32.partialorder %v4030, 0.0
        %vm4063 = vcmp.gt.f32.partialorder %v4031, 0.0
        %vm4064 = vcmp.gt.f32.partialorder %v4032, 0.0
        %vm4065 = vcmp.gt.f32.partialorder %v4033, 0.0
        %vm4066 = vcmp.gt.f32.partialorder %v4034, 0.0
        %vm4067 = vcmp.gt.f32.partialorder %v4035, 0.0
        %vm4068 = vcmp.gt.f32.partialorder %v4036, 0.0
        %vm4069 = vcmp.gt.f32.partialorder %v4037, 0.0
        %vm4070 = vcmp.gt.f32.partialorder %v4038, 0.0
        %vm4071 = vcmp.gt.f32.partialorder %v4039, 0.0
        %vm4072 = vcmp.gt.f32.partialorder %v4040, 0.0
        %vm4073 = vcmp.gt.f32.partialorder %v4041, 0.0
        %vm4074 = vcmp.gt.f32.partialorder %v4042, 0.0
        %vm4075 = vcmp.gt.f32.partialorder %v4043, 0.0
        %vm4076 = vcmp.gt.f32.partialorder %v4044, 0.0
        %vm4077 = vcmp.gt.f32.partialorder %v4045, 0.0
        %vm4078 = vcmp.gt.f32.partialorder %v4046, 0.0
        %vm4079 = vcmp.gt.f32.partialorder %v4047, 0.0
        %vm4080 = vcmp.gt.f32.partialorder %v4048, 0.0
        %vm4081 = vcmp.gt.f32.partialorder %v4049, 0.0
        %vm4082 = vcmp.gt.f32.partialorder %v4050, 0.0
        %vm4083 = vcmp.gt.f32.partialorder %v4051, 0.0
        %vm4084 = vcmp.gt.f32.partialorder %v4052, 0.0
        %vm4085 = vcmp.gt.f32.partialorder %v4053, 0.0
        %v4086 = vmul.f32 %v4022, 0.01
        %v4087 = vmul.f32 %v4023, 0.01
        %v4088 = vmul.f32 %v4024, 0.01
        %v4089 = vmul.f32 %v4025, 0.01
        %v4090 = vmul.f32 %v4026, 0.01
        %v4091 = vmul.f32 %v4027, 0.01
        %v4092 = vmul.f32 %v4028, 0.01
        %v4093 = vmul.f32 %v4029, 0.01
        %v4094 = vmul.f32 %v4030, 0.01
        %v4095 = vmul.f32 %v4031, 0.01
        %v4096 = vmul.f32 %v4032, 0.01
        %v4097 = vmul.f32 %v4033, 0.01
        %v4098 = vmul.f32 %v4034, 0.01
        %v4099 = vmul.f32 %v4035, 0.01
        %v4100 = vmul.f32 %v4036, 0.01
        %v4101 = vmul.f32 %v4037, 0.01
        %v4102 = vmul.f32 %v4038, 0.01
        %v4103 = vmul.f32 %v4039, 0.01
        %v4104 = vmul.f32 %v4040, 0.01
        %v4105 = vmul.f32 %v4041, 0.01
        %v4106 = vmul.f32 %v4042, 0.01
        %v4107 = vmul.f32 %v4043, 0.01
        %v4108 = vmul.f32 %v4044, 0.01
        %v4109 = vmul.f32 %v4045, 0.01
        %v4110 = vmul.f32 %v4046, 0.01
        %v4111 = vmul.f32 %v4047, 0.01
        %v4112 = vmul.f32 %v4048, 0.01
        %v4113 = vmul.f32 %v4049, 0.01
        %v4114 = vmul.f32 %v4050, 0.01
        %v4115 = vmul.f32 %v4051, 0.01
        %v4116 = vmul.f32 %v4052, 0.01
        %v4117 = vmul.f32 %v4053, 0.01
        %v4118 = vsel %vm4054, %v4022, %v4086
        %v4119 = vsel %vm4055, %v4023, %v4087
        %v4120 = vsel %vm4056, %v4024, %v4088
        %v4121 = vsel %vm4057, %v4025, %v4089
        %v4122 = vsel %vm4058, %v4026, %v4090
        %v4123 = vsel %vm4059, %v4027, %v4091
        %v4124 = vsel %vm4060, %v4028, %v4092
        %v4125 = vsel %vm4061, %v4029, %v4093
        %v4126 = vsel %vm4062, %v4030, %v4094
        %v4127 = vsel %vm4063, %v4031, %v4095
        %v4128 = vsel %vm4064, %v4032, %v4096
        %v4129 = vsel %vm4065, %v4033, %v4097
        %v4130 = vsel %vm4066, %v4034, %v4098
        %v4131 = vsel %vm4067, %v4035, %v4099
        %v4132 = vsel %vm4068, %v4036, %v4100
        %v4133 = vsel %vm4069, %v4037, %v4101
        %v4134 = vsel %vm4070, %v4038, %v4102
        %v4135 = vsel %vm4071, %v4039, %v4103
        %v4136 = vsel %vm4072, %v4040, %v4104
        %v4137 = vsel %vm4073, %v4041, %v4105
        %v4138 = vsel %vm4074, %v4042, %v4106
        %v4139 = vsel %vm4075, %v4043, %v4107
        %v4140 = vsel %vm4076, %v4044, %v4108
        %v4141 = vsel %vm4077, %v4045, %v4109
        %v4142 = vsel %vm4078, %v4046, %v4110
        %v4143 = vsel %vm4079, %v4047, %v4111
        %v4144 = vsel %vm4080, %v4048, %v4112
        %v4145 = vsel %vm4081, %v4049, %v4113
        %v4146 = vsel %vm4082, %v4050, %v4114
        %v4147 = vsel %vm4083, %v4051, %v4115
        %v4148 = vsel %vm4084, %v4052, %v4116
        %v4149 = vsel %vm4085, %v4053, %v4117
        %4150 = vst.msk [vmem:[#allocation5] sm:$0xff] %vm3812, 0.0
        %4151 = vst.msk [vmem:[#allocation5 + $0x8] sm:$0xff] %vm3812, 0.0
        %vm4152 = vcmask 123904
        %4153 = vst.msk [vmem:[#allocation5 + $0x10] sm:$0x3] %vm4152, 0.0
        %s4154 = scalar_lea.vmem [#allocation5], 408
        %4155 = vst.msk [vmem:[%s4154] sm:$0xff] %vm3812, 0.0
        %4156 = vst.msk [vmem:[%s4154 + $0x8] sm:$0xff] %vm3812, 0.0
        %4157 = vst.msk [vmem:[%s4154 + $0x10] sm:$0x3] %vm4152, 0.0
        %vm4158 = vcmask 122880
        %4159 = vst.msk [vmem:[#allocation5] sm:$0x1] %vm4158, 0.0
        %4160 = vst.msk [vmem:[#allocation5 + $0x18] sm:$0x1] %vm4158, 0.0
        %4161 = vst.msk [vmem:[#allocation5 + $0x30] sm:$0x1] %vm4158, 0.0
        %4162 = vst.msk [vmem:[#allocation5 + $0x48] sm:$0x1] %vm4158, 0.0
        %4163 = vst.msk [vmem:[#allocation5 + $0x60] sm:$0x1] %vm4158, 0.0
        %4164 = vst.msk [vmem:[#allocation5 + $0x78] sm:$0x1] %vm4158, 0.0
        %4165 = vst.msk [vmem:[#allocation5 + $0x90] sm:$0x1] %vm4158, 0.0
        %4166 = vst.msk [vmem:[#allocation5 + $0xa8] sm:$0x1] %vm4158, 0.0
        %4167 = vst.msk [vmem:[#allocation5 + $0xc0] sm:$0x1] %vm4158, 0.0
        %4168 = vst.msk [vmem:[#allocation5 + $0xd8] sm:$0x1] %vm4158, 0.0
        %4169 = vst.msk [vmem:[#allocation5 + $0xf0] sm:$0x1] %vm4158, 0.0
        %4170 = vst.msk [vmem:[#allocation5 + $0x108] sm:$0x1] %vm4158, 0.0
        %4171 = vst.msk [vmem:[#allocation5 + $0x120] sm:$0x1] %vm4158, 0.0
        %4172 = vst.msk [vmem:[#allocation5 + $0x138] sm:$0x1] %vm4158, 0.0
        %4173 = vst.msk [vmem:[#allocation5 + $0x150] sm:$0x1] %vm4158, 0.0
        %4174 = vst.msk [vmem:[#allocation5 + $0x168] sm:$0x1] %vm4158, 0.0
        %4175 = vst.msk [vmem:[#allocation5 + $0x180] sm:$0x1] %vm4158, 0.0
        %4176 = vst.msk [vmem:[#allocation5 + $0x198] sm:$0x1] %vm4158, 0.0
        %4177 = vst.msk [vmem:[#allocation5 + $0x11] sm:$0x1] %vm4158, 0.0
        %4178 = vst.msk [vmem:[#allocation5 + $0x29] sm:$0x1] %vm4158, 0.0
        %4179 = vst.msk [vmem:[#allocation5 + $0x41] sm:$0x1] %vm4158, 0.0
        %4180 = vst.msk [vmem:[#allocation5 + $0x59] sm:$0x1] %vm4158, 0.0
        %4181 = vst.msk [vmem:[#allocation5 + $0x71] sm:$0x1] %vm4158, 0.0
        %4182 = vst.msk [vmem:[#allocation5 + $0x89] sm:$0x1] %vm4158, 0.0
        %4183 = vst.msk [vmem:[#allocation5 + $0xa1] sm:$0x1] %vm4158, 0.0
        %4184 = vst.msk [vmem:[#allocation5 + $0xb9] sm:$0x1] %vm4158, 0.0
        %4185 = vst.msk [vmem:[#allocation5 + $0xd1] sm:$0x1] %vm4158, 0.0
        %4186 = vst.msk [vmem:[#allocation5 + $0xe9] sm:$0x1] %vm4158, 0.0
        %4187 = vst.msk [vmem:[#allocation5 + $0x101] sm:$0x1] %vm4158, 0.0
        %4188 = vst.msk [vmem:[#allocation5 + $0x119] sm:$0x1] %vm4158, 0.0
        %4189 = vst.msk [vmem:[#allocation5 + $0x131] sm:$0x1] %vm4158, 0.0
        %4190 = vst.msk [vmem:[#allocation5 + $0x149] sm:$0x1] %vm4158, 0.0
        %4191 = vst.msk [vmem:[#allocation5 + $0x161] sm:$0x1] %vm4158, 0.0
        %4192 = vst.msk [vmem:[#allocation5 + $0x179] sm:$0x1] %vm4158, 0.0
        %4193 = vst.msk [vmem:[#allocation5 + $0x191] sm:$0x1] %vm4158, 0.0
        %4194 = vst.msk [vmem:[#allocation5 + $0x1a9] sm:$0x1] %vm4158, 0.0
        %s4195 = scalar_lea.vmem [#allocation5], 24
        %4196 = vst.msk [vmem:[%s4195 + $0x1] sm:$0xff] %vm3812, %v4118
        %4197 = vst.msk [vmem:[%s4195 + $0x9] sm:$0xff] %vm3812, %v4119
        %4198 = vst.msk [vmem:[%s4195 + $0x19] sm:$0xff] %vm3812, %v4120
        %4199 = vst.msk [vmem:[%s4195 + $0x21] sm:$0xff] %vm3812, %v4121
        %4200 = vst.msk [vmem:[%s4195 + $0x31] sm:$0xff] %vm3812, %v4122
        %4201 = vst.msk [vmem:[%s4195 + $0x39] sm:$0xff] %vm3812, %v4123
        %4202 = vst.msk [vmem:[%s4195 + $0x49] sm:$0xff] %vm3812, %v4124
        %4203 = vst.msk [vmem:[%s4195 + $0x51] sm:$0xff] %vm3812, %v4125
        %4204 = vst.msk [vmem:[%s4195 + $0x61] sm:$0xff] %vm3812, %v4126
        %4205 = vst.msk [vmem:[%s4195 + $0x69] sm:$0xff] %vm3812, %v4127
        %4206 = vst.msk [vmem:[%s4195 + $0x79] sm:$0xff] %vm3812, %v4128
        %4207 = vst.msk [vmem:[%s4195 + $0x81] sm:$0xff] %vm3812, %v4129
        %4208 = vst.msk [vmem:[%s4195 + $0x91] sm:$0xff] %vm3812, %v4130
        %4209 = vst.msk [vmem:[%s4195 + $0x99] sm:$0xff] %vm3812, %v4131
        %4210 = vst.msk [vmem:[%s4195 + $0xa9] sm:$0xff] %vm3812, %v4132
        %4211 = vst.msk [vmem:[%s4195 + $0xb1] sm:$0xff] %vm3812, %v4133
        %4212 = vst.msk [vmem:[%s4195 + $0xc1] sm:$0xff] %vm3812, %v4134
        %4213 = vst.msk [vmem:[%s4195 + $0xc9] sm:$0xff] %vm3812, %v4135
        %4214 = vst.msk [vmem:[%s4195 + $0xd9] sm:$0xff] %vm3812, %v4136
        %4215 = vst.msk [vmem:[%s4195 + $0xe1] sm:$0xff] %vm3812, %v4137
        %4216 = vst.msk [vmem:[%s4195 + $0xf1] sm:$0xff] %vm3812, %v4138
        %4217 = vst.msk [vmem:[%s4195 + $0xf9] sm:$0xff] %vm3812, %v4139
        %4218 = vst.msk [vmem:[%s4195 + $0x109] sm:$0xff] %vm3812, %v4140
        %4219 = vst.msk [vmem:[%s4195 + $0x111] sm:$0xff] %vm3812, %v4141
        %4220 = vst.msk [vmem:[%s4195 + $0x121] sm:$0xff] %vm3812, %v4142
        %4221 = vst.msk [vmem:[%s4195 + $0x129] sm:$0xff] %vm3812, %v4143
        %4222 = vst.msk [vmem:[%s4195 + $0x139] sm:$0xff] %vm3812, %v4144
        %4223 = vst.msk [vmem:[%s4195 + $0x141] sm:$0xff] %vm3812, %v4145
        %4224 = vst.msk [vmem:[%s4195 + $0x151] sm:$0xff] %vm3812, %v4146
        %4225 = vst.msk [vmem:[%s4195 + $0x159] sm:$0xff] %vm3812, %v4147
        %4226 = vst.msk [vmem:[%s4195 + $0x169] sm:$0xff] %vm3812, %v4148
        %4227 = vst.msk [vmem:[%s4195 + $0x171] sm:$0xff] %vm3812, %v4149
        %v4228 = vld [vmem:[#allocation5] sm:$0xff]
        %v4229 = vld [vmem:[#allocation5 + $0x8] sm:$0xff]
        %v4230 = vld [vmem:[#allocation5 + $0x18] sm:$0xff]
        %v4231 = vld [vmem:[#allocation5 + $0x20] sm:$0xff]
        %v4232 = vld [vmem:[#allocation5 + $0x30] sm:$0xff]
        %v4233 = vld [vmem:[#allocation5 + $0x38] sm:$0xff]
        %v4234 = vld [vmem:[#allocation5 + $0x48] sm:$0xff]
        %v4235 = vld [vmem:[#allocation5 + $0x50] sm:$0xff]
        %v4236 = vld [vmem:[#allocation5 + $0x60] sm:$0xff]
        %v4237 = vld [vmem:[#allocation5 + $0x68] sm:$0xff]
        %v4238 = vld [vmem:[#allocation5 + $0x78] sm:$0xff]
        %v4239 = vld [vmem:[#allocation5 + $0x80] sm:$0xff]
        %v4240 = vld [vmem:[#allocation5 + $0x90] sm:$0xff]
        %v4241 = vld [vmem:[#allocation5 + $0x98] sm:$0xff]
        %v4242 = vld [vmem:[#allocation5 + $0xa8] sm:$0xff]
        %v4243 = vld [vmem:[#allocation5 + $0xb0] sm:$0xff]
        %v4244 = vld [vmem:[#allocation5 + $0xc0] sm:$0xff]
        %v4245 = vld [vmem:[#allocation5 + $0xc8] sm:$0xff]
        %v4246 = vld [vmem:[#allocation5 + $0xd8] sm:$0xff]
        %v4247 = vld [vmem:[#allocation5 + $0xe0] sm:$0xff]
        %v4248 = vld [vmem:[#allocation5 + $0xf0] sm:$0xff]
        %v4249 = vld [vmem:[#allocation5 + $0xf8] sm:$0xff]
        %v4250 = vld [vmem:[#allocation5 + $0x108] sm:$0xff]
        %v4251 = vld [vmem:[#allocation5 + $0x110] sm:$0xff]
        %v4252 = vld [vmem:[#allocation5 + $0x120] sm:$0xff]
        %v4253 = vld [vmem:[#allocation5 + $0x128] sm:$0xff]
        %v4254 = vld [vmem:[#allocation5 + $0x138] sm:$0xff]
        %v4255 = vld [vmem:[#allocation5 + $0x140] sm:$0xff]
        %v4256 = vld [vmem:[#allocation5 + $0x150] sm:$0xff]
        %v4257 = vld [vmem:[#allocation5 + $0x158] sm:$0xff]
        %v4258 = vld [vmem:[#allocation5 + $0x168] sm:$0xff]
        %v4259 = vld [vmem:[#allocation5 + $0x170] sm:$0xff]
        %v4260 = vld [vmem:[#allocation5 + $0x180] sm:$0xff]
        %v4261 = vld [vmem:[#allocation5 + $0x188] sm:$0xff]
        %v4262 = vld [vmem:[#allocation5 + $0x198] sm:$0xff]
        %v4263 = vld [vmem:[#allocation5 + $0x1a0] sm:$0xff]
        %v4264 = vld [vmem:[#allocation5 + $0x1] sm:$0xff]
        %v4265 = vld [vmem:[#allocation5 + $0x9] sm:$0xff]
        %v4266 = vld [vmem:[#allocation5 + $0x19] sm:$0xff]
        %v4267 = vld [vmem:[#allocation5 + $0x21] sm:$0xff]
        %v4268 = vld [vmem:[#allocation5 + $0x31] sm:$0xff]
        %v4269 = vld [vmem:[#allocation5 + $0x39] sm:$0xff]
        %v4270 = vld [vmem:[#allocation5 + $0x49] sm:$0xff]
        %v4271 = vld [vmem:[#allocation5 + $0x51] sm:$0xff]
        %v4272 = vld [vmem:[#allocation5 + $0x61] sm:$0xff]
        %v4273 = vld [vmem:[#allocation5 + $0x69] sm:$0xff]
        %v4274 = vld [vmem:[#allocation5 + $0x79] sm:$0xff]
        %v4275 = vld [vmem:[#allocation5 + $0x81] sm:$0xff]
        %v4276 = vld [vmem:[#allocation5 + $0x91] sm:$0xff]
        %v4277 = vld [vmem:[#allocation5 + $0x99] sm:$0xff]
        %v4278 = vld [vmem:[#allocation5 + $0xa9] sm:$0xff]
        %v4279 = vld [vmem:[#allocation5 + $0xb1] sm:$0xff]
        %v4280 = vld [vmem:[#allocation5 + $0xc1] sm:$0xff]
        %v4281 = vld [vmem:[#allocation5 + $0xc9] sm:$0xff]
        %v4282 = vld [vmem:[#allocation5 + $0xd9] sm:$0xff]
        %v4283 = vld [vmem:[#allocation5 + $0xe1] sm:$0xff]
        %v4284 = vld [vmem:[#allocation5 + $0xf1] sm:$0xff]
        %v4285 = vld [vmem:[#allocation5 + $0xf9] sm:$0xff]
        %v4286 = vld [vmem:[#allocation5 + $0x109] sm:$0xff]
        %v4287 = vld [vmem:[#allocation5 + $0x111] sm:$0xff]
        %v4288 = vld [vmem:[#allocation5 + $0x121] sm:$0xff]
        %v4289 = vld [vmem:[#allocation5 + $0x129] sm:$0xff]
        %v4290 = vld [vmem:[#allocation5 + $0x139] sm:$0xff]
        %v4291 = vld [vmem:[#allocation5 + $0x141] sm:$0xff]
        %v4292 = vld [vmem:[#allocation5 + $0x151] sm:$0xff]
        %v4293 = vld [vmem:[#allocation5 + $0x159] sm:$0xff]
        %v4294 = vld [vmem:[#allocation5 + $0x169] sm:$0xff]
        %v4295 = vld [vmem:[#allocation5 + $0x171] sm:$0xff]
        %v4296 = vld [vmem:[#allocation5 + $0x181] sm:$0xff]
        %v4297 = vld [vmem:[#allocation5 + $0x189] sm:$0xff]
        %v4298 = vld [vmem:[#allocation5 + $0x199] sm:$0xff]
        %v4299 = vld [vmem:[#allocation5 + $0x1a1] sm:$0xff]
        %v4300 = vld [vmem:[#allocation5 + $0x2] sm:$0xff]
        %v4301 = vld [vmem:[#allocation5 + $0xa] sm:$0xff]
        %v4302 = vld [vmem:[#allocation5 + $0x1a] sm:$0xff]
        %v4303 = vld [vmem:[#allocation5 + $0x22] sm:$0xff]
        %v4304 = vld [vmem:[#allocation5 + $0x32] sm:$0xff]
        %v4305 = vld [vmem:[#allocation5 + $0x3a] sm:$0xff]
        %v4306 = vld [vmem:[#allocation5 + $0x4a] sm:$0xff]
        %v4307 = vld [vmem:[#allocation5 + $0x52] sm:$0xff]
        %v4308 = vld [vmem:[#allocation5 + $0x62] sm:$0xff]
        %v4309 = vld [vmem:[#allocation5 + $0x6a] sm:$0xff]
        %v4310 = vld [vmem:[#allocation5 + $0x7a] sm:$0xff]
        %v4311 = vld [vmem:[#allocation5 + $0x82] sm:$0xff]
        %v4312 = vld [vmem:[#allocation5 + $0x92] sm:$0xff]
        %v4313 = vld [vmem:[#allocation5 + $0x9a] sm:$0xff]
        %v4314 = vld [vmem:[#allocation5 + $0xaa] sm:$0xff]
        %v4315 = vld [vmem:[#allocation5 + $0xb2] sm:$0xff]
        %v4316 = vld [vmem:[#allocation5 + $0xc2] sm:$0xff]
        %v4317 = vld [vmem:[#allocation5 + $0xca] sm:$0xff]
        %v4318 = vld [vmem:[#allocation5 + $0xda] sm:$0xff]
        %v4319 = vld [vmem:[#allocation5 + $0xe2] sm:$0xff]
        %v4320 = vld [vmem:[#allocation5 + $0xf2] sm:$0xff]
        %v4321 = vld [vmem:[#allocation5 + $0xfa] sm:$0xff]
        %v4322 = vld [vmem:[#allocation5 + $0x10a] sm:$0xff]
        %v4323 = vld [vmem:[#allocation5 + $0x112] sm:$0xff]
        %v4324 = vld [vmem:[#allocation5 + $0x122] sm:$0xff]
        %v4325 = vld [vmem:[#allocation5 + $0x12a] sm:$0xff]
        %v4326 = vld [vmem:[#allocation5 + $0x13a] sm:$0xff]
        %v4327 = vld [vmem:[#allocation5 + $0x142] sm:$0xff]
        %v4328 = vld [vmem:[#allocation5 + $0x152] sm:$0xff]
        %v4329 = vld [vmem:[#allocation5 + $0x15a] sm:$0xff]
        %v4330 = vld [vmem:[#allocation5 + $0x16a] sm:$0xff]
        %v4331 = vld [vmem:[#allocation5 + $0x172] sm:$0xff]
        %v4332 = vld [vmem:[#allocation5 + $0x182] sm:$0xff]
        %v4333 = vld [vmem:[#allocation5 + $0x18a] sm:$0xff]
        %v4334 = vld [vmem:[#allocation5 + $0x19a] sm:$0xff]
        %v4335 = vld [vmem:[#allocation5 + $0x1a2] sm:$0xff]
        %4372 = vrot.lane.b32.xlu0 %v4264, 16
        %v4373 = vpop.permute.xlu0 %4372
        %4374 = vrot.lane.b32.xlu0 %v4265, 16
        %v4375 = vpop.permute.xlu0 %4374
        %4376 = vrot.lane.b32.xlu0 %v4266, 16
        %v4377 = vpop.permute.xlu0 %4376
        %4378 = vrot.lane.b32.xlu0 %v4267, 16
        %v4379 = vpop.permute.xlu0 %4378
        %4380 = vrot.lane.b32.xlu0 %v4268, 16
        %v4381 = vpop.permute.xlu0 %4380
        %4382 = vrot.lane.b32.xlu0 %v4269, 16
        %v4383 = vpop.permute.xlu0 %4382
        %4384 = vrot.lane.b32.xlu0 %v4270, 16
        %v4385 = vpop.permute.xlu0 %4384
        %4386 = vrot.lane.b32.xlu0 %v4271, 16
        %v4387 = vpop.permute.xlu0 %4386
        %4388 = vrot.lane.b32.xlu0 %v4272, 16
        %v4389 = vpop.permute.xlu0 %4388
        %4390 = vrot.lane.b32.xlu0 %v4273, 16
        %v4391 = vpop.permute.xlu0 %4390
        %4392 = vrot.lane.b32.xlu0 %v4274, 16
        %v4393 = vpop.permute.xlu0 %4392
        %4394 = vrot.lane.b32.xlu0 %v4275, 16
        %v4395 = vpop.permute.xlu0 %4394
        %4396 = vrot.lane.b32.xlu0 %v4276, 16
        %v4397 = vpop.permute.xlu0 %4396
        %4398 = vrot.lane.b32.xlu0 %v4277, 16
        %v4399 = vpop.permute.xlu0 %4398
        %4400 = vrot.lane.b32.xlu0 %v4278, 16
        %v4401 = vpop.permute.xlu0 %4400
        %4402 = vrot.lane.b32.xlu0 %v4279, 16
        %v4403 = vpop.permute.xlu0 %4402
        %4404 = vrot.lane.b32.xlu0 %v4280, 16
        %v4405 = vpop.permute.xlu0 %4404
        %4406 = vrot.lane.b32.xlu0 %v4281, 16
        %v4407 = vpop.permute.xlu0 %4406
        %4408 = vrot.lane.b32.xlu0 %v4282, 16
        %v4409 = vpop.permute.xlu0 %4408
        %4410 = vrot.lane.b32.xlu0 %v4283, 16
        %v4411 = vpop.permute.xlu0 %4410
        %4412 = vrot.lane.b32.xlu0 %v4284, 16
        %v4413 = vpop.permute.xlu0 %4412
        %4414 = vrot.lane.b32.xlu0 %v4285, 16
        %v4415 = vpop.permute.xlu0 %4414
        %4416 = vrot.lane.b32.xlu0 %v4286, 16
        %v4417 = vpop.permute.xlu0 %4416
        %4418 = vrot.lane.b32.xlu0 %v4287, 16
        %v4419 = vpop.permute.xlu0 %4418
        %4420 = vrot.lane.b32.xlu0 %v4288, 16
        %v4421 = vpop.permute.xlu0 %4420
        %4422 = vrot.lane.b32.xlu0 %v4289, 16
        %v4423 = vpop.permute.xlu0 %4422
        %4424 = vrot.lane.b32.xlu0 %v4290, 16
        %v4425 = vpop.permute.xlu0 %4424
        %4426 = vrot.lane.b32.xlu0 %v4291, 16
        %v4427 = vpop.permute.xlu0 %4426
        %4428 = vrot.lane.b32.xlu0 %v4292, 16
        %v4429 = vpop.permute.xlu0 %4428
        %4430 = vrot.lane.b32.xlu0 %v4293, 16
        %v4431 = vpop.permute.xlu0 %4430
        %4432 = vrot.lane.b32.xlu0 %v4294, 16
        %v4433 = vpop.permute.xlu0 %4432
        %4434 = vrot.lane.b32.xlu0 %v4295, 16
        %v4435 = vpop.permute.xlu0 %4434
        %4436 = vrot.lane.b32.xlu0 %v4296, 16
        %v4437 = vpop.permute.xlu0 %4436
        %4438 = vrot.lane.b32.xlu0 %v4297, 16
        %v4439 = vpop.permute.xlu0 %4438
        %4440 = vrot.lane.b32.xlu0 %v4298, 16
        %v4441 = vpop.permute.xlu0 %4440
        %4442 = vrot.lane.b32.xlu0 %v4299, 16
        %v4443 = vpop.permute.xlu0 %4442
        %4516 = vrot.lane.b32.xlu0 %v4300, 32
        %v4517 = vpop.permute.xlu0 %4516
        %4518 = vrot.lane.b32.xlu0 %v4301, 32
        %v4519 = vpop.permute.xlu0 %4518
        %4520 = vrot.lane.b32.xlu0 %v4302, 32
        %v4521 = vpop.permute.xlu0 %4520
        %4522 = vrot.lane.b32.xlu0 %v4303, 32
        %v4523 = vpop.permute.xlu0 %4522
        %4524 = vrot.lane.b32.xlu0 %v4304, 32
        %v4525 = vpop.permute.xlu0 %4524
        %4526 = vrot.lane.b32.xlu0 %v4305, 32
        %v4527 = vpop.permute.xlu0 %4526
        %4528 = vrot.lane.b32.xlu0 %v4306, 32
        %v4529 = vpop.permute.xlu0 %4528
        %4530 = vrot.lane.b32.xlu0 %v4307, 32
        %v4531 = vpop.permute.xlu0 %4530
        %4532 = vrot.lane.b32.xlu0 %v4308, 32
        %v4533 = vpop.permute.xlu0 %4532
        %4534 = vrot.lane.b32.xlu0 %v4309, 32
        %v4535 = vpop.permute.xlu0 %4534
        %4536 = vrot.lane.b32.xlu0 %v4310, 32
        %v4537 = vpop.permute.xlu0 %4536
        %4538 = vrot.lane.b32.xlu0 %v4311, 32
        %v4539 = vpop.permute.xlu0 %4538
        %4540 = vrot.lane.b32.xlu0 %v4312, 32
        %v4541 = vpop.permute.xlu0 %4540
        %4542 = vrot.lane.b32.xlu0 %v4313, 32
        %v4543 = vpop.permute.xlu0 %4542
        %4544 = vrot.lane.b32.xlu0 %v4314, 32
        %v4545 = vpop.permute.xlu0 %4544
        %4546 = vrot.lane.b32.xlu0 %v4315, 32
        %v4547 = vpop.permute.xlu0 %4546
        %4548 = vrot.lane.b32.xlu0 %v4316, 32
        %v4549 = vpop.permute.xlu0 %4548
        %4550 = vrot.lane.b32.xlu0 %v4317, 32
        %v4551 = vpop.permute.xlu0 %4550
        %4552 = vrot.lane.b32.xlu0 %v4318, 32
        %v4553 = vpop.permute.xlu0 %4552
        %4554 = vrot.lane.b32.xlu0 %v4319, 32
        %v4555 = vpop.permute.xlu0 %4554
        %4556 = vrot.lane.b32.xlu0 %v4320, 32
        %v4557 = vpop.permute.xlu0 %4556
        %4558 = vrot.lane.b32.xlu0 %v4321, 32
        %v4559 = vpop.permute.xlu0 %4558
        %4560 = vrot.lane.b32.xlu0 %v4322, 32
        %v4561 = vpop.permute.xlu0 %4560
        %4562 = vrot.lane.b32.xlu0 %v4323, 32
        %v4563 = vpop.permute.xlu0 %4562
        %4564 = vrot.lane.b32.xlu0 %v4324, 32
        %v4565 = vpop.permute.xlu0 %4564
        %4566 = vrot.lane.b32.xlu0 %v4325, 32
        %v4567 = vpop.permute.xlu0 %4566
        %4568 = vrot.lane.b32.xlu0 %v4326, 32
        %v4569 = vpop.permute.xlu0 %4568
        %4570 = vrot.lane.b32.xlu0 %v4327, 32
        %v4571 = vpop.permute.xlu0 %4570
        %4572 = vrot.lane.b32.xlu0 %v4328, 32
        %v4573 = vpop.permute.xlu0 %4572
        %4574 = vrot.lane.b32.xlu0 %v4329, 32
        %v4575 = vpop.permute.xlu0 %4574
        %4576 = vrot.lane.b32.xlu0 %v4330, 32
        %v4577 = vpop.permute.xlu0 %4576
        %4578 = vrot.lane.b32.xlu0 %v4331, 32
        %v4579 = vpop.permute.xlu0 %4578
        %4580 = vrot.lane.b32.xlu0 %v4332, 32
        %v4581 = vpop.permute.xlu0 %4580
        %4582 = vrot.lane.b32.xlu0 %v4333, 32
        %v4583 = vpop.permute.xlu0 %4582
        %4584 = vrot.lane.b32.xlu0 %v4334, 32
        %v4585 = vpop.permute.xlu0 %4584
        %4586 = vrot.lane.b32.xlu0 %v4335, 32
        %v4587 = vpop.permute.xlu0 %4586
        %v4624 = vsel %vm3812, %v4228, %v4373
        %v4625 = vsel %vm3812, %v4229, %v4375
        %v4626 = vsel %vm3812, %v4230, %v4377
        %v4627 = vsel %vm3812, %v4231, %v4379
        %v4628 = vsel %vm3812, %v4232, %v4381
        %v4629 = vsel %vm3812, %v4233, %v4383
        %v4630 = vsel %vm3812, %v4234, %v4385
        %v4631 = vsel %vm3812, %v4235, %v4387
        %v4632 = vsel %vm3812, %v4236, %v4389
        %v4633 = vsel %vm3812, %v4237, %v4391
        %v4634 = vsel %vm3812, %v4238, %v4393
        %v4635 = vsel %vm3812, %v4239, %v4395
        %v4636 = vsel %vm3812, %v4240, %v4397
        %v4637 = vsel %vm3812, %v4241, %v4399
        %v4638 = vsel %vm3812, %v4242, %v4401
        %v4639 = vsel %vm3812, %v4243, %v4403
        %v4640 = vsel %vm3812, %v4244, %v4405
        %v4641 = vsel %vm3812, %v4245, %v4407
        %v4642 = vsel %vm3812, %v4246, %v4409
        %v4643 = vsel %vm3812, %v4247, %v4411
        %v4644 = vsel %vm3812, %v4248, %v4413
        %v4645 = vsel %vm3812, %v4249, %v4415
        %v4646 = vsel %vm3812, %v4250, %v4417
        %v4647 = vsel %vm3812, %v4251, %v4419
        %v4648 = vsel %vm3812, %v4252, %v4421
        %v4649 = vsel %vm3812, %v4253, %v4423
        %v4650 = vsel %vm3812, %v4254, %v4425
        %v4651 = vsel %vm3812, %v4255, %v4427
        %v4652 = vsel %vm3812, %v4256, %v4429
        %v4653 = vsel %vm3812, %v4257, %v4431
        %v4654 = vsel %vm3812, %v4258, %v4433
        %v4655 = vsel %vm3812, %v4259, %v4435
        %v4656 = vsel %vm3812, %v4260, %v4437
        %v4657 = vsel %vm3812, %v4261, %v4439
        %v4658 = vsel %vm3812, %v4262, %v4441
        %v4659 = vsel %vm3812, %v4263, %v4443
        %v4660 = vsel %vm930, %v4624, %v4517
        %v4661 = vsel %vm930, %v4625, %v4519
        %v4662 = vsel %vm930, %v4626, %v4521
        %v4663 = vsel %vm930, %v4627, %v4523
        %v4664 = vsel %vm930, %v4628, %v4525
        %v4665 = vsel %vm930, %v4629, %v4527
        %v4666 = vsel %vm930, %v4630, %v4529
        %v4667 = vsel %vm930, %v4631, %v4531
        %v4668 = vsel %vm930, %v4632, %v4533
        %v4669 = vsel %vm930, %v4633, %v4535
        %v4670 = vsel %vm930, %v4634, %v4537
        %v4671 = vsel %vm930, %v4635, %v4539
        %v4672 = vsel %vm930, %v4636, %v4541
        %v4673 = vsel %vm930, %v4637, %v4543
        %v4674 = vsel %vm930, %v4638, %v4545
        %v4675 = vsel %vm930, %v4639, %v4547
        %v4676 = vsel %vm930, %v4640, %v4549
        %v4677 = vsel %vm930, %v4641, %v4551
        %v4678 = vsel %vm930, %v4642, %v4553
        %v4679 = vsel %vm930, %v4643, %v4555
        %v4680 = vsel %vm930, %v4644, %v4557
        %v4681 = vsel %vm930, %v4645, %v4559
        %v4682 = vsel %vm930, %v4646, %v4561
        %v4683 = vsel %vm930, %v4647, %v4563
        %v4684 = vsel %vm930, %v4648, %v4565
        %v4685 = vsel %vm930, %v4649, %v4567
        %v4686 = vsel %vm930, %v4650, %v4569
        %v4687 = vsel %vm930, %v4651, %v4571
        %v4688 = vsel %vm930, %v4652, %v4573
        %v4689 = vsel %vm930, %v4653, %v4575
        %v4690 = vsel %vm930, %v4654, %v4577
        %v4691 = vsel %vm930, %v4655, %v4579
        %v4692 = vsel %vm930, %v4656, %v4581
        %v4693 = vsel %vm930, %v4657, %v4583
        %v4694 = vsel %vm930, %v4658, %v4585
        %v4695 = vsel %vm930, %v4659, %v4587
        %4728 = vrot.lane.b32.xlu0 %v4662, 48
        %v4729 = vpop.permute.xlu0 %4728
        %4730 = vrot.lane.b32.xlu0 %v4663, 48
        %v4731 = vpop.permute.xlu0 %4730
        %4732 = vrot.lane.b32.xlu0 %v4664, 48
        %v4733 = vpop.permute.xlu0 %4732
        %4734 = vrot.lane.b32.xlu0 %v4665, 48
        %v4735 = vpop.permute.xlu0 %4734
        %4736 = vrot.lane.b32.xlu0 %v4666, 48
        %v4737 = vpop.permute.xlu0 %4736
        %4738 = vrot.lane.b32.xlu0 %v4667, 48
        %v4739 = vpop.permute.xlu0 %4738
        %4740 = vrot.lane.b32.xlu0 %v4668, 48
        %v4741 = vpop.permute.xlu0 %4740
        %4742 = vrot.lane.b32.xlu0 %v4669, 48
        %v4743 = vpop.permute.xlu0 %4742
        %4744 = vrot.lane.b32.xlu0 %v4670, 48
        %v4745 = vpop.permute.xlu0 %4744
        %4746 = vrot.lane.b32.xlu0 %v4671, 48
        %v4747 = vpop.permute.xlu0 %4746
        %4748 = vrot.lane.b32.xlu0 %v4672, 48
        %v4749 = vpop.permute.xlu0 %4748
        %4750 = vrot.lane.b32.xlu0 %v4673, 48
        %v4751 = vpop.permute.xlu0 %4750
        %4752 = vrot.lane.b32.xlu0 %v4674, 48
        %v4753 = vpop.permute.xlu0 %4752
        %4754 = vrot.lane.b32.xlu0 %v4675, 48
        %v4755 = vpop.permute.xlu0 %4754
        %4756 = vrot.lane.b32.xlu0 %v4676, 48
        %v4757 = vpop.permute.xlu0 %4756
        %4758 = vrot.lane.b32.xlu0 %v4677, 48
        %v4759 = vpop.permute.xlu0 %4758
        %4760 = vrot.lane.b32.xlu0 %v4678, 48
        %v4761 = vpop.permute.xlu0 %4760
        %4762 = vrot.lane.b32.xlu0 %v4679, 48
        %v4763 = vpop.permute.xlu0 %4762
        %4764 = vrot.lane.b32.xlu0 %v4680, 48
        %v4765 = vpop.permute.xlu0 %4764
        %4766 = vrot.lane.b32.xlu0 %v4681, 48
        %v4767 = vpop.permute.xlu0 %4766
        %4768 = vrot.lane.b32.xlu0 %v4682, 48
        %v4769 = vpop.permute.xlu0 %4768
        %4770 = vrot.lane.b32.xlu0 %v4683, 48
        %v4771 = vpop.permute.xlu0 %4770
        %4772 = vrot.lane.b32.xlu0 %v4684, 48
        %v4773 = vpop.permute.xlu0 %4772
        %4774 = vrot.lane.b32.xlu0 %v4685, 48
        %v4775 = vpop.permute.xlu0 %4774
        %4776 = vrot.lane.b32.xlu0 %v4686, 48
        %v4777 = vpop.permute.xlu0 %4776
        %4778 = vrot.lane.b32.xlu0 %v4687, 48
        %v4779 = vpop.permute.xlu0 %4778
        %4780 = vrot.lane.b32.xlu0 %v4688, 48
        %v4781 = vpop.permute.xlu0 %4780
        %4782 = vrot.lane.b32.xlu0 %v4689, 48
        %v4783 = vpop.permute.xlu0 %4782
        %4784 = vrot.lane.b32.xlu0 %v4690, 48
        %v4785 = vpop.permute.xlu0 %4784
        %4786 = vrot.lane.b32.xlu0 %v4691, 48
        %v4787 = vpop.permute.xlu0 %4786
        %4788 = vrot.lane.b32.xlu0 %v4692, 48
        %v4789 = vpop.permute.xlu0 %4788
        %4790 = vrot.lane.b32.xlu0 %v4693, 48
        %v4791 = vpop.permute.xlu0 %4790
        %4826 = vrot.lane.b32.xlu0 %v4664, 96
        %v4827 = vpop.permute.xlu0 %4826
        %4828 = vrot.lane.b32.xlu0 %v4665, 96
        %v4829 = vpop.permute.xlu0 %4828
        %4830 = vrot.lane.b32.xlu0 %v4666, 96
        %v4831 = vpop.permute.xlu0 %4830
        %4832 = vrot.lane.b32.xlu0 %v4667, 96
        %v4833 = vpop.permute.xlu0 %4832
        %4834 = vrot.lane.b32.xlu0 %v4668, 96
        %v4835 = vpop.permute.xlu0 %4834
        %4836 = vrot.lane.b32.xlu0 %v4669, 96
        %v4837 = vpop.permute.xlu0 %4836
        %4838 = vrot.lane.b32.xlu0 %v4670, 96
        %v4839 = vpop.permute.xlu0 %4838
        %4840 = vrot.lane.b32.xlu0 %v4671, 96
        %v4841 = vpop.permute.xlu0 %4840
        %4842 = vrot.lane.b32.xlu0 %v4672, 96
        %v4843 = vpop.permute.xlu0 %4842
        %4844 = vrot.lane.b32.xlu0 %v4673, 96
        %v4845 = vpop.permute.xlu0 %4844
        %4846 = vrot.lane.b32.xlu0 %v4674, 96
        %v4847 = vpop.permute.xlu0 %4846
        %4848 = vrot.lane.b32.xlu0 %v4675, 96
        %v4849 = vpop.permute.xlu0 %4848
        %4850 = vrot.lane.b32.xlu0 %v4676, 96
        %v4851 = vpop.permute.xlu0 %4850
        %4852 = vrot.lane.b32.xlu0 %v4677, 96
        %v4853 = vpop.permute.xlu0 %4852
        %4854 = vrot.lane.b32.xlu0 %v4678, 96
        %v4855 = vpop.permute.xlu0 %4854
        %4856 = vrot.lane.b32.xlu0 %v4679, 96
        %v4857 = vpop.permute.xlu0 %4856
        %4858 = vrot.lane.b32.xlu0 %v4680, 96
        %v4859 = vpop.permute.xlu0 %4858
        %4860 = vrot.lane.b32.xlu0 %v4681, 96
        %v4861 = vpop.permute.xlu0 %4860
        %4862 = vrot.lane.b32.xlu0 %v4682, 96
        %v4863 = vpop.permute.xlu0 %4862
        %4864 = vrot.lane.b32.xlu0 %v4683, 96
        %v4865 = vpop.permute.xlu0 %4864
        %4866 = vrot.lane.b32.xlu0 %v4684, 96
        %v4867 = vpop.permute.xlu0 %4866
        %4868 = vrot.lane.b32.xlu0 %v4685, 96
        %v4869 = vpop.permute.xlu0 %4868
        %4870 = vrot.lane.b32.xlu0 %v4686, 96
        %v4871 = vpop.permute.xlu0 %4870
        %4872 = vrot.lane.b32.xlu0 %v4687, 96
        %v4873 = vpop.permute.xlu0 %4872
        %4874 = vrot.lane.b32.xlu0 %v4688, 96
        %v4875 = vpop.permute.xlu0 %4874
        %4876 = vrot.lane.b32.xlu0 %v4689, 96
        %v4877 = vpop.permute.xlu0 %4876
        %4878 = vrot.lane.b32.xlu0 %v4690, 96
        %v4879 = vpop.permute.xlu0 %4878
        %4880 = vrot.lane.b32.xlu0 %v4691, 96
        %v4881 = vpop.permute.xlu0 %4880
        %4882 = vrot.lane.b32.xlu0 %v4692, 96
        %v4883 = vpop.permute.xlu0 %4882
        %4884 = vrot.lane.b32.xlu0 %v4693, 96
        %v4885 = vpop.permute.xlu0 %4884
        %4886 = vrot.lane.b32.xlu0 %v4694, 96
        %v4887 = vpop.permute.xlu0 %4886
        %4888 = vrot.lane.b32.xlu0 %v4695, 96
        %v4889 = vpop.permute.xlu0 %4888
        %vm4922 = vcmask 392192
        %v4923 = vsel %vm4922, %v4660, %v4729
        %v4924 = vsel %vm4922, %v4661, %v4731
        %v4925 = vsel %vm4922, %v4662, %v4733
        %v4926 = vsel %vm4922, %v4663, %v4735
        %v4927 = vsel %vm4922, %v4664, %v4737
        %v4928 = vsel %vm4922, %v4665, %v4739
        %v4929 = vsel %vm4922, %v4666, %v4741
        %v4930 = vsel %vm4922, %v4667, %v4743
        %v4931 = vsel %vm4922, %v4668, %v4745
        %v4932 = vsel %vm4922, %v4669, %v4747
        %v4933 = vsel %vm4922, %v4670, %v4749
        %v4934 = vsel %vm4922, %v4671, %v4751
        %v4935 = vsel %vm4922, %v4672, %v4753
        %v4936 = vsel %vm4922, %v4673, %v4755
        %v4937 = vsel %vm4922, %v4674, %v4757
        %v4938 = vsel %vm4922, %v4675, %v4759
        %v4939 = vsel %vm4922, %v4676, %v4761
        %v4940 = vsel %vm4922, %v4677, %v4763
        %v4941 = vsel %vm4922, %v4678, %v4765
        %v4942 = vsel %vm4922, %v4679, %v4767
        %v4943 = vsel %vm4922, %v4680, %v4769
        %v4944 = vsel %vm4922, %v4681, %v4771
        %v4945 = vsel %vm4922, %v4682, %v4773
        %v4946 = vsel %vm4922, %v4683, %v4775
        %v4947 = vsel %vm4922, %v4684, %v4777
        %v4948 = vsel %vm4922, %v4685, %v4779
        %v4949 = vsel %vm4922, %v4686, %v4781
        %v4950 = vsel %vm4922, %v4687, %v4783
        %v4951 = vsel %vm4922, %v4688, %v4785
        %v4952 = vsel %vm4922, %v4689, %v4787
        %v4953 = vsel %vm4922, %v4690, %v4789
        %v4954 = vsel %vm4922, %v4691, %v4791
        %v4955 = vsel %vm1252, %v4923, %v4827
        %v4956 = vsel %vm1252, %v4924, %v4829
        %v4957 = vsel %vm1252, %v4925, %v4831
        %v4958 = vsel %vm1252, %v4926, %v4833
        %v4959 = vsel %vm1252, %v4927, %v4835
        %v4960 = vsel %vm1252, %v4928, %v4837
        %v4961 = vsel %vm1252, %v4929, %v4839
        %v4962 = vsel %vm1252, %v4930, %v4841
        %v4963 = vsel %vm1252, %v4931, %v4843
        %v4964 = vsel %vm1252, %v4932, %v4845
        %v4965 = vsel %vm1252, %v4933, %v4847
        %v4966 = vsel %vm1252, %v4934, %v4849
        %v4967 = vsel %vm1252, %v4935, %v4851
        %v4968 = vsel %vm1252, %v4936, %v4853
        %v4969 = vsel %vm1252, %v4937, %v4855
        %v4970 = vsel %vm1252, %v4938, %v4857
        %v4971 = vsel %vm1252, %v4939, %v4859
        %v4972 = vsel %vm1252, %v4940, %v4861
        %v4973 = vsel %vm1252, %v4941, %v4863
        %v4974 = vsel %vm1252, %v4942, %v4865
        %v4975 = vsel %vm1252, %v4943, %v4867
        %v4976 = vsel %vm1252, %v4944, %v4869
        %v4977 = vsel %vm1252, %v4945, %v4871
        %v4978 = vsel %vm1252, %v4946, %v4873
        %v4979 = vsel %vm1252, %v4947, %v4875
        %v4980 = vsel %vm1252, %v4948, %v4877
        %v4981 = vsel %vm1252, %v4949, %v4879
        %v4982 = vsel %vm1252, %v4950, %v4881
        %v4983 = vsel %vm1252, %v4951, %v4883
        %v4984 = vsel %vm1252, %v4952, %v4885
        %v4985 = vsel %vm1252, %v4953, %v4887
        %v4986 = vsel %vm1252, %v4954, %v4889
        %v4987 = vpack.c.bf16 %v4956, %v4955
        %v4988 = vpack.c.bf16 %v4829, %v4827
        %v4989 = vpack.c.bf16 %v4958, %v4957
        %v4990 = vpack.c.bf16 %v4833, %v4831
        %v4991 = vpack.c.bf16 %v4960, %v4959
        %v4992 = vpack.c.bf16 %v4837, %v4835
        %v4993 = vpack.c.bf16 %v4962, %v4961
        %v4994 = vpack.c.bf16 %v4841, %v4839
        %v4995 = vpack.c.bf16 %v4964, %v4963
        %v4996 = vpack.c.bf16 %v4845, %v4843
        %v4997 = vpack.c.bf16 %v4966, %v4965
        %v4998 = vpack.c.bf16 %v4849, %v4847
        %v4999 = vpack.c.bf16 %v4968, %v4967
        %v5000 = vpack.c.bf16 %v4853, %v4851
        %v5001 = vpack.c.bf16 %v4970, %v4969
        %v5002 = vpack.c.bf16 %v4857, %v4855
        %v5003 = vpack.c.bf16 %v4972, %v4971
        %v5004 = vpack.c.bf16 %v4861, %v4859
        %v5005 = vpack.c.bf16 %v4974, %v4973
        %v5006 = vpack.c.bf16 %v4865, %v4863
        %v5007 = vpack.c.bf16 %v4976, %v4975
        %v5008 = vpack.c.bf16 %v4869, %v4867
        %v5009 = vpack.c.bf16 %v4978, %v4977
        %v5010 = vpack.c.bf16 %v4873, %v4871
        %v5011 = vpack.c.bf16 %v4980, %v4979
        %v5012 = vpack.c.bf16 %v4877, %v4875
        %v5013 = vpack.c.bf16 %v4982, %v4981
        %v5014 = vpack.c.bf16 %v4881, %v4879
        %v5015 = vpack.c.bf16 %v4984, %v4983
        %v5016 = vpack.c.bf16 %v4885, %v4883
        %v5017 = vpack.c.bf16 %v4986, %v4985
        %v5018 = vpack.c.bf16 %v4889, %v4887
        %v5019 = vld [vmem:[#allocation16] sm:$0xf]
        %v5020 = vld [vmem:[#allocation16 + $0x4] sm:$0xf]
        %v5021 = vld [vmem:[#allocation16 + $0x8] sm:$0xf]
        %v5022 = vld [vmem:[#allocation16 + $0xc] sm:$0xf]
        %v5023 = vld [vmem:[#allocation16 + $0x10] sm:$0xf]
        %v5024 = vld [vmem:[#allocation16 + $0x14] sm:$0xf]
        %v5025 = vld [vmem:[#allocation16 + $0x18] sm:$0xf]
        %v5026 = vld [vmem:[#allocation16 + $0x1c] sm:$0xf]
        %v5027 = vld [vmem:[#allocation16 + $0x20] sm:$0xf]
        %v5028 = vld [vmem:[#allocation16 + $0x24] sm:$0xf]
        %v5029 = vld [vmem:[#allocation16 + $0x28] sm:$0xf]
        %v5030 = vld [vmem:[#allocation16 + $0x2c] sm:$0xf]
        %v5031 = vld [vmem:[#allocation16 + $0x30] sm:$0xf]
        %v5032 = vld [vmem:[#allocation16 + $0x34] sm:$0xf]
        %v5033 = vld [vmem:[#allocation16 + $0x38] sm:$0xf]
        %v5034 = vld [vmem:[#allocation16 + $0x3c] sm:$0xf]
        %v5035 = vld [vmem:[#allocation16 + $0x40] sm:$0xf]
        %v5036 = vld [vmem:[#allocation16 + $0x44] sm:$0xf]
        %v5055 = vunpack.c.l.b16 %v5019
        %v5056 = vunpack.c.l.b16 %v5020
        %v5057 = vunpack.c.l.b16 %v5021
        %v5058 = vunpack.c.l.b16 %v5022
        %v5059 = vunpack.c.l.b16 %v5023
        %v5060 = vunpack.c.l.b16 %v5024
        %v5061 = vunpack.c.l.b16 %v5025
        %v5062 = vunpack.c.l.b16 %v5026
        %v5063 = vunpack.c.l.b16 %v5027
        %v5064 = vunpack.c.l.b16 %v5028
        %v5065 = vunpack.c.l.b16 %v5029
        %v5066 = vunpack.c.l.b16 %v5030
        %v5067 = vunpack.c.l.b16 %v5031
        %v5068 = vunpack.c.l.b16 %v5032
        %v5069 = vunpack.c.l.b16 %v5033
        %v5070 = vunpack.c.l.b16 %v5034
        %v5071 = vunpack.c.l.b16 %v5035
        %v5072 = vunpack.c.l.b16 %v5036
        %v5073 = vpack.c.b16 %v5056, %v5055
        %v5074 = vpack.c.b16 %v5058, %v5057
        %v5075 = vpack.c.b16 %v5060, %v5059
        %v5076 = vpack.c.b16 %v5062, %v5061
        %v5077 = vpack.c.b16 %v5064, %v5063
        %v5078 = vpack.c.b16 %v5066, %v5065
        %v5079 = vpack.c.b16 %v5068, %v5067
        %v5080 = vpack.c.b16 %v5070, %v5069
        %v5081 = vpack.c.b16 %v5072, %v5071
        %v5092 = vsel %vm3812, %v4988, 0
        %v5095 = vsel %vm3812, %v4990, 0
        %v5098 = vsel %vm3812, %v4992, 0
        %v5101 = vsel %vm3812, %v4994, 0
        %v5104 = vsel %vm3812, %v4996, 0
        %v5107 = vsel %vm3812, %v4998, 0
        %v5110 = vsel %vm3812, %v5000, 0
        %v5113 = vsel %vm3812, %v5002, 0
        %v5116 = vsel %vm3812, %v5004, 0
        %v5119 = vsel %vm3812, %v5006, 0
        %v5122 = vsel %vm3812, %v5008, 0
        %v5125 = vsel %vm3812, %v5010, 0
        %v5128 = vsel %vm3812, %v5012, 0
        %v5131 = vsel %vm3812, %v5014, 0
        %v5134 = vsel %vm3812, %v5016, 0
        %v5137 = vsel %vm3812, %v5018, 0
        %5139 = vmatprep.subr.bf16.mxu0 0
        %5140 = vmatpush1.bf16.msra.mxu0 %v5073
        %5141 = vmatprep.subr.bf16.mxu0 0
        %5142 = vmatpush1.bf16.msra.mxu0 %v5074
        %5143 = vmatprep.subr.bf16.mxu0 0
        %5144 = vmatpush1.bf16.msra.mxu0 %v5075
        %5145 = vmatprep.subr.bf16.mxu0 0
        %5146 = vmatpush1.bf16.msra.mxu0 %v5076
        %5147 = vmatprep.subr.bf16.mxu0 0
        %5148 = vmatpush1.bf16.msra.mxu0 %v5077
        %5149 = vmatprep.subr.bf16.mxu0 0
        %5150 = vmatpush1.bf16.msra.mxu0 %v5078
        %5151 = vmatprep.subr.bf16.mxu0 0
        %5152 = vmatpush1.bf16.msra.mxu0 %v5079
        %5153 = vmatprep.subr.bf16.mxu0 0
        %5154 = vmatpush1.bf16.msra.mxu0 %v5080
        %5155 = vmatprep.subr.bf16.mxu0 0
        %5156 = vmatpush1.bf16.msra.mxu0 %v5081
        %5157 = vmatprep.subr.bf16.mxu0 0
        %5158 = vmatpush1.bf16.msra.mxu0 0
        %5159 = vmatprep.subr.bf16.mxu0 0
        %5160 = vmatpush1.bf16.msra.mxu0 0
        %5161 = vmatprep.subr.bf16.mxu0 0
        %5162 = vmatpush1.bf16.msra.mxu0 0
        %5163 = vmatprep.subr.bf16.mxu0 0
        %5164 = vmatpush1.bf16.msra.mxu0 0
        %5165 = vmatprep.subr.bf16.mxu0 0
        %5166 = vmatpush1.bf16.msra.mxu0 0
        %5167 = vmatprep.subr.bf16.mxu0 0
        %5168 = vmatpush1.bf16.msra.mxu0 0
        %5169 = vmatprep.subr.bf16.mxu0 0
        %5170 = vmatpush1.bf16.msra.mxu0 0
        %5171 = vmatprep.mubr.bf16.mxu0 %v5092
        %5172 = vmatmul.mubr.bf16.gmra.mrb[0].mxu0 %v4987
        %v5173 = vpop.f32.mrb[0].mxu0
        %v5174 = vadd.f32 0.0, %v5173
        %v5175 = vpop.f32.mrb[0].mxu0
        %v5176 = vpop.f32.mrb[0].mxu0
        %v5177 = vadd.f32 0.0, %v5176
        %v5178 = vpop.f32.mrb[0].mxu0
        %5179 = vmatprep.mubr.bf16.mxu0 %v5095
        %5180 = vmatmul.mubr.bf16.gmra.mrb[0].mxu0 %v4989
        %v5181 = vpop.f32.mrb[0].mxu0
        %v5182 = vadd.f32 0.0, %v5181
        %v5183 = vpop.f32.mrb[0].mxu0
        %v5184 = vpop.f32.mrb[0].mxu0
        %v5185 = vadd.f32 0.0, %v5184
        %v5186 = vpop.f32.mrb[0].mxu0
        %5187 = vmatprep.mubr.bf16.mxu0 %v5098
        %5188 = vmatmul.mubr.bf16.gmra.mrb[0].mxu0 %v4991
        %v5189 = vpop.f32.mrb[0].mxu0
        %v5190 = vadd.f32 0.0, %v5189
        %v5191 = vpop.f32.mrb[0].mxu0
        %v5192 = vpop.f32.mrb[0].mxu0
        %v5193 = vadd.f32 0.0, %v5192
        %v5194 = vpop.f32.mrb[0].mxu0
        %5195 = vmatprep.mubr.bf16.mxu0 %v5101
        %5196 = vmatmul.mubr.bf16.gmra.mrb[0].mxu0 %v4993
        %v5197 = vpop.f32.mrb[0].mxu0
        %v5198 = vadd.f32 0.0, %v5197
        %v5199 = vpop.f32.mrb[0].mxu0
        %v5200 = vpop.f32.mrb[0].mxu0
        %v5201 = vadd.f32 0.0, %v5200
        %v5202 = vpop.f32.mrb[0].mxu0
        %5203 = vmatprep.mubr.bf16.mxu0 %v5104
        %5204 = vmatmul.mubr.bf16.gmra.mrb[0].mxu0 %v4995
        %v5205 = vpop.f32.mrb[0].mxu0
        %v5206 = vadd.f32 0.0, %v5205
        %v5207 = vpop.f32.mrb[0].mxu0
        %v5208 = vpop.f32.mrb[0].mxu0
        %v5209 = vadd.f32 0.0, %v5208
        %v5210 = vpop.f32.mrb[0].mxu0
        %5211 = vmatprep.mubr.bf16.mxu0 %v5107
        %5212 = vmatmul.mubr.bf16.gmra.mrb[0].mxu0 %v4997
        %v5213 = vpop.f32.mrb[0].mxu0
        %v5214 = vadd.f32 0.0, %v5213
        %v5215 = vpop.f32.mrb[0].mxu0
        %v5216 = vpop.f32.mrb[0].mxu0
        %v5217 = vadd.f32 0.0, %v5216
        %v5218 = vpop.f32.mrb[0].mxu0
        %5219 = vmatprep.mubr.bf16.mxu0 %v5110
        %5220 = vmatmul.mubr.bf16.gmra.mrb[0].mxu0 %v4999
        %v5221 = vpop.f32.mrb[0].mxu0
        %v5222 = vadd.f32 0.0, %v5221
        %v5223 = vpop.f32.mrb[0].mxu0
        %v5224 = vpop.f32.mrb[0].mxu0
        %v5225 = vadd.f32 0.0, %v5224
        %v5226 = vpop.f32.mrb[0].mxu0
        %5227 = vmatprep.mubr.bf16.mxu0 %v5113
        %5228 = vmatmul.mubr.bf16.gmra.mrb[0].mxu0 %v5001
        %v5229 = vpop.f32.mrb[0].mxu0
        %v5230 = vadd.f32 0.0, %v5229
        %v5231 = vpop.f32.mrb[0].mxu0
        %v5232 = vpop.f32.mrb[0].mxu0
        %v5233 = vadd.f32 0.0, %v5232
        %v5234 = vpop.f32.mrb[0].mxu0
        %5235 = vmatprep.mubr.bf16.mxu0 %v5116
        %5236 = vmatmul.mubr.bf16.gmra.mrb[0].mxu0 %v5003
        %v5237 = vpop.f32.mrb[0].mxu0
        %v5238 = vadd.f32 0.0, %v5237
        %v5239 = vpop.f32.mrb[0].mxu0
        %v5240 = vpop.f32.mrb[0].mxu0
        %v5241 = vadd.f32 0.0, %v5240
        %v5242 = vpop.f32.mrb[0].mxu0
        %5243 = vmatprep.mubr.bf16.mxu0 %v5119
        %5244 = vmatmul.mubr.bf16.gmra.mrb[0].mxu0 %v5005
        %v5245 = vpop.f32.mrb[0].mxu0
        %v5246 = vadd.f32 0.0, %v5245
        %v5247 = vpop.f32.mrb[0].mxu0
        %v5248 = vpop.f32.mrb[0].mxu0
        %v5249 = vadd.f32 0.0, %v5248
        %v5250 = vpop.f32.mrb[0].mxu0
        %5251 = vmatprep.mubr.bf16.mxu0 %v5122
        %5252 = vmatmul.mubr.bf16.gmra.mrb[0].mxu0 %v5007
        %v5253 = vpop.f32.mrb[0].mxu0
        %v5254 = vadd.f32 0.0, %v5253
        %v5255 = vpop.f32.mrb[0].mxu0
        %v5256 = vpop.f32.mrb[0].mxu0
        %v5257 = vadd.f32 0.0, %v5256
        %v5258 = vpop.f32.mrb[0].mxu0
        %5259 = vmatprep.mubr.bf16.mxu0 %v5125
        %5260 = vmatmul.mubr.bf16.gmra.mrb[0].mxu0 %v5009
        %v5261 = vpop.f32.mrb[0].mxu0
        %v5262 = vadd.f32 0.0, %v5261
        %v5263 = vpop.f32.mrb[0].mxu0
        %v5264 = vpop.f32.mrb[0].mxu0
        %v5265 = vadd.f32 0.0, %v5264
        %v5266 = vpop.f32.mrb[0].mxu0
        %5267 = vmatprep.mubr.bf16.mxu0 %v5128
        %5268 = vmatmul.mubr.bf16.gmra.mrb[0].mxu0 %v5011
        %v5269 = vpop.f32.mrb[0].mxu0
        %v5270 = vadd.f32 0.0, %v5269
        %v5271 = vpop.f32.mrb[0].mxu0
        %v5272 = vpop.f32.mrb[0].mxu0
        %v5273 = vadd.f32 0.0, %v5272
        %v5274 = vpop.f32.mrb[0].mxu0
        %5275 = vmatprep.mubr.bf16.mxu0 %v5131
        %5276 = vmatmul.mubr.bf16.gmra.mrb[0].mxu0 %v5013
        %v5277 = vpop.f32.mrb[0].mxu0
        %v5278 = vadd.f32 0.0, %v5277
        %v5279 = vpop.f32.mrb[0].mxu0
        %v5280 = vpop.f32.mrb[0].mxu0
        %v5281 = vadd.f32 0.0, %v5280
        %v5282 = vpop.f32.mrb[0].mxu0
        %5283 = vmatprep.mubr.bf16.mxu0 %v5134
        %5284 = vmatmul.mubr.bf16.gmra.mrb[0].mxu0 %v5015
        %v5285 = vpop.f32.mrb[0].mxu0
        %v5286 = vadd.f32 0.0, %v5285
        %v5287 = vpop.f32.mrb[0].mxu0
        %v5288 = vpop.f32.mrb[0].mxu0
        %v5289 = vadd.f32 0.0, %v5288
        %v5290 = vpop.f32.mrb[0].mxu0
        %5291 = vmatprep.mubr.bf16.mxu0 %v5137
        %5292 = vmatmul.mubr.bf16.gmra.mrb[0].mxu0 %v5017
        %v5293 = vpop.f32.mrb[0].mxu0
        %v5294 = vadd.f32 0.0, %v5293
        %v5295 = vpop.f32.mrb[0].mxu0
        %v5296 = vpop.f32.mrb[0].mxu0
        %v5297 = vadd.f32 0.0, %v5296
        %v5298 = vpop.f32.mrb[0].mxu0
        %5299 = vdwg.mxu0
        %v5300 = vsel %vm3812, %v5174, 0.0
        %v5301 = vsel %vm3812, %v5177, 0.0
        %v5302 = vadd.f32 %v5300, %v5301
        %v5303 = vsel %vm3812, %v5182, 0.0
        %v5304 = vadd.f32 %v5302, %v5303
        %v5305 = vsel %vm3812, %v5185, 0.0
        %v5306 = vadd.f32 %v5304, %v5305
        %v5307 = vsel %vm3812, %v5190, 0.0
        %v5308 = vadd.f32 %v5306, %v5307
        %v5309 = vsel %vm3812, %v5193, 0.0
        %v5310 = vadd.f32 %v5308, %v5309
        %v5311 = vsel %vm3812, %v5198, 0.0
        %v5312 = vadd.f32 %v5310, %v5311
        %v5313 = vsel %vm3812, %v5201, 0.0
        %v5314 = vadd.f32 %v5312, %v5313
        %v5315 = vsel %vm3812, %v5206, 0.0
        %v5316 = vadd.f32 %v5314, %v5315
        %v5317 = vsel %vm3812, %v5209, 0.0
        %v5318 = vadd.f32 %v5316, %v5317
        %v5319 = vsel %vm3812, %v5214, 0.0
        %v5320 = vadd.f32 %v5318, %v5319
        %v5321 = vsel %vm3812, %v5217, 0.0
        %v5322 = vadd.f32 %v5320, %v5321
        %v5323 = vsel %vm3812, %v5222, 0.0
        %v5324 = vadd.f32 %v5322, %v5323
        %v5325 = vsel %vm3812, %v5225, 0.0
        %v5326 = vadd.f32 %v5324, %v5325
        %v5327 = vsel %vm3812, %v5230, 0.0
        %v5328 = vadd.f32 %v5326, %v5327
        %v5329 = vsel %vm3812, %v5233, 0.0
        %v5330 = vadd.f32 %v5328, %v5329
        %v5331 = vsel %vm3812, %v5238, 0.0
        %v5332 = vadd.f32 %v5330, %v5331
        %v5333 = vsel %vm3812, %v5241, 0.0
        %v5334 = vadd.f32 %v5332, %v5333
        %v5335 = vsel %vm3812, %v5246, 0.0
        %v5336 = vadd.f32 %v5334, %v5335
        %v5337 = vsel %vm3812, %v5249, 0.0
        %v5338 = vadd.f32 %v5336, %v5337
        %v5339 = vsel %vm3812, %v5254, 0.0
        %v5340 = vadd.f32 %v5338, %v5339
        %v5341 = vsel %vm3812, %v5257, 0.0
        %v5342 = vadd.f32 %v5340, %v5341
        %v5343 = vsel %vm3812, %v5262, 0.0
        %v5344 = vadd.f32 %v5342, %v5343
        %v5345 = vsel %vm3812, %v5265, 0.0
        %v5346 = vadd.f32 %v5344, %v5345
        %v5347 = vsel %vm3812, %v5270, 0.0
        %v5348 = vadd.f32 %v5346, %v5347
        %v5349 = vsel %vm3812, %v5273, 0.0
        %v5350 = vadd.f32 %v5348, %v5349
        %v5351 = vsel %vm3812, %v5278, 0.0
        %v5352 = vadd.f32 %v5350, %v5351
        %v5353 = vsel %vm3812, %v5281, 0.0
        %v5354 = vadd.f32 %v5352, %v5353
        %v5355 = vsel %vm3812, %v5286, 0.0
        %v5356 = vadd.f32 %v5354, %v5355
        %v5357 = vsel %vm3812, %v5289, 0.0
        %v5358 = vadd.f32 %v5356, %v5357
        %v5359 = vsel %vm3812, %v5294, 0.0
        %v5360 = vadd.f32 %v5358, %v5359
        %v5361 = vsel %vm3812, %v5297, 0.0
        %v5362 = vadd.f32 %v5360, %v5361
        %v5363 = vrot.slane %v5362, 4
        %v5364 = vadd.f32 %v5362, %v5363
        %v5365 = vrot.slane %v5364, 2
        %v5366 = vadd.f32 %v5364, %v5365
        %v5367 = vrot.slane %v5366, 1
        %v5368 = vadd.f32 %v5366, %v5367
        %v5369 = vmul.f32 %v5368, 0.00390625
        %v5370 = vmul.f32 %v5174, %v5174
        %v5371 = vmul.f32 %v5177, %v5177
        %v5372 = vmul.f32 %v5182, %v5182
        %v5373 = vmul.f32 %v5185, %v5185
        %v5374 = vmul.f32 %v5190, %v5190
        %v5375 = vmul.f32 %v5193, %v5193
        %v5376 = vmul.f32 %v5198, %v5198
        %v5377 = vmul.f32 %v5201, %v5201
        %v5378 = vmul.f32 %v5206, %v5206
        %v5379 = vmul.f32 %v5209, %v5209
        %v5380 = vmul.f32 %v5214, %v5214
        %v5381 = vmul.f32 %v5217, %v5217
        %v5382 = vmul.f32 %v5222, %v5222
        %v5383 = vmul.f32 %v5225, %v5225
        %v5384 = vmul.f32 %v5230, %v5230
        %v5385 = vmul.f32 %v5233, %v5233
        %v5386 = vmul.f32 %v5238, %v5238
        %v5387 = vmul.f32 %v5241, %v5241
        %v5388 = vmul.f32 %v5246, %v5246
        %v5389 = vmul.f32 %v5249, %v5249
        %v5390 = vmul.f32 %v5254, %v5254
        %v5391 = vmul.f32 %v5257, %v5257
        %v5392 = vmul.f32 %v5262, %v5262
        %v5393 = vmul.f32 %v5265, %v5265
        %v5394 = vmul.f32 %v5270, %v5270
        %v5395 = vmul.f32 %v5273, %v5273
        %v5396 = vmul.f32 %v5278, %v5278
        %v5397 = vmul.f32 %v5281, %v5281
        %v5398 = vmul.f32 %v5286, %v5286
        %v5399 = vmul.f32 %v5289, %v5289
        %v5400 = vmul.f32 %v5294, %v5294
        %v5401 = vmul.f32 %v5297, %v5297
        %v5402 = vsel %vm3812, %v5370, 0.0
        %v5403 = vsel %vm3812, %v5371, 0.0
        %v5404 = vadd.f32 %v5402, %v5403
        %v5405 = vsel %vm3812, %v5372, 0.0
        %v5406 = vadd.f32 %v5404, %v5405
        %v5407 = vsel %vm3812, %v5373, 0.0
        %v5408 = vadd.f32 %v5406, %v5407
        %v5409 = vsel %vm3812, %v5374, 0.0
        %v5410 = vadd.f32 %v5408, %v5409
        %v5411 = vsel %vm3812, %v5375, 0.0
        %v5412 = vadd.f32 %v5410, %v5411
        %v5413 = vsel %vm3812, %v5376, 0.0
        %v5414 = vadd.f32 %v5412, %v5413
        %v5415 = vsel %vm3812, %v5377, 0.0
        %v5416 = vadd.f32 %v5414, %v5415
        %v5417 = vsel %vm3812, %v5378, 0.0
        %v5418 = vadd.f32 %v5416, %v5417
        %v5419 = vsel %vm3812, %v5379, 0.0
        %v5420 = vadd.f32 %v5418, %v5419
        %v5421 = vsel %vm3812, %v5380, 0.0
        %v5422 = vadd.f32 %v5420, %v5421
        %v5423 = vsel %vm3812, %v5381, 0.0
        %v5424 = vadd.f32 %v5422, %v5423
        %v5425 = vsel %vm3812, %v5382, 0.0
        %v5426 = vadd.f32 %v5424, %v5425
        %v5427 = vsel %vm3812, %v5383, 0.0
        %v5428 = vadd.f32 %v5426, %v5427
        %v5429 = vsel %vm3812, %v5384, 0.0
        %v5430 = vadd.f32 %v5428, %v5429
        %v5431 = vsel %vm3812, %v5385, 0.0
        %v5432 = vadd.f32 %v5430, %v5431
        %v5433 = vsel %vm3812, %v5386, 0.0
        %v5434 = vadd.f32 %v5432, %v5433
        %v5435 = vsel %vm3812, %v5387, 0.0
        %v5436 = vadd.f32 %v5434, %v5435
        %v5437 = vsel %vm3812, %v5388, 0.0
        %v5438 = vadd.f32 %v5436, %v5437
        %v5439 = vsel %vm3812, %v5389, 0.0
        %v5440 = vadd.f32 %v5438, %v5439
        %v5441 = vsel %vm3812, %v5390, 0.0
        %v5442 = vadd.f32 %v5440, %v5441
        %v5443 = vsel %vm3812, %v5391, 0.0
        %v5444 = vadd.f32 %v5442, %v5443
        %v5445 = vsel %vm3812, %v5392, 0.0
        %v5446 = vadd.f32 %v5444, %v5445
        %v5447 = vsel %vm3812, %v5393, 0.0
        %v5448 = vadd.f32 %v5446, %v5447
        %v5449 = vsel %vm3812, %v5394, 0.0
        %v5450 = vadd.f32 %v5448, %v5449
        %v5451 = vsel %vm3812, %v5395, 0.0
        %v5452 = vadd.f32 %v5450, %v5451
        %v5453 = vsel %vm3812, %v5396, 0.0
        %v5454 = vadd.f32 %v5452, %v5453
        %v5455 = vsel %vm3812, %v5397, 0.0
        %v5456 = vadd.f32 %v5454, %v5455
        %v5457 = vsel %vm3812, %v5398, 0.0
        %v5458 = vadd.f32 %v5456, %v5457
        %v5459 = vsel %vm3812, %v5399, 0.0
        %v5460 = vadd.f32 %v5458, %v5459
        %v5461 = vsel %vm3812, %v5400, 0.0
        %v5462 = vadd.f32 %v5460, %v5461
        %v5463 = vsel %vm3812, %v5401, 0.0
        %v5464 = vadd.f32 %v5462, %v5463
        %v5465 = vrot.slane %v5464, 4
        %v5466 = vadd.f32 %v5464, %v5465
        %v5467 = vrot.slane %v5466, 2
        %v5468 = vadd.f32 %v5466, %v5467
        %v5469 = vrot.slane %v5468, 1
        %v5470 = vadd.f32 %v5468, %v5469
        %v5471 = vmul.f32 %v5470, 0.00390625
        %v5472 = vmul.f32 %v5369, %v5369
        %v5473 = vsub.f32 %v5471, %v5472
        %v5474 = vmax.f32 %v5473, 0.0
        %v5475 = vsub.f32 %v5174, %v5369
        %v5476 = vsub.f32 %v5177, %v5369
        %v5477 = vsub.f32 %v5182, %v5369
        %v5478 = vsub.f32 %v5185, %v5369
        %v5479 = vsub.f32 %v5190, %v5369
        %v5480 = vsub.f32 %v5193, %v5369
        %v5481 = vsub.f32 %v5198, %v5369
        %v5482 = vsub.f32 %v5201, %v5369
        %v5483 = vsub.f32 %v5206, %v5369
        %v5484 = vsub.f32 %v5209, %v5369
        %v5485 = vsub.f32 %v5214, %v5369
        %v5486 = vsub.f32 %v5217, %v5369
        %v5487 = vsub.f32 %v5222, %v5369
        %v5488 = vsub.f32 %v5225, %v5369
        %v5489 = vsub.f32 %v5230, %v5369
        %v5490 = vsub.f32 %v5233, %v5369
        %v5491 = vsub.f32 %v5238, %v5369
        %v5492 = vsub.f32 %v5241, %v5369
        %v5493 = vsub.f32 %v5246, %v5369
        %v5494 = vsub.f32 %v5249, %v5369
        %v5495 = vsub.f32 %v5254, %v5369
        %v5496 = vsub.f32 %v5257, %v5369
        %v5497 = vsub.f32 %v5262, %v5369
        %v5498 = vsub.f32 %v5265, %v5369
        %v5499 = vsub.f32 %v5270, %v5369
        %v5500 = vsub.f32 %v5273, %v5369
        %v5501 = vsub.f32 %v5278, %v5369
        %v5502 = vsub.f32 %v5281, %v5369
        %v5503 = vsub.f32 %v5286, %v5369
        %v5504 = vsub.f32 %v5289, %v5369
        %v5505 = vsub.f32 %v5294, %v5369
        %v5506 = vsub.f32 %v5297, %v5369
        %v5507 = vadd.f32 %v5474, 1e-05
        %v5508 = vrsqrt.pop %v5507
        %v5509 = vmul.f32 %v5475, %v5508
        %v5510 = vmul.f32 %v5476, %v5508
        %v5511 = vmul.f32 %v5477, %v5508
        %v5512 = vmul.f32 %v5478, %v5508
        %v5513 = vmul.f32 %v5479, %v5508
        %v5514 = vmul.f32 %v5480, %v5508
        %v5515 = vmul.f32 %v5481, %v5508
        %v5516 = vmul.f32 %v5482, %v5508
        %v5517 = vmul.f32 %v5483, %v5508
        %v5518 = vmul.f32 %v5484, %v5508
        %v5519 = vmul.f32 %v5485, %v5508
        %v5520 = vmul.f32 %v5486, %v5508
        %v5521 = vmul.f32 %v5487, %v5508
        %v5522 = vmul.f32 %v5488, %v5508
        %v5523 = vmul.f32 %v5489, %v5508
        %v5524 = vmul.f32 %v5490, %v5508
        %v5525 = vmul.f32 %v5491, %v5508
        %v5526 = vmul.f32 %v5492, %v5508
        %v5527 = vmul.f32 %v5493, %v5508
        %v5528 = vmul.f32 %v5494, %v5508
        %v5529 = vmul.f32 %v5495, %v5508
        %v5530 = vmul.f32 %v5496, %v5508
        %v5531 = vmul.f32 %v5497, %v5508
        %v5532 = vmul.f32 %v5498, %v5508
        %v5533 = vmul.f32 %v5499, %v5508
        %v5534 = vmul.f32 %v5500, %v5508
        %v5535 = vmul.f32 %v5501, %v5508
        %v5536 = vmul.f32 %v5502, %v5508
        %v5537 = vmul.f32 %v5503, %v5508
        %v5538 = vmul.f32 %v5504, %v5508
        %v5539 = vmul.f32 %v5505, %v5508
        %v5540 = vmul.f32 %v5506, %v5508
        %vm5541 = vcmp.gt.f32.partialorder %v5509, 0.0
        %vm5542 = vcmp.gt.f32.partialorder %v5510, 0.0
        %vm5543 = vcmp.gt.f32.partialorder %v5511, 0.0
        %vm5544 = vcmp.gt.f32.partialorder %v5512, 0.0
        %vm5545 = vcmp.gt.f32.partialorder %v5513, 0.0
        %vm5546 = vcmp.gt.f32.partialorder %v5514, 0.0
        %vm5547 = vcmp.gt.f32.partialorder %v5515, 0.0
        %vm5548 = vcmp.gt.f32.partialorder %v5516, 0.0
        %vm5549 = vcmp.gt.f32.partialorder %v5517, 0.0
        %vm5550 = vcmp.gt.f32.partialorder %v5518, 0.0
        %vm5551 = vcmp.gt.f32.partialorder %v5519, 0.0
        %vm5552 = vcmp.gt.f32.partialorder %v5520, 0.0
        %vm5553 = vcmp.gt.f32.partialorder %v5521, 0.0
        %vm5554 = vcmp.gt.f32.partialorder %v5522, 0.0
        %vm5555 = vcmp.gt.f32.partialorder %v5523, 0.0
        %vm5556 = vcmp.gt.f32.partialorder %v5524, 0.0
        %vm5557 = vcmp.gt.f32.partialorder %v5525, 0.0
        %vm5558 = vcmp.gt.f32.partialorder %v5526, 0.0
        %vm5559 = vcmp.gt.f32.partialorder %v5527, 0.0
        %vm5560 = vcmp.gt.f32.partialorder %v5528, 0.0
        %vm5561 = vcmp.gt.f32.partialorder %v5529, 0.0
        %vm5562 = vcmp.gt.f32.partialorder %v5530, 0.0
        %vm5563 = vcmp.gt.f32.partialorder %v5531, 0.0
        %vm5564 = vcmp.gt.f32.partialorder %v5532, 0.0
        %vm5565 = vcmp.gt.f32.partialorder %v5533, 0.0
        %vm5566 = vcmp.gt.f32.partialorder %v5534, 0.0
        %vm5567 = vcmp.gt.f32.partialorder %v5535, 0.0
        %vm5568 = vcmp.gt.f32.partialorder %v5536, 0.0
        %vm5569 = vcmp.gt.f32.partialorder %v5537, 0.0
        %vm5570 = vcmp.gt.f32.partialorder %v5538, 0.0
        %vm5571 = vcmp.gt.f32.partialorder %v5539, 0.0
        %vm5572 = vcmp.gt.f32.partialorder %v5540, 0.0
        %v5573 = vmul.f32 %v5509, 0.01
        %v5574 = vmul.f32 %v5510, 0.01
        %v5575 = vmul.f32 %v5511, 0.01
        %v5576 = vmul.f32 %v5512, 0.01
        %v5577 = vmul.f32 %v5513, 0.01
        %v5578 = vmul.f32 %v5514, 0.01
        %v5579 = vmul.f32 %v5515, 0.01
        %v5580 = vmul.f32 %v5516, 0.01
        %v5581 = vmul.f32 %v5517, 0.01
        %v5582 = vmul.f32 %v5518, 0.01
        %v5583 = vmul.f32 %v5519, 0.01
        %v5584 = vmul.f32 %v5520, 0.01
        %v5585 = vmul.f32 %v5521, 0.01
        %v5586 = vmul.f32 %v5522, 0.01
        %v5587 = vmul.f32 %v5523, 0.01
        %v5588 = vmul.f32 %v5524, 0.01
        %v5589 = vmul.f32 %v5525, 0.01
        %v5590 = vmul.f32 %v5526, 0.01
        %v5591 = vmul.f32 %v5527, 0.01
        %v5592 = vmul.f32 %v5528, 0.01
        %v5593 = vmul.f32 %v5529, 0.01
        %v5594 = vmul.f32 %v5530, 0.01
        %v5595 = vmul.f32 %v5531, 0.01
        %v5596 = vmul.f32 %v5532, 0.01
        %v5597 = vmul.f32 %v5533, 0.01
        %v5598 = vmul.f32 %v5534, 0.01
        %v5599 = vmul.f32 %v5535, 0.01
        %v5600 = vmul.f32 %v5536, 0.01
        %v5601 = vmul.f32 %v5537, 0.01
        %v5602 = vmul.f32 %v5538, 0.01
        %v5603 = vmul.f32 %v5539, 0.01
        %v5604 = vmul.f32 %v5540, 0.01
        %v5605 = vsel %vm5541, %v5509, %v5573
        %v5606 = vsel %vm5542, %v5510, %v5574
        %v5607 = vsel %vm5543, %v5511, %v5575
        %v5608 = vsel %vm5544, %v5512, %v5576
        %v5609 = vsel %vm5545, %v5513, %v5577
        %v5610 = vsel %vm5546, %v5514, %v5578
        %v5611 = vsel %vm5547, %v5515, %v5579
        %v5612 = vsel %vm5548, %v5516, %v5580
        %v5613 = vsel %vm5549, %v5517, %v5581
        %v5614 = vsel %vm5550, %v5518, %v5582
        %v5615 = vsel %vm5551, %v5519, %v5583
        %v5616 = vsel %vm5552, %v5520, %v5584
        %v5617 = vsel %vm5553, %v5521, %v5585
        %v5618 = vsel %vm5554, %v5522, %v5586
        %v5619 = vsel %vm5555, %v5523, %v5587
        %v5620 = vsel %vm5556, %v5524, %v5588
        %v5621 = vsel %vm5557, %v5525, %v5589
        %v5622 = vsel %vm5558, %v5526, %v5590
        %v5623 = vsel %vm5559, %v5527, %v5591
        %v5624 = vsel %vm5560, %v5528, %v5592
        %v5625 = vsel %vm5561, %v5529, %v5593
        %v5626 = vsel %vm5562, %v5530, %v5594
        %v5627 = vsel %vm5563, %v5531, %v5595
        %v5628 = vsel %vm5564, %v5532, %v5596
        %v5629 = vsel %vm5565, %v5533, %v5597
        %v5630 = vsel %vm5566, %v5534, %v5598
        %v5631 = vsel %vm5567, %v5535, %v5599
        %v5632 = vsel %vm5568, %v5536, %v5600
        %v5633 = vsel %vm5569, %v5537, %v5601
        %v5634 = vsel %vm5570, %v5538, %v5602
        %v5635 = vsel %vm5571, %v5539, %v5603
        %v5636 = vsel %vm5572, %v5540, %v5604
        %5637 = vst.msk [vmem:[#allocation6] sm:$0xff] %vm3812, 0.0
        %5638 = vst.msk [vmem:[#allocation6 + $0x8] sm:$0xff] %vm3812, 0.0
        %5639 = vst.msk [vmem:[#allocation6 + $0x10] sm:$0x3] %vm4152, 0.0
        %s5640 = scalar_lea.vmem [#allocation6], 408
        %5641 = vst.msk [vmem:[%s5640] sm:$0xff] %vm3812, 0.0
        %5642 = vst.msk [vmem:[%s5640 + $0x8] sm:$0xff] %vm3812, 0.0
        %5643 = vst.msk [vmem:[%s5640 + $0x10] sm:$0x3] %vm4152, 0.0
        %5644 = vst.msk [vmem:[#allocation6] sm:$0x1] %vm4158, 0.0
        %5645 = vst.msk [vmem:[#allocation6 + $0x18] sm:$0x1] %vm4158, 0.0
        %5646 = vst.msk [vmem:[#allocation6 + $0x30] sm:$0x1] %vm4158, 0.0
        %5647 = vst.msk [vmem:[#allocation6 + $0x48] sm:$0x1] %vm4158, 0.0
        %5648 = vst.msk [vmem:[#allocation6 + $0x60] sm:$0x1] %vm4158, 0.0
        %5649 = vst.msk [vmem:[#allocation6 + $0x78] sm:$0x1] %vm4158, 0.0
        %5650 = vst.msk [vmem:[#allocation6 + $0x90] sm:$0x1] %vm4158, 0.0
        %5651 = vst.msk [vmem:[#allocation6 + $0xa8] sm:$0x1] %vm4158, 0.0
        %5652 = vst.msk [vmem:[#allocation6 + $0xc0] sm:$0x1] %vm4158, 0.0
        %5653 = vst.msk [vmem:[#allocation6 + $0xd8] sm:$0x1] %vm4158, 0.0
        %5654 = vst.msk [vmem:[#allocation6 + $0xf0] sm:$0x1] %vm4158, 0.0
        %5655 = vst.msk [vmem:[#allocation6 + $0x108] sm:$0x1] %vm4158, 0.0
        %5656 = vst.msk [vmem:[#allocation6 + $0x120] sm:$0x1] %vm4158, 0.0
        %5657 = vst.msk [vmem:[#allocation6 + $0x138] sm:$0x1] %vm4158, 0.0
        %5658 = vst.msk [vmem:[#allocation6 + $0x150] sm:$0x1] %vm4158, 0.0
        %5659 = vst.msk [vmem:[#allocation6 + $0x168] sm:$0x1] %vm4158, 0.0
        %5660 = vst.msk [vmem:[#allocation6 + $0x180] sm:$0x1] %vm4158, 0.0
        %5661 = vst.msk [vmem:[#allocation6 + $0x198] sm:$0x1] %vm4158, 0.0
        %5662 = vst.msk [vmem:[#allocation6 + $0x11] sm:$0x1] %vm4158, 0.0
        %5663 = vst.msk [vmem:[#allocation6 + $0x29] sm:$0x1] %vm4158, 0.0
        %5664 = vst.msk [vmem:[#allocation6 + $0x41] sm:$0x1] %vm4158, 0.0
        %5665 = vst.msk [vmem:[#allocation6 + $0x59] sm:$0x1] %vm4158, 0.0
        %5666 = vst.msk [vmem:[#allocation6 + $0x71] sm:$0x1] %vm4158, 0.0
        %5667 = vst.msk [vmem:[#allocation6 + $0x89] sm:$0x1] %vm4158, 0.0
        %5668 = vst.msk [vmem:[#allocation6 + $0xa1] sm:$0x1] %vm4158, 0.0
        %5669 = vst.msk [vmem:[#allocation6 + $0xb9] sm:$0x1] %vm4158, 0.0
        %5670 = vst.msk [vmem:[#allocation6 + $0xd1] sm:$0x1] %vm4158, 0.0
        %5671 = vst.msk [vmem:[#allocation6 + $0xe9] sm:$0x1] %vm4158, 0.0
        %5672 = vst.msk [vmem:[#allocation6 + $0x101] sm:$0x1] %vm4158, 0.0
        %5673 = vst.msk [vmem:[#allocation6 + $0x119] sm:$0x1] %vm4158, 0.0
        %5674 = vst.msk [vmem:[#allocation6 + $0x131] sm:$0x1] %vm4158, 0.0
        %5675 = vst.msk [vmem:[#allocation6 + $0x149] sm:$0x1] %vm4158, 0.0
        %5676 = vst.msk [vmem:[#allocation6 + $0x161] sm:$0x1] %vm4158, 0.0
        %5677 = vst.msk [vmem:[#allocation6 + $0x179] sm:$0x1] %vm4158, 0.0
        %5678 = vst.msk [vmem:[#allocation6 + $0x191] sm:$0x1] %vm4158, 0.0
        %5679 = vst.msk [vmem:[#allocation6 + $0x1a9] sm:$0x1] %vm4158, 0.0
        %s5680 = scalar_lea.vmem [#allocation6], 24
        %5681 = vst.msk [vmem:[%s5680 + $0x1] sm:$0xff] %vm3812, %v5605
        %5682 = vst.msk [vmem:[%s5680 + $0x9] sm:$0xff] %vm3812, %v5606
        %5683 = vst.msk [vmem:[%s5680 + $0x19] sm:$0xff] %vm3812, %v5607
        %5684 = vst.msk [vmem:[%s5680 + $0x21] sm:$0xff] %vm3812, %v5608
        %5685 = vst.msk [vmem:[%s5680 + $0x31] sm:$0xff] %vm3812, %v5609
        %5686 = vst.msk [vmem:[%s5680 + $0x39] sm:$0xff] %vm3812, %v5610
        %5687 = vst.msk [vmem:[%s5680 + $0x49] sm:$0xff] %vm3812, %v5611
        %5688 = vst.msk [vmem:[%s5680 + $0x51] sm:$0xff] %vm3812, %v5612
        %5689 = vst.msk [vmem:[%s5680 + $0x61] sm:$0xff] %vm3812, %v5613
        %5690 = vst.msk [vmem:[%s5680 + $0x69] sm:$0xff] %vm3812, %v5614
        %5691 = vst.msk [vmem:[%s5680 + $0x79] sm:$0xff] %vm3812, %v5615
        %5692 = vst.msk [vmem:[%s5680 + $0x81] sm:$0xff] %vm3812, %v5616
        %5693 = vst.msk [vmem:[%s5680 + $0x91] sm:$0xff] %vm3812, %v5617
        %5694 = vst.msk [vmem:[%s5680 + $0x99] sm:$0xff] %vm3812, %v5618
        %5695 = vst.msk [vmem:[%s5680 + $0xa9] sm:$0xff] %vm3812, %v5619
        %5696 = vst.msk [vmem:[%s5680 + $0xb1] sm:$0xff] %vm3812, %v5620
        %5697 = vst.msk [vmem:[%s5680 + $0xc1] sm:$0xff] %vm3812, %v5621
        %5698 = vst.msk [vmem:[%s5680 + $0xc9] sm:$0xff] %vm3812, %v5622
        %5699 = vst.msk [vmem:[%s5680 + $0xd9] sm:$0xff] %vm3812, %v5623
        %5700 = vst.msk [vmem:[%s5680 + $0xe1] sm:$0xff] %vm3812, %v5624
        %5701 = vst.msk [vmem:[%s5680 + $0xf1] sm:$0xff] %vm3812, %v5625
        %5702 = vst.msk [vmem:[%s5680 + $0xf9] sm:$0xff] %vm3812, %v5626
        %5703 = vst.msk [vmem:[%s5680 + $0x109] sm:$0xff] %vm3812, %v5627
        %5704 = vst.msk [vmem:[%s5680 + $0x111] sm:$0xff] %vm3812, %v5628
        %5705 = vst.msk [vmem:[%s5680 + $0x121] sm:$0xff] %vm3812, %v5629
        %5706 = vst.msk [vmem:[%s5680 + $0x129] sm:$0xff] %vm3812, %v5630
        %5707 = vst.msk [vmem:[%s5680 + $0x139] sm:$0xff] %vm3812, %v5631
        %5708 = vst.msk [vmem:[%s5680 + $0x141] sm:$0xff] %vm3812, %v5632
        %5709 = vst.msk [vmem:[%s5680 + $0x151] sm:$0xff] %vm3812, %v5633
        %5710 = vst.msk [vmem:[%s5680 + $0x159] sm:$0xff] %vm3812, %v5634
        %5711 = vst.msk [vmem:[%s5680 + $0x169] sm:$0xff] %vm3812, %v5635
        %5712 = vst.msk [vmem:[%s5680 + $0x171] sm:$0xff] %vm3812, %v5636
        %v5713 = vld [vmem:[#allocation6] sm:$0xff]
        %v5714 = vld [vmem:[#allocation6 + $0x8] sm:$0xff]
        %v5715 = vld [vmem:[#allocation6 + $0x18] sm:$0xff]
        %v5716 = vld [vmem:[#allocation6 + $0x20] sm:$0xff]
        %v5717 = vld [vmem:[#allocation6 + $0x30] sm:$0xff]
        %v5718 = vld [vmem:[#allocation6 + $0x38] sm:$0xff]
        %v5719 = vld [vmem:[#allocation6 + $0x48] sm:$0xff]
        %v5720 = vld [vmem:[#allocation6 + $0x50] sm:$0xff]
        %v5721 = vld [vmem:[#allocation6 + $0x60] sm:$0xff]
        %v5722 = vld [vmem:[#allocation6 + $0x68] sm:$0xff]
        %v5723 = vld [vmem:[#allocation6 + $0x78] sm:$0xff]
        %v5724 = vld [vmem:[#allocation6 + $0x80] sm:$0xff]
        %v5725 = vld [vmem:[#allocation6 + $0x90] sm:$0xff]
        %v5726 = vld [vmem:[#allocation6 + $0x98] sm:$0xff]
        %v5727 = vld [vmem:[#allocation6 + $0xa8] sm:$0xff]
        %v5728 = vld [vmem:[#allocation6 + $0xb0] sm:$0xff]
        %v5729 = vld [vmem:[#allocation6 + $0xc0] sm:$0xff]
        %v5730 = vld [vmem:[#allocation6 + $0xc8] sm:$0xff]
        %v5731 = vld [vmem:[#allocation6 + $0xd8] sm:$0xff]
        %v5732 = vld [vmem:[#allocation6 + $0xe0] sm:$0xff]
        %v5733 = vld [vmem:[#allocation6 + $0xf0] sm:$0xff]
        %v5734 = vld [vmem:[#allocation6 + $0xf8] sm:$0xff]
        %v5735 = vld [vmem:[#allocation6 + $0x108] sm:$0xff]
        %v5736 = vld [vmem:[#allocation6 + $0x110] sm:$0xff]
        %v5737 = vld [vmem:[#allocation6 + $0x120] sm:$0xff]
        %v5738 = vld [vmem:[#allocation6 + $0x128] sm:$0xff]
        %v5739 = vld [vmem:[#allocation6 + $0x138] sm:$0xff]
        %v5740 = vld [vmem:[#allocation6 + $0x140] sm:$0xff]
        %v5741 = vld [vmem:[#allocation6 + $0x150] sm:$0xff]
        %v5742 = vld [vmem:[#allocation6 + $0x158] sm:$0xff]
        %v5743 = vld [vmem:[#allocation6 + $0x168] sm:$0xff]
        %v5744 = vld [vmem:[#allocation6 + $0x170] sm:$0xff]
        %v5745 = vld [vmem:[#allocation6 + $0x180] sm:$0xff]
        %v5746 = vld [vmem:[#allocation6 + $0x188] sm:$0xff]
        %v5747 = vld [vmem:[#allocation6 + $0x198] sm:$0xff]
        %v5748 = vld [vmem:[#allocation6 + $0x1a0] sm:$0xff]
        %v5749 = vld [vmem:[#allocation6 + $0x1] sm:$0xff]
        %v5750 = vld [vmem:[#allocation6 + $0x9] sm:$0xff]
        %v5751 = vld [vmem:[#allocation6 + $0x19] sm:$0xff]
        %v5752 = vld [vmem:[#allocation6 + $0x21] sm:$0xff]
        %v5753 = vld [vmem:[#allocation6 + $0x31] sm:$0xff]
        %v5754 = vld [vmem:[#allocation6 + $0x39] sm:$0xff]
        %v5755 = vld [vmem:[#allocation6 + $0x49] sm:$0xff]
        %v5756 = vld [vmem:[#allocation6 + $0x51] sm:$0xff]
        %v5757 = vld [vmem:[#allocation6 + $0x61] sm:$0xff]
        %v5758 = vld [vmem:[#allocation6 + $0x69] sm:$0xff]
        %v5759 = vld [vmem:[#allocation6 + $0x79] sm:$0xff]
        %v5760 = vld [vmem:[#allocation6 + $0x81] sm:$0xff]
        %v5761 = vld [vmem:[#allocation6 + $0x91] sm:$0xff]
        %v5762 = vld [vmem:[#allocation6 + $0x99] sm:$0xff]
        %v5763 = vld [vmem:[#allocation6 + $0xa9] sm:$0xff]
        %v5764 = vld [vmem:[#allocation6 + $0xb1] sm:$0xff]
        %v5765 = vld [vmem:[#allocation6 + $0xc1] sm:$0xff]
        %v5766 = vld [vmem:[#allocation6 + $0xc9] sm:$0xff]
        %v5767 = vld [vmem:[#allocation6 + $0xd9] sm:$0xff]
        %v5768 = vld [vmem:[#allocation6 + $0xe1] sm:$0xff]
        %v5769 = vld [vmem:[#allocation6 + $0xf1] sm:$0xff]
        %v5770 = vld [vmem:[#allocation6 + $0xf9] sm:$0xff]
        %v5771 = vld [vmem:[#allocation6 + $0x109] sm:$0xff]
        %v5772 = vld [vmem:[#allocation6 + $0x111] sm:$0xff]
        %v5773 = vld [vmem:[#allocation6 + $0x121] sm:$0xff]
        %v5774 = vld [vmem:[#allocation6 + $0x129] sm:$0xff]
        %v5775 = vld [vmem:[#allocation6 + $0x139] sm:$0xff]
        %v5776 = vld [vmem:[#allocation6 + $0x141] sm:$0xff]
        %v5777 = vld [vmem:[#allocation6 + $0x151] sm:$0xff]
        %v5778 = vld [vmem:[#allocation6 + $0x159] sm:$0xff]
        %v5779 = vld [vmem:[#allocation6 + $0x169] sm:$0xff]
        %v5780 = vld [vmem:[#allocation6 + $0x171] sm:$0xff]
        %v5781 = vld [vmem:[#allocation6 + $0x181] sm:$0xff]
        %v5782 = vld [vmem:[#allocation6 + $0x189] sm:$0xff]
        %v5783 = vld [vmem:[#allocation6 + $0x199] sm:$0xff]
        %v5784 = vld [vmem:[#allocation6 + $0x1a1] sm:$0xff]
        %v5785 = vld [vmem:[#allocation6 + $0x2] sm:$0xff]
        %v5786 = vld [vmem:[#allocation6 + $0xa] sm:$0xff]
        %v5787 = vld [vmem:[#allocation6 + $0x1a] sm:$0xff]
        %v5788 = vld [vmem:[#allocation6 + $0x22] sm:$0xff]
        %v5789 = vld [vmem:[#allocation6 + $0x32] sm:$0xff]
        %v5790 = vld [vmem:[#allocation6 + $0x3a] sm:$0xff]
        %v5791 = vld [vmem:[#allocation6 + $0x4a] sm:$0xff]
        %v5792 = vld [vmem:[#allocation6 + $0x52] sm:$0xff]
        %v5793 = vld [vmem:[#allocation6 + $0x62] sm:$0xff]
        %v5794 = vld [vmem:[#allocation6 + $0x6a] sm:$0xff]
        %v5795 = vld [vmem:[#allocation6 + $0x7a] sm:$0xff]
        %v5796 = vld [vmem:[#allocation6 + $0x82] sm:$0xff]
        %v5797 = vld [vmem:[#allocation6 + $0x92] sm:$0xff]
        %v5798 = vld [vmem:[#allocation6 + $0x9a] sm:$0xff]
        %v5799 = vld [vmem:[#allocation6 + $0xaa] sm:$0xff]
        %v5800 = vld [vmem:[#allocation6 + $0xb2] sm:$0xff]
        %v5801 = vld [vmem:[#allocation6 + $0xc2] sm:$0xff]
        %v5802 = vld [vmem:[#allocation6 + $0xca] sm:$0xff]
        %v5803 = vld [vmem:[#allocation6 + $0xda] sm:$0xff]
        %v5804 = vld [vmem:[#allocation6 + $0xe2] sm:$0xff]
        %v5805 = vld [vmem:[#allocation6 + $0xf2] sm:$0xff]
        %v5806 = vld [vmem:[#allocation6 + $0xfa] sm:$0xff]
        %v5807 = vld [vmem:[#allocation6 + $0x10a] sm:$0xff]
        %v5808 = vld [vmem:[#allocation6 + $0x112] sm:$0xff]
        %v5809 = vld [vmem:[#allocation6 + $0x122] sm:$0xff]
        %v5810 = vld [vmem:[#allocation6 + $0x12a] sm:$0xff]
        %v5811 = vld [vmem:[#allocation6 + $0x13a] sm:$0xff]
        %v5812 = vld [vmem:[#allocation6 + $0x142] sm:$0xff]
        %v5813 = vld [vmem:[#allocation6 + $0x152] sm:$0xff]
        %v5814 = vld [vmem:[#allocation6 + $0x15a] sm:$0xff]
        %v5815 = vld [vmem:[#allocation6 + $0x16a] sm:$0xff]
        %v5816 = vld [vmem:[#allocation6 + $0x172] sm:$0xff]
        %v5817 = vld [vmem:[#allocation6 + $0x182] sm:$0xff]
        %v5818 = vld [vmem:[#allocation6 + $0x18a] sm:$0xff]
        %v5819 = vld [vmem:[#allocation6 + $0x19a] sm:$0xff]
        %v5820 = vld [vmem:[#allocation6 + $0x1a2] sm:$0xff]
        %5857 = vrot.lane.b32.xlu0 %v5749, 16
        %v5858 = vpop.permute.xlu0 %5857
        %5859 = vrot.lane.b32.xlu0 %v5750, 16
        %v5860 = vpop.permute.xlu0 %5859
        %5861 = vrot.lane.b32.xlu0 %v5751, 16
        %v5862 = vpop.permute.xlu0 %5861
        %5863 = vrot.lane.b32.xlu0 %v5752, 16
        %v5864 = vpop.permute.xlu0 %5863
        %5865 = vrot.lane.b32.xlu0 %v5753, 16
        %v5866 = vpop.permute.xlu0 %5865
        %5867 = vrot.lane.b32.xlu0 %v5754, 16
        %v5868 = vpop.permute.xlu0 %5867
        %5869 = vrot.lane.b32.xlu0 %v5755, 16
        %v5870 = vpop.permute.xlu0 %5869
        %5871 = vrot.lane.b32.xlu0 %v5756, 16
        %v5872 = vpop.permute.xlu0 %5871
        %5873 = vrot.lane.b32.xlu0 %v5757, 16
        %v5874 = vpop.permute.xlu0 %5873
        %5875 = vrot.lane.b32.xlu0 %v5758, 16
        %v5876 = vpop.permute.xlu0 %5875
        %5877 = vrot.lane.b32.xlu0 %v5759, 16
        %v5878 = vpop.permute.xlu0 %5877
        %5879 = vrot.lane.b32.xlu0 %v5760, 16
        %v5880 = vpop.permute.xlu0 %5879
        %5881 = vrot.lane.b32.xlu0 %v5761, 16
        %v5882 = vpop.permute.xlu0 %5881
        %5883 = vrot.lane.b32.xlu0 %v5762, 16
        %v5884 = vpop.permute.xlu0 %5883
        %5885 = vrot.lane.b32.xlu0 %v5763, 16
        %v5886 = vpop.permute.xlu0 %5885
        %5887 = vrot.lane.b32.xlu0 %v5764, 16
        %v5888 = vpop.permute.xlu0 %5887
        %5889 = vrot.lane.b32.xlu0 %v5765, 16
        %v5890 = vpop.permute.xlu0 %5889
        %5891 = vrot.lane.b32.xlu0 %v5766, 16
        %v5892 = vpop.permute.xlu0 %5891
        %5893 = vrot.lane.b32.xlu0 %v5767, 16
        %v5894 = vpop.permute.xlu0 %5893
        %5895 = vrot.lane.b32.xlu0 %v5768, 16
        %v5896 = vpop.permute.xlu0 %5895
        %5897 = vrot.lane.b32.xlu0 %v5769, 16
        %v5898 = vpop.permute.xlu0 %5897
        %5899 = vrot.lane.b32.xlu0 %v5770, 16
        %v5900 = vpop.permute.xlu0 %5899
        %5901 = vrot.lane.b32.xlu0 %v5771, 16
        %v5902 = vpop.permute.xlu0 %5901
        %5903 = vrot.lane.b32.xlu0 %v5772, 16
        %v5904 = vpop.permute.xlu0 %5903
        %5905 = vrot.lane.b32.xlu0 %v5773, 16
        %v5906 = vpop.permute.xlu0 %5905
        %5907 = vrot.lane.b32.xlu0 %v5774, 16
        %v5908 = vpop.permute.xlu0 %5907
        %5909 = vrot.lane.b32.xlu0 %v5775, 16
        %v5910 = vpop.permute.xlu0 %5909
        %5911 = vrot.lane.b32.xlu0 %v5776, 16
        %v5912 = vpop.permute.xlu0 %5911
        %5913 = vrot.lane.b32.xlu0 %v5777, 16
        %v5914 = vpop.permute.xlu0 %5913
        %5915 = vrot.lane.b32.xlu0 %v5778, 16
        %v5916 = vpop.permute.xlu0 %5915
        %5917 = vrot.lane.b32.xlu0 %v5779, 16
        %v5918 = vpop.permute.xlu0 %5917
        %5919 = vrot.lane.b32.xlu0 %v5780, 16
        %v5920 = vpop.permute.xlu0 %5919
        %5921 = vrot.lane.b32.xlu0 %v5781, 16
        %v5922 = vpop.permute.xlu0 %5921
        %5923 = vrot.lane.b32.xlu0 %v5782, 16
        %v5924 = vpop.permute.xlu0 %5923
        %5925 = vrot.lane.b32.xlu0 %v5783, 16
        %v5926 = vpop.permute.xlu0 %5925
        %5927 = vrot.lane.b32.xlu0 %v5784, 16
        %v5928 = vpop.permute.xlu0 %5927
        %6001 = vrot.lane.b32.xlu0 %v5785, 32
        %v6002 = vpop.permute.xlu0 %6001
        %6003 = vrot.lane.b32.xlu0 %v5786, 32
        %v6004 = vpop.permute.xlu0 %6003
        %6005 = vrot.lane.b32.xlu0 %v5787, 32
        %v6006 = vpop.permute.xlu0 %6005
        %6007 = vrot.lane.b32.xlu0 %v5788, 32
        %v6008 = vpop.permute.xlu0 %6007
        %6009 = vrot.lane.b32.xlu0 %v5789, 32
        %v6010 = vpop.permute.xlu0 %6009
        %6011 = vrot.lane.b32.xlu0 %v5790, 32
        %v6012 = vpop.permute.xlu0 %6011
        %6013 = vrot.lane.b32.xlu0 %v5791, 32
        %v6014 = vpop.permute.xlu0 %6013
        %6015 = vrot.lane.b32.xlu0 %v5792, 32
        %v6016 = vpop.permute.xlu0 %6015
        %6017 = vrot.lane.b32.xlu0 %v5793, 32
        %v6018 = vpop.permute.xlu0 %6017
        %6019 = vrot.lane.b32.xlu0 %v5794, 32
        %v6020 = vpop.permute.xlu0 %6019
        %6021 = vrot.lane.b32.xlu0 %v5795, 32
        %v6022 = vpop.permute.xlu0 %6021
        %6023 = vrot.lane.b32.xlu0 %v5796, 32
        %v6024 = vpop.permute.xlu0 %6023
        %6025 = vrot.lane.b32.xlu0 %v5797, 32
        %v6026 = vpop.permute.xlu0 %6025
        %6027 = vrot.lane.b32.xlu0 %v5798, 32
        %v6028 = vpop.permute.xlu0 %6027
        %6029 = vrot.lane.b32.xlu0 %v5799, 32
        %v6030 = vpop.permute.xlu0 %6029
        %6031 = vrot.lane.b32.xlu0 %v5800, 32
        %v6032 = vpop.permute.xlu0 %6031
        %6033 = vrot.lane.b32.xlu0 %v5801, 32
        %v6034 = vpop.permute.xlu0 %6033
        %6035 = vrot.lane.b32.xlu0 %v5802, 32
        %v6036 = vpop.permute.xlu0 %6035
        %6037 = vrot.lane.b32.xlu0 %v5803, 32
        %v6038 = vpop.permute.xlu0 %6037
        %6039 = vrot.lane.b32.xlu0 %v5804, 32
        %v6040 = vpop.permute.xlu0 %6039
        %6041 = vrot.lane.b32.xlu0 %v5805, 32
        %v6042 = vpop.permute.xlu0 %6041
        %6043 = vrot.lane.b32.xlu0 %v5806, 32
        %v6044 = vpop.permute.xlu0 %6043
        %6045 = vrot.lane.b32.xlu0 %v5807, 32
        %v6046 = vpop.permute.xlu0 %6045
        %6047 = vrot.lane.b32.xlu0 %v5808, 32
        %v6048 = vpop.permute.xlu0 %6047
        %6049 = vrot.lane.b32.xlu0 %v5809, 32
        %v6050 = vpop.permute.xlu0 %6049
        %6051 = vrot.lane.b32.xlu0 %v5810, 32
        %v6052 = vpop.permute.xlu0 %6051
        %6053 = vrot.lane.b32.xlu0 %v5811, 32
        %v6054 = vpop.permute.xlu0 %6053
        %6055 = vrot.lane.b32.xlu0 %v5812, 32
        %v6056 = vpop.permute.xlu0 %6055
        %6057 = vrot.lane.b32.xlu0 %v5813, 32
        %v6058 = vpop.permute.xlu0 %6057
        %6059 = vrot.lane.b32.xlu0 %v5814, 32
        %v6060 = vpop.permute.xlu0 %6059
        %6061 = vrot.lane.b32.xlu0 %v5815, 32
        %v6062 = vpop.permute.xlu0 %6061
        %6063 = vrot.lane.b32.xlu0 %v5816, 32
        %v6064 = vpop.permute.xlu0 %6063
        %6065 = vrot.lane.b32.xlu0 %v5817, 32
        %v6066 = vpop.permute.xlu0 %6065
        %6067 = vrot.lane.b32.xlu0 %v5818, 32
        %v6068 = vpop.permute.xlu0 %6067
        %6069 = vrot.lane.b32.xlu0 %v5819, 32
        %v6070 = vpop.permute.xlu0 %6069
        %6071 = vrot.lane.b32.xlu0 %v5820, 32
        %v6072 = vpop.permute.xlu0 %6071
        %v6109 = vsel %vm3812, %v5713, %v5858
        %v6110 = vsel %vm3812, %v5714, %v5860
        %v6111 = vsel %vm3812, %v5715, %v5862
        %v6112 = vsel %vm3812, %v5716, %v5864
        %v6113 = vsel %vm3812, %v5717, %v5866
        %v6114 = vsel %vm3812, %v5718, %v5868
        %v6115 = vsel %vm3812, %v5719, %v5870
        %v6116 = vsel %vm3812, %v5720, %v5872
        %v6117 = vsel %vm3812, %v5721, %v5874
        %v6118 = vsel %vm3812, %v5722, %v5876
        %v6119 = vsel %vm3812, %v5723, %v5878
        %v6120 = vsel %vm3812, %v5724, %v5880
        %v6121 = vsel %vm3812, %v5725, %v5882
        %v6122 = vsel %vm3812, %v5726, %v5884
        %v6123 = vsel %vm3812, %v5727, %v5886
        %v6124 = vsel %vm3812, %v5728, %v5888
        %v6125 = vsel %vm3812, %v5729, %v5890
        %v6126 = vsel %vm3812, %v5730, %v5892
        %v6127 = vsel %vm3812, %v5731, %v5894
        %v6128 = vsel %vm3812, %v5732, %v5896
        %v6129 = vsel %vm3812, %v5733, %v5898
        %v6130 = vsel %vm3812, %v5734, %v5900
        %v6131 = vsel %vm3812, %v5735, %v5902
        %v6132 = vsel %vm3812, %v5736, %v5904
        %v6133 = vsel %vm3812, %v5737, %v5906
        %v6134 = vsel %vm3812, %v5738, %v5908
        %v6135 = vsel %vm3812, %v5739, %v5910
        %v6136 = vsel %vm3812, %v5740, %v5912
        %v6137 = vsel %vm3812, %v5741, %v5914
        %v6138 = vsel %vm3812, %v5742, %v5916
        %v6139 = vsel %vm3812, %v5743, %v5918
        %v6140 = vsel %vm3812, %v5744, %v5920
        %v6141 = vsel %vm3812, %v5745, %v5922
        %v6142 = vsel %vm3812, %v5746, %v5924
        %v6143 = vsel %vm3812, %v5747, %v5926
        %v6144 = vsel %vm3812, %v5748, %v5928
        %v6145 = vsel %vm930, %v6109, %v6002
        %v6146 = vsel %vm930, %v6110, %v6004
        %v6147 = vsel %vm930, %v6111, %v6006
        %v6148 = vsel %vm930, %v6112, %v6008
        %v6149 = vsel %vm930, %v6113, %v6010
        %v6150 = vsel %vm930, %v6114, %v6012
        %v6151 = vsel %vm930, %v6115, %v6014
        %v6152 = vsel %vm930, %v6116, %v6016
        %v6153 = vsel %vm930, %v6117, %v6018
        %v6154 = vsel %vm930, %v6118, %v6020
        %v6155 = vsel %vm930, %v6119, %v6022
        %v6156 = vsel %vm930, %v6120, %v6024
        %v6157 = vsel %vm930, %v6121, %v6026
        %v6158 = vsel %vm930, %v6122, %v6028
        %v6159 = vsel %vm930, %v6123, %v6030
        %v6160 = vsel %vm930, %v6124, %v6032
        %v6161 = vsel %vm930, %v6125, %v6034
        %v6162 = vsel %vm930, %v6126, %v6036
        %v6163 = vsel %vm930, %v6127, %v6038
        %v6164 = vsel %vm930, %v6128, %v6040
        %v6165 = vsel %vm930, %v6129, %v6042
        %v6166 = vsel %vm930, %v6130, %v6044
        %v6167 = vsel %vm930, %v6131, %v6046
        %v6168 = vsel %vm930, %v6132, %v6048
        %v6169 = vsel %vm930, %v6133, %v6050
        %v6170 = vsel %vm930, %v6134, %v6052
        %v6171 = vsel %vm930, %v6135, %v6054
        %v6172 = vsel %vm930, %v6136, %v6056
        %v6173 = vsel %vm930, %v6137, %v6058
        %v6174 = vsel %vm930, %v6138, %v6060
        %v6175 = vsel %vm930, %v6139, %v6062
        %v6176 = vsel %vm930, %v6140, %v6064
        %v6177 = vsel %vm930, %v6141, %v6066
        %v6178 = vsel %vm930, %v6142, %v6068
        %v6179 = vsel %vm930, %v6143, %v6070
        %v6180 = vsel %vm930, %v6144, %v6072
        %6213 = vrot.lane.b32.xlu0 %v6147, 48
        %v6214 = vpop.permute.xlu0 %6213
        %6215 = vrot.lane.b32.xlu0 %v6148, 48
        %v6216 = vpop.permute.xlu0 %6215
        %6217 = vrot.lane.b32.xlu0 %v6149, 48
        %v6218 = vpop.permute.xlu0 %6217
        %6219 = vrot.lane.b32.xlu0 %v6150, 48
        %v6220 = vpop.permute.xlu0 %6219
        %6221 = vrot.lane.b32.xlu0 %v6151, 48
        %v6222 = vpop.permute.xlu0 %6221
        %6223 = vrot.lane.b32.xlu0 %v6152, 48
        %v6224 = vpop.permute.xlu0 %6223
        %6225 = vrot.lane.b32.xlu0 %v6153, 48
        %v6226 = vpop.permute.xlu0 %6225
        %6227 = vrot.lane.b32.xlu0 %v6154, 48
        %v6228 = vpop.permute.xlu0 %6227
        %6229 = vrot.lane.b32.xlu0 %v6155, 48
        %v6230 = vpop.permute.xlu0 %6229
        %6231 = vrot.lane.b32.xlu0 %v6156, 48
        %v6232 = vpop.permute.xlu0 %6231
        %6233 = vrot.lane.b32.xlu0 %v6157, 48
        %v6234 = vpop.permute.xlu0 %6233
        %6235 = vrot.lane.b32.xlu0 %v6158, 48
        %v6236 = vpop.permute.xlu0 %6235
        %6237 = vrot.lane.b32.xlu0 %v6159, 48
        %v6238 = vpop.permute.xlu0 %6237
        %6239 = vrot.lane.b32.xlu0 %v6160, 48
        %v6240 = vpop.permute.xlu0 %6239
        %6241 = vrot.lane.b32.xlu0 %v6161, 48
        %v6242 = vpop.permute.xlu0 %6241
        %6243 = vrot.lane.b32.xlu0 %v6162, 48
        %v6244 = vpop.permute.xlu0 %6243
        %6245 = vrot.lane.b32.xlu0 %v6163, 48
        %v6246 = vpop.permute.xlu0 %6245
        %6247 = vrot.lane.b32.xlu0 %v6164, 48
        %v6248 = vpop.permute.xlu0 %6247
        %6249 = vrot.lane.b32.xlu0 %v6165, 48
        %v6250 = vpop.permute.xlu0 %6249
        %6251 = vrot.lane.b32.xlu0 %v6166, 48
        %v6252 = vpop.permute.xlu0 %6251
        %6253 = vrot.lane.b32.xlu0 %v6167, 48
        %v6254 = vpop.permute.xlu0 %6253
        %6255 = vrot.lane.b32.xlu0 %v6168, 48
        %v6256 = vpop.permute.xlu0 %6255
        %6257 = vrot.lane.b32.xlu0 %v6169, 48
        %v6258 = vpop.permute.xlu0 %6257
        %6259 = vrot.lane.b32.xlu0 %v6170, 48
        %v6260 = vpop.permute.xlu0 %6259
        %6261 = vrot.lane.b32.xlu0 %v6171, 48
        %v6262 = vpop.permute.xlu0 %6261
        %6263 = vrot.lane.b32.xlu0 %v6172, 48
        %v6264 = vpop.permute.xlu0 %6263
        %6265 = vrot.lane.b32.xlu0 %v6173, 48
        %v6266 = vpop.permute.xlu0 %6265
        %6267 = vrot.lane.b32.xlu0 %v6174, 48
        %v6268 = vpop.permute.xlu0 %6267
        %6269 = vrot.lane.b32.xlu0 %v6175, 48
        %v6270 = vpop.permute.xlu0 %6269
        %6271 = vrot.lane.b32.xlu0 %v6176, 48
        %v6272 = vpop.permute.xlu0 %6271
        %6273 = vrot.lane.b32.xlu0 %v6177, 48
        %v6274 = vpop.permute.xlu0 %6273
        %6275 = vrot.lane.b32.xlu0 %v6178, 48
        %v6276 = vpop.permute.xlu0 %6275
        %6311 = vrot.lane.b32.xlu0 %v6149, 96
        %v6312 = vpop.permute.xlu0 %6311
        %6313 = vrot.lane.b32.xlu0 %v6150, 96
        %v6314 = vpop.permute.xlu0 %6313
        %6315 = vrot.lane.b32.xlu0 %v6151, 96
        %v6316 = vpop.permute.xlu0 %6315
        %6317 = vrot.lane.b32.xlu0 %v6152, 96
        %v6318 = vpop.permute.xlu0 %6317
        %6319 = vrot.lane.b32.xlu0 %v6153, 96
        %v6320 = vpop.permute.xlu0 %6319
        %6321 = vrot.lane.b32.xlu0 %v6154, 96
        %v6322 = vpop.permute.xlu0 %6321
        %6323 = vrot.lane.b32.xlu0 %v6155, 96
        %v6324 = vpop.permute.xlu0 %6323
        %6325 = vrot.lane.b32.xlu0 %v6156, 96
        %v6326 = vpop.permute.xlu0 %6325
        %6327 = vrot.lane.b32.xlu0 %v6157, 96
        %v6328 = vpop.permute.xlu0 %6327
        %6329 = vrot.lane.b32.xlu0 %v6158, 96
        %v6330 = vpop.permute.xlu0 %6329
        %6331 = vrot.lane.b32.xlu0 %v6159, 96
        %v6332 = vpop.permute.xlu0 %6331
        %6333 = vrot.lane.b32.xlu0 %v6160, 96
        %v6334 = vpop.permute.xlu0 %6333
        %6335 = vrot.lane.b32.xlu0 %v6161, 96
        %v6336 = vpop.permute.xlu0 %6335
        %6337 = vrot.lane.b32.xlu0 %v6162, 96
        %v6338 = vpop.permute.xlu0 %6337
        %6339 = vrot.lane.b32.xlu0 %v6163, 96
        %v6340 = vpop.permute.xlu0 %6339
        %6341 = vrot.lane.b32.xlu0 %v6164, 96
        %v6342 = vpop.permute.xlu0 %6341
        %6343 = vrot.lane.b32.xlu0 %v6165, 96
        %v6344 = vpop.permute.xlu0 %6343
        %6345 = vrot.lane.b32.xlu0 %v6166, 96
        %v6346 = vpop.permute.xlu0 %6345
        %6347 = vrot.lane.b32.xlu0 %v6167, 96
        %v6348 = vpop.permute.xlu0 %6347
        %6349 = vrot.lane.b32.xlu0 %v6168, 96
        %v6350 = vpop.permute.xlu0 %6349
        %6351 = vrot.lane.b32.xlu0 %v6169, 96
        %v6352 = vpop.permute.xlu0 %6351
        %6353 = vrot.lane.b32.xlu0 %v6170, 96
        %v6354 = vpop.permute.xlu0 %6353
        %6355 = vrot.lane.b32.xlu0 %v6171, 96
        %v6356 = vpop.permute.xlu0 %6355
        %6357 = vrot.lane.b32.xlu0 %v6172, 96
        %v6358 = vpop.permute.xlu0 %6357
        %6359 = vrot.lane.b32.xlu0 %v6173, 96
        %v6360 = vpop.permute.xlu0 %6359
        %6361 = vrot.lane.b32.xlu0 %v6174, 96
        %v6362 = vpop.permute.xlu0 %6361
        %6363 = vrot.lane.b32.xlu0 %v6175, 96
        %v6364 = vpop.permute.xlu0 %6363
        %6365 = vrot.lane.b32.xlu0 %v6176, 96
        %v6366 = vpop.permute.xlu0 %6365
        %6367 = vrot.lane.b32.xlu0 %v6177, 96
        %v6368 = vpop.permute.xlu0 %6367
        %6369 = vrot.lane.b32.xlu0 %v6178, 96
        %v6370 = vpop.permute.xlu0 %6369
        %6371 = vrot.lane.b32.xlu0 %v6179, 96
        %v6372 = vpop.permute.xlu0 %6371
        %6373 = vrot.lane.b32.xlu0 %v6180, 96
        %v6374 = vpop.permute.xlu0 %6373
        %v6407 = vsel %vm4922, %v6145, %v6214
        %v6408 = vsel %vm4922, %v6146, %v6216
        %v6409 = vsel %vm4922, %v6147, %v6218
        %v6410 = vsel %vm4922, %v6148, %v6220
        %v6411 = vsel %vm4922, %v6149, %v6222
        %v6412 = vsel %vm4922, %v6150, %v6224
        %v6413 = vsel %vm4922, %v6151, %v6226
        %v6414 = vsel %vm4922, %v6152, %v6228
        %v6415 = vsel %vm4922, %v6153, %v6230
        %v6416 = vsel %vm4922, %v6154, %v6232
        %v6417 = vsel %vm4922, %v6155, %v6234
        %v6418 = vsel %vm4922, %v6156, %v6236
        %v6419 = vsel %vm4922, %v6157, %v6238
        %v6420 = vsel %vm4922, %v6158, %v6240
        %v6421 = vsel %vm4922, %v6159, %v6242
        %v6422 = vsel %vm4922, %v6160, %v6244
        %v6423 = vsel %vm4922, %v6161, %v6246
        %v6424 = vsel %vm4922, %v6162, %v6248
        %v6425 = vsel %vm4922, %v6163, %v6250
        %v6426 = vsel %vm4922, %v6164, %v6252
        %v6427 = vsel %vm4922, %v6165, %v6254
        %v6428 = vsel %vm4922, %v6166, %v6256
        %v6429 = vsel %vm4922, %v6167, %v6258
        %v6430 = vsel %vm4922, %v6168, %v6260
        %v6431 = vsel %vm4922, %v6169, %v6262
        %v6432 = vsel %vm4922, %v6170, %v6264
        %v6433 = vsel %vm4922, %v6171, %v6266
        %v6434 = vsel %vm4922, %v6172, %v6268
        %v6435 = vsel %vm4922, %v6173, %v6270
        %v6436 = vsel %vm4922, %v6174, %v6272
        %v6437 = vsel %vm4922, %v6175, %v6274
        %v6438 = vsel %vm4922, %v6176, %v6276
        %v6439 = vsel %vm1252, %v6407, %v6312
        %v6440 = vsel %vm1252, %v6408, %v6314
        %v6441 = vsel %vm1252, %v6409, %v6316
        %v6442 = vsel %vm1252, %v6410, %v6318
        %v6443 = vsel %vm1252, %v6411, %v6320
        %v6444 = vsel %vm1252, %v6412, %v6322
        %v6445 = vsel %vm1252, %v6413, %v6324
        %v6446 = vsel %vm1252, %v6414, %v6326
        %v6447 = vsel %vm1252, %v6415, %v6328
        %v6448 = vsel %vm1252, %v6416, %v6330
        %v6449 = vsel %vm1252, %v6417, %v6332
        %v6450 = vsel %vm1252, %v6418, %v6334
        %v6451 = vsel %vm1252, %v6419, %v6336
        %v6452 = vsel %vm1252, %v6420, %v6338
        %v6453 = vsel %vm1252, %v6421, %v6340
        %v6454 = vsel %vm1252, %v6422, %v6342
        %v6455 = vsel %vm1252, %v6423, %v6344
        %v6456 = vsel %vm1252, %v6424, %v6346
        %v6457 = vsel %vm1252, %v6425, %v6348
        %v6458 = vsel %vm1252, %v6426, %v6350
        %v6459 = vsel %vm1252, %v6427, %v6352
        %v6460 = vsel %vm1252, %v6428, %v6354
        %v6461 = vsel %vm1252, %v6429, %v6356
        %v6462 = vsel %vm1252, %v6430, %v6358
        %v6463 = vsel %vm1252, %v6431, %v6360
        %v6464 = vsel %vm1252, %v6432, %v6362
        %v6465 = vsel %vm1252, %v6433, %v6364
        %v6466 = vsel %vm1252, %v6434, %v6366
        %v6467 = vsel %vm1252, %v6435, %v6368
        %v6468 = vsel %vm1252, %v6436, %v6370
        %v6469 = vsel %vm1252, %v6437, %v6372
        %v6470 = vsel %vm1252, %v6438, %v6374
        %v6471 = vpack.c.bf16 %v6440, %v6439
        %v6472 = vpack.c.bf16 %v6314, %v6312
        %v6473 = vpack.c.bf16 %v6442, %v6441
        %v6474 = vpack.c.bf16 %v6318, %v6316
        %v6475 = vpack.c.bf16 %v6444, %v6443
        %v6476 = vpack.c.bf16 %v6322, %v6320
        %v6477 = vpack.c.bf16 %v6446, %v6445
        %v6478 = vpack.c.bf16 %v6326, %v6324
        %v6479 = vpack.c.bf16 %v6448, %v6447
        %v6480 = vpack.c.bf16 %v6330, %v6328
        %v6481 = vpack.c.bf16 %v6450, %v6449
        %v6482 = vpack.c.bf16 %v6334, %v6332
        %v6483 = vpack.c.bf16 %v6452, %v6451
        %v6484 = vpack.c.bf16 %v6338, %v6336
        %v6485 = vpack.c.bf16 %v6454, %v6453
        %v6486 = vpack.c.bf16 %v6342, %v6340
        %v6487 = vpack.c.bf16 %v6456, %v6455
        %v6488 = vpack.c.bf16 %v6346, %v6344
        %v6489 = vpack.c.bf16 %v6458, %v6457
        %v6490 = vpack.c.bf16 %v6350, %v6348
        %v6491 = vpack.c.bf16 %v6460, %v6459
        %v6492 = vpack.c.bf16 %v6354, %v6352
        %v6493 = vpack.c.bf16 %v6462, %v6461
        %v6494 = vpack.c.bf16 %v6358, %v6356
        %v6495 = vpack.c.bf16 %v6464, %v6463
        %v6496 = vpack.c.bf16 %v6362, %v6360
        %v6497 = vpack.c.bf16 %v6466, %v6465
        %v6498 = vpack.c.bf16 %v6366, %v6364
        %v6499 = vpack.c.bf16 %v6468, %v6467
        %v6500 = vpack.c.bf16 %v6370, %v6368
        %v6501 = vpack.c.bf16 %v6470, %v6469
        %v6502 = vpack.c.bf16 %v6374, %v6372
        %v6503 = vld [vmem:[#allocation18] sm:$0xf]
        %v6504 = vld [vmem:[#allocation18 + $0x4] sm:$0xf]
        %v6505 = vld [vmem:[#allocation18 + $0x8] sm:$0xf]
        %v6506 = vld [vmem:[#allocation18 + $0xc] sm:$0xf]
        %v6507 = vld [vmem:[#allocation18 + $0x10] sm:$0xf]
        %v6508 = vld [vmem:[#allocation18 + $0x14] sm:$0xf]
        %v6509 = vld [vmem:[#allocation18 + $0x18] sm:$0xf]
        %v6510 = vld [vmem:[#allocation18 + $0x1c] sm:$0xf]
        %v6511 = vld [vmem:[#allocation18 + $0x20] sm:$0xf]
        %v6512 = vld [vmem:[#allocation18 + $0x24] sm:$0xf]
        %v6513 = vld [vmem:[#allocation18 + $0x28] sm:$0xf]
        %v6514 = vld [vmem:[#allocation18 + $0x2c] sm:$0xf]
        %v6515 = vld [vmem:[#allocation18 + $0x30] sm:$0xf]
        %v6516 = vld [vmem:[#allocation18 + $0x34] sm:$0xf]
        %v6517 = vld [vmem:[#allocation18 + $0x38] sm:$0xf]
        %v6518 = vld [vmem:[#allocation18 + $0x3c] sm:$0xf]
        %v6519 = vld [vmem:[#allocation18 + $0x40] sm:$0xf]
        %v6520 = vld [vmem:[#allocation18 + $0x44] sm:$0xf]
        %v6521 = vld [vmem:[#allocation19] sm:$0x1]
        %v6523 = vlaneseq
        %v6524 = vshrl.u32 %v6523, 7
        %v6525 = vsub.s32 0, %v6524
        %v6526 = vrot.slane %v6521, %v6525
        %v6546 = vunpack.c.l.b16 %v6503
        %v6547 = vunpack.c.l.b16 %v6504
        %v6548 = vunpack.c.l.b16 %v6505
        %v6549 = vunpack.c.l.b16 %v6506
        %v6550 = vunpack.c.l.b16 %v6507
        %v6551 = vunpack.c.l.b16 %v6508
        %v6552 = vunpack.c.l.b16 %v6509
        %v6553 = vunpack.c.l.b16 %v6510
        %v6554 = vunpack.c.l.b16 %v6511
        %v6555 = vunpack.c.l.b16 %v6512
        %v6556 = vunpack.c.l.b16 %v6513
        %v6557 = vunpack.c.l.b16 %v6514
        %v6558 = vunpack.c.l.b16 %v6515
        %v6559 = vunpack.c.l.b16 %v6516
        %v6560 = vunpack.c.l.b16 %v6517
        %v6561 = vunpack.c.l.b16 %v6518
        %v6562 = vunpack.c.l.b16 %v6519
        %v6563 = vunpack.c.l.b16 %v6520
        %v6564 = vpack.c.b16 %v6547, %v6546
        %v6565 = vpack.c.b16 %v6549, %v6548
        %v6566 = vpack.c.b16 %v6551, %v6550
        %v6567 = vpack.c.b16 %v6553, %v6552
        %v6568 = vpack.c.b16 %v6555, %v6554
        %v6569 = vpack.c.b16 %v6557, %v6556
        %v6570 = vpack.c.b16 %v6559, %v6558
        %v6571 = vpack.c.b16 %v6561, %v6560
        %v6572 = vpack.c.b16 %v6563, %v6562
        %v6583 = vsel %vm3812, %v6472, 0
        %v6586 = vsel %vm3812, %v6474, 0
        %v6589 = vsel %vm3812, %v6476, 0
        %v6592 = vsel %vm3812, %v6478, 0
        %v6595 = vsel %vm3812, %v6480, 0
        %v6598 = vsel %vm3812, %v6482, 0
        %v6601 = vsel %vm3812, %v6484, 0
        %v6604 = vsel %vm3812, %v6486, 0
        %v6607 = vsel %vm3812, %v6488, 0
        %v6610 = vsel %vm3812, %v6490, 0
        %v6613 = vsel %vm3812, %v6492, 0
        %v6616 = vsel %vm3812, %v6494, 0
        %v6619 = vsel %vm3812, %v6496, 0
        %v6622 = vsel %vm3812, %v6498, 0
        %v6625 = vsel %vm3812, %v6500, 0
        %v6628 = vsel %vm3812, %v6502, 0
        %6630 = vmatprep.subr.bf16.mxu0 0
        %6631 = vmatpush1.bf16.msra.mxu0 %v6564
        %6632 = vmatprep.subr.bf16.mxu0 0
        %6633 = vmatpush1.bf16.msra.mxu0 %v6565
        %6634 = vmatprep.subr.bf16.mxu0 0
        %6635 = vmatpush1.bf16.msra.mxu0 %v6566
        %6636 = vmatprep.subr.bf16.mxu0 0
        %6637 = vmatpush1.bf16.msra.mxu0 %v6567
        %6638 = vmatprep.subr.bf16.mxu0 0
        %6639 = vmatpush1.bf16.msra.mxu0 %v6568
        %6640 = vmatprep.subr.bf16.mxu0 0
        %6641 = vmatpush1.bf16.msra.mxu0 %v6569
        %6642 = vmatprep.subr.bf16.mxu0 0
        %6643 = vmatpush1.bf16.msra.mxu0 %v6570
        %6644 = vmatprep.subr.bf16.mxu0 0
        %6645 = vmatpush1.bf16.msra.mxu0 %v6571
        %6646 = vmatprep.subr.bf16.mxu0 0
        %6647 = vmatpush1.bf16.msra.mxu0 %v6572
        %6648 = vmatprep.subr.bf16.mxu0 0
        %6649 = vmatpush1.bf16.msra.mxu0 0
        %6650 = vmatprep.subr.bf16.mxu0 0
        %6651 = vmatpush1.bf16.msra.mxu0 0
        %6652 = vmatprep.subr.bf16.mxu0 0
        %6653 = vmatpush1.bf16.msra.mxu0 0
        %6654 = vmatprep.subr.bf16.mxu0 0
        %6655 = vmatpush1.bf16.msra.mxu0 0
        %6656 = vmatprep.subr.bf16.mxu0 0
        %6657 = vmatpush1.bf16.msra.mxu0 0
        %6658 = vmatprep.subr.bf16.mxu0 0
        %6659 = vmatpush1.bf16.msra.mxu0 0
        %6660 = vmatprep.subr.bf16.mxu0 0
        %6661 = vmatpush1.bf16.msra.mxu0 0
        %6662 = vmatprep.mubr.bf16.mxu0 %v6583
        %6663 = vmatmul.mubr.bf16.gmra.mrb[0].mxu0 %v6471
        %v6664 = vpop.f32.mrb[0].mxu0
        %v6665 = vadd.f32 %v6526, %v6664
        %v6666 = vpop.f32.mrb[0].mxu0
        %v6667 = vpop.f32.mrb[0].mxu0
        %v6668 = vadd.f32 %v6526, %v6667
        %v6669 = vpop.f32.mrb[0].mxu0
        %6670 = vmatprep.mubr.bf16.mxu0 %v6586
        %6671 = vmatmul.mubr.bf16.gmra.mrb[0].mxu0 %v6473
        %v6672 = vpop.f32.mrb[0].mxu0
        %v6673 = vadd.f32 %v6526, %v6672
        %v6674 = vpop.f32.mrb[0].mxu0
        %v6675 = vpop.f32.mrb[0].mxu0
        %v6676 = vadd.f32 %v6526, %v6675
        %v6677 = vpop.f32.mrb[0].mxu0
        %6678 = vmatprep.mubr.bf16.mxu0 %v6589
        %6679 = vmatmul.mubr.bf16.gmra.mrb[0].mxu0 %v6475
        %v6680 = vpop.f32.mrb[0].mxu0
        %v6681 = vadd.f32 %v6526, %v6680
        %v6682 = vpop.f32.mrb[0].mxu0
        %v6683 = vpop.f32.mrb[0].mxu0
        %v6684 = vadd.f32 %v6526, %v6683
        %v6685 = vpop.f32.mrb[0].mxu0
        %6686 = vmatprep.mubr.bf16.mxu0 %v6592
        %6687 = vmatmul.mubr.bf16.gmra.mrb[0].mxu0 %v6477
        %v6688 = vpop.f32.mrb[0].mxu0
        %v6689 = vadd.f32 %v6526, %v6688
        %v6690 = vpop.f32.mrb[0].mxu0
        %v6691 = vpop.f32.mrb[0].mxu0
        %v6692 = vadd.f32 %v6526, %v6691
        %v6693 = vpop.f32.mrb[0].mxu0
        %6694 = vmatprep.mubr.bf16.mxu0 %v6595
        %6695 = vmatmul.mubr.bf16.gmra.mrb[0].mxu0 %v6479
        %v6696 = vpop.f32.mrb[0].mxu0
        %v6697 = vadd.f32 %v6526, %v6696
        %v6698 = vpop.f32.mrb[0].mxu0
        %v6699 = vpop.f32.mrb[0].mxu0
        %v6700 = vadd.f32 %v6526, %v6699
        %v6701 = vpop.f32.mrb[0].mxu0
        %6702 = vmatprep.mubr.bf16.mxu0 %v6598
        %6703 = vmatmul.mubr.bf16.gmra.mrb[0].mxu0 %v6481
        %v6704 = vpop.f32.mrb[0].mxu0
        %v6705 = vadd.f32 %v6526, %v6704
        %v6706 = vpop.f32.mrb[0].mxu0
        %v6707 = vpop.f32.mrb[0].mxu0
        %v6708 = vadd.f32 %v6526, %v6707
        %v6709 = vpop.f32.mrb[0].mxu0
        %6710 = vmatprep.mubr.bf16.mxu0 %v6601
        %6711 = vmatmul.mubr.bf16.gmra.mrb[0].mxu0 %v6483
        %v6712 = vpop.f32.mrb[0].mxu0
        %v6713 = vadd.f32 %v6526, %v6712
        %v6714 = vpop.f32.mrb[0].mxu0
        %v6715 = vpop.f32.mrb[0].mxu0
        %v6716 = vadd.f32 %v6526, %v6715
        %v6717 = vpop.f32.mrb[0].mxu0
        %6718 = vmatprep.mubr.bf16.mxu0 %v6604
        %6719 = vmatmul.mubr.bf16.gmra.mrb[0].mxu0 %v6485
        %v6720 = vpop.f32.mrb[0].mxu0
        %v6721 = vadd.f32 %v6526, %v6720
        %v6722 = vpop.f32.mrb[0].mxu0
        %v6723 = vpop.f32.mrb[0].mxu0
        %v6724 = vadd.f32 %v6526, %v6723
        %v6725 = vpop.f32.mrb[0].mxu0
        %6726 = vmatprep.mubr.bf16.mxu0 %v6607
        %6727 = vmatmul.mubr.bf16.gmra.mrb[0].mxu0 %v6487
        %v6728 = vpop.f32.mrb[0].mxu0
        %v6729 = vadd.f32 %v6526, %v6728
        %v6730 = vpop.f32.mrb[0].mxu0
        %v6731 = vpop.f32.mrb[0].mxu0
        %v6732 = vadd.f32 %v6526, %v6731
        %v6733 = vpop.f32.mrb[0].mxu0
        %6734 = vmatprep.mubr.bf16.mxu0 %v6610
        %6735 = vmatmul.mubr.bf16.gmra.mrb[0].mxu0 %v6489
        %v6736 = vpop.f32.mrb[0].mxu0
        %v6737 = vadd.f32 %v6526, %v6736
        %v6738 = vpop.f32.mrb[0].mxu0
        %v6739 = vpop.f32.mrb[0].mxu0
        %v6740 = vadd.f32 %v6526, %v6739
        %v6741 = vpop.f32.mrb[0].mxu0
        %6742 = vmatprep.mubr.bf16.mxu0 %v6613
        %6743 = vmatmul.mubr.bf16.gmra.mrb[0].mxu0 %v6491
        %v6744 = vpop.f32.mrb[0].mxu0
        %v6745 = vadd.f32 %v6526, %v6744
        %v6746 = vpop.f32.mrb[0].mxu0
        %v6747 = vpop.f32.mrb[0].mxu0
        %v6748 = vadd.f32 %v6526, %v6747
        %v6749 = vpop.f32.mrb[0].mxu0
        %6750 = vmatprep.mubr.bf16.mxu0 %v6616
        %6751 = vmatmul.mubr.bf16.gmra.mrb[0].mxu0 %v6493
        %v6752 = vpop.f32.mrb[0].mxu0
        %v6753 = vadd.f32 %v6526, %v6752
        %v6754 = vpop.f32.mrb[0].mxu0
        %v6755 = vpop.f32.mrb[0].mxu0
        %v6756 = vadd.f32 %v6526, %v6755
        %v6757 = vpop.f32.mrb[0].mxu0
        %6758 = vmatprep.mubr.bf16.mxu0 %v6619
        %6759 = vmatmul.mubr.bf16.gmra.mrb[0].mxu0 %v6495
        %v6760 = vpop.f32.mrb[0].mxu0
        %v6761 = vadd.f32 %v6526, %v6760
        %v6762 = vpop.f32.mrb[0].mxu0
        %v6763 = vpop.f32.mrb[0].mxu0
        %v6764 = vadd.f32 %v6526, %v6763
        %v6765 = vpop.f32.mrb[0].mxu0
        %6766 = vmatprep.mubr.bf16.mxu0 %v6622
        %6767 = vmatmul.mubr.bf16.gmra.mrb[0].mxu0 %v6497
        %v6768 = vpop.f32.mrb[0].mxu0
        %v6769 = vadd.f32 %v6526, %v6768
        %v6770 = vpop.f32.mrb[0].mxu0
        %v6771 = vpop.f32.mrb[0].mxu0
        %v6772 = vadd.f32 %v6526, %v6771
        %v6773 = vpop.f32.mrb[0].mxu0
        %6774 = vmatprep.mubr.bf16.mxu0 %v6625
        %6775 = vmatmul.mubr.bf16.gmra.mrb[0].mxu0 %v6499
        %v6776 = vpop.f32.mrb[0].mxu0
        %v6777 = vadd.f32 %v6526, %v6776
        %v6778 = vpop.f32.mrb[0].mxu0
        %v6779 = vpop.f32.mrb[0].mxu0
        %v6780 = vadd.f32 %v6526, %v6779
        %v6781 = vpop.f32.mrb[0].mxu0
        %6782 = vmatprep.mubr.bf16.mxu0 %v6628
        %6783 = vmatmul.mubr.bf16.gmra.mrb[0].mxu0 %v6501
        %v6784 = vpop.f32.mrb[0].mxu0
        %v6785 = vadd.f32 %v6526, %v6784
        %v6786 = vpop.f32.mrb[0].mxu0
        %v6787 = vpop.f32.mrb[0].mxu0
        %v6788 = vadd.f32 %v6526, %v6787
        %v6789 = vpop.f32.mrb[0].mxu0
        %6790 = vdwg.mxu0
        %vm6791 = vcmp.gt.f32.partialorder %v6665, 0.0
        %vm6792 = vcmp.gt.f32.partialorder %v6668, 0.0
        %vm6793 = vcmp.gt.f32.partialorder %v6673, 0.0
        %vm6794 = vcmp.gt.f32.partialorder %v6676, 0.0
        %vm6795 = vcmp.gt.f32.partialorder %v6681, 0.0
        %vm6796 = vcmp.gt.f32.partialorder %v6684, 0.0
        %vm6797 = vcmp.gt.f32.partialorder %v6689, 0.0
        %vm6798 = vcmp.gt.f32.partialorder %v6692, 0.0
        %vm6799 = vcmp.gt.f32.partialorder %v6697, 0.0
        %vm6800 = vcmp.gt.f32.partialorder %v6700, 0.0
        %vm6801 = vcmp.gt.f32.partialorder %v6705, 0.0
        %vm6802 = vcmp.gt.f32.partialorder %v6708, 0.0
        %vm6803 = vcmp.gt.f32.partialorder %v6713, 0.0
        %vm6804 = vcmp.gt.f32.partialorder %v6716, 0.0
        %vm6805 = vcmp.gt.f32.partialorder %v6721, 0.0
        %vm6806 = vcmp.gt.f32.partialorder %v6724, 0.0
        %vm6807 = vcmp.gt.f32.partialorder %v6729, 0.0
        %vm6808 = vcmp.gt.f32.partialorder %v6732, 0.0
        %vm6809 = vcmp.gt.f32.partialorder %v6737, 0.0
        %vm6810 = vcmp.gt.f32.partialorder %v6740, 0.0
        %vm6811 = vcmp.gt.f32.partialorder %v6745, 0.0
        %vm6812 = vcmp.gt.f32.partialorder %v6748, 0.0
        %vm6813 = vcmp.gt.f32.partialorder %v6753, 0.0
        %vm6814 = vcmp.gt.f32.partialorder %v6756, 0.0
        %vm6815 = vcmp.gt.f32.partialorder %v6761, 0.0
        %vm6816 = vcmp.gt.f32.partialorder %v6764, 0.0
        %vm6817 = vcmp.gt.f32.partialorder %v6769, 0.0
        %vm6818 = vcmp.gt.f32.partialorder %v6772, 0.0
        %vm6819 = vcmp.gt.f32.partialorder %v6777, 0.0
        %vm6820 = vcmp.gt.f32.partialorder %v6780, 0.0
        %vm6821 = vcmp.gt.f32.partialorder %v6785, 0.0
        %vm6822 = vcmp.gt.f32.partialorder %v6788, 0.0
        %v6823 = vmul.f32 %v6665, 0.01
        %v6824 = vmul.f32 %v6668, 0.01
        %v6825 = vmul.f32 %v6673, 0.01
        %v6826 = vmul.f32 %v6676, 0.01
        %v6827 = vmul.f32 %v6681, 0.01
        %v6828 = vmul.f32 %v6684, 0.01
        %v6829 = vmul.f32 %v6689, 0.01
        %v6830 = vmul.f32 %v6692, 0.01
        %v6831 = vmul.f32 %v6697, 0.01
        %v6832 = vmul.f32 %v6700, 0.01
        %v6833 = vmul.f32 %v6705, 0.01
        %v6834 = vmul.f32 %v6708, 0.01
        %v6835 = vmul.f32 %v6713, 0.01
        %v6836 = vmul.f32 %v6716, 0.01
        %v6837 = vmul.f32 %v6721, 0.01
        %v6838 = vmul.f32 %v6724, 0.01
        %v6839 = vmul.f32 %v6729, 0.01
        %v6840 = vmul.f32 %v6732, 0.01
        %v6841 = vmul.f32 %v6737, 0.01
        %v6842 = vmul.f32 %v6740, 0.01
        %v6843 = vmul.f32 %v6745, 0.01
        %v6844 = vmul.f32 %v6748, 0.01
        %v6845 = vmul.f32 %v6753, 0.01
        %v6846 = vmul.f32 %v6756, 0.01
        %v6847 = vmul.f32 %v6761, 0.01
        %v6848 = vmul.f32 %v6764, 0.01
        %v6849 = vmul.f32 %v6769, 0.01
        %v6850 = vmul.f32 %v6772, 0.01
        %v6851 = vmul.f32 %v6777, 0.01
        %v6852 = vmul.f32 %v6780, 0.01
        %v6853 = vmul.f32 %v6785, 0.01
        %v6854 = vmul.f32 %v6788, 0.01
        %v6855 = vsel %vm6791, %v6665, %v6823
        %v6856 = vsel %vm6792, %v6668, %v6824
        %v6857 = vsel %vm6793, %v6673, %v6825
        %v6858 = vsel %vm6794, %v6676, %v6826
        %v6859 = vsel %vm6795, %v6681, %v6827
        %v6860 = vsel %vm6796, %v6684, %v6828
        %v6861 = vsel %vm6797, %v6689, %v6829
        %v6862 = vsel %vm6798, %v6692, %v6830
        %v6863 = vsel %vm6799, %v6697, %v6831
        %v6864 = vsel %vm6800, %v6700, %v6832
        %v6865 = vsel %vm6801, %v6705, %v6833
        %v6866 = vsel %vm6802, %v6708, %v6834
        %v6867 = vsel %vm6803, %v6713, %v6835
        %v6868 = vsel %vm6804, %v6716, %v6836
        %v6869 = vsel %vm6805, %v6721, %v6837
        %v6870 = vsel %vm6806, %v6724, %v6838
        %v6871 = vsel %vm6807, %v6729, %v6839
        %v6872 = vsel %vm6808, %v6732, %v6840
        %v6873 = vsel %vm6809, %v6737, %v6841
        %v6874 = vsel %vm6810, %v6740, %v6842
        %v6875 = vsel %vm6811, %v6745, %v6843
        %v6876 = vsel %vm6812, %v6748, %v6844
        %v6877 = vsel %vm6813, %v6753, %v6845
        %v6878 = vsel %vm6814, %v6756, %v6846
        %v6879 = vsel %vm6815, %v6761, %v6847
        %v6880 = vsel %vm6816, %v6764, %v6848
        %v6881 = vsel %vm6817, %v6769, %v6849
        %v6882 = vsel %vm6818, %v6772, %v6850
        %v6883 = vsel %vm6819, %v6777, %v6851
        %v6884 = vsel %vm6820, %v6780, %v6852
        %v6885 = vsel %vm6821, %v6785, %v6853
        %v6886 = vsel %vm6822, %v6788, %v6854
        %v6887 = vld [vmem:[#allocation21] sm:$0x3]
        %v6888 = vpack.c.bf16 %v6856, %v6855
        %v6889 = vpack.c.bf16 %v6858, %v6857
        %v6890 = vpack.c.bf16 %v6860, %v6859
        %v6891 = vpack.c.bf16 %v6862, %v6861
        %v6892 = vpack.c.bf16 %v6864, %v6863
        %v6893 = vpack.c.bf16 %v6866, %v6865
        %v6894 = vpack.c.bf16 %v6868, %v6867
        %v6895 = vpack.c.bf16 %v6870, %v6869
        %v6896 = vpack.c.bf16 %v6872, %v6871
        %v6897 = vpack.c.bf16 %v6874, %v6873
        %v6898 = vpack.c.bf16 %v6876, %v6875
        %v6899 = vpack.c.bf16 %v6878, %v6877
        %v6900 = vpack.c.bf16 %v6880, %v6879
        %v6901 = vpack.c.bf16 %v6882, %v6881
        %v6902 = vpack.c.bf16 %v6884, %v6883
        %v6903 = vpack.c.bf16 %v6886, %v6885
        %v6904 = vld [vmem:[#allocation22] sm:$0x7]
        %6906 = vset.pattern.permute.xlu0 0
        %6907 = vperm.xlu0 %6906, %v6904
        %v6908 = vpop.permute.xlu0 %6907
        %v6911 = vsel %vm3812, %v6887, 0
        %v6914 = vsel %vm3812, %v6888, 0
        %v6917 = vsel %vm3812, %v6889, 0
        %v6920 = vsel %vm3812, %v6890, 0
        %v6923 = vsel %vm3812, %v6891, 0
        %v6926 = vsel %vm3812, %v6892, 0
        %v6929 = vsel %vm3812, %v6893, 0
        %v6932 = vsel %vm3812, %v6894, 0
        %v6935 = vsel %vm3812, %v6895, 0
        %v6938 = vsel %vm3812, %v6896, 0
        %v6941 = vsel %vm3812, %v6897, 0
        %v6944 = vsel %vm3812, %v6898, 0
        %v6947 = vsel %vm3812, %v6899, 0
        %v6950 = vsel %vm3812, %v6900, 0
        %v6953 = vsel %vm3812, %v6901, 0
        %v6956 = vsel %vm3812, %v6902, 0
        %v6959 = vsel %vm3812, %v6903, 0
        %6961 = vmatprep.subr.bf16.mxu0 0
        %6962 = vmatpush1.bf16.xpose.msra.mxu0 %v6914
        %6963 = vmatprep.subr.bf16.mxu0 0
        %6964 = vmatpush1.bf16.xpose.msra.mxu0 %v6917
        %6965 = vmatprep.subr.bf16.mxu0 0
        %6966 = vmatpush1.bf16.xpose.msra.mxu0 %v6920
        %6967 = vmatprep.subr.bf16.mxu0 0
        %6968 = vmatpush1.bf16.xpose.msra.mxu0 %v6923
        %6969 = vmatprep.subr.bf16.mxu0 0
        %6970 = vmatpush1.bf16.xpose.msra.mxu0 %v6926
        %6971 = vmatprep.subr.bf16.mxu0 0
        %6972 = vmatpush1.bf16.xpose.msra.mxu0 %v6929
        %6973 = vmatprep.subr.bf16.mxu0 0
        %6974 = vmatpush1.bf16.xpose.msra.mxu0 %v6932
        %6975 = vmatprep.subr.bf16.mxu0 0
        %6976 = vmatpush1.bf16.xpose.msra.mxu0 %v6935
        %6977 = vmatprep.subr.bf16.mxu0 0
        %6978 = vmatpush1.bf16.xpose.msra.mxu0 %v6938
        %6979 = vmatprep.subr.bf16.mxu0 0
        %6980 = vmatpush1.bf16.xpose.msra.mxu0 %v6941
        %6981 = vmatprep.subr.bf16.mxu0 0
        %6982 = vmatpush1.bf16.xpose.msra.mxu0 %v6944
        %6983 = vmatprep.subr.bf16.mxu0 0
        %6984 = vmatpush1.bf16.xpose.msra.mxu0 %v6947
        %6985 = vmatprep.subr.bf16.mxu0 0
        %6986 = vmatpush1.bf16.xpose.msra.mxu0 %v6950
        %6987 = vmatprep.subr.bf16.mxu0 0
        %6988 = vmatpush1.bf16.xpose.msra.mxu0 %v6953
        %6989 = vmatprep.subr.bf16.mxu0 0
        %6990 = vmatpush1.bf16.xpose.msra.mxu0 %v6956
        %6991 = vmatprep.subr.bf16.mxu0 0
        %6992 = vmatpush1.bf16.xpose.msra.mxu0 %v6959
        %6993 = vmatprep.mubr.bf16.mxu0 0
        %6994 = vmatmul.mubr.bf16.gmra.mrb[0].mxu0 %v6911
        %v6995 = vpop.f32.mrb[0].mxu0
        %v6996 = vadd.f32 %v6908, %v6995
        %v6997 = vpop.f32.mrb[0].mxu0
        %v6998 = vadd.f32 %v6908, %v6997
        %v6999 = vpop.f32.mrb[0].mxu0
        %v7000 = vpop.f32.mrb[0].mxu0
        %7001 = vdwg.mxu0
        %v7002 = vpack.c.bf16 %v6996, %v6996
        %v7003 = vpack.c.bf16 %v6998, %v6998
        %v7006 = vcombine.low %v7002, %v7003
        %v7008 = vunpack.c.l.s4 1983009808
        %v7009 = vunpack.c.0.s8 %v7008
        %v7010 = vlaneseq
        %v7011 = vshrl.u32 %v7010, 7
        %v7012 = vsub.s32 %v7009, %v7011
        %v7013 = vrot.slane %v7006, %v7012
        %vm7015 = vcmask 1041408
        %vm7016 = vsmask.f32 1280
        %vm7017 = vmand %vm7015, %vm7016
        %vm7018 = vcmask 1043458
        %vm7019 = vsmask.f32 3328
        %vm7020 = vmand %vm7018, %vm7019
        %vm7021 = vmor %vm7020, %vm7017
        %v7022 = vld [vmem:[%s527] sm:$0xf]
        %v7023 = vsel %vm7021, %v7013, %v7022
        %7024 = vst [vmem:[%s527] sm:$0xf] %v7023
        %s7025 = sand.u32 %s262, 1
        %s7026 = scalar_lea.sflag [#allocation9], %s7025
        %s7027 = sand.u32 %s262, 1
        %s7028 = smul.addr %s7027, 4
        %s7029 = scalar_lea.vmem [#allocation24], %s7028
        // Predicated region
        $region101: #{decoder_forward.1} parent=59 // pred_check
          %p7030 = pneg %p272
        $region102: #{decoder_forward.1} parent=59 // pred_check_branch
          %7032 = sbr.rel (%p7030) target = $region104
        $region103: #{decoder_forward.1} parent=59 // pred_region
          %s7034 = ssub.s32 64, 64
          %7035 = vsyncadd %s7026, %s7034
          %s7036 = smul.addr %s34, 2
          %s7037 = smul.addr %s7036, 32
          %s7038 = scalar_lea.hbm %s10, %s7037
          %s7040 = sshll.u32 %s7029, 4
          %s7041 = int_to_ptr.vmem [resolvable:$true] %s7040
          %7043 = dma.vmem_to_hbm [thread:$0]  %s7041, 64, %s7038, %s7026
        $region104: #{decoder_forward.1} parent=59 // pred_fallthru
          _
      $region60: #{decoder_forward.1} parent=5 // pred_fallthru
        _
      %p7044 = scmp.le.s32.totalorder 2, %s29
      // Predicated region
      $region105: #{decoder_forward.1} parent=5 // pred_check
        %p7045 = pneg %p7044
      $region106: #{decoder_forward.1} parent=5 // pred_check_branch
        %7047 = sbr.rel (%p7045) target = $region108
      $region107: #{decoder_forward.1} parent=5 // pred_region
        %s7048 = ssub.s32 %s29, 2
        // Predicated region
        $region109: #{decoder_forward.1} parent=107 // pred_check
          %p7049 = pneg %p278
        $region110: #{decoder_forward.1} parent=107 // pred_check_branch
          %7051 = sbr.rel (%p7049) target = $region112
        $region111: #{decoder_forward.1} parent=107 // pred_region
          %s7052 = sand.u32 %s263, 1
          %s7053 = scalar_lea.sflag [#allocation9], %s7052
          %s7054 = sand.u32 %s263, 1
          %s7055 = smul.addr %s7054, 4
          %s7056 = scalar_lea.vmem [#allocation24], %s7055
          %7057 = dma.done %s7053, 64
        $region112: #{decoder_forward.1} parent=107 // pred_fallthru
          _
      $region108: #{decoder_forward.1} parent=5 // pred_fallthru
        _
    $region6: #{decoder_forward.1} parent=1 // loop_footer
      %s33 = sadd.s32 1, %s29
    $region7: #{decoder_forward.1} parent=1 // loop_footer_branch
      %28 = sbr.rel target = $region3
    $region8: #{decoder_forward.1} parent=1 // loop_exit
      _
    %7058 = vsyncpa [#allocation8], 1
    %s7059 = scalar_lea.sflag [#allocation8], 1
    %7060 = vsyncpa %s7059, 1
    %7061 = vsyncpa [#allocation11], 1
    %s7062 = scalar_lea.sflag [#allocation11], 1
    %7063 = vsyncpa %s7062, 1
    %7064 = vsyncpa [#allocation14], 1
    %7065 = vsyncpa [#allocation17], 1
    %7066 = vsyncpa [#allocation20], 1
    %7067 = vsyncpa [#allocation23], 1
    %7068 = vsyncpa [#allocation9], 1
    %s7069 = scalar_lea.sflag [#allocation9], 1
    %7070 = vsyncpa %s7069, 1

</llo_original>
